<compile_context>
chip_gen: v6e
topology: v6e:2x2x1
jax: 0.10.0
libtpu: 0.0.40
codegen_flags: <defaults>
</compile_context>

<pallas_src>
import functools

import numpy as np

import jax
import jax.numpy as jnp
from jax import lax
from jax.experimental import pallas as pl
from jax.experimental.pallas import tpu as pltpu

HIDDEN = 128            # DynamicConv hardcodes hidden_dim = dim_dynamic = 128
POOLER_RES = 7          # ROIPooler output_size -> 49 positions per ROI
NUM_HEADS = 4           # hidden_channel must be divisible by num_heads
FFN_DIM = 4 * HIDDEN


# ----------------------------------------------------------------------------- helpers
def _layer_norm(x, gamma, beta, eps=1e-5):
    mu = jnp.mean(x, axis=-1, keepdims=True)
    xc = x - mu
    var = jnp.mean(xc * xc, axis=-1, keepdims=True)
    return xc * lax.rsqrt(var + eps) * gamma + beta


def _resident(shape):
    """BlockSpec for a full array that stays resident (constant block index)."""
    zeros = (0,) * len(shape)
    return pl.BlockSpec(tuple(shape), lambda *_args, _z=zeros: _z)


# ------------------------------------------------------------- kernel 1: self-attn + LN1
def _mha_ln_kernel(x_ref, wi_ref, bi_ref, wo_ref, bo_ref, g_ref, b_ref, o_ref, *,
                   num_heads):
    x = x_ref[...]                                            # [N, C] f32
    n, c = x.shape
    hd = c // num_heads
    qkv = jnp.dot(x.astype(jnp.bfloat16), wi_ref[...],
                  preferred_element_type=jnp.float32) + bi_ref[...]   # [N, 3C]
    q = qkv[:, :c] * (1.0 / float(hd) ** 0.5)
    k = qkv[:, c:2 * c]
    v = qkv[:, 2 * c:]
    heads = []
    for h in range(num_heads):                                # static unroll over heads
        sl = slice(h * hd, (h + 1) * hd)
        s = lax.dot_general(q[:, sl], k[:, sl], (((1,), (1,)), ((), ())),
                            preferred_element_type=jnp.float32)        # [N, N]
        s = s - jnp.max(s, axis=-1, keepdims=True)
        p = jnp.exp(s)
        p = p / jnp.sum(p, axis=-1, keepdims=True)
        heads.append(jnp.dot(p, v[:, sl], preferred_element_type=jnp.float32))
    attn = jnp.concatenate(heads, axis=-1)                    # [N, C]
    proj = jnp.dot(attn.astype(jnp.bfloat16), wo_ref[...],
                   preferred_element_type=jnp.float32) + bo_ref[...]
    y = _layer_norm(x + proj, g_ref[...], b_ref[...])
    o_ref[...] = y.astype(o_ref.dtype)


def mha_ln_block(x, p, num_heads):
    n, c = x.shape
    args = (x, p['attn_w_in'], p['attn_b_in'], p['attn_w_out'], p['attn_b_out'],
            p['ln1_g'], p['ln1_b'])
    kern = functools.partial(_mha_ln_kernel, num_heads=num_heads)
    # N (proposals on this view) is small; attention needs all rows at once -> single step.
    return pl.pallas_call(
        kern,
        out_shape=jax.ShapeDtypeStruct((n, c), jnp.float32),
        grid=(1,),
        in_specs=[_resident(a.shape) for a in args],
        out_specs=_resident((n, c)),
        compiler_params=pltpu.CompilerParams(dimension_semantics=("arbitrary",)),
    )(*args)


# --------------------------------------------- kernel 2: dynamic_layer (big tiled matmul)
def _linear_cols_kernel(x_ref, w_ref, b_ref, o_ref):
    acc = jnp.dot(x_ref[...].astype(jnp.bfloat16), w_ref[...],
                  preferred_element_type=jnp.float32)
    o_ref[...] = (acc + b_ref[...]).astype(o_ref.dtype)


def dynamic_layer(y1, w, b, tn=4096):
    n, c = y1.shape
    m = w.shape[1]
    assert m % tn == 0
    flops = 2 * n * c * m
    bytes_acc = (y1.size * 4 + w.size * 2 + b.size * 4 + n * m * 4)
    return pl.pallas_call(
        _linear_cols_kernel,
        out_shape=jax.ShapeDtypeStruct((n, m), jnp.float32),
        grid=(m // tn,),
        in_specs=[pl.BlockSpec((n, c), lambda j: (0, 0)),      # activations resident
                  pl.BlockSpec((c, tn), lambda j: (0, j)),     # weight column tiles
                  pl.BlockSpec((1, tn), lambda j: (0, j))],    # bias column tiles
        out_specs=pl.BlockSpec((n, tn), lambda j: (0, j)),     # lane-dense output tiles
        compiler_params=pltpu.CompilerParams(dimension_semantics=("parallel",)),
        cost_estimate=pl.CostEstimate(flops=int(flops), transcendentals=0,
                                      bytes_accessed=int(bytes_acc)),
    )(y1, w, b)


# ---------------------------------------- kernel 3: DynamicConv bmm chain (grid over boxes)
def _dyconv_bmm_kernel(roi_ref, p1_ref, p2_ref, g1_ref, b1_ref, g2_ref, b2_ref, o_ref):
    roi = roi_ref[0]                                          # [49, C]
    p1 = p1_ref[0].astype(jnp.bfloat16)                       # [C, C]
    p2 = p2_ref[0].astype(jnp.bfloat16)
    f = jnp.dot(roi.astype(jnp.bfloat16), p1, preferred_element_type=jnp.float32)
    f = jnp.maximum(_layer_norm(f, g1_ref[...], b1_ref[...]), 0.0)
    f = jnp.dot(f.astype(jnp.bfloat16), p2, preferred_element_type=jnp.float32)
    f = jnp.maximum(_layer_norm(f, g2_ref[...], b2_ref[...]), 0.0)
    o_ref[0] = f.astype(o_ref.dtype)


def dyconv_bmm(roi, p1, p2, g1, b1, g2, b2):
    n, r, c = roi.shape
    return pl.pallas_call(
        _dyconv_bmm_kernel,
        out_shape=jax.ShapeDtypeStruct((n, r, c), jnp.float32),
        grid=(n,),
        in_specs=[pl.BlockSpec((1, r, c), lambda i: (i, 0, 0)),
                  pl.BlockSpec((1, c, c), lambda i: (i, 0, 0)),
                  pl.BlockSpec((1, c, c), lambda i: (i, 0, 0)),
                  _resident(g1.shape), _resident(b1.shape),
                  _resident(g2.shape), _resident(b2.shape)],
        out_specs=pl.BlockSpec((1, r, c), lambda i: (i, 0, 0)),
        compiler_params=pltpu.CompilerParams(dimension_semantics=("parallel",)),
    )(roi, p1, p2, g1, b1, g2, b2)


# ------------------------------ kernel 4: out_layer + LN + residuals + FFN (all fused)
def _dc_out_ffn_kernel(f2_ref, w3_ref, b3_ref, n3g_ref, n3b_ref,
                       y1_ref, q2g_ref, q2b_ref,
                       w1_ref, b1_ref, w2_ref, b2_ref,
                       q3g_ref, q3b_ref, o_ref):
    f2 = f2_ref[...].astype(jnp.bfloat16)                     # [N, 49*C]
    dc = jnp.dot(f2, w3_ref[...], preferred_element_type=jnp.float32) + b3_ref[...]
    dc = jnp.maximum(_layer_norm(dc, n3g_ref[...], n3b_ref[...]), 0.0)
    q = _layer_norm(y1_ref[...] + dc, q2g_ref[...], q2b_ref[...])       # block norm2
    h = jnp.dot(q.astype(jnp.bfloat16), w1_ref[...],
                preferred_element_type=jnp.float32) + b1_ref[...]
    h = jax.nn.gelu(h)                                        # tanh approximation
    h = jnp.dot(h.astype(jnp.bfloat16), w2_ref[...],
                preferred_element_type=jnp.float32) + b2_ref[...]
    o_ref[...] = _layer_norm(q + h, q3g_ref[...], q3b_ref[...]).astype(o_ref.dtype)


def dc_out_ffn(f2_flat, y1, p):
    n, kdim = f2_flat.shape
    c = y1.shape[1]
    args = (f2_flat, p['dc_w_out'], p['dc_b_out'], p['dc_n3_g'], p['dc_n3_b'],
            y1, p['norm2_g'], p['norm2_b'],
            p['ffn_w1'], p['ffn_b1'], p['ffn_w2'], p['ffn_b2'],
            p['norm3_g'], p['norm3_b'])
    flops = 2 * n * kdim * c + 4 * n * c * p['ffn_w1'].shape[1]
    bytes_acc = sum(int(a.size) * a.dtype.itemsize for a in args) + n * c * 4
    return pl.pallas_call(
        _dc_out_ffn_kernel,
        out_shape=jax.ShapeDtypeStruct((n, c), jnp.float32),
        grid=(1,),
        in_specs=[_resident(a.shape) for a in args],
        out_specs=_resident((n, c)),
        compiler_params=pltpu.CompilerParams(dimension_semantics=("arbitrary",)),
        cost_estimate=pl.CostEstimate(flops=int(flops),
                                      transcendentals=int(n * p['ffn_w1'].shape[1]),
                                      bytes_accessed=int(bytes_acc)),
    )(*args)


# ------------------------------------------------------------------- per-view pipeline
def per_view_forward(params, x, roi, num_heads):
    """x: [Nv, C] gathered proposal features; roi: [Nv, 49, C] pooled ROI features."""
    n, c = x.shape
    y1 = mha_ln_block(x, params, num_heads)                           # [Nv, C]
    dyn = dynamic_layer(y1, params['dyn_w'], params['dyn_b'])         # [Nv, 2*C*C]
    npar = c * c
    p1 = dyn[:, :npar].reshape(n, c, c)                               # [Nv, C, C]
    p2 = dyn[:, npar:].reshape(n, c, c)
    f2 = dyconv_bmm(roi, p1, p2,
                    params['dc_n1_g'], params['dc_n1_b'],
                    params['dc_n2_g'], params['dc_n2_b'])             # [Nv, 49, C]
    f2_flat = f2.reshape(n, roi.shape[1] * c)                         # flatten(1)
    return dc_out_ffn(f2_flat, y1, params)                            # [Nv, C]


per_view_jit = jax.jit(per_view_forward, static_argnums=(3,))


# --------------------------------------------------------------------------- parameters
def init_params(key, c=HIDDEN, pooler_res=POOLER_RES, ffn_dim=FFN_DIM):
    def nrm(k, shape, scale=0.02, dtype=jnp.float32):
        return (scale * jax.random.normal(k, shape, jnp.float32)).astype(dtype)

    ks = jax.random.split(key, 12)
    ones = lambda s: jnp.ones(s, jnp.float32)
    zeros = lambda s: jnp.zeros(s, jnp.float32)
    return {
        # dyconv_pre_self_attn (MultiheadAttention) + block norm1
        'attn_w_in': nrm(ks[0], (c, 3 * c), dtype=jnp.bfloat16),
        'attn_b_in': nrm(ks[1], (1, 3 * c)),
        'attn_w_out': nrm(ks[2], (c, c), dtype=jnp.bfloat16),
        'attn_b_out': nrm(ks[3], (1, c)),
        'ln1_g': ones((1, c)), 'ln1_b': zeros((1, c)),
        # DynamicConv
        'dyn_w': nrm(ks[4], (c, 2 * c * c), dtype=jnp.bfloat16),
        'dyn_b': nrm(ks[5], (1, 2 * c * c)),
        'dc_n1_g': ones((1, c)), 'dc_n1_b': zeros((1, c)),
        'dc_n2_g': ones((1, c)), 'dc_n2_b': zeros((1, c)),
        'dc_w_out': nrm(ks[6], (pooler_res * pooler_res * c, c), dtype=jnp.bfloat16),
        'dc_b_out': nrm(ks[7], (1, c)),
        'dc_n3_g': ones((1, c)), 'dc_n3_b': zeros((1, c)),
        # block norm2 / FFN / norm3
        'norm2_g': ones((1, c)), 'norm2_b': zeros((1, c)),
        'ffn_w1': nrm(ks[8], (c, ffn_dim), dtype=jnp.bfloat16),
        'ffn_b1': nrm(ks[9], (1, ffn_dim)),
        'ffn_w2': nrm(ks[10], (ffn_dim, c), dtype=jnp.bfloat16),
        'ffn_b2': nrm(ks[11], (1, c)),
        'norm3_g': ones((1, c)), 'norm3_b': zeros((1, c)),
    }


# --------------------------------------------------------------------------------- demo
if __name__ == "__main__":
    key = jax.random.PRNGKey(0)
    B, C, P, V = 2, HIDDEN, 16, 2          # batch, hidden_channel, num_proposals, num_views
    N_ON = 12                              # proposals projecting onto each view (synthetic)

    key, kq, kroi, kmask, kp = jax.random.split(key, 5)
    params = init_params(kp)
    query_feat = jax.random.normal(kq, (B, C, P), jnp.float32)
    # Synthetic "pooled" ROI features for every (sample, view, proposal).
    # TODO(synk): in the real module these come from ROIAlignV2 over lidar->image boxes.
    roi_all = jax.random.normal(kroi, (B, V, P, POOLER_RES * POOLER_RES, C), jnp.float32)

    # Synthetic on-image proposal sets per (sample, view).
    # TODO(synk): the real mask comes from bbox decode + 3D->image projection (img_metas).
    idx_sets = {}
    for b in range(B):
        for v in range(V):
            kk = jax.random.fold_in(kmask, b * V + v)
            perm = np.asarray(jax.random.permutation(kk, P))
            idx_sets[(b, v)] = np.sort(perm[:N_ON])

    query_out = jnp.zeros_like(query_feat)                 # query_feat = zeros_like(...)
    view_mask = jnp.full((B, P), -1.0, jnp.float32)        # on_the_image_mask init

    for b in range(B):
        for v in range(V):
            idx = idx_sets[(b, v)]
            if idx.size <= 1:                              # mimic "on_the_image.sum() <= 1"
                continue
            idx_j = jnp.asarray(idx)
            x = jnp.take(query_feat[b], idx_j, axis=1).T            # [Nv, C]
            roi = jnp.take(roi_all[b, v], idx_j, axis=0)            # [Nv, 49, C]
            upd = per_view_jit(params, x, roi, NUM_HEADS)           # [Nv, C]
            query_out = query_out.at[b].set(query_out[b].at[:, idx_j].set(upd.T))
            view_mask = view_mask.at[b].set(view_mask[b].at[idx_j].set(float(v)))

    query_out = jax.block_until_ready(query_out)
    view_mask = jax.block_until_ready(view_mask)

    assert query_out.shape == (B, C, P)
    assert view_mask.shape == (B, P)
    assert bool(jnp.all(jnp.isfinite(query_out)))

    print("KERNEL_OK")
</pallas_src>

<mosaic_0001>
module attributes {stable_mosaic.version = 11 : i64} {
  func.func @_mha_ln_kernel(%arg0: i32, %arg1: memref<12x128xf32, #tpu.memory_space<vmem>>, %arg2: memref<128x384xbf16, #tpu.memory_space<vmem>>, %arg3: memref<1x384xf32, #tpu.memory_space<vmem>>, %arg4: memref<128x128xbf16, #tpu.memory_space<vmem>>, %arg5: memref<1x128xf32, #tpu.memory_space<vmem>>, %arg6: memref<1x128xf32, #tpu.memory_space<vmem>>, %arg7: memref<1x128xf32, #tpu.memory_space<vmem>>, %arg8: memref<12x128xf32, #tpu.memory_space<vmem>>) attributes {dimension_semantics = [#tpu.dimension_semantics<arbitrary>], iteration_bounds = array<i64: 1>, scalar_prefetch = 0 : i64, scratch_operands = 0 : i64, tpu.core_type = #tpu.core_type<tc>, window_params = [{pipeline_mode = #tpu.pipeline_mode<synchronous>, transform_indices = @transform_0, window_bounds = array<i64: 12, 128>}, {pipeline_mode = #tpu.pipeline_mode<synchronous>, transform_indices = @transform_1, window_bounds = array<i64: 128, 384>}, {pipeline_mode = #tpu.pipeline_mode<synchronous>, transform_indices = @transform_2, window_bounds = array<i64: 1, 384>}, {pipeline_mode = #tpu.pipeline_mode<synchronous>, transform_indices = @transform_3, window_bounds = array<i64: 128, 128>}, {pipeline_mode = #tpu.pipeline_mode<synchronous>, transform_indices = @transform_4, window_bounds = array<i64: 1, 128>}, {pipeline_mode = #tpu.pipeline_mode<synchronous>, transform_indices = @transform_5, window_bounds = array<i64: 1, 128>}, {pipeline_mode = #tpu.pipeline_mode<synchronous>, transform_indices = @transform_6, window_bounds = array<i64: 1, 128>}, {pipeline_mode = #tpu.pipeline_mode<synchronous>, transform_indices = @transform_7, window_bounds = array<i64: 12, 128>}]} {
    %c0 = arith.constant 0 : index
    %c0_0 = arith.constant 0 : index
    %0 = vector.load %arg1[%c0, %c0_0] : memref<12x128xf32, #tpu.memory_space<vmem>>, vector<12x128xf32>
    %1 = arith.truncf %0 : vector<12x128xf32> to vector<12x128xbf16>
    %c0_1 = arith.constant 0 : index
    %c0_2 = arith.constant 0 : index
    %2 = vector.load %arg2[%c0_1, %c0_2] : memref<128x384xbf16, #tpu.memory_space<vmem>>, vector<128x384xbf16>
    %cst = arith.constant dense<0.000000e+00> : vector<12x384xf32>
    %3 = tpu.matmul %1, %2, %cst {dimension_numbers = #tpu.dot_dimension_numbers<[1], [0], [0], [1], [0, 0, 1, 1], [], []>} : vector<12x128xbf16>, vector<128x384xbf16>, vector<12x384xf32> -> vector<12x384xf32>
    %c0_3 = arith.constant 0 : index
    %c0_4 = arith.constant 0 : index
    %4 = vector.load %arg3[%c0_3, %c0_4] : memref<1x384xf32, #tpu.memory_space<vmem>>, vector<1x384xf32>
    %5 = vector.broadcast %4 : vector<1x384xf32> to vector<12x384xf32>
    %6 = arith.addf %3, %5 : vector<12x384xf32>
    %7 = vector.extract_strided_slice %6 {offsets = [0, 0], sizes = [12, 128], strides = [1, 1]} : vector<12x384xf32> to vector<12x128xf32>
    %cst_5 = arith.constant 0.176776692 : f32
    %8 = vector.broadcast %cst_5 : f32 to vector<12x128xf32>
    %9 = arith.mulf %7, %8 : vector<12x128xf32>
    %10 = vector.extract_strided_slice %6 {offsets = [0, 128], sizes = [12, 128], strides = [1, 1]} : vector<12x384xf32> to vector<12x128xf32>
    %11 = vector.extract_strided_slice %6 {offsets = [0, 256], sizes = [12, 128], strides = [1, 1]} : vector<12x384xf32> to vector<12x128xf32>
    %12 = vector.extract_strided_slice %9 {offsets = [0, 0], sizes = [12, 32], strides = [1, 1]} : vector<12x128xf32> to vector<12x32xf32>
    %13 = vector.extract_strided_slice %10 {offsets = [0, 0], sizes = [12, 32], strides = [1, 1]} : vector<12x128xf32> to vector<12x32xf32>
    %cst_6 = arith.constant dense<0.000000e+00> : vector<12x12xf32>
    %14 = tpu.matmul %12, %13, %cst_6 {dimension_numbers = #tpu.dot_dimension_numbers<[1], [1], [0], [0], [0, 0, 1, 0], [], []>} : vector<12x32xf32>, vector<12x32xf32>, vector<12x12xf32> -> vector<12x12xf32>
    %cst_7 = arith.constant dense<0xFF800000> : vector<12xf32>
    %15 = vector.multi_reduction <maximumf>, %14, %cst_7 [1] : vector<12x12xf32> to vector<12xf32>
    %16 = vector.shape_cast %15 : vector<12xf32> to vector<12x1xf32>
    %17 = vector.broadcast %16 : vector<12x1xf32> to vector<12x12xf32>
    %18 = arith.subf %14, %17 : vector<12x12xf32>
    %19 = math.exp %18 : vector<12x12xf32>
    %cst_8 = arith.constant dense<0.000000e+00> : vector<12xf32>
    %20 = vector.multi_reduction <add>, %19, %cst_8 [1] : vector<12x12xf32> to vector<12xf32>
    %21 = vector.shape_cast %20 : vector<12xf32> to vector<12x1xf32>
    %22 = vector.broadcast %21 : vector<12x1xf32> to vector<12x12xf32>
    %23 = arith.divf %19, %22 : vector<12x12xf32>
    %24 = vector.extract_strided_slice %11 {offsets = [0, 0], sizes = [12, 32], strides = [1, 1]} : vector<12x128xf32> to vector<12x32xf32>
    %cst_9 = arith.constant dense<0.000000e+00> : vector<12x32xf32>
    %25 = tpu.matmul %23, %24, %cst_9 {dimension_numbers = #tpu.dot_dimension_numbers<[1], [0], [0], [1], [0, 0, 1, 1], [], []>} : vector<12x12xf32>, vector<12x32xf32>, vector<12x32xf32> -> vector<12x32xf32>
    %26 = vector.extract_strided_slice %9 {offsets = [0, 32], sizes = [12, 32], strides = [1, 1]} : vector<12x128xf32> to vector<12x32xf32>
    %27 = vector.extract_strided_slice %10 {offsets = [0, 32], sizes = [12, 32], strides = [1, 1]} : vector<12x128xf32> to vector<12x32xf32>
    %cst_10 = arith.constant dense<0.000000e+00> : vector<12x12xf32>
    %28 = tpu.matmul %26, %27, %cst_10 {dimension_numbers = #tpu.dot_dimension_numbers<[1], [1], [0], [0], [0, 0, 1, 0], [], []>} : vector<12x32xf32>, vector<12x32xf32>, vector<12x12xf32> -> vector<12x12xf32>
    %cst_11 = arith.constant dense<0xFF800000> : vector<12xf32>
    %29 = vector.multi_reduction <maximumf>, %28, %cst_11 [1] : vector<12x12xf32> to vector<12xf32>
    %30 = vector.shape_cast %29 : vector<12xf32> to vector<12x1xf32>
    %31 = vector.broadcast %30 : vector<12x1xf32> to vector<12x12xf32>
    %32 = arith.subf %28, %31 : vector<12x12xf32>
    %33 = math.exp %32 : vector<12x12xf32>
    %cst_12 = arith.constant dense<0.000000e+00> : vector<12xf32>
    %34 = vector.multi_reduction <add>, %33, %cst_12 [1] : vector<12x12xf32> to vector<12xf32>
    %35 = vector.shape_cast %34 : vector<12xf32> to vector<12x1xf32>
    %36 = vector.broadcast %35 : vector<12x1xf32> to vector<12x12xf32>
    %37 = arith.divf %33, %36 : vector<12x12xf32>
    %38 = vector.extract_strided_slice %11 {offsets = [0, 32], sizes = [12, 32], strides = [1, 1]} : vector<12x128xf32> to vector<12x32xf32>
    %cst_13 = arith.constant dense<0.000000e+00> : vector<12x32xf32>
    %39 = tpu.matmul %37, %38, %cst_13 {dimension_numbers = #tpu.dot_dimension_numbers<[1], [0], [0], [1], [0, 0, 1, 1], [], []>} : vector<12x12xf32>, vector<12x32xf32>, vector<12x32xf32> -> vector<12x32xf32>
    %40 = vector.extract_strided_slice %9 {offsets = [0, 64], sizes = [12, 32], strides = [1, 1]} : vector<12x128xf32> to vector<12x32xf32>
    %41 = vector.extract_strided_slice %10 {offsets = [0, 64], sizes = [12, 32], strides = [1, 1]} : vector<12x128xf32> to vector<12x32xf32>
    %cst_14 = arith.constant dense<0.000000e+00> : vector<12x12xf32>
    %42 = tpu.matmul %40, %41, %cst_14 {dimension_numbers = #tpu.dot_dimension_numbers<[1], [1], [0], [0], [0, 0, 1, 0], [], []>} : vector<12x32xf32>, vector<12x32xf32>, vector<12x12xf32> -> vector<12x12xf32>
    %cst_15 = arith.constant dense<0xFF800000> : vector<12xf32>
    %43 = vector.multi_reduction <maximumf>, %42, %cst_15 [1] : vector<12x12xf32> to vector<12xf32>
    %44 = vector.shape_cast %43 : vector<12xf32> to vector<12x1xf32>
    %45 = vector.broadcast %44 : vector<12x1xf32> to vector<12x12xf32>
    %46 = arith.subf %42, %45 : vector<12x12xf32>
    %47 = math.exp %46 : vector<12x12xf32>
    %cst_16 = arith.constant dense<0.000000e+00> : vector<12xf32>
    %48 = vector.multi_reduction <add>, %47, %cst_16 [1] : vector<12x12xf32> to vector<12xf32>
    %49 = vector.shape_cast %48 : vector<12xf32> to vector<12x1xf32>
    %50 = vector.broadcast %49 : vector<12x1xf32> to vector<12x12xf32>
    %51 = arith.divf %47, %50 : vector<12x12xf32>
    %52 = vector.extract_strided_slice %11 {offsets = [0, 64], sizes = [12, 32], strides = [1, 1]} : vector<12x128xf32> to vector<12x32xf32>
    %cst_17 = arith.constant dense<0.000000e+00> : vector<12x32xf32>
    %53 = tpu.matmul %51, %52, %cst_17 {dimension_numbers = #tpu.dot_dimension_numbers<[1], [0], [0], [1], [0, 0, 1, 1], [], []>} : vector<12x12xf32>, vector<12x32xf32>, vector<12x32xf32> -> vector<12x32xf32>
    %54 = vector.extract_strided_slice %9 {offsets = [0, 96], sizes = [12, 32], strides = [1, 1]} : vector<12x128xf32> to vector<12x32xf32>
    %55 = vector.extract_strided_slice %10 {offsets = [0, 96], sizes = [12, 32], strides = [1, 1]} : vector<12x128xf32> to vector<12x32xf32>
    %cst_18 = arith.constant dense<0.000000e+00> : vector<12x12xf32>
    %56 = tpu.matmul %54, %55, %cst_18 {dimension_numbers = #tpu.dot_dimension_numbers<[1], [1], [0], [0], [0, 0, 1, 0], [], []>} : vector<12x32xf32>, vector<12x32xf32>, vector<12x12xf32> -> vector<12x12xf32>
    %cst_19 = arith.constant dense<0xFF800000> : vector<12xf32>
    %57 = vector.multi_reduction <maximumf>, %56, %cst_19 [1] : vector<12x12xf32> to vector<12xf32>
    %58 = vector.shape_cast %57 : vector<12xf32> to vector<12x1xf32>
    %59 = vector.broadcast %58 : vector<12x1xf32> to vector<12x12xf32>
    %60 = arith.subf %56, %59 : vector<12x12xf32>
    %61 = math.exp %60 : vector<12x12xf32>
    %cst_20 = arith.constant dense<0.000000e+00> : vector<12xf32>
    %62 = vector.multi_reduction <add>, %61, %cst_20 [1] : vector<12x12xf32> to vector<12xf32>
    %63 = vector.shape_cast %62 : vector<12xf32> to vector<12x1xf32>
    %64 = vector.broadcast %63 : vector<12x1xf32> to vector<12x12xf32>
    %65 = arith.divf %61, %64 : vector<12x12xf32>
    %66 = vector.extract_strided_slice %11 {offsets = [0, 96], sizes = [12, 32], strides = [1, 1]} : vector<12x128xf32> to vector<12x32xf32>
    %cst_21 = arith.constant dense<0.000000e+00> : vector<12x32xf32>
    %67 = tpu.matmul %65, %66, %cst_21 {dimension_numbers = #tpu.dot_dimension_numbers<[1], [0], [0], [1], [0, 0, 1, 1], [], []>} : vector<12x12xf32>, vector<12x32xf32>, vector<12x32xf32> -> vector<12x32xf32>
    %68 = tpu.concatenate %25, %39, %53, %67 in 1 : vector<12x32xf32>, vector<12x32xf32>, vector<12x32xf32>, vector<12x32xf32> -> vector<12x128xf32>
    %69 = arith.truncf %68 : vector<12x128xf32> to vector<12x128xbf16>
    %c0_22 = arith.constant 0 : index
    %c0_23 = arith.constant 0 : index
    %70 = vector.load %arg4[%c0_22, %c0_23] : memref<128x128xbf16, #tpu.memory_space<vmem>>, vector<128x128xbf16>
    %cst_24 = arith.constant dense<0.000000e+00> : vector<12x128xf32>
    %71 = tpu.matmul %69, %70, %cst_24 {dimension_numbers = #tpu.dot_dimension_numbers<[1], [0], [0], [1], [0, 0, 1, 1], [], []>} : vector<12x128xbf16>, vector<128x128xbf16>, vector<12x128xf32> -> vector<12x128xf32>
    %c0_25 = arith.constant 0 : index
    %c0_26 = arith.constant 0 : index
    %72 = vector.load %arg5[%c0_25, %c0_26] : memref<1x128xf32, #tpu.memory_space<vmem>>, vector<1x128xf32>
    %73 = vector.broadcast %72 : vector<1x128xf32> to vector<12x128xf32>
    %74 = arith.addf %71, %73 : vector<12x128xf32>
    %75 = arith.addf %0, %74 : vector<12x128xf32>
    %c0_27 = arith.constant 0 : index
    %c0_28 = arith.constant 0 : index
    %76 = vector.load %arg6[%c0_27, %c0_28] : memref<1x128xf32, #tpu.memory_space<vmem>>, vector<1x128xf32>
    %c0_29 = arith.constant 0 : index
    %c0_30 = arith.constant 0 : index
    %77 = vector.load %arg7[%c0_29, %c0_30] : memref<1x128xf32, #tpu.memory_space<vmem>>, vector<1x128xf32>
    %cst_31 = arith.constant dense<0.000000e+00> : vector<12xf32>
    %78 = vector.multi_reduction <add>, %75, %cst_31 [1] : vector<12x128xf32> to vector<12xf32>
    %79 = vector.shape_cast %78 : vector<12xf32> to vector<12x1xf32>
    %cst_32 = arith.constant 1.280000e+02 : f32
    %80 = vector.broadcast %cst_32 : f32 to vector<12x1xf32>
    %81 = arith.divf %79, %80 : vector<12x1xf32>
    %82 = vector.broadcast %81 : vector<12x1xf32> to vector<12x128xf32>
    %83 = arith.subf %75, %82 : vector<12x128xf32>
    %84 = arith.mulf %83, %83 : vector<12x128xf32>
    %cst_33 = arith.constant dense<0.000000e+00> : vector<12xf32>
    %85 = vector.multi_reduction <add>, %84, %cst_33 [1] : vector<12x128xf32> to vector<12xf32>
    %86 = vector.shape_cast %85 : vector<12xf32> to vector<12x1xf32>
    %cst_34 = arith.constant 1.280000e+02 : f32
    %87 = vector.broadcast %cst_34 : f32 to vector<12x1xf32>
    %88 = arith.divf %86, %87 : vector<12x1xf32>
    %cst_35 = arith.constant 9.99999974E-6 : f32
    %89 = vector.broadcast %cst_35 : f32 to vector<12x1xf32>
    %90 = arith.addf %88, %89 : vector<12x1xf32>
    %91 = math.rsqrt %90 : vector<12x1xf32>
    %92 = vector.broadcast %91 : vector<12x1xf32> to vector<12x128xf32>
    %93 = arith.mulf %83, %92 : vector<12x128xf32>
    %94 = vector.broadcast %76 : vector<1x128xf32> to vector<12x128xf32>
    %95 = arith.mulf %93, %94 : vector<12x128xf32>
    %96 = vector.broadcast %77 : vector<1x128xf32> to vector<12x128xf32>
    %97 = arith.addf %95, %96 : vector<12x128xf32>
    %c0_36 = arith.constant 0 : index
    %c0_37 = arith.constant 0 : index
    %98 = vector.load %arg8[%c0_36, %c0_37] : memref<12x128xf32, #tpu.memory_space<vmem>>, vector<12x128xf32>
    tpu.vector_store %arg8[%c0_36, %c0_37], %97 {strides = array<i32>} : memref<12x128xf32, #tpu.memory_space<vmem>>, vector<12x128xf32>,
    return
  }
  func.func @transform_0(%arg0: i32) -> (i32, i32) {
    %c0_i32 = arith.constant 0 : i32
    %c0_i32_0 = arith.constant 0 : i32
    %c0_i32_1 = arith.constant 0 : i32
    return %c0_i32, %c0_i32_0 : i32, i32
  }
  func.func @transform_1(%arg0: i32) -> (i32, i32) {
    %c0_i32 = arith.constant 0 : i32
    %c0_i32_0 = arith.constant 0 : i32
    %c0_i32_1 = arith.constant 0 : i32
    return %c0_i32, %c0_i32_0 : i32, i32
  }
  func.func @transform_2(%arg0: i32) -> (i32, i32) {
    %c0_i32 = arith.constant 0 : i32
    %c0_i32_0 = arith.constant 0 : i32
    %c0_i32_1 = arith.constant 0 : i32
    return %c0_i32, %c0_i32_0 : i32, i32
  }
  func.func @transform_3(%arg0: i32) -> (i32, i32) {
    %c0_i32 = arith.constant 0 : i32
    %c0_i32_0 = arith.constant 0 : i32
    %c0_i32_1 = arith.constant 0 : i32
    return %c0_i32, %c0_i32_0 : i32, i32
  }
  func.func @transform_4(%arg0: i32) -> (i32, i32) {
    %c0_i32 = arith.constant 0 : i32
    %c0_i32_0 = arith.constant 0 : i32
    %c0_i32_1 = arith.constant 0 : i32
    return %c0_i32, %c0_i32_0 : i32, i32
  }
  func.func @transform_5(%arg0: i32) -> (i32, i32) {
    %c0_i32 = arith.constant 0 : i32
    %c0_i32_0 = arith.constant 0 : i32
    %c0_i32_1 = arith.constant 0 : i32
    return %c0_i32, %c0_i32_0 : i32, i32
  }
  func.func @transform_6(%arg0: i32) -> (i32, i32) {
    %c0_i32 = arith.constant 0 : i32
    %c0_i32_0 = arith.constant 0 : i32
    %c0_i32_1 = arith.constant 0 : i32
    return %c0_i32, %c0_i32_0 : i32, i32
  }
  func.func @transform_7(%arg0: i32) -> (i32, i32) {
    %c0_i32 = arith.constant 0 : i32
    %c0_i32_0 = arith.constant 0 : i32
    %c0_i32_1 = arith.constant 0 : i32
    return %c0_i32, %c0_i32_0 : i32, i32
  }
}

module attributes {stable_mosaic.version = 11 : i64} {
  func.func @_linear_cols_kernel(%arg0: i32, %arg1: memref<12x128xf32, #tpu.memory_space<vmem>>, %arg2: memref<128x4096xbf16, #tpu.memory_space<vmem>>, %arg3: memref<1x4096xf32, #tpu.memory_space<vmem>>, %arg4: memref<12x4096xf32, #tpu.memory_space<vmem>>) attributes {dimension_semantics = [#tpu.dimension_semantics<parallel>], iteration_bounds = array<i64: 8>, scalar_prefetch = 0 : i64, scratch_operands = 0 : i64, tpu.core_type = #tpu.core_type<tc>, window_params = [{pipeline_mode = #tpu.pipeline_mode<synchronous>, transform_indices = @transform_0, window_bounds = array<i64: 12, 128>}, {transform_indices = @transform_1, window_bounds = array<i64: 128, 4096>}, {transform_indices = @transform_2, window_bounds = array<i64: 1, 4096>}, {transform_indices = @transform_3, window_bounds = array<i64: 12, 4096>}]} {
    %c0 = arith.constant 0 : index
    %c0_0 = arith.constant 0 : index
    %0 = vector.load %arg1[%c0, %c0_0] : memref<12x128xf32, #tpu.memory_space<vmem>>, vector<12x128xf32>
    %1 = arith.truncf %0 : vector<12x128xf32> to vector<12x128xbf16>
    %c0_1 = arith.constant 0 : index
    %c0_2 = arith.constant 0 : index
    %2 = vector.load %arg2[%c0_1, %c0_2] : memref<128x4096xbf16, #tpu.memory_space<vmem>>, vector<128x4096xbf16>
    %cst = arith.constant dense<0.000000e+00> : vector<12x4096xf32>
    %3 = tpu.matmul %1, %2, %cst {dimension_numbers = #tpu.dot_dimension_numbers<[1], [0], [0], [1], [0, 0, 1, 1], [], []>} : vector<12x128xbf16>, vector<128x4096xbf16>, vector<12x4096xf32> -> vector<12x4096xf32>
    %c0_3 = arith.constant 0 : index
    %c0_4 = arith.constant 0 : index
    %4 = vector.load %arg3[%c0_3, %c0_4] : memref<1x4096xf32, #tpu.memory_space<vmem>>, vector<1x4096xf32>
    %5 = vector.broadcast %4 : vector<1x4096xf32> to vector<12x4096xf32>
    %6 = arith.addf %3, %5 : vector<12x4096xf32>
    %c0_5 = arith.constant 0 : index
    %c0_6 = arith.constant 0 : index
    %7 = vector.load %arg4[%c0_5, %c0_6] : memref<12x4096xf32, #tpu.memory_space<vmem>>, vector<12x4096xf32>
    tpu.vector_store %arg4[%c0_5, %c0_6], %6 {strides = array<i32>} : memref<12x4096xf32, #tpu.memory_space<vmem>>, vector<12x4096xf32>,
    return
  }
  func.func @transform_0(%arg0: i32) -> (i32, i32) {
    %c0_i32 = arith.constant 0 : i32
    %c0_i32_0 = arith.constant 0 : i32
    %c0_i32_1 = arith.constant 0 : i32
    return %c0_i32, %c0_i32_0 : i32, i32
  }
  func.func @transform_1(%arg0: i32) -> (i32, i32) {
    %c0_i32 = arith.constant 0 : i32
    %c0_i32_0 = arith.constant 0 : i32
    return %c0_i32, %arg0 : i32, i32
  }
  func.func @transform_2(%arg0: i32) -> (i32, i32) {
    %c0_i32 = arith.constant 0 : i32
    %c0_i32_0 = arith.constant 0 : i32
    return %c0_i32, %arg0 : i32, i32
  }
  func.func @transform_3(%arg0: i32) -> (i32, i32) {
    %c0_i32 = arith.constant 0 : i32
    %c0_i32_0 = arith.constant 0 : i32
    return %c0_i32, %arg0 : i32, i32
  }
}

module attributes {stable_mosaic.version = 11 : i64} {
  func.func @_dyconv_bmm_kernel(%arg0: i32, %arg1: memref<1x49x128xf32, #tpu.memory_space<vmem>>, %arg2: memref<1x128x128xf32, #tpu.memory_space<vmem>>, %arg3: memref<1x128x128xf32, #tpu.memory_space<vmem>>, %arg4: memref<1x128xf32, #tpu.memory_space<vmem>>, %arg5: memref<1x128xf32, #tpu.memory_space<vmem>>, %arg6: memref<1x128xf32, #tpu.memory_space<vmem>>, %arg7: memref<1x128xf32, #tpu.memory_space<vmem>>, %arg8: memref<1x49x128xf32, #tpu.memory_space<vmem>>) attributes {dimension_semantics = [#tpu.dimension_semantics<parallel>], iteration_bounds = array<i64: 12>, scalar_prefetch = 0 : i64, scratch_operands = 0 : i64, tpu.core_type = #tpu.core_type<tc>, window_params = [{transform_indices = @transform_0, window_bounds = array<i64: 1, 49, 128>}, {transform_indices = @transform_1, window_bounds = array<i64: 1, 128, 128>}, {transform_indices = @transform_2, window_bounds = array<i64: 1, 128, 128>}, {pipeline_mode = #tpu.pipeline_mode<synchronous>, transform_indices = @transform_3, window_bounds = array<i64: 1, 128>}, {pipeline_mode = #tpu.pipeline_mode<synchronous>, transform_indices = @transform_4, window_bounds = array<i64: 1, 128>}, {pipeline_mode = #tpu.pipeline_mode<synchronous>, transform_indices = @transform_5, window_bounds = array<i64: 1, 128>}, {pipeline_mode = #tpu.pipeline_mode<synchronous>, transform_indices = @transform_6, window_bounds = array<i64: 1, 128>}, {transform_indices = @transform_7, window_bounds = array<i64: 1, 49, 128>}]} {
    %c0 = arith.constant 0 : index
    %c0_0 = arith.constant 0 : index
    %c0_1 = arith.constant 0 : index
    %0 = vector.load %arg1[%c0, %c0_0, %c0_1] : memref<1x49x128xf32, #tpu.memory_space<vmem>>, vector<1x49x128xf32>
    %1 = vector.shape_cast %0 : vector<1x49x128xf32> to vector<49x128xf32>
    %c0_2 = arith.constant 0 : index
    %c0_3 = arith.constant 0 : index
    %c0_4 = arith.constant 0 : index
    %2 = vector.load %arg2[%c0_2, %c0_3, %c0_4] : memref<1x128x128xf32, #tpu.memory_space<vmem>>, vector<1x128x128xf32>
    %3 = vector.shape_cast %2 : vector<1x128x128xf32> to vector<128x128xf32>
    %4 = arith.truncf %3 : vector<128x128xf32> to vector<128x128xbf16>
    %c0_5 = arith.constant 0 : index
    %c0_6 = arith.constant 0 : index
    %c0_7 = arith.constant 0 : index
    %5 = vector.load %arg3[%c0_5, %c0_6, %c0_7] : memref<1x128x128xf32, #tpu.memory_space<vmem>>, vector<1x128x128xf32>
    %6 = vector.shape_cast %5 : vector<1x128x128xf32> to vector<128x128xf32>
    %7 = arith.truncf %6 : vector<128x128xf32> to vector<128x128xbf16>
    %8 = arith.truncf %1 : vector<49x128xf32> to vector<49x128xbf16>
    %cst = arith.constant dense<0.000000e+00> : vector<49x128xf32>
    %9 = tpu.matmul %8, %4, %cst {dimension_numbers = #tpu.dot_dimension_numbers<[1], [0], [0], [1], [0, 0, 1, 1], [], []>} : vector<49x128xbf16>, vector<128x128xbf16>, vector<49x128xf32> -> vector<49x128xf32>
    %c0_8 = arith.constant 0 : index
    %c0_9 = arith.constant 0 : index
    %10 = vector.load %arg4[%c0_8, %c0_9] : memref<1x128xf32, #tpu.memory_space<vmem>>, vector<1x128xf32>
    %c0_10 = arith.constant 0 : index
    %c0_11 = arith.constant 0 : index
    %11 = vector.load %arg5[%c0_10, %c0_11] : memref<1x128xf32, #tpu.memory_space<vmem>>, vector<1x128xf32>
    %cst_12 = arith.constant dense<0.000000e+00> : vector<49xf32>
    %12 = vector.multi_reduction <add>, %9, %cst_12 [1] : vector<49x128xf32> to vector<49xf32>
    %13 = vector.shape_cast %12 : vector<49xf32> to vector<49x1xf32>
    %cst_13 = arith.constant 1.280000e+02 : f32
    %14 = vector.broadcast %cst_13 : f32 to vector<49x1xf32>
    %15 = arith.divf %13, %14 : vector<49x1xf32>
    %16 = vector.broadcast %15 : vector<49x1xf32> to vector<49x128xf32>
    %17 = arith.subf %9, %16 : vector<49x128xf32>
    %18 = arith.mulf %17, %17 : vector<49x128xf32>
    %cst_14 = arith.constant dense<0.000000e+00> : vector<49xf32>
    %19 = vector.multi_reduction <add>, %18, %cst_14 [1] : vector<49x128xf32> to vector<49xf32>
    %20 = vector.shape_cast %19 : vector<49xf32> to vector<49x1xf32>
    %cst_15 = arith.constant 1.280000e+02 : f32
    %21 = vector.broadcast %cst_15 : f32 to vector<49x1xf32>
    %22 = arith.divf %20, %21 : vector<49x1xf32>
    %cst_16 = arith.constant 9.99999974E-6 : f32
    %23 = vector.broadcast %cst_16 : f32 to vector<49x1xf32>
    %24 = arith.addf %22, %23 : vector<49x1xf32>
    %25 = math.rsqrt %24 : vector<49x1xf32>
    %26 = vector.broadcast %25 : vector<49x1xf32> to vector<49x128xf32>
    %27 = arith.mulf %17, %26 : vector<49x128xf32>
    %28 = vector.broadcast %10 : vector<1x128xf32> to vector<49x128xf32>
    %29 = arith.mulf %27, %28 : vector<49x128xf32>
    %30 = vector.broadcast %11 : vector<1x128xf32> to vector<49x128xf32>
    %31 = arith.addf %29, %30 : vector<49x128xf32>
    %cst_17 = arith.constant 0.000000e+00 : f32
    %32 = vector.broadcast %cst_17 : f32 to vector<49x128xf32>
    %33 = arith.maximumf %31, %32 : vector<49x128xf32>
    %34 = arith.truncf %33 : vector<49x128xf32> to vector<49x128xbf16>
    %cst_18 = arith.constant dense<0.000000e+00> : vector<49x128xf32>
    %35 = tpu.matmul %34, %7, %cst_18 {dimension_numbers = #tpu.dot_dimension_numbers<[1], [0], [0], [1], [0, 0, 1, 1], [], []>} : vector<49x128xbf16>, vector<128x128xbf16>, vector<49x128xf32> -> vector<49x128xf32>
    %c0_19 = arith.constant 0 : index
    %c0_20 = arith.constant 0 : index
    %36 = vector.load %arg6[%c0_19, %c0_20] : memref<1x128xf32, #tpu.memory_space<vmem>>, vector<1x128xf32>
    %c0_21 = arith.constant 0 : index
    %c0_22 = arith.constant 0 : index
    %37 = vector.load %arg7[%c0_21, %c0_22] : memref<1x128xf32, #tpu.memory_space<vmem>>, vector<1x128xf32>
    %cst_23 = arith.constant dense<0.000000e+00> : vector<49xf32>
    %38 = vector.multi_reduction <add>, %35, %cst_23 [1] : vector<49x128xf32> to vector<49xf32>
    %39 = vector.shape_cast %38 : vector<49xf32> to vector<49x1xf32>
    %cst_24 = arith.constant 1.280000e+02 : f32
    %40 = vector.broadcast %cst_24 : f32 to vector<49x1xf32>
    %41 = arith.divf %39, %40 : vector<49x1xf32>
    %42 = vector.broadcast %41 : vector<49x1xf32> to vector<49x128xf32>
    %43 = arith.subf %35, %42 : vector<49x128xf32>
    %44 = arith.mulf %43, %43 : vector<49x128xf32>
    %cst_25 = arith.constant dense<0.000000e+00> : vector<49xf32>
    %45 = vector.multi_reduction <add>, %44, %cst_25 [1] : vector<49x128xf32> to vector<49xf32>
    %46 = vector.shape_cast %45 : vector<49xf32> to vector<49x1xf32>
    %cst_26 = arith.constant 1.280000e+02 : f32
    %47 = vector.broadcast %cst_26 : f32 to vector<49x1xf32>
    %48 = arith.divf %46, %47 : vector<49x1xf32>
    %cst_27 = arith.constant 9.99999974E-6 : f32
    %49 = vector.broadcast %cst_27 : f32 to vector<49x1xf32>
    %50 = arith.addf %48, %49 : vector<49x1xf32>
    %51 = math.rsqrt %50 : vector<49x1xf32>
    %52 = vector.broadcast %51 : vector<49x1xf32> to vector<49x128xf32>
    %53 = arith.mulf %43, %52 : vector<49x128xf32>
    %54 = vector.broadcast %36 : vector<1x128xf32> to vector<49x128xf32>
    %55 = arith.mulf %53, %54 : vector<49x128xf32>
    %56 = vector.broadcast %37 : vector<1x128xf32> to vector<49x128xf32>
    %57 = arith.addf %55, %56 : vector<49x128xf32>
    %cst_28 = arith.constant 0.000000e+00 : f32
    %58 = vector.broadcast %cst_28 : f32 to vector<49x128xf32>
    %59 = arith.maximumf %57, %58 : vector<49x128xf32>
    %c0_29 = arith.constant 0 : index
    %c0_30 = arith.constant 0 : index
    %c0_31 = arith.constant 0 : index
    %60 = vector.load %arg8[%c0_29, %c0_30, %c0_31] : memref<1x49x128xf32, #tpu.memory_space<vmem>>, vector<1x49x128xf32>
    %61 = vector.shape_cast %60 : vector<1x49x128xf32> to vector<49x128xf32>
    %62 = vector.shape_cast %59 : vector<49x128xf32> to vector<1x49x128xf32>
    tpu.vector_store %arg8[%c0_29, %c0_30, %c0_31], %62 {strides = array<i32>} : memref<1x49x128xf32, #tpu.memory_space<vmem>>, vector<1x49x128xf32>,
    return
  }
  func.func @transform_0(%arg0: i32) -> (i32, i32, i32) {
    %c0_i32 = arith.constant 0 : i32
    %c0_i32_0 = arith.constant 0 : i32
    %c0_i32_1 = arith.constant 0 : i32
    return %arg0, %c0_i32, %c0_i32_0 : i32, i32, i32
  }
  func.func @transform_1(%arg0: i32) -> (i32, i32, i32) {
    %c0_i32 = arith.constant 0 : i32
    %c0_i32_0 = arith.constant 0 : i32
    %c0_i32_1 = arith.constant 0 : i32
    return %arg0, %c0_i32, %c0_i32_0 : i32, i32, i32
  }
  func.func @transform_2(%arg0: i32) -> (i32, i32, i32) {
    %c0_i32 = arith.constant 0 : i32
    %c0_i32_0 = arith.constant 0 : i32
    %c0_i32_1 = arith.constant 0 : i32
    return %arg0, %c0_i32, %c0_i32_0 : i32, i32, i32
  }
  func.func @transform_3(%arg0: i32) -> (i32, i32) {
    %c0_i32 = arith.constant 0 : i32
    %c0_i32_0 = arith.constant 0 : i32
    %c0_i32_1 = arith.constant 0 : i32
    return %c0_i32, %c0_i32_0 : i32, i32
  }
  func.func @transform_4(%arg0: i32) -> (i32, i32) {
    %c0_i32 = arith.constant 0 : i32
    %c0_i32_0 = arith.constant 0 : i32
    %c0_i32_1 = arith.constant 0 : i32
    return %c0_i32, %c0_i32_0 : i32, i32
  }
  func.func @transform_5(%arg0: i32) -> (i32, i32) {
    %c0_i32 = arith.constant 0 : i32
    %c0_i32_0 = arith.constant 0 : i32
    %c0_i32_1 = arith.constant 0 : i32
    return %c0_i32, %c0_i32_0 : i32, i32
  }
  func.func @transform_6(%arg0: i32) -> (i32, i32) {
    %c0_i32 = arith.constant 0 : i32
    %c0_i32_0 = arith.constant 0 : i32
    %c0_i32_1 = arith.constant 0 : i32
    return %c0_i32, %c0_i32_0 : i32, i32
  }
  func.func @transform_7(%arg0: i32) -> (i32, i32, i32) {
    %c0_i32 = arith.constant 0 : i32
    %c0_i32_0 = arith.constant 0 : i32
    %c0_i32_1 = arith.constant 0 : i32
    return %arg0, %c0_i32, %c0_i32_0 : i32, i32, i32
  }
}

module attributes {stable_mosaic.version = 11 : i64} {
  func.func @_dc_out_ffn_kernel(%arg0: i32, %arg1: memref<12x6272xf32, #tpu.memory_space<vmem>>, %arg2: memref<6272x128xbf16, #tpu.memory_space<vmem>>, %arg3: memref<1x128xf32, #tpu.memory_space<vmem>>, %arg4: memref<1x128xf32, #tpu.memory_space<vmem>>, %arg5: memref<1x128xf32, #tpu.memory_space<vmem>>, %arg6: memref<12x128xf32, #tpu.memory_space<vmem>>, %arg7: memref<1x128xf32, #tpu.memory_space<vmem>>, %arg8: memref<1x128xf32, #tpu.memory_space<vmem>>, %arg9: memref<128x512xbf16, #tpu.memory_space<vmem>>, %arg10: memref<1x512xf32, #tpu.memory_space<vmem>>, %arg11: memref<512x128xbf16, #tpu.memory_space<vmem>>, %arg12: memref<1x128xf32, #tpu.memory_space<vmem>>, %arg13: memref<1x128xf32, #tpu.memory_space<vmem>>, %arg14: memref<1x128xf32, #tpu.memory_space<vmem>>, %arg15: memref<12x128xf32, #tpu.memory_space<vmem>>) attributes {dimension_semantics = [#tpu.dimension_semantics<arbitrary>], iteration_bounds = array<i64: 1>, scalar_prefetch = 0 : i64, scratch_operands = 0 : i64, tpu.core_type = #tpu.core_type<tc>, window_params = [{pipeline_mode = #tpu.pipeline_mode<synchronous>, transform_indices = @transform_0, window_bounds = array<i64: 12, 6272>}, {pipeline_mode = #tpu.pipeline_mode<synchronous>, transform_indices = @transform_1, window_bounds = array<i64: 6272, 128>}, {pipeline_mode = #tpu.pipeline_mode<synchronous>, transform_indices = @transform_2, window_bounds = array<i64: 1, 128>}, {pipeline_mode = #tpu.pipeline_mode<synchronous>, transform_indices = @transform_3, window_bounds = array<i64: 1, 128>}, {pipeline_mode = #tpu.pipeline_mode<synchronous>, transform_indices = @transform_4, window_bounds = array<i64: 1, 128>}, {pipeline_mode = #tpu.pipeline_mode<synchronous>, transform_indices = @transform_5, window_bounds = array<i64: 12, 128>}, {pipeline_mode = #tpu.pipeline_mode<synchronous>, transform_indices = @transform_6, window_bounds = array<i64: 1, 128>}, {pipeline_mode = #tpu.pipeline_mode<synchronous>, transform_indices = @transform_7, window_bounds = array<i64: 1, 128>}, {pipeline_mode = #tpu.pipeline_mode<synchronous>, transform_indices = @transform_8, window_bounds = array<i64: 128, 512>}, {pipeline_mode = #tpu.pipeline_mode<synchronous>, transform_indices = @transform_9, window_bounds = array<i64: 1, 512>}, {pipeline_mode = #tpu.pipeline_mode<synchronous>, transform_indices = @transform_10, window_bounds = array<i64: 512, 128>}, {pipeline_mode = #tpu.pipeline_mode<synchronous>, transform_indices = @transform_11, window_bounds = array<i64: 1, 128>}, {pipeline_mode = #tpu.pipeline_mode<synchronous>, transform_indices = @transform_12, window_bounds = array<i64: 1, 128>}, {pipeline_mode = #tpu.pipeline_mode<synchronous>, transform_indices = @transform_13, window_bounds = array<i64: 1, 128>}, {pipeline_mode = #tpu.pipeline_mode<synchronous>, transform_indices = @transform_14, window_bounds = array<i64: 12, 128>}]} {
    %c0 = arith.constant 0 : index
    %c0_0 = arith.constant 0 : index
    %0 = vector.load %arg1[%c0, %c0_0] : memref<12x6272xf32, #tpu.memory_space<vmem>>, vector<12x6272xf32>
    %1 = arith.truncf %0 : vector<12x6272xf32> to vector<12x6272xbf16>
    %c0_1 = arith.constant 0 : index
    %c0_2 = arith.constant 0 : index
    %2 = vector.load %arg2[%c0_1, %c0_2] : memref<6272x128xbf16, #tpu.memory_space<vmem>>, vector<6272x128xbf16>
    %cst = arith.constant dense<0.000000e+00> : vector<12x128xf32>
    %3 = tpu.matmul %1, %2, %cst {dimension_numbers = #tpu.dot_dimension_numbers<[1], [0], [0], [1], [0, 0, 1, 1], [], []>} : vector<12x6272xbf16>, vector<6272x128xbf16>, vector<12x128xf32> -> vector<12x128xf32>
    %c0_3 = arith.constant 0 : index
    %c0_4 = arith.constant 0 : index
    %4 = vector.load %arg3[%c0_3, %c0_4] : memref<1x128xf32, #tpu.memory_space<vmem>>, vector<1x128xf32>
    %5 = vector.broadcast %4 : vector<1x128xf32> to vector<12x128xf32>
    %6 = arith.addf %3, %5 : vector<12x128xf32>
    %c0_5 = arith.constant 0 : index
    %c0_6 = arith.constant 0 : index
    %7 = vector.load %arg4[%c0_5, %c0_6] : memref<1x128xf32, #tpu.memory_space<vmem>>, vector<1x128xf32>
    %c0_7 = arith.constant 0 : index
    %c0_8 = arith.constant 0 : index
    %8 = vector.load %arg5[%c0_7, %c0_8] : memref<1x128xf32, #tpu.memory_space<vmem>>, vector<1x128xf32>
    %cst_9 = arith.constant dense<0.000000e+00> : vector<12xf32>
    %9 = vector.multi_reduction <add>, %6, %cst_9 [1] : vector<12x128xf32> to vector<12xf32>
    %10 = vector.shape_cast %9 : vector<12xf32> to vector<12x1xf32>
    %cst_10 = arith.constant 1.280000e+02 : f32
    %11 = vector.broadcast %cst_10 : f32 to vector<12x1xf32>
    %12 = arith.divf %10, %11 : vector<12x1xf32>
    %13 = vector.broadcast %12 : vector<12x1xf32> to vector<12x128xf32>
    %14 = arith.subf %6, %13 : vector<12x128xf32>
    %15 = arith.mulf %14, %14 : vector<12x128xf32>
    %cst_11 = arith.constant dense<0.000000e+00> : vector<12xf32>
    %16 = vector.multi_reduction <add>, %15, %cst_11 [1] : vector<12x128xf32> to vector<12xf32>
    %17 = vector.shape_cast %16 : vector<12xf32> to vector<12x1xf32>
    %cst_12 = arith.constant 1.280000e+02 : f32
    %18 = vector.broadcast %cst_12 : f32 to vector<12x1xf32>
    %19 = arith.divf %17, %18 : vector<12x1xf32>
    %cst_13 = arith.constant 9.99999974E-6 : f32
    %20 = vector.broadcast %cst_13 : f32 to vector<12x1xf32>
    %21 = arith.addf %19, %20 : vector<12x1xf32>
    %22 = math.rsqrt %21 : vector<12x1xf32>
    %23 = vector.broadcast %22 : vector<12x1xf32> to vector<12x128xf32>
    %24 = arith.mulf %14, %23 : vector<12x128xf32>
    %25 = vector.broadcast %7 : vector<1x128xf32> to vector<12x128xf32>
    %26 = arith.mulf %24, %25 : vector<12x128xf32>
    %27 = vector.broadcast %8 : vector<1x128xf32> to vector<12x128xf32>
    %28 = arith.addf %26, %27 : vector<12x128xf32>
    %cst_14 = arith.constant 0.000000e+00 : f32
    %29 = vector.broadcast %cst_14 : f32 to vector<12x128xf32>
    %30 = arith.maximumf %28, %29 : vector<12x128xf32>
    %c0_15 = arith.constant 0 : index
    %c0_16 = arith.constant 0 : index
    %31 = vector.load %arg6[%c0_15, %c0_16] : memref<12x128xf32, #tpu.memory_space<vmem>>, vector<12x128xf32>
    %32 = arith.addf %31, %30 : vector<12x128xf32>
    %c0_17 = arith.constant 0 : index
    %c0_18 = arith.constant 0 : index
    %33 = vector.load %arg7[%c0_17, %c0_18] : memref<1x128xf32, #tpu.memory_space<vmem>>, vector<1x128xf32>
    %c0_19 = arith.constant 0 : index
    %c0_20 = arith.constant 0 : index
    %34 = vector.load %arg8[%c0_19, %c0_20] : memref<1x128xf32, #tpu.memory_space<vmem>>, vector<1x128xf32>
    %cst_21 = arith.constant dense<0.000000e+00> : vector<12xf32>
    %35 = vector.multi_reduction <add>, %32, %cst_21 [1] : vector<12x128xf32> to vector<12xf32>
    %36 = vector.shape_cast %35 : vector<12xf32> to vector<12x1xf32>
    %cst_22 = arith.constant 1.280000e+02 : f32
    %37 = vector.broadcast %cst_22 : f32 to vector<12x1xf32>
    %38 = arith.divf %36, %37 : vector<12x1xf32>
    %39 = vector.broadcast %38 : vector<12x1xf32> to vector<12x128xf32>
    %40 = arith.subf %32, %39 : vector<12x128xf32>
    %41 = arith.mulf %40, %40 : vector<12x128xf32>
    %cst_23 = arith.constant dense<0.000000e+00> : vector<12xf32>
    %42 = vector.multi_reduction <add>, %41, %cst_23 [1] : vector<12x128xf32> to vector<12xf32>
    %43 = vector.shape_cast %42 : vector<12xf32> to vector<12x1xf32>
    %cst_24 = arith.constant 1.280000e+02 : f32
    %44 = vector.broadcast %cst_24 : f32 to vector<12x1xf32>
    %45 = arith.divf %43, %44 : vector<12x1xf32>
    %cst_25 = arith.constant 9.99999974E-6 : f32
    %46 = vector.broadcast %cst_25 : f32 to vector<12x1xf32>
    %47 = arith.addf %45, %46 : vector<12x1xf32>
    %48 = math.rsqrt %47 : vector<12x1xf32>
    %49 = vector.broadcast %48 : vector<12x1xf32> to vector<12x128xf32>
    %50 = arith.mulf %40, %49 : vector<12x128xf32>
    %51 = vector.broadcast %33 : vector<1x128xf32> to vector<12x128xf32>
    %52 = arith.mulf %50, %51 : vector<12x128xf32>
    %53 = vector.broadcast %34 : vector<1x128xf32> to vector<12x128xf32>
    %54 = arith.addf %52, %53 : vector<12x128xf32>
    %55 = arith.truncf %54 : vector<12x128xf32> to vector<12x128xbf16>
    %c0_26 = arith.constant 0 : index
    %c0_27 = arith.constant 0 : index
    %56 = vector.load %arg9[%c0_26, %c0_27] : memref<128x512xbf16, #tpu.memory_space<vmem>>, vector<128x512xbf16>
    %cst_28 = arith.constant dense<0.000000e+00> : vector<12x512xf32>
    %57 = tpu.matmul %55, %56, %cst_28 {dimension_numbers = #tpu.dot_dimension_numbers<[1], [0], [0], [1], [0, 0, 1, 1], [], []>} : vector<12x128xbf16>, vector<128x512xbf16>, vector<12x512xf32> -> vector<12x512xf32>
    %c0_29 = arith.constant 0 : index
    %c0_30 = arith.constant 0 : index
    %58 = vector.load %arg10[%c0_29, %c0_30] : memref<1x512xf32, #tpu.memory_space<vmem>>, vector<1x512xf32>
    %59 = vector.broadcast %58 : vector<1x512xf32> to vector<12x512xf32>
    %60 = arith.addf %57, %59 : vector<12x512xf32>
    %61 = arith.mulf %60, %60 : vector<12x512xf32>
    %62 = arith.mulf %60, %61 : vector<12x512xf32>
    %cst_31 = arith.constant 4.471500e-02 : f32
    %63 = vector.broadcast %cst_31 : f32 to vector<12x512xf32>
    %64 = arith.mulf %63, %62 : vector<12x512xf32>
    %65 = arith.addf %60, %64 : vector<12x512xf32>
    %cst_32 = arith.constant 0.797884583 : f32
    %66 = vector.broadcast %cst_32 : f32 to vector<12x512xf32>
    %67 = arith.mulf %66, %65 : vector<12x512xf32>
    %68 = math.tanh %67 : vector<12x512xf32>
    %cst_33 = arith.constant 1.000000e+00 : f32
    %69 = vector.broadcast %cst_33 : f32 to vector<12x512xf32>
    %70 = arith.addf %69, %68 : vector<12x512xf32>
    %cst_34 = arith.constant 5.000000e-01 : f32
    %71 = vector.broadcast %cst_34 : f32 to vector<12x512xf32>
    %72 = arith.mulf %71, %70 : vector<12x512xf32>
    %73 = arith.mulf %60, %72 : vector<12x512xf32>
    %74 = arith.truncf %73 : vector<12x512xf32> to vector<12x512xbf16>
    %c0_35 = arith.constant 0 : index
    %c0_36 = arith.constant 0 : index
    %75 = vector.load %arg11[%c0_35, %c0_36] : memref<512x128xbf16, #tpu.memory_space<vmem>>, vector<512x128xbf16>
    %cst_37 = arith.constant dense<0.000000e+00> : vector<12x128xf32>
    %76 = tpu.matmul %74, %75, %cst_37 {dimension_numbers = #tpu.dot_dimension_numbers<[1], [0], [0], [1], [0, 0, 1, 1], [], []>} : vector<12x512xbf16>, vector<512x128xbf16>, vector<12x128xf32> -> vector<12x128xf32>
    %c0_38 = arith.constant 0 : index
    %c0_39 = arith.constant 0 : index
    %77 = vector.load %arg12[%c0_38, %c0_39] : memref<1x128xf32, #tpu.memory_space<vmem>>, vector<1x128xf32>
    %78 = vector.broadcast %77 : vector<1x128xf32> to vector<12x128xf32>
    %79 = arith.addf %76, %78 : vector<12x128xf32>
    %80 = arith.addf %54, %79 : vector<12x128xf32>
    %c0_40 = arith.constant 0 : index
    %c0_41 = arith.constant 0 : index
    %81 = vector.load %arg13[%c0_40, %c0_41] : memref<1x128xf32, #tpu.memory_space<vmem>>, vector<1x128xf32>
    %c0_42 = arith.constant 0 : index
    %c0_43 = arith.constant 0 : index
    %82 = vector.load %arg14[%c0_42, %c0_43] : memref<1x128xf32, #tpu.memory_space<vmem>>, vector<1x128xf32>
    %cst_44 = arith.constant dense<0.000000e+00> : vector<12xf32>
    %83 = vector.multi_reduction <add>, %80, %cst_44 [1] : vector<12x128xf32> to vector<12xf32>
    %84 = vector.shape_cast %83 : vector<12xf32> to vector<12x1xf32>
    %cst_45 = arith.constant 1.280000e+02 : f32
    %85 = vector.broadcast %cst_45 : f32 to vector<12x1xf32>
    %86 = arith.divf %84, %85 : vector<12x1xf32>
    %87 = vector.broadcast %86 : vector<12x1xf32> to vector<12x128xf32>
    %88 = arith.subf %80, %87 : vector<12x128xf32>
    %89 = arith.mulf %88, %88 : vector<12x128xf32>
    %cst_46 = arith.constant dense<0.000000e+00> : vector<12xf32>
    %90 = vector.multi_reduction <add>, %89, %cst_46 [1] : vector<12x128xf32> to vector<12xf32>
    %91 = vector.shape_cast %90 : vector<12xf32> to vector<12x1xf32>
    %cst_47 = arith.constant 1.280000e+02 : f32
    %92 = vector.broadcast %cst_47 : f32 to vector<12x1xf32>
    %93 = arith.divf %91, %92 : vector<12x1xf32>
    %cst_48 = arith.constant 9.99999974E-6 : f32
    %94 = vector.broadcast %cst_48 : f32 to vector<12x1xf32>
    %95 = arith.addf %93, %94 : vector<12x1xf32>
    %96 = math.rsqrt %95 : vector<12x1xf32>
    %97 = vector.broadcast %96 : vector<12x1xf32> to vector<12x128xf32>
    %98 = arith.mulf %88, %97 : vector<12x128xf32>
    %99 = vector.broadcast %81 : vector<1x128xf32> to vector<12x128xf32>
    %100 = arith.mulf %98, %99 : vector<12x128xf32>
    %101 = vector.broadcast %82 : vector<1x128xf32> to vector<12x128xf32>
    %102 = arith.addf %100, %101 : vector<12x128xf32>
    %c0_49 = arith.constant 0 : index
    %c0_50 = arith.constant 0 : index
    %103 = vector.load %arg15[%c0_49, %c0_50] : memref<12x128xf32, #tpu.memory_space<vmem>>, vector<12x128xf32>
    tpu.vector_store %arg15[%c0_49, %c0_50], %102 {strides = array<i32>} : memref<12x128xf32, #tpu.memory_space<vmem>>, vector<12x128xf32>,
    return
  }
  func.func @transform_0(%arg0: i32) -> (i32, i32) {
    %c0_i32 = arith.constant 0 : i32
    %c0_i32_0 = arith.constant 0 : i32
    %c0_i32_1 = arith.constant 0 : i32
    return %c0_i32, %c0_i32_0 : i32, i32
  }
  func.func @transform_1(%arg0: i32) -> (i32, i32) {
    %c0_i32 = arith.constant 0 : i32
    %c0_i32_0 = arith.constant 0 : i32
    %c0_i32_1 = arith.constant 0 : i32
    return %c0_i32, %c0_i32_0 : i32, i32
  }
  func.func @transform_2(%arg0: i32) -> (i32, i32) {
    %c0_i32 = arith.constant 0 : i32
    %c0_i32_0 = arith.constant 0 : i32
    %c0_i32_1 = arith.constant 0 : i32
    return %c0_i32, %c0_i32_0 : i32, i32
  }
  func.func @transform_3(%arg0: i32) -> (i32, i32) {
    %c0_i32 = arith.constant 0 : i32
    %c0_i32_0 = arith.constant 0 : i32
    %c0_i32_1 = arith.constant 0 : i32
    return %c0_i32, %c0_i32_0 : i32, i32
  }
  func.func @transform_4(%arg0: i32) -> (i32, i32) {
    %c0_i32 = arith.constant 0 : i32
    %c0_i32_0 = arith.constant 0 : i32
    %c0_i32_1 = arith.constant 0 : i32
    return %c0_i32, %c0_i32_0 : i32, i32
  }
  func.func @transform_5(%arg0: i32) -> (i32, i32) {
    %c0_i32 = arith.constant 0 : i32
    %c0_i32_0 = arith.constant 0 : i32
    %c0_i32_1 = arith.constant 0 : i32
    return %c0_i32, %c0_i32_0 : i32, i32
  }
  func.func @transform_6(%arg0: i32) -> (i32, i32) {
    %c0_i32 = arith.constant 0 : i32
    %c0_i32_0 = arith.constant 0 : i32
    %c0_i32_1 = arith.constant 0 : i32
    return %c0_i32, %c0_i32_0 : i32, i32
  }
  func.func @transform_7(%arg0: i32) -> (i32, i32) {
    %c0_i32 = arith.constant 0 : i32
    %c0_i32_0 = arith.constant 0 : i32
    %c0_i32_1 = arith.constant 0 : i32
    return %c0_i32, %c0_i32_0 : i32, i32
  }
  func.func @transform_8(%arg0: i32) -> (i32, i32) {
    %c0_i32 = arith.constant 0 : i32
    %c0_i32_0 = arith.constant 0 : i32
    %c0_i32_1 = arith.constant 0 : i32
    return %c0_i32, %c0_i32_0 : i32, i32
  }
  func.func @transform_9(%arg0: i32) -> (i32, i32) {
    %c0_i32 = arith.constant 0 : i32
    %c0_i32_0 = arith.constant 0 : i32
    %c0_i32_1 = arith.constant 0 : i32
    return %c0_i32, %c0_i32_0 : i32, i32
  }
  func.func @transform_10(%arg0: i32) -> (i32, i32) {
    %c0_i32 = arith.constant 0 : i32
    %c0_i32_0 = arith.constant 0 : i32
    %c0_i32_1 = arith.constant 0 : i32
    return %c0_i32, %c0_i32_0 : i32, i32
  }
  func.func @transform_11(%arg0: i32) -> (i32, i32) {
    %c0_i32 = arith.constant 0 : i32
    %c0_i32_0 = arith.constant 0 : i32
    %c0_i32_1 = arith.constant 0 : i32
    return %c0_i32, %c0_i32_0 : i32, i32
  }
  func.func @transform_12(%arg0: i32) -> (i32, i32) {
    %c0_i32 = arith.constant 0 : i32
    %c0_i32_0 = arith.constant 0 : i32
    %c0_i32_1 = arith.constant 0 : i32
    return %c0_i32, %c0_i32_0 : i32, i32
  }
  func.func @transform_13(%arg0: i32) -> (i32, i32) {
    %c0_i32 = arith.constant 0 : i32
    %c0_i32_0 = arith.constant 0 : i32
    %c0_i32_1 = arith.constant 0 : i32
    return %c0_i32, %c0_i32_0 : i32, i32
  }
  func.func @transform_14(%arg0: i32) -> (i32, i32) {
    %c0_i32 = arith.constant 0 : i32
    %c0_i32_0 = arith.constant 0 : i32
    %c0_i32_1 = arith.constant 0 : i32
    return %c0_i32, %c0_i32_0 : i32, i32
  }
}

</mosaic_0001>

<llo_original>
// kernel: per_view_forward.6
$region0: #{per_view_forward.6}
  #allocation0 [shape = 'u32[]', space=smem, size = 0x4, offset = 0x4, fixed_abs, tag = 'smem constant byte address 0x4 - core index']
  #allocation1 [shape = 'u32[144,128]{1,0:T(1,128)}', space=vmem, size = 0x12000, scoped, tag = 'internal scratch']
  %s0 = inlined_call_operand.vmem [shape: f32[12,49,128], index: 0, kind: input, shape index: {}]
  %s1 = inlined_call_operand.vmem [shape: f32[12,128,128], index: 1, kind: input, shape index: {}]
  %s2 = inlined_call_operand.vmem [shape: f32[12,128,128], index: 2, kind: input, shape index: {}]
  %s3 = inlined_call_operand.vmem [shape: f32[1,128], index: 3, kind: input, shape index: {}]
  %s4 = inlined_call_operand.vmem [shape: f32[1,128], index: 4, kind: input, shape index: {}]
  %s5 = inlined_call_operand.vmem [shape: f32[1,128], index: 5, kind: input, shape index: {}]
  %s6 = inlined_call_operand.vmem [shape: f32[1,128], index: 6, kind: input, shape index: {}]
  %s7 = inlined_call_operand.vmem [shape: f32[12,49,128], index: 7, kind: output, shape index: {}]
  %s8 = sld [smem:[#allocation0]]
  $region61: #{per_view_forward.6} parent=0
    _
  %s10 = ssub.s32 1, %s8
  %s11 = scalar_select 0, %s10, %s8
  loop: start=0, step=1, limit=14
  $region2: #{per_view_forward.6} parent=0 // loop_pre_header
    _
  $region3: #{per_view_forward.6} parent=0 // loop_header
    %s13 = sphi 0, %s17
    %p14 = scmp.ge.s32.totalorder %s13, 14
    %s23 = sphi 0, %s25
    %s26 = sphi 0, %s23
    %s27 = sphi 0, %s26
    %s43 = sphi 0, %s27
    %s49 = sphi 0, %s51
    %s52 = sphi 0, %s49
    %s53 = sphi 0, %s52
    %s69 = sphi 0, %s53
    %s75 = sphi 0, %s77
    %s78 = sphi 0, %s75
    %s79 = sphi 0, %s78
    %s95 = sphi 0, %s79
    %s99 = sphi 0, %s99
    %s101 = sphi 0, %s99
    %s102 = sphi 0, %s101
    %s116 = sphi 0, %s102
    %s120 = sphi 0, %s120
    %s122 = sphi 0, %s120
    %s123 = sphi 0, %s122
    %s137 = sphi 0, %s123
    %s141 = sphi 0, %s141
    %s143 = sphi 0, %s141
    %s144 = sphi 0, %s143
    %s158 = sphi 0, %s144
    %s162 = sphi 0, %s162
    %s164 = sphi 0, %s162
    %s165 = sphi 0, %s164
    %s179 = sphi 0, %s165
    %s185 = sphi 0, %s187
    %s188 = sphi 0, %s185
    %s189 = sphi 0, %s188
    %s205 = sphi 0, %s189
  $region4: #{per_view_forward.6} parent=0 // loop_header_branch
    %16 = sbr.rel (%p14) target = $region8
  $region5: #{per_view_forward.6} parent=0 // loop_body
    %s18 = ssub.s32 %s13, 1
    %s19 = ssub.s32 %s13, 2
    %s20 = sadd.s32 %s13, 1
    %s21 = ssub.s32 %s13, %s20
    %p22 = scmp.eq.s32.totalorder %s21, 0
    %s24 = sadd.s32 %s23, 1
    %s25 = scalar_select %p22, %s23, %s24
    %p28 = pneg %p22
    %p29 = scmp.eq.s32.totalorder %s13, 11
    %p30 = por %p28, %p29
    %p31 = scmp.ne.s32.totalorder %s23, %s26
    %p32 = scmp.eq.s32.totalorder %s13, 0
    %p33 = por %p31, %p32
    %p34 = scmp.ne.s32.totalorder %s23, %s26
    %p35 = scmp.eq.s32.totalorder %s18, 11
    %p36 = por %p34, %p35
    %p37 = scmp.ne.s32.totalorder %s26, %s27
    %p38 = scmp.eq.s32.totalorder %s18, 0
    %p39 = por %p37, %p38
    %p40 = scmp.ne.s32.totalorder %s26, %s27
    %p41 = scmp.eq.s32.totalorder %s19, 11
    %p42 = por %p40, %p41
    %p44 = scmp.ne.s32.totalorder %s27, %s43
    %p45 = scmp.eq.s32.totalorder %s19, 0
    %p46 = por %p44, %p45
    %s47 = ssub.s32 %s13, %s20
    %p48 = scmp.eq.s32.totalorder %s47, 0
    %s50 = sadd.s32 %s49, 1
    %s51 = scalar_select %p48, %s49, %s50
    %p54 = pneg %p48
    %p55 = scmp.eq.s32.totalorder %s13, 11
    %p56 = por %p54, %p55
    %p57 = scmp.ne.s32.totalorder %s49, %s52
    %p58 = scmp.eq.s32.totalorder %s13, 0
    %p59 = por %p57, %p58
    %p60 = scmp.ne.s32.totalorder %s49, %s52
    %p61 = scmp.eq.s32.totalorder %s18, 11
    %p62 = por %p60, %p61
    %p63 = scmp.ne.s32.totalorder %s52, %s53
    %p64 = scmp.eq.s32.totalorder %s18, 0
    %p65 = por %p63, %p64
    %p66 = scmp.ne.s32.totalorder %s52, %s53
    %p67 = scmp.eq.s32.totalorder %s19, 11
    %p68 = por %p66, %p67
    %p70 = scmp.ne.s32.totalorder %s53, %s69
    %p71 = scmp.eq.s32.totalorder %s19, 0
    %p72 = por %p70, %p71
    %s73 = ssub.s32 %s13, %s20
    %p74 = scmp.eq.s32.totalorder %s73, 0
    %s76 = sadd.s32 %s75, 1
    %s77 = scalar_select %p74, %s75, %s76
    %p80 = pneg %p74
    %p81 = scmp.eq.s32.totalorder %s13, 11
    %p82 = por %p80, %p81
    %p83 = scmp.ne.s32.totalorder %s75, %s78
    %p84 = scmp.eq.s32.totalorder %s13, 0
    %p85 = por %p83, %p84
    %p86 = scmp.ne.s32.totalorder %s75, %s78
    %p87 = scmp.eq.s32.totalorder %s18, 11
    %p88 = por %p86, %p87
    %p89 = scmp.ne.s32.totalorder %s78, %s79
    %p90 = scmp.eq.s32.totalorder %s18, 0
    %p91 = por %p89, %p90
    %p92 = scmp.ne.s32.totalorder %s78, %s79
    %p93 = scmp.eq.s32.totalorder %s19, 11
    %p94 = por %p92, %p93
    %p96 = scmp.ne.s32.totalorder %s79, %s95
    %p97 = scmp.eq.s32.totalorder %s19, 0
    %p98 = por %p96, %p97
    %s100 = sadd.s32 %s99, 1
    %p103 = scmp.eq.s32.totalorder %s13, 11
    %p104 = scmp.ne.s32.totalorder %s99, %s101
    %p105 = scmp.eq.s32.totalorder %s13, 0
    %p106 = por %p104, %p105
    %p107 = scmp.ne.s32.totalorder %s99, %s101
    %p108 = scmp.eq.s32.totalorder %s18, 11
    %p109 = por %p107, %p108
    %p110 = scmp.ne.s32.totalorder %s101, %s102
    %p111 = scmp.eq.s32.totalorder %s18, 0
    %p112 = por %p110, %p111
    %p113 = scmp.ne.s32.totalorder %s101, %s102
    %p114 = scmp.eq.s32.totalorder %s19, 11
    %p115 = por %p113, %p114
    %p117 = scmp.ne.s32.totalorder %s102, %s116
    %p118 = scmp.eq.s32.totalorder %s19, 0
    %p119 = por %p117, %p118
    %s121 = sadd.s32 %s120, 1
    %p124 = scmp.eq.s32.totalorder %s13, 11
    %p125 = scmp.ne.s32.totalorder %s120, %s122
    %p126 = scmp.eq.s32.totalorder %s13, 0
    %p127 = por %p125, %p126
    %p128 = scmp.ne.s32.totalorder %s120, %s122
    %p129 = scmp.eq.s32.totalorder %s18, 11
    %p130 = por %p128, %p129
    %p131 = scmp.ne.s32.totalorder %s122, %s123
    %p132 = scmp.eq.s32.totalorder %s18, 0
    %p133 = por %p131, %p132
    %p134 = scmp.ne.s32.totalorder %s122, %s123
    %p135 = scmp.eq.s32.totalorder %s19, 11
    %p136 = por %p134, %p135
    %p138 = scmp.ne.s32.totalorder %s123, %s137
    %p139 = scmp.eq.s32.totalorder %s19, 0
    %p140 = por %p138, %p139
    %s142 = sadd.s32 %s141, 1
    %p145 = scmp.eq.s32.totalorder %s13, 11
    %p146 = scmp.ne.s32.totalorder %s141, %s143
    %p147 = scmp.eq.s32.totalorder %s13, 0
    %p148 = por %p146, %p147
    %p149 = scmp.ne.s32.totalorder %s141, %s143
    %p150 = scmp.eq.s32.totalorder %s18, 11
    %p151 = por %p149, %p150
    %p152 = scmp.ne.s32.totalorder %s143, %s144
    %p153 = scmp.eq.s32.totalorder %s18, 0
    %p154 = por %p152, %p153
    %p155 = scmp.ne.s32.totalorder %s143, %s144
    %p156 = scmp.eq.s32.totalorder %s19, 11
    %p157 = por %p155, %p156
    %p159 = scmp.ne.s32.totalorder %s144, %s158
    %p160 = scmp.eq.s32.totalorder %s19, 0
    %p161 = por %p159, %p160
    %s163 = sadd.s32 %s162, 1
    %p166 = scmp.eq.s32.totalorder %s13, 11
    %p167 = scmp.ne.s32.totalorder %s162, %s164
    %p168 = scmp.eq.s32.totalorder %s13, 0
    %p169 = por %p167, %p168
    %p170 = scmp.ne.s32.totalorder %s162, %s164
    %p171 = scmp.eq.s32.totalorder %s18, 11
    %p172 = por %p170, %p171
    %p173 = scmp.ne.s32.totalorder %s164, %s165
    %p174 = scmp.eq.s32.totalorder %s18, 0
    %p175 = por %p173, %p174
    %p176 = scmp.ne.s32.totalorder %s164, %s165
    %p177 = scmp.eq.s32.totalorder %s19, 11
    %p178 = por %p176, %p177
    %p180 = scmp.ne.s32.totalorder %s165, %s179
    %p181 = scmp.eq.s32.totalorder %s19, 0
    %p182 = por %p180, %p181
    %s183 = ssub.s32 %s13, %s20
    %p184 = scmp.eq.s32.totalorder %s183, 0
    %s186 = sadd.s32 %s185, 1
    %s187 = scalar_select %p184, %s185, %s186
    %p190 = pneg %p184
    %p191 = scmp.eq.s32.totalorder %s13, 11
    %p192 = por %p190, %p191
    %p193 = scmp.ne.s32.totalorder %s185, %s188
    %p194 = scmp.eq.s32.totalorder %s13, 0
    %p195 = por %p193, %p194
    %p196 = scmp.ne.s32.totalorder %s185, %s188
    %p197 = scmp.eq.s32.totalorder %s18, 11
    %p198 = por %p196, %p197
    %p199 = scmp.ne.s32.totalorder %s188, %s189
    %p200 = scmp.eq.s32.totalorder %s18, 0
    %p201 = por %p199, %p200
    %p202 = scmp.ne.s32.totalorder %s188, %s189
    %p203 = scmp.eq.s32.totalorder %s19, 11
    %p204 = por %p202, %p203
    %p206 = scmp.ne.s32.totalorder %s189, %s205
    %p207 = scmp.eq.s32.totalorder %s19, 0
    %p208 = por %p206, %p207
    %p209 = scmp.le.s32.totalorder 1, %s13
    %p210 = scmp.lt.s32.totalorder %s13, 13
    %p211 = pnand %p209, %p210
    %p212 = pneg %p211
    // Predicated region
    $region9: #{per_view_forward.6} parent=5 // pred_check
      _
    $region10: #{per_view_forward.6} parent=5 // pred_check_branch
      %214 = sbr.rel (%p211) target = $region12
    $region11: #{per_view_forward.6} parent=5 // pred_region
      %s215 = ssub.s32 %s13, 1
      // Predicated region
      $region13: #{per_view_forward.6} parent=11 // pred_check
        %p216 = pneg %p112
      $region14: #{per_view_forward.6} parent=11 // pred_check_branch
        %218 = sbr.rel (%p216) target = $region16
      $region15: #{per_view_forward.6} parent=11 // pred_region
        _
      $region16: #{per_view_forward.6} parent=11 // pred_fallthru
        _
      // Predicated region
      $region17: #{per_view_forward.6} parent=11 // pred_check
        %p219 = pneg %p133
      $region18: #{per_view_forward.6} parent=11 // pred_check_branch
        %221 = sbr.rel (%p219) target = $region20
      $region19: #{per_view_forward.6} parent=11 // pred_region
        _
      $region20: #{per_view_forward.6} parent=11 // pred_fallthru
        _
      // Predicated region
      $region21: #{per_view_forward.6} parent=11 // pred_check
        %p222 = pneg %p154
      $region22: #{per_view_forward.6} parent=11 // pred_check_branch
        %224 = sbr.rel (%p222) target = $region24
      $region23: #{per_view_forward.6} parent=11 // pred_region
        _
      $region24: #{per_view_forward.6} parent=11 // pred_fallthru
        _
      // Predicated region
      $region25: #{per_view_forward.6} parent=11 // pred_check
        %p225 = pneg %p175
      $region26: #{per_view_forward.6} parent=11 // pred_check_branch
        %227 = sbr.rel (%p225) target = $region28
      $region27: #{per_view_forward.6} parent=11 // pred_region
        _
      $region28: #{per_view_forward.6} parent=11 // pred_fallthru
        _
    $region12: #{per_view_forward.6} parent=5 // pred_fallthru
      _
    %p228 = scmp.lt.s32.totalorder %s13, 12
    // Predicated region
    $region29: #{per_view_forward.6} parent=5 // pred_check
      %p229 = pneg %p228
    $region30: #{per_view_forward.6} parent=5 // pred_check_branch
      %231 = sbr.rel (%p229) target = $region32
    $region31: #{per_view_forward.6} parent=5 // pred_region
      // Predicated region
      $region33: #{per_view_forward.6} parent=31 // pred_check
        %p232 = pneg %p33
      $region34: #{per_view_forward.6} parent=31 // pred_check_branch
        %234 = sbr.rel (%p232) target = $region36
      $region35: #{per_view_forward.6} parent=31 // pred_region
        %p235 = scmp.lt.s32.totalorder %s13, 11
        %s236 = scalar_select %p235, %s13, 11
        %s237 = smul.addr %s236, 7
        %s238 = smul.addr %s237, 8
        %s239 = scalar_lea.vmem %s0, %s238
      $region36: #{per_view_forward.6} parent=31 // pred_fallthru
        _
      // Predicated region
      $region37: #{per_view_forward.6} parent=31 // pred_check
        %p240 = pneg %p59
      $region38: #{per_view_forward.6} parent=31 // pred_check_branch
        %242 = sbr.rel (%p240) target = $region40
      $region39: #{per_view_forward.6} parent=31 // pred_region
        %p243 = scmp.lt.s32.totalorder %s13, 11
        %s244 = scalar_select %p243, %s13, 11
        %s245 = smul.addr %s244, 16
        %s246 = smul.addr %s245, 8
        %s247 = scalar_lea.vmem %s1, %s246
      $region40: #{per_view_forward.6} parent=31 // pred_fallthru
        _
      // Predicated region
      $region41: #{per_view_forward.6} parent=31 // pred_check
        %p248 = pneg %p85
      $region42: #{per_view_forward.6} parent=31 // pred_check_branch
        %250 = sbr.rel (%p248) target = $region44
      $region43: #{per_view_forward.6} parent=31 // pred_region
        %p251 = scmp.lt.s32.totalorder %s13, 11
        %s252 = scalar_select %p251, %s13, 11
        %s253 = smul.addr %s252, 16
        %s254 = smul.addr %s253, 8
        %s255 = scalar_lea.vmem %s2, %s254
      $region44: #{per_view_forward.6} parent=31 // pred_fallthru
        _
    $region32: #{per_view_forward.6} parent=5 // pred_fallthru
      _
    %p256 = scmp.le.s32.totalorder 1, %s13
    %p257 = scmp.lt.s32.totalorder %s13, 13
    %p258 = pnand %p256, %p257
    %p259 = pneg %p258
    // Predicated region
    $region45: #{per_view_forward.6} parent=5 // pred_check
      _
    $region46: #{per_view_forward.6} parent=5 // pred_check_branch
      %261 = sbr.rel (%p258) target = $region48
    $region47: #{per_view_forward.6} parent=5 // pred_region
      %s262 = ssub.s32 %s13, 1
      %p263 = scmp.lt.s32.totalorder %s18, 11
      %s264 = scalar_select %p263, %s18, 11
      %s265 = smul.addr %s264, 7
      %s266 = smul.addr %s265, 8
      %s267 = scalar_lea.vmem %s0, %s266
      %p268 = pneg %p39
      %p269 = pneg %p36
      %p270 = scmp.lt.s32.totalorder %s18, 11
      %s271 = scalar_select %p270, %s18, 11
      %s272 = smul.addr %s271, 16
      %s273 = smul.addr %s272, 8
      %s274 = scalar_lea.vmem %s1, %s273
      %p275 = pneg %p65
      %p276 = pneg %p62
      %p277 = scmp.lt.s32.totalorder %s18, 11
      %s278 = scalar_select %p277, %s18, 11
      %s279 = smul.addr %s278, 16
      %s280 = smul.addr %s279, 8
      %s281 = scalar_lea.vmem %s2, %s280
      %p282 = pneg %p91
      %p283 = pneg %p88
      %p284 = pneg %p112
      %p285 = pneg %p109
      %p286 = pneg %p133
      %p287 = pneg %p130
      %p288 = pneg %p154
      %p289 = pneg %p151
      %p290 = pneg %p175
      %p291 = pneg %p172
      %p292 = pneg %p201
      %p293 = pneg %p198
      %p294 = scmp.lt.s32.totalorder %s18, 11
      %s295 = scalar_select %p294, %s18, 11
      %s296 = smul.addr %s295, 7
      %s297 = smul.addr %s296, 8
      %s298 = scalar_lea.vmem %s7, %s297
      %p299 = scmp.lt.s32.totalorder %s18, 11
      %s300 = scalar_select %p299, %s18, 11
      %s301 = smul.addr %s300, 7
      %s302 = smul.addr %s301, 8
      %s303 = scalar_lea.vmem %s0, %s302
      %p304 = scmp.lt.s32.totalorder %s18, 11
      %s305 = scalar_select %p304, %s18, 11
      %s306 = smul.addr %s305, 16
      %s307 = smul.addr %s306, 8
      %s308 = scalar_lea.vmem %s1, %s307
      %p309 = scmp.lt.s32.totalorder %s18, 11
      %s310 = scalar_select %p309, %s18, 11
      %s311 = smul.addr %s310, 16
      %s312 = smul.addr %s311, 8
      %s313 = scalar_lea.vmem %s2, %s312
      %p314 = scmp.lt.s32.totalorder %s18, 11
      %s315 = scalar_select %p314, %s18, 11
      %s316 = smul.addr %s315, 7
      %s317 = smul.addr %s316, 8
      %s318 = scalar_lea.vmem %s7, %s317
      %v320 = vld [vmem:[%s303] sm:$0xff]
      %v321 = vld [vmem:[%s303 + $0x8] sm:$0xff]
      %v322 = vld [vmem:[%s303 + $0x10] sm:$0xff]
      %v323 = vld [vmem:[%s303 + $0x18] sm:$0xff]
      %v324 = vld [vmem:[%s303 + $0x20] sm:$0xff]
      %v325 = vld [vmem:[%s303 + $0x28] sm:$0xff]
      %v326 = vld [vmem:[%s303 + $0x30] sm:$0x1]
      %v327 = vld [vmem:[%s308] sm:$0xff]
      %v328 = vld [vmem:[%s308 + $0x8] sm:$0xff]
      %v329 = vld [vmem:[%s308 + $0x10] sm:$0xff]
      %v330 = vld [vmem:[%s308 + $0x18] sm:$0xff]
      %v331 = vld [vmem:[%s308 + $0x20] sm:$0xff]
      %v332 = vld [vmem:[%s308 + $0x28] sm:$0xff]
      %v333 = vld [vmem:[%s308 + $0x30] sm:$0xff]
      %v334 = vld [vmem:[%s308 + $0x38] sm:$0xff]
      %v335 = vld [vmem:[%s308 + $0x40] sm:$0xff]
      %v336 = vld [vmem:[%s308 + $0x48] sm:$0xff]
      %v337 = vld [vmem:[%s308 + $0x50] sm:$0xff]
      %v338 = vld [vmem:[%s308 + $0x58] sm:$0xff]
      %v339 = vld [vmem:[%s308 + $0x60] sm:$0xff]
      %v340 = vld [vmem:[%s308 + $0x68] sm:$0xff]
      %v341 = vld [vmem:[%s308 + $0x70] sm:$0xff]
      %v342 = vld [vmem:[%s308 + $0x78] sm:$0xff]
      %v343 = vpack.c.bf16 %v328, %v327
      %v344 = vpack.c.bf16 %v330, %v329
      %v345 = vpack.c.bf16 %v332, %v331
      %v346 = vpack.c.bf16 %v334, %v333
      %v347 = vpack.c.bf16 %v336, %v335
      %v348 = vpack.c.bf16 %v338, %v337
      %v349 = vpack.c.bf16 %v340, %v339
      %v350 = vpack.c.bf16 %v342, %v341
      %v351 = vld [vmem:[%s313] sm:$0xff]
      %v352 = vld [vmem:[%s313 + $0x8] sm:$0xff]
      %v353 = vld [vmem:[%s313 + $0x10] sm:$0xff]
      %v354 = vld [vmem:[%s313 + $0x18] sm:$0xff]
      %v355 = vld [vmem:[%s313 + $0x20] sm:$0xff]
      %v356 = vld [vmem:[%s313 + $0x28] sm:$0xff]
      %v357 = vld [vmem:[%s313 + $0x30] sm:$0xff]
      %v358 = vld [vmem:[%s313 + $0x38] sm:$0xff]
      %v359 = vld [vmem:[%s313 + $0x40] sm:$0xff]
      %v360 = vld [vmem:[%s313 + $0x48] sm:$0xff]
      %v361 = vld [vmem:[%s313 + $0x50] sm:$0xff]
      %v362 = vld [vmem:[%s313 + $0x58] sm:$0xff]
      %v363 = vld [vmem:[%s313 + $0x60] sm:$0xff]
      %v364 = vld [vmem:[%s313 + $0x68] sm:$0xff]
      %v365 = vld [vmem:[%s313 + $0x70] sm:$0xff]
      %v366 = vld [vmem:[%s313 + $0x78] sm:$0xff]
      %v367 = vpack.c.bf16 %v352, %v351
      %v368 = vpack.c.bf16 %v354, %v353
      %v369 = vpack.c.bf16 %v356, %v355
      %v370 = vpack.c.bf16 %v358, %v357
      %v371 = vpack.c.bf16 %v360, %v359
      %v372 = vpack.c.bf16 %v362, %v361
      %v373 = vpack.c.bf16 %v364, %v363
      %v374 = vpack.c.bf16 %v366, %v365
      %v375 = vpack.c.bf16 %v321, %v320
      %v376 = vpack.c.bf16 %v323, %v322
      %v377 = vpack.c.bf16 %v325, %v324
      %v378 = vpack.c.bf16 %v326, %v326
      %379 = vmatprep.subr.bf16.mxu0 0
      %380 = vmatpush1.bf16.msra.mxu0 %v350
      %381 = vmatprep.subr.bf16.mxu0 0
      %382 = vmatpush1.bf16.msra.mxu0 %v349
      %383 = vmatprep.subr.bf16.mxu0 0
      %384 = vmatpush1.bf16.msra.mxu0 %v348
      %385 = vmatprep.subr.bf16.mxu0 0
      %386 = vmatpush1.bf16.msra.mxu0 %v347
      %387 = vmatprep.subr.bf16.mxu0 0
      %388 = vmatpush1.bf16.msra.mxu0 %v346
      %389 = vmatprep.subr.bf16.mxu0 0
      %390 = vmatpush1.bf16.msra.mxu0 %v345
      %391 = vmatprep.subr.bf16.mxu0 0
      %392 = vmatpush1.bf16.msra.mxu0 %v344
      %393 = vmatprep.subr.bf16.mxu0 0
      %394 = vmatpush1.bf16.msra.mxu0 %v343
      %395 = vmatprep.subr.bf16.mxu0 0
      %396 = vmatpush2.bf16.msra.mxu0 0
      %397 = vmatprep.subr.bf16.mxu0 0
      %398 = vmatpush2.bf16.msra.mxu0 0
      %399 = vmatprep.subr.bf16.mxu0 0
      %400 = vmatpush2.bf16.msra.mxu0 0
      %401 = vmatprep.subr.bf16.mxu0 0
      %402 = vmatpush2.bf16.msra.mxu0 0
      %403 = vmatprep.subr.bf16.mxu0 0
      %404 = vmatpush2.bf16.msra.mxu0 0
      %405 = vmatprep.subr.bf16.mxu0 0
      %406 = vmatpush2.bf16.msra.mxu0 0
      %407 = vmatprep.subr.bf16.mxu0 0
      %408 = vmatpush2.bf16.msra.mxu0 0
      %409 = vmatprep.subr.bf16.mxu0 0
      %410 = vmatpush2.bf16.msra.mxu0 0
      %411 = vmatprep.mubr.bf16.mxu0 0
      %412 = vmatmul.mubr.bf16.gmra.mxu0 %v375
      %v413 = vpop.f32.mrf.mxu0
      %v414 = vadd.f32 0.0, %v413
      %v415 = vpop.f32.mrf.mxu0
      %v416 = vpop.f32.mrf.mxu0
      %v417 = vadd.f32 0.0, %v416
      %v418 = vpop.f32.mrf.mxu0
      %419 = vmatprep.mubr.bf16.mxu0 0
      %420 = vmatmul.mubr.bf16.gmra.mxu0 %v376
      %v421 = vpop.f32.mrf.mxu0
      %v422 = vadd.f32 0.0, %v421
      %v423 = vpop.f32.mrf.mxu0
      %v424 = vpop.f32.mrf.mxu0
      %v425 = vadd.f32 0.0, %v424
      %v426 = vpop.f32.mrf.mxu0
      %427 = vmatprep.mubr.bf16.mxu0 0
      %428 = vmatmul.mubr.bf16.gmra.mxu0 %v377
      %v429 = vpop.f32.mrf.mxu0
      %v430 = vadd.f32 0.0, %v429
      %v431 = vpop.f32.mrf.mxu0
      %v432 = vpop.f32.mrf.mxu0
      %v433 = vadd.f32 0.0, %v432
      %v434 = vpop.f32.mrf.mxu0
      %435 = vmatprep.mubr.bf16.mxu0 0
      %436 = vmatmul.mubr.bf16.gmra.mxu0 %v378
      %v437 = vpop.f32.mrf.mxu0
      %v438 = vadd.f32 0.0, %v437
      %v439 = vpop.f32.mrf.mxu0
      %v440 = vpop.f32.mrf.mxu0
      %v441 = vpop.f32.mrf.mxu0
      %442 = vdwg.mxu0
      %v443 = vld [vmem:[%s3] sm:$0x1]
      %v444 = vld [vmem:[%s4] sm:$0x1]
      %445 = vadd.xlane.f32.xlu0 %v414
      %v446 = vpop.xlane.xlu0 %445
      %447 = vadd.xlane.f32.xlu0 %v417
      %v448 = vpop.xlane.xlu0 %447
      %449 = vadd.xlane.f32.xlu0 %v422
      %v450 = vpop.xlane.xlu0 %449
      %451 = vadd.xlane.f32.xlu0 %v425
      %v452 = vpop.xlane.xlu0 %451
      %453 = vadd.xlane.f32.xlu0 %v430
      %v454 = vpop.xlane.xlu0 %453
      %455 = vadd.xlane.f32.xlu0 %v433
      %v456 = vpop.xlane.xlu0 %455
      %vm457 = vcmask 1040384
      %v458 = vsel %vm457, %v438, 0.0
      %459 = vadd.xlane.f32.xlu0 %v458
      %v460 = vpop.xlane.xlu0 %459
      %v461 = vrcp.pop 128.0
      %v462 = vmul.f32 %v446, %v461
      %v463 = vmul.f32 %v448, %v461
      %v464 = vmul.f32 %v450, %v461
      %v465 = vmul.f32 %v452, %v461
      %v466 = vmul.f32 %v454, %v461
      %v467 = vmul.f32 %v456, %v461
      %v468 = vmul.f32 %v460, %v461
      %v469 = vsub.f32 %v414, %v462
      %v470 = vsub.f32 %v417, %v463
      %v471 = vsub.f32 %v422, %v464
      %v472 = vsub.f32 %v425, %v465
      %v473 = vsub.f32 %v430, %v466
      %v474 = vsub.f32 %v433, %v467
      %v475 = vsub.f32 %v438, %v468
      %v476 = vmul.f32 %v469, %v469
      %v477 = vmul.f32 %v470, %v470
      %v478 = vmul.f32 %v471, %v471
      %v479 = vmul.f32 %v472, %v472
      %v480 = vmul.f32 %v473, %v473
      %v481 = vmul.f32 %v474, %v474
      %v482 = vmul.f32 %v475, %v475
      %483 = vadd.xlane.f32.xlu0 %v476
      %v484 = vpop.xlane.xlu0 %483
      %485 = vadd.xlane.f32.xlu0 %v477
      %v486 = vpop.xlane.xlu0 %485
      %487 = vadd.xlane.f32.xlu0 %v478
      %v488 = vpop.xlane.xlu0 %487
      %489 = vadd.xlane.f32.xlu0 %v479
      %v490 = vpop.xlane.xlu0 %489
      %491 = vadd.xlane.f32.xlu0 %v480
      %v492 = vpop.xlane.xlu0 %491
      %493 = vadd.xlane.f32.xlu0 %v481
      %v494 = vpop.xlane.xlu0 %493
      %v495 = vsel %vm457, %v482, 0.0
      %496 = vadd.xlane.f32.xlu0 %v495
      %v497 = vpop.xlane.xlu0 %496
      %v498 = vmul.f32 %v484, %v461
      %v499 = vmul.f32 %v486, %v461
      %v500 = vmul.f32 %v488, %v461
      %v501 = vmul.f32 %v490, %v461
      %v502 = vmul.f32 %v492, %v461
      %v503 = vmul.f32 %v494, %v461
      %v504 = vmul.f32 %v497, %v461
      %v505 = vadd.f32 %v498, 1e-05
      %v506 = vadd.f32 %v499, 1e-05
      %v507 = vadd.f32 %v500, 1e-05
      %v508 = vadd.f32 %v501, 1e-05
      %v509 = vadd.f32 %v502, 1e-05
      %v510 = vadd.f32 %v503, 1e-05
      %v511 = vadd.f32 %v504, 1e-05
      %v512 = vrsqrt.pop %v505
      %v513 = vrsqrt.pop %v506
      %v514 = vrsqrt.pop %v507
      %v515 = vrsqrt.pop %v508
      %v516 = vrsqrt.pop %v509
      %v517 = vrsqrt.pop %v510
      %v518 = vrsqrt.pop %v511
      %v519 = vmul.f32 %v469, %v512
      %v520 = vmul.f32 %v470, %v513
      %v521 = vmul.f32 %v471, %v514
      %v522 = vmul.f32 %v472, %v515
      %v523 = vmul.f32 %v473, %v516
      %v524 = vmul.f32 %v474, %v517
      %v525 = vmul.f32 %v475, %v518
      %v527 = vlaneseq
      %v528 = vshrl.u32 %v527, 7
      %v529 = vsub.s32 0, %v528
      %v530 = vrot.slane %v443, %v529
      %v532 = vmul.f32 %v519, %v530
      %v533 = vmul.f32 %v520, %v530
      %v534 = vmul.f32 %v521, %v530
      %v535 = vmul.f32 %v522, %v530
      %v536 = vmul.f32 %v523, %v530
      %v537 = vmul.f32 %v524, %v530
      %v538 = vmul.f32 %v525, %v530
      %v540 = vlaneseq
      %v541 = vshrl.u32 %v540, 7
      %v542 = vsub.s32 0, %v541
      %v543 = vrot.slane %v444, %v542
      %v545 = vadd.f32 %v532, %v543
      %v546 = vadd.f32 %v533, %v543
      %v547 = vadd.f32 %v534, %v543
      %v548 = vadd.f32 %v535, %v543
      %v549 = vadd.f32 %v536, %v543
      %v550 = vadd.f32 %v537, %v543
      %v551 = vadd.f32 %v538, %v543
      %v552 = vmax.f32 %v545, 0.0
      %v553 = vmax.f32 %v546, 0.0
      %v554 = vmax.f32 %v547, 0.0
      %v555 = vmax.f32 %v548, 0.0
      %v556 = vmax.f32 %v549, 0.0
      %v557 = vmax.f32 %v550, 0.0
      %v558 = vmax.f32 %v551, 0.0
      %v559 = vpack.c.bf16 %v553, %v552
      %v560 = vpack.c.bf16 %v555, %v554
      %v561 = vpack.c.bf16 %v557, %v556
      %v562 = vpack.c.bf16 %v558, %v558
      %563 = vmatprep.subr.bf16.mxu0 0
      %564 = vmatpush1.bf16.msra.mxu0 %v374
      %565 = vmatprep.subr.bf16.mxu0 0
      %566 = vmatpush1.bf16.msra.mxu0 %v373
      %567 = vmatprep.subr.bf16.mxu0 0
      %568 = vmatpush1.bf16.msra.mxu0 %v372
      %569 = vmatprep.subr.bf16.mxu0 0
      %570 = vmatpush1.bf16.msra.mxu0 %v371
      %571 = vmatprep.subr.bf16.mxu0 0
      %572 = vmatpush1.bf16.msra.mxu0 %v370
      %573 = vmatprep.subr.bf16.mxu0 0
      %574 = vmatpush1.bf16.msra.mxu0 %v369
      %575 = vmatprep.subr.bf16.mxu0 0
      %576 = vmatpush1.bf16.msra.mxu0 %v368
      %577 = vmatprep.subr.bf16.mxu0 0
      %578 = vmatpush1.bf16.msra.mxu0 %v367
      %579 = vmatprep.subr.bf16.mxu0 0
      %580 = vmatpush2.bf16.msra.mxu0 0
      %581 = vmatprep.subr.bf16.mxu0 0
      %582 = vmatpush2.bf16.msra.mxu0 0
      %583 = vmatprep.subr.bf16.mxu0 0
      %584 = vmatpush2.bf16.msra.mxu0 0
      %585 = vmatprep.subr.bf16.mxu0 0
      %586 = vmatpush2.bf16.msra.mxu0 0
      %587 = vmatprep.subr.bf16.mxu0 0
      %588 = vmatpush2.bf16.msra.mxu0 0
      %589 = vmatprep.subr.bf16.mxu0 0
      %590 = vmatpush2.bf16.msra.mxu0 0
      %591 = vmatprep.subr.bf16.mxu0 0
      %592 = vmatpush2.bf16.msra.mxu0 0
      %593 = vmatprep.subr.bf16.mxu0 0
      %594 = vmatpush2.bf16.msra.mxu0 0
      %595 = vmatprep.mubr.bf16.mxu0 0
      %596 = vmatmul.mubr.bf16.gmra.mxu0 %v559
      %v597 = vpop.f32.mrf.mxu0
      %v598 = vadd.f32 0.0, %v597
      %v599 = vpop.f32.mrf.mxu0
      %v600 = vpop.f32.mrf.mxu0
      %v601 = vadd.f32 0.0, %v600
      %v602 = vpop.f32.mrf.mxu0
      %603 = vmatprep.mubr.bf16.mxu0 0
      %604 = vmatmul.mubr.bf16.gmra.mxu0 %v560
      %v605 = vpop.f32.mrf.mxu0
      %v606 = vadd.f32 0.0, %v605
      %v607 = vpop.f32.mrf.mxu0
      %v608 = vpop.f32.mrf.mxu0
      %v609 = vadd.f32 0.0, %v608
      %v610 = vpop.f32.mrf.mxu0
      %611 = vmatprep.mubr.bf16.mxu0 0
      %612 = vmatmul.mubr.bf16.gmra.mxu0 %v561
      %v613 = vpop.f32.mrf.mxu0
      %v614 = vadd.f32 0.0, %v613
      %v615 = vpop.f32.mrf.mxu0
      %v616 = vpop.f32.mrf.mxu0
      %v617 = vadd.f32 0.0, %v616
      %v618 = vpop.f32.mrf.mxu0
      %619 = vmatprep.mubr.bf16.mxu0 0
      %620 = vmatmul.mubr.bf16.gmra.mxu0 %v562
      %v621 = vpop.f32.mrf.mxu0
      %v622 = vadd.f32 0.0, %v621
      %v623 = vpop.f32.mrf.mxu0
      %v624 = vpop.f32.mrf.mxu0
      %v625 = vpop.f32.mrf.mxu0
      %626 = vdwg.mxu0
      %v627 = vld [vmem:[%s5] sm:$0x1]
      %v628 = vld [vmem:[%s6] sm:$0x1]
      %629 = vadd.xlane.f32.xlu0 %v598
      %v630 = vpop.xlane.xlu0 %629
      %631 = vadd.xlane.f32.xlu0 %v601
      %v632 = vpop.xlane.xlu0 %631
      %633 = vadd.xlane.f32.xlu0 %v606
      %v634 = vpop.xlane.xlu0 %633
      %635 = vadd.xlane.f32.xlu0 %v609
      %v636 = vpop.xlane.xlu0 %635
      %637 = vadd.xlane.f32.xlu0 %v614
      %v638 = vpop.xlane.xlu0 %637
      %639 = vadd.xlane.f32.xlu0 %v617
      %v640 = vpop.xlane.xlu0 %639
      %v641 = vsel %vm457, %v622, 0.0
      %642 = vadd.xlane.f32.xlu0 %v641
      %v643 = vpop.xlane.xlu0 %642
      %v644 = vmul.f32 %v630, %v461
      %v645 = vmul.f32 %v632, %v461
      %v646 = vmul.f32 %v634, %v461
      %v647 = vmul.f32 %v636, %v461
      %v648 = vmul.f32 %v638, %v461
      %v649 = vmul.f32 %v640, %v461
      %v650 = vmul.f32 %v643, %v461
      %v651 = vsub.f32 %v598, %v644
      %v652 = vsub.f32 %v601, %v645
      %v653 = vsub.f32 %v606, %v646
      %v654 = vsub.f32 %v609, %v647
      %v655 = vsub.f32 %v614, %v648
      %v656 = vsub.f32 %v617, %v649
      %v657 = vsub.f32 %v622, %v650
      %v658 = vmul.f32 %v651, %v651
      %v659 = vmul.f32 %v652, %v652
      %v660 = vmul.f32 %v653, %v653
      %v661 = vmul.f32 %v654, %v654
      %v662 = vmul.f32 %v655, %v655
      %v663 = vmul.f32 %v656, %v656
      %v664 = vmul.f32 %v657, %v657
      %665 = vadd.xlane.f32.xlu0 %v658
      %v666 = vpop.xlane.xlu0 %665
      %667 = vadd.xlane.f32.xlu0 %v659
      %v668 = vpop.xlane.xlu0 %667
      %669 = vadd.xlane.f32.xlu0 %v660
      %v670 = vpop.xlane.xlu0 %669
      %671 = vadd.xlane.f32.xlu0 %v661
      %v672 = vpop.xlane.xlu0 %671
      %673 = vadd.xlane.f32.xlu0 %v662
      %v674 = vpop.xlane.xlu0 %673
      %675 = vadd.xlane.f32.xlu0 %v663
      %v676 = vpop.xlane.xlu0 %675
      %v677 = vsel %vm457, %v664, 0.0
      %678 = vadd.xlane.f32.xlu0 %v677
      %v679 = vpop.xlane.xlu0 %678
      %v680 = vmul.f32 %v666, %v461
      %v681 = vmul.f32 %v668, %v461
      %v682 = vmul.f32 %v670, %v461
      %v683 = vmul.f32 %v672, %v461
      %v684 = vmul.f32 %v674, %v461
      %v685 = vmul.f32 %v676, %v461
      %v686 = vmul.f32 %v679, %v461
      %v687 = vadd.f32 %v680, 1e-05
      %v688 = vadd.f32 %v681, 1e-05
      %v689 = vadd.f32 %v682, 1e-05
      %v690 = vadd.f32 %v683, 1e-05
      %v691 = vadd.f32 %v684, 1e-05
      %v692 = vadd.f32 %v685, 1e-05
      %v693 = vadd.f32 %v686, 1e-05
      %v694 = vrsqrt.pop %v687
      %v695 = vrsqrt.pop %v688
      %v696 = vrsqrt.pop %v689
      %v697 = vrsqrt.pop %v690
      %v698 = vrsqrt.pop %v691
      %v699 = vrsqrt.pop %v692
      %v700 = vrsqrt.pop %v693
      %v701 = vmul.f32 %v651, %v694
      %v702 = vmul.f32 %v652, %v695
      %v703 = vmul.f32 %v653, %v696
      %v704 = vmul.f32 %v654, %v697
      %v705 = vmul.f32 %v655, %v698
      %v706 = vmul.f32 %v656, %v699
      %v707 = vmul.f32 %v657, %v700
      %v709 = vlaneseq
      %v710 = vshrl.u32 %v709, 7
      %v711 = vsub.s32 0, %v710
      %v712 = vrot.slane %v627, %v711
      %v714 = vmul.f32 %v701, %v712
      %v715 = vmul.f32 %v702, %v712
      %v716 = vmul.f32 %v703, %v712
      %v717 = vmul.f32 %v704, %v712
      %v718 = vmul.f32 %v705, %v712
      %v719 = vmul.f32 %v706, %v712
      %v720 = vmul.f32 %v707, %v712
      %v722 = vlaneseq
      %v723 = vshrl.u32 %v722, 7
      %v724 = vsub.s32 0, %v723
      %v725 = vrot.slane %v628, %v724
      %v727 = vadd.f32 %v714, %v725
      %v728 = vadd.f32 %v715, %v725
      %v729 = vadd.f32 %v716, %v725
      %v730 = vadd.f32 %v717, %v725
      %v731 = vadd.f32 %v718, %v725
      %v732 = vadd.f32 %v719, %v725
      %v733 = vadd.f32 %v720, %v725
      %v734 = vmax.f32 %v727, 0.0
      %v735 = vmax.f32 %v728, 0.0
      %v736 = vmax.f32 %v729, 0.0
      %v737 = vmax.f32 %v730, 0.0
      %v738 = vmax.f32 %v731, 0.0
      %v739 = vmax.f32 %v732, 0.0
      %v740 = vmax.f32 %v733, 0.0
      %741 = vst [vmem:[%s318] sm:$0xff] %v734
      %742 = vst [vmem:[%s318 + $0x8] sm:$0xff] %v735
      %743 = vst [vmem:[%s318 + $0x10] sm:$0xff] %v736
      %744 = vst [vmem:[%s318 + $0x18] sm:$0xff] %v737
      %745 = vst [vmem:[%s318 + $0x20] sm:$0xff] %v738
      %746 = vst [vmem:[%s318 + $0x28] sm:$0xff] %v739
      %747 = vst [vmem:[%s318 + $0x30] sm:$0x1] %v740
      %p748 = scmp.lt.s32.totalorder %s18, 11
      %s749 = scalar_select %p748, %s18, 11
      %s750 = smul.addr %s749, 7
      %s751 = smul.addr %s750, 8
      %s752 = scalar_lea.vmem %s7, %s751
      // Predicated region
      $region49: #{per_view_forward.6} parent=47 // pred_check
        %p753 = pneg %p198
      $region50: #{per_view_forward.6} parent=47 // pred_check_branch
        %755 = sbr.rel (%p753) target = $region52
      $region51: #{per_view_forward.6} parent=47 // pred_region
        _
      $region52: #{per_view_forward.6} parent=47 // pred_fallthru
        _
    $region48: #{per_view_forward.6} parent=5 // pred_fallthru
      _
    %p756 = scmp.le.s32.totalorder 2, %s13
    // Predicated region
    $region53: #{per_view_forward.6} parent=5 // pred_check
      %p757 = pneg %p756
    $region54: #{per_view_forward.6} parent=5 // pred_check_branch
      %759 = sbr.rel (%p757) target = $region56
    $region55: #{per_view_forward.6} parent=5 // pred_region
      %s760 = ssub.s32 %s13, 2
      // Predicated region
      $region57: #{per_view_forward.6} parent=55 // pred_check
        %p761 = pneg %p204
      $region58: #{per_view_forward.6} parent=55 // pred_check_branch
        %763 = sbr.rel (%p761) target = $region60
      $region59: #{per_view_forward.6} parent=55 // pred_region
        %p764 = scmp.lt.s32.totalorder %s19, 11
        %s765 = scalar_select %p764, %s19, 11
        %s766 = smul.addr %s765, 7
        %s767 = smul.addr %s766, 8
        %s768 = scalar_lea.vmem %s7, %s767
      $region60: #{per_view_forward.6} parent=55 // pred_fallthru
        _
    $region56: #{per_view_forward.6} parent=5 // pred_fallthru
      _
  $region6: #{per_view_forward.6} parent=0 // loop_footer
    %s17 = sadd.s32 1, %s13
  $region7: #{per_view_forward.6} parent=0 // loop_footer_branch
    %12 = sbr.rel target = $region3
  $region8: #{per_view_forward.6} parent=0 // loop_exit
    _

// kernel: per_view_forward.4
$region0: #{per_view_forward.4}
  #allocation0 [shape = 'u32[]', space=smem, size = 0x4, offset = 0x4, fixed_abs, tag = 'smem constant byte address 0x4 - core index']
  #allocation1 [shape = 'u32[144,128]{1,0:T(1,128)}', space=vmem, size = 0x12000, scoped, tag = 'internal scratch']
  %s0 = inlined_call_operand.hbm [shape: f32[12,128], index: 0, kind: input, shape index: {}]
  %s1 = inlined_call_operand.hbm [shape: bf16[128,384], index: 1, kind: input, shape index: {}]
  %s2 = inlined_call_operand.hbm [shape: f32[1,384], index: 2, kind: input, shape index: {}]
  %s3 = inlined_call_operand.hbm [shape: bf16[128,128], index: 3, kind: input, shape index: {}]
  %s4 = inlined_call_operand.hbm [shape: f32[1,128], index: 4, kind: input, shape index: {}]
  %s5 = inlined_call_operand.hbm [shape: f32[1,128], index: 5, kind: input, shape index: {}]
  %s6 = inlined_call_operand.hbm [shape: f32[1,128], index: 6, kind: input, shape index: {}]
  %s7 = inlined_call_operand.vmem [shape: f32[12,128], index: 7, kind: output, shape index: {}]
  %s8 = sld [smem:[#allocation0]]
  $region66: #{per_view_forward.4} parent=0
    _
  %s10 = ssub.s32 1, %s8
  %s11 = scalar_select 0, %s10, %s8
  $region1: #{per_view_forward.4} parent=0
    #allocation2 [shape = 'u8[8192]{0}', space=vmem, size = 0x2000, scoped, tag = 'input window, operand 0, single buffered']
    #allocation3 [shape = 's32[1]{0}', space=sflag, size = 0x4, scoped, tag = 'scoped memory for per_view_forward.4']
    #allocation4 [shape = 'u8[98304]{0}', space=vmem, size = 0x18000, scoped, tag = 'input window, operand 1, single buffered']
    #allocation5 [shape = 's32[1]{0}', space=sflag, size = 0x4, scoped, tag = 'scoped memory for per_view_forward.4']
    #allocation6 [shape = 'u8[1536]{0}', space=vmem, size = 0x800, scoped, tag = 'input window, operand 2, single buffered']
    #allocation7 [shape = 'u8[32768]{0}', space=vmem, size = 0x8000, scoped, tag = 'input window, operand 3, single buffered']
    #allocation8 [shape = 's32[1]{0}', space=sflag, size = 0x4, scoped, tag = 'scoped memory for per_view_forward.4']
    #allocation9 [shape = 'u8[512]{0}', space=vmem, size = 0x400, scoped, tag = 'input window, operand 4, single buffered']
    #allocation10 [shape = 'u8[512]{0}', space=vmem, size = 0x400, scoped, tag = 'input window, operand 5, single buffered']
    #allocation11 [shape = 's32[1]{0}', space=sflag, size = 0x4, scoped, tag = 'scoped memory for per_view_forward.4']
    #allocation12 [shape = 'u8[512]{0}', space=vmem, size = 0x400, scoped, tag = 'input window, operand 6, single buffered']
    %12 = vsyncpa [#allocation3], 0
    %13 = vsyncpa [#allocation5], 0
    %14 = vsyncpa [#allocation8], 0
    %15 = vsyncpa [#allocation11], 0
    // Predicated region
    $region2: #{per_view_forward.4} parent=1 // pred_check
      _
    $region3: #{per_view_forward.4} parent=1 // pred_check_branch
      %17 = sbr.rel (0) target = $region5
    $region4: #{per_view_forward.4} parent=1 // pred_region
      %s19 = ssub.s32 256, 256
      %20 = vsyncadd [#allocation3], %s19
      %s21 = sshll.u32 [#allocation2], 4
      %s22 = int_to_ptr.vmem [resolvable:$true] %s21
      %27 = dma.hbm_to_vmem [thread:$0]  %s0, 256, %s22, [#allocation3], 128, 128, 8
    $region5: #{per_view_forward.4} parent=1 // pred_fallthru
      _
    // Predicated region
    $region6: #{per_view_forward.4} parent=1 // pred_check
      _
    $region7: #{per_view_forward.4} parent=1 // pred_check_branch
      %29 = sbr.rel (0) target = $region9
    $region8: #{per_view_forward.4} parent=1 // pred_region
      %s31 = ssub.s32 3072, 3072
      %32 = vsyncadd [#allocation5], %s31
      %s33 = sshll.u32 [#allocation4], 4
      %s34 = int_to_ptr.vmem [resolvable:$true] %s33
      %39 = dma.hbm_to_vmem [thread:$0]  %s1, 3072, %s34, [#allocation5], 192, 192, 12
    $region9: #{per_view_forward.4} parent=1 // pred_fallthru
      _
    // Predicated region
    $region10: #{per_view_forward.4} parent=1 // pred_check
      _
    $region11: #{per_view_forward.4} parent=1 // pred_check_branch
      %41 = sbr.rel (0) target = $region13
    $region12: #{per_view_forward.4} parent=1 // pred_region
      %s43 = ssub.s32 48, 48
      %44 = vsyncadd [#allocation5], %s43
      %s46 = sshll.u32 [#allocation6], 4
      %s47 = int_to_ptr.vmem [resolvable:$true] %s46
      %49 = dma.hbm_to_vmem [thread:$0]  %s2, 48, %s47, [#allocation5]
    $region13: #{per_view_forward.4} parent=1 // pred_fallthru
      _
    // Predicated region
    $region14: #{per_view_forward.4} parent=1 // pred_check
      _
    $region15: #{per_view_forward.4} parent=1 // pred_check_branch
      %51 = sbr.rel (0) target = $region17
    $region16: #{per_view_forward.4} parent=1 // pred_region
      %s53 = ssub.s32 1024, 1024
      %54 = vsyncadd [#allocation8], %s53
      %s55 = sshll.u32 [#allocation7], 4
      %s56 = int_to_ptr.vmem [resolvable:$true] %s55
      %61 = dma.hbm_to_vmem [thread:$0]  %s3, 1024, %s56, [#allocation8], 64, 64, 4
    $region17: #{per_view_forward.4} parent=1 // pred_fallthru
      _
    // Predicated region
    $region18: #{per_view_forward.4} parent=1 // pred_check
      _
    $region19: #{per_view_forward.4} parent=1 // pred_check_branch
      %63 = sbr.rel (0) target = $region21
    $region20: #{per_view_forward.4} parent=1 // pred_region
      %s65 = ssub.s32 16, 16
      %66 = vsyncadd [#allocation8], %s65
      %s68 = sshll.u32 [#allocation9], 4
      %s69 = int_to_ptr.vmem [resolvable:$true] %s68
      %71 = dma.hbm_to_vmem [thread:$0]  %s4, 16, %s69, [#allocation8]
    $region21: #{per_view_forward.4} parent=1 // pred_fallthru
      _
    // Predicated region
    $region22: #{per_view_forward.4} parent=1 // pred_check
      _
    $region23: #{per_view_forward.4} parent=1 // pred_check_branch
      %73 = sbr.rel (0) target = $region25
    $region24: #{per_view_forward.4} parent=1 // pred_region
      %s75 = ssub.s32 16, 16
      %76 = vsyncadd [#allocation11], %s75
      %s78 = sshll.u32 [#allocation10], 4
      %s79 = int_to_ptr.vmem [resolvable:$true] %s78
      %81 = dma.hbm_to_vmem [thread:$0]  %s5, 16, %s79, [#allocation11]
    $region25: #{per_view_forward.4} parent=1 // pred_fallthru
      _
    // Predicated region
    $region26: #{per_view_forward.4} parent=1 // pred_check
      _
    $region27: #{per_view_forward.4} parent=1 // pred_check_branch
      %83 = sbr.rel (0) target = $region29
    $region28: #{per_view_forward.4} parent=1 // pred_region
      %s85 = ssub.s32 16, 16
      %86 = vsyncadd [#allocation11], %s85
      %s88 = sshll.u32 [#allocation12], 4
      %s89 = int_to_ptr.vmem [resolvable:$true] %s88
      %91 = dma.hbm_to_vmem [thread:$0]  %s6, 16, %s89, [#allocation11]
    $region29: #{per_view_forward.4} parent=1 // pred_fallthru
      _
    // Predicated region
    $region30: #{per_view_forward.4} parent=1 // pred_check
      _
    $region31: #{per_view_forward.4} parent=1 // pred_check_branch
      %93 = sbr.rel (0) target = $region33
    $region32: #{per_view_forward.4} parent=1 // pred_region
      %94 = dma.done [#allocation3], 256
    $region33: #{per_view_forward.4} parent=1 // pred_fallthru
      _
    // Predicated region
    $region34: #{per_view_forward.4} parent=1 // pred_check
      _
    $region35: #{per_view_forward.4} parent=1 // pred_check_branch
      %96 = sbr.rel (0) target = $region37
    $region36: #{per_view_forward.4} parent=1 // pred_region
      %97 = dma.done [#allocation5], 3072
    $region37: #{per_view_forward.4} parent=1 // pred_fallthru
      _
    // Predicated region
    $region38: #{per_view_forward.4} parent=1 // pred_check
      _
    $region39: #{per_view_forward.4} parent=1 // pred_check_branch
      %99 = sbr.rel (0) target = $region41
    $region40: #{per_view_forward.4} parent=1 // pred_region
      %100 = dma.done [#allocation5], 48
    $region41: #{per_view_forward.4} parent=1 // pred_fallthru
      _
    // Predicated region
    $region42: #{per_view_forward.4} parent=1 // pred_check
      _
    $region43: #{per_view_forward.4} parent=1 // pred_check_branch
      %102 = sbr.rel (0) target = $region45
    $region44: #{per_view_forward.4} parent=1 // pred_region
      %103 = dma.done [#allocation8], 1024
    $region45: #{per_view_forward.4} parent=1 // pred_fallthru
      _
    // Predicated region
    $region46: #{per_view_forward.4} parent=1 // pred_check
      _
    $region47: #{per_view_forward.4} parent=1 // pred_check_branch
      %105 = sbr.rel (0) target = $region49
    $region48: #{per_view_forward.4} parent=1 // pred_region
      %106 = dma.done [#allocation8], 16
    $region49: #{per_view_forward.4} parent=1 // pred_fallthru
      _
    // Predicated region
    $region50: #{per_view_forward.4} parent=1 // pred_check
      _
    $region51: #{per_view_forward.4} parent=1 // pred_check_branch
      %108 = sbr.rel (0) target = $region53
    $region52: #{per_view_forward.4} parent=1 // pred_region
      %109 = dma.done [#allocation11], 16
    $region53: #{per_view_forward.4} parent=1 // pred_fallthru
      _
    // Predicated region
    $region54: #{per_view_forward.4} parent=1 // pred_check
      _
    $region55: #{per_view_forward.4} parent=1 // pred_check_branch
      %111 = sbr.rel (0) target = $region57
    $region56: #{per_view_forward.4} parent=1 // pred_region
      %112 = dma.done [#allocation11], 16
    $region57: #{per_view_forward.4} parent=1 // pred_fallthru
      _
    %v114 = vld [vmem:[#allocation2] sm:$0xff]
    %v115 = vld [vmem:[#allocation2 + $0x8] sm:$0xf]
    %v116 = vpack.c.bf16 %v115, %v114
    %v117 = vld [vmem:[#allocation4] sm:$0xff]
    %v118 = vld [vmem:[#allocation4 + $0x8] sm:$0xf]
    %v119 = vld [vmem:[#allocation4 + $0xc] sm:$0xff]
    %v120 = vld [vmem:[#allocation4 + $0x14] sm:$0xf]
    %v121 = vld [vmem:[#allocation4 + $0x18] sm:$0xff]
    %v122 = vld [vmem:[#allocation4 + $0x20] sm:$0xf]
    %v123 = vld [vmem:[#allocation4 + $0x24] sm:$0xff]
    %v124 = vld [vmem:[#allocation4 + $0x2c] sm:$0xf]
    %v125 = vld [vmem:[#allocation4 + $0x30] sm:$0xff]
    %v126 = vld [vmem:[#allocation4 + $0x38] sm:$0xf]
    %v127 = vld [vmem:[#allocation4 + $0x3c] sm:$0xff]
    %v128 = vld [vmem:[#allocation4 + $0x44] sm:$0xf]
    %v129 = vld [vmem:[#allocation4 + $0x48] sm:$0xff]
    %v130 = vld [vmem:[#allocation4 + $0x50] sm:$0xf]
    %v131 = vld [vmem:[#allocation4 + $0x54] sm:$0xff]
    %v132 = vld [vmem:[#allocation4 + $0x5c] sm:$0xf]
    %v133 = vld [vmem:[#allocation4 + $0x60] sm:$0xff]
    %v134 = vld [vmem:[#allocation4 + $0x68] sm:$0xf]
    %v135 = vld [vmem:[#allocation4 + $0x6c] sm:$0xff]
    %v136 = vld [vmem:[#allocation4 + $0x74] sm:$0xf]
    %v137 = vld [vmem:[#allocation4 + $0x78] sm:$0xff]
    %v138 = vld [vmem:[#allocation4 + $0x80] sm:$0xf]
    %v139 = vld [vmem:[#allocation4 + $0x84] sm:$0xff]
    %v140 = vld [vmem:[#allocation4 + $0x8c] sm:$0xf]
    %v141 = vld [vmem:[#allocation4 + $0x90] sm:$0xff]
    %v142 = vld [vmem:[#allocation4 + $0x98] sm:$0xf]
    %v143 = vld [vmem:[#allocation4 + $0x9c] sm:$0xff]
    %v144 = vld [vmem:[#allocation4 + $0xa4] sm:$0xf]
    %v145 = vld [vmem:[#allocation4 + $0xa8] sm:$0xff]
    %v146 = vld [vmem:[#allocation4 + $0xb0] sm:$0xf]
    %v147 = vld [vmem:[#allocation4 + $0xb4] sm:$0xff]
    %v148 = vld [vmem:[#allocation4 + $0xbc] sm:$0xf]
    %v149 = vld [vmem:[#allocation6] sm:$0x7]
    %v151 = vlaneseq
    %v152 = vshrl.u32 %v151, 7
    %v153 = vsub.s32 0, %v152
    %v154 = vrot.slane %v149, %v153
    %v155 = vlaneseq
    %v156 = vshrl.u32 %v155, 7
    %v157 = vsub.s32 1, %v156
    %v158 = vrot.slane %v149, %v157
    %v159 = vlaneseq
    %v160 = vshrl.u32 %v159, 7
    %v161 = vsub.s32 2, %v160
    %v162 = vrot.slane %v149, %v161
    %v198 = vunpack.c.l.b16 %v117
    %v199 = vunpack.c.h.b16 %v117
    %v200 = vunpack.c.l.b16 %v118
    %v201 = vunpack.c.l.b16 %v119
    %v202 = vunpack.c.h.b16 %v119
    %v203 = vunpack.c.l.b16 %v120
    %v204 = vunpack.c.l.b16 %v121
    %v205 = vunpack.c.h.b16 %v121
    %v206 = vunpack.c.l.b16 %v122
    %v207 = vunpack.c.l.b16 %v123
    %v208 = vunpack.c.h.b16 %v123
    %v209 = vunpack.c.l.b16 %v124
    %v210 = vunpack.c.l.b16 %v125
    %v211 = vunpack.c.h.b16 %v125
    %v212 = vunpack.c.l.b16 %v126
    %v213 = vunpack.c.l.b16 %v127
    %v214 = vunpack.c.h.b16 %v127
    %v215 = vunpack.c.l.b16 %v128
    %v216 = vunpack.c.l.b16 %v129
    %v217 = vunpack.c.h.b16 %v129
    %v218 = vunpack.c.l.b16 %v130
    %v219 = vunpack.c.l.b16 %v131
    %v220 = vunpack.c.h.b16 %v131
    %v221 = vunpack.c.l.b16 %v132
    %v222 = vunpack.c.l.b16 %v133
    %v223 = vunpack.c.h.b16 %v133
    %v224 = vunpack.c.l.b16 %v134
    %v225 = vunpack.c.l.b16 %v135
    %v226 = vunpack.c.h.b16 %v135
    %v227 = vunpack.c.l.b16 %v136
    %v228 = vunpack.c.l.b16 %v137
    %v229 = vunpack.c.h.b16 %v137
    %v230 = vunpack.c.l.b16 %v138
    %v231 = vunpack.c.l.b16 %v139
    %v232 = vunpack.c.h.b16 %v139
    %v233 = vunpack.c.l.b16 %v140
    %v234 = vunpack.c.l.b16 %v141
    %v235 = vunpack.c.h.b16 %v141
    %v236 = vunpack.c.l.b16 %v142
    %v237 = vunpack.c.l.b16 %v143
    %v238 = vunpack.c.h.b16 %v143
    %v239 = vunpack.c.l.b16 %v144
    %v240 = vunpack.c.l.b16 %v145
    %v241 = vunpack.c.h.b16 %v145
    %v242 = vunpack.c.l.b16 %v146
    %v243 = vunpack.c.l.b16 %v147
    %v244 = vunpack.c.h.b16 %v147
    %v245 = vunpack.c.l.b16 %v148
    %v246 = vpack.c.b16 %v201, %v198
    %v247 = vpack.c.b16 %v202, %v199
    %v248 = vpack.c.b16 %v203, %v200
    %v249 = vpack.c.b16 %v207, %v204
    %v250 = vpack.c.b16 %v208, %v205
    %v251 = vpack.c.b16 %v209, %v206
    %v252 = vpack.c.b16 %v213, %v210
    %v253 = vpack.c.b16 %v214, %v211
    %v254 = vpack.c.b16 %v215, %v212
    %v255 = vpack.c.b16 %v219, %v216
    %v256 = vpack.c.b16 %v220, %v217
    %v257 = vpack.c.b16 %v221, %v218
    %v258 = vpack.c.b16 %v225, %v222
    %v259 = vpack.c.b16 %v226, %v223
    %v260 = vpack.c.b16 %v227, %v224
    %v261 = vpack.c.b16 %v231, %v228
    %v262 = vpack.c.b16 %v232, %v229
    %v263 = vpack.c.b16 %v233, %v230
    %v264 = vpack.c.b16 %v237, %v234
    %v265 = vpack.c.b16 %v238, %v235
    %v266 = vpack.c.b16 %v239, %v236
    %v267 = vpack.c.b16 %v243, %v240
    %v268 = vpack.c.b16 %v244, %v241
    %v269 = vpack.c.b16 %v245, %v242
    %294 = vmatprep.subr.bf16.mxu0 %v268
    %295 = vmatpush1.bf16.msra.mxu0 %v267
    %296 = vmatprep.subr.bf16.mxu0 %v265
    %297 = vmatpush1.bf16.msra.mxu0 %v264
    %298 = vmatprep.subr.bf16.mxu0 %v262
    %299 = vmatpush1.bf16.msra.mxu0 %v261
    %300 = vmatprep.subr.bf16.mxu0 %v259
    %301 = vmatpush1.bf16.msra.mxu0 %v258
    %302 = vmatprep.subr.bf16.mxu0 %v256
    %303 = vmatpush1.bf16.msra.mxu0 %v255
    %304 = vmatprep.subr.bf16.mxu0 %v253
    %305 = vmatpush1.bf16.msra.mxu0 %v252
    %306 = vmatprep.subr.bf16.mxu0 %v250
    %307 = vmatpush1.bf16.msra.mxu0 %v249
    %308 = vmatprep.subr.bf16.mxu0 %v247
    %309 = vmatpush1.bf16.msra.mxu0 %v246
    %310 = vmatprep.subr.bf16.mxu0 0
    %311 = vmatpush2.bf16.msra.mxu0 0
    %312 = vmatprep.subr.bf16.mxu0 0
    %313 = vmatpush2.bf16.msra.mxu0 0
    %314 = vmatprep.subr.bf16.mxu0 0
    %315 = vmatpush2.bf16.msra.mxu0 0
    %316 = vmatprep.subr.bf16.mxu0 0
    %317 = vmatpush2.bf16.msra.mxu0 0
    %318 = vmatprep.subr.bf16.mxu0 0
    %319 = vmatpush2.bf16.msra.mxu0 0
    %320 = vmatprep.subr.bf16.mxu0 0
    %321 = vmatpush2.bf16.msra.mxu0 0
    %322 = vmatprep.subr.bf16.mxu0 0
    %323 = vmatpush2.bf16.msra.mxu0 0
    %324 = vmatprep.subr.bf16.mxu0 0
    %325 = vmatpush2.bf16.msra.mxu0 0
    %326 = vmatprep.mubr.bf16.mxu0 0
    %327 = vmatmul.mubr.bf16.gmra.mxu0 %v116
    %v328 = vpop.f32.mrf.mxu0
    %v329 = vadd.f32 %v154, %v328
    %v330 = vpop.f32.mrf.mxu0
    %v331 = vadd.f32 %v158, %v330
    %v332 = vpop.f32.mrf.mxu0
    %v333 = vadd.f32 %v154, %v332
    %v334 = vpop.f32.mrf.mxu0
    %v335 = vadd.f32 %v158, %v334
    %336 = vdwg.mxu0
    %337 = vmatprep.subr.bf16.mxu0 0
    %338 = vmatpush1.bf16.msra.mxu0 %v269
    %339 = vmatprep.subr.bf16.mxu0 0
    %340 = vmatpush1.bf16.msra.mxu0 %v266
    %341 = vmatprep.subr.bf16.mxu0 0
    %342 = vmatpush1.bf16.msra.mxu0 %v263
    %343 = vmatprep.subr.bf16.mxu0 0
    %344 = vmatpush1.bf16.msra.mxu0 %v260
    %345 = vmatprep.subr.bf16.mxu0 0
    %346 = vmatpush1.bf16.msra.mxu0 %v257
    %347 = vmatprep.subr.bf16.mxu0 0
    %348 = vmatpush1.bf16.msra.mxu0 %v254
    %349 = vmatprep.subr.bf16.mxu0 0
    %350 = vmatpush1.bf16.msra.mxu0 %v251
    %351 = vmatprep.subr.bf16.mxu0 0
    %352 = vmatpush1.bf16.msra.mxu0 %v248
    %353 = vmatprep.subr.bf16.mxu0 0
    %354 = vmatpush2.bf16.msra.mxu0 0
    %355 = vmatprep.subr.bf16.mxu0 0
    %356 = vmatpush2.bf16.msra.mxu0 0
    %357 = vmatprep.subr.bf16.mxu0 0
    %358 = vmatpush2.bf16.msra.mxu0 0
    %359 = vmatprep.subr.bf16.mxu0 0
    %360 = vmatpush2.bf16.msra.mxu0 0
    %361 = vmatprep.subr.bf16.mxu0 0
    %362 = vmatpush2.bf16.msra.mxu0 0
    %363 = vmatprep.subr.bf16.mxu0 0
    %364 = vmatpush2.bf16.msra.mxu0 0
    %365 = vmatprep.subr.bf16.mxu0 0
    %366 = vmatpush2.bf16.msra.mxu0 0
    %367 = vmatprep.subr.bf16.mxu0 0
    %368 = vmatpush2.bf16.msra.mxu0 0
    %369 = vmatprep.mubr.bf16.mxu0 0
    %370 = vmatmul.mubr.bf16.gmra.mxu0 %v116
    %v371 = vpop.f32.mrf.mxu0
    %v372 = vadd.f32 %v162, %v371
    %v373 = vpop.f32.mrf.mxu0
    %v374 = vpop.f32.mrf.mxu0
    %v375 = vadd.f32 %v162, %v374
    %v376 = vpop.f32.mrf.mxu0
    %377 = vdwg.mxu0
    %v378 = vmul.f32 %v329, 0.17677669
    %v379 = vmul.f32 %v333, 0.17677669
    %vm380 = vcmask 261120
    %v382 = vsel %vm380, %v378, 0
    %v385 = vsel %vm380, %v379, 0
    %v388 = vsel %vm380, %v331, 0
    %v391 = vsel %vm380, %v335, 0
    %393 = vmatprep.subr.mxu0 0.0
    %394 = vmatpush1.xpose.msra.mxu0 0.0
    %395 = vmatprep.subr.mxu0 0.0
    %396 = vmatpush1.xpose.msra.mxu0 0.0
    %397 = vmatprep.subr.mxu0 0.0
    %398 = vmatpush1.xpose.msra.mxu0 0.0
    %399 = vmatprep.subr.mxu0 0.0
    %400 = vmatpush1.xpose.msra.mxu0 0.0
    %401 = vmatprep.subr.mxu0 0.0
    %402 = vmatpush1.xpose.msra.mxu0 0.0
    %403 = vmatprep.subr.mxu0 0.0
    %404 = vmatpush1.xpose.msra.mxu0 0.0
    %405 = vmatprep.subr.mxu0 0.0
    %406 = vmatpush1.xpose.msra.mxu0 0.0
    %407 = vmatprep.subr.mxu0 0.0
    %408 = vmatpush1.xpose.msra.mxu0 0.0
    %409 = vmatprep.subr.mxu0 0.0
    %410 = vmatpush1.xpose.msra.mxu0 0.0
    %411 = vmatprep.subr.mxu0 0.0
    %412 = vmatpush1.xpose.msra.mxu0 0.0
    %413 = vmatprep.subr.mxu0 0.0
    %414 = vmatpush1.xpose.msra.mxu0 0.0
    %415 = vmatprep.subr.mxu0 0.0
    %416 = vmatpush1.xpose.msra.mxu0 0.0
    %417 = vmatprep.subr.mxu0 0.0
    %418 = vmatpush1.xpose.msra.mxu0 0.0
    %419 = vmatprep.subr.mxu0 0.0
    %420 = vmatpush1.xpose.msra.mxu0 0.0
    %421 = vmatprep.subr.mxu0 0.0
    %422 = vmatpush1.xpose.msra.mxu0 %v391
    %423 = vmatprep.subr.mxu0 0.0
    %424 = vmatpush1.xpose.msra.mxu0 %v388
    %425 = vmatprep.subr.mxu0 0.0
    %426 = vmatpush2.xpose.msra.mxu0 0.0
    %427 = vmatprep.subr.mxu0 0.0
    %428 = vmatpush2.xpose.msra.mxu0 0.0
    %429 = vmatprep.subr.mxu0 0.0
    %430 = vmatpush2.xpose.msra.mxu0 0.0
    %431 = vmatprep.subr.mxu0 0.0
    %432 = vmatpush2.xpose.msra.mxu0 0.0
    %433 = vmatprep.subr.mxu0 0.0
    %434 = vmatpush2.xpose.msra.mxu0 0.0
    %435 = vmatprep.subr.mxu0 0.0
    %436 = vmatpush2.xpose.msra.mxu0 0.0
    %437 = vmatprep.subr.mxu0 0.0
    %438 = vmatpush2.xpose.msra.mxu0 0.0
    %439 = vmatprep.subr.mxu0 0.0
    %440 = vmatpush2.xpose.msra.mxu0 0.0
    %441 = vmatprep.subr.mxu0 0.0
    %442 = vmatpush2.xpose.msra.mxu0 0.0
    %443 = vmatprep.subr.mxu0 0.0
    %444 = vmatpush2.xpose.msra.mxu0 0.0
    %445 = vmatprep.subr.mxu0 0.0
    %446 = vmatpush2.xpose.msra.mxu0 0.0
    %447 = vmatprep.subr.mxu0 0.0
    %448 = vmatpush2.xpose.msra.mxu0 0.0
    %449 = vmatprep.subr.mxu0 0.0
    %450 = vmatpush2.xpose.msra.mxu0 0.0
    %451 = vmatprep.subr.mxu0 0.0
    %452 = vmatpush2.xpose.msra.mxu0 0.0
    %453 = vmatprep.subr.mxu0 0.0
    %454 = vmatpush2.xpose.msra.mxu0 0.0
    %455 = vmatprep.subr.mxu0 0.0
    %456 = vmatpush2.xpose.msra.mxu0 0.0
    %457 = vmatprep.mubr.f32.mxu0 0.0
    %458 = vmatmul.mubr.f32.gmra.mxu0 %v382
    %v459 = vpop.f32.mrf.mxu0
    %v460 = vadd.f32 0.0, %v459
    %v461 = vpop.f32.mrf.mxu0
    %462 = vmatprep.mubr.f32.mxu0 0.0
    %463 = vmatmul.mubr.f32.gmra.mxu0 %v385
    %v464 = vpop.f32.mrf.mxu0
    %v465 = vadd.f32 0.0, %v464
    %v466 = vpop.f32.mrf.mxu0
    %467 = vdwg.mxu0
    %vm468 = vcmask 97280
    %v469 = vsel %vm468, %v460, -inf
    %470 = vmax.xlane.f32.xlu0 %v469
    %v471 = vpop.xlane.xlu0 %470
    %vm472 = vcmask 93184
    %v473 = vsel %vm472, %v465, -inf
    %474 = vmax.xlane.f32.xlu0 %v473
    %v475 = vpop.xlane.xlu0 %474
    %v476 = vsub.f32 %v460, %v471
    %v477 = vsub.f32 %v465, %v475
    %v478 = vmul.f32 %v476, 1.442695
    %v479 = vpow.pop %v478
    %v480 = vmul.f32 %v477, 1.442695
    %v481 = vpow.pop %v480
    %v482 = vsel %vm468, %v479, 0.0
    %483 = vadd.xlane.f32.xlu0 %v482
    %v484 = vpop.xlane.xlu0 %483
    %v485 = vsel %vm472, %v481, 0.0
    %486 = vadd.xlane.f32.xlu0 %v485
    %v487 = vpop.xlane.xlu0 %486
    %v488 = vrcp.pop %v484
    %v489 = vmul.f32 %v479, %v488
    %v490 = vrcp.pop %v487
    %v491 = vmul.f32 %v481, %v490
    %v493 = vsel %vm468, %v489, 0
    %v496 = vsel %vm468, %v491, 0
    %vm498 = vcmask 1043456
    %v500 = vsel %vm498, %v375, 0
    %502 = vmatprep.subr.mxu0 0.0
    %503 = vmatpush1.msra.mxu0 0.0
    %504 = vmatprep.subr.mxu0 0.0
    %505 = vmatpush1.msra.mxu0 0.0
    %506 = vmatprep.subr.mxu0 0.0
    %507 = vmatpush1.msra.mxu0 0.0
    %508 = vmatprep.subr.mxu0 0.0
    %509 = vmatpush1.msra.mxu0 0.0
    %510 = vmatprep.subr.mxu0 0.0
    %511 = vmatpush1.msra.mxu0 0.0
    %512 = vmatprep.subr.mxu0 0.0
    %513 = vmatpush1.msra.mxu0 0.0
    %514 = vmatprep.subr.mxu0 0.0
    %515 = vmatpush1.msra.mxu0 0.0
    %516 = vmatprep.subr.mxu0 0.0
    %517 = vmatpush1.msra.mxu0 0.0
    %518 = vmatprep.subr.mxu0 0.0
    %519 = vmatpush1.msra.mxu0 0.0
    %520 = vmatprep.subr.mxu0 0.0
    %521 = vmatpush1.msra.mxu0 0.0
    %522 = vmatprep.subr.mxu0 0.0
    %523 = vmatpush1.msra.mxu0 0.0
    %524 = vmatprep.subr.mxu0 0.0
    %525 = vmatpush1.msra.mxu0 0.0
    %526 = vmatprep.subr.mxu0 0.0
    %527 = vmatpush1.msra.mxu0 0.0
    %528 = vmatprep.subr.mxu0 0.0
    %529 = vmatpush1.msra.mxu0 0.0
    %530 = vmatprep.subr.mxu0 0.0
    %531 = vmatpush1.msra.mxu0 %v500
    %532 = vmatprep.subr.mxu0 0.0
    %533 = vmatpush1.msra.mxu0 %v372
    %534 = vmatprep.subr.mxu0 0.0
    %535 = vmatpush2.msra.mxu0 0.0
    %536 = vmatprep.subr.mxu0 0.0
    %537 = vmatpush2.msra.mxu0 0.0
    %538 = vmatprep.subr.mxu0 0.0
    %539 = vmatpush2.msra.mxu0 0.0
    %540 = vmatprep.subr.mxu0 0.0
    %541 = vmatpush2.msra.mxu0 0.0
    %542 = vmatprep.subr.mxu0 0.0
    %543 = vmatpush2.msra.mxu0 0.0
    %544 = vmatprep.subr.mxu0 0.0
    %545 = vmatpush2.msra.mxu0 0.0
    %546 = vmatprep.subr.mxu0 0.0
    %547 = vmatpush2.msra.mxu0 0.0
    %548 = vmatprep.subr.mxu0 0.0
    %549 = vmatpush2.msra.mxu0 0.0
    %550 = vmatprep.subr.mxu0 0.0
    %551 = vmatpush2.msra.mxu0 0.0
    %552 = vmatprep.subr.mxu0 0.0
    %553 = vmatpush2.msra.mxu0 0.0
    %554 = vmatprep.subr.mxu0 0.0
    %555 = vmatpush2.msra.mxu0 0.0
    %556 = vmatprep.subr.mxu0 0.0
    %557 = vmatpush2.msra.mxu0 0.0
    %558 = vmatprep.subr.mxu0 0.0
    %559 = vmatpush2.msra.mxu0 0.0
    %560 = vmatprep.subr.mxu0 0.0
    %561 = vmatpush2.msra.mxu0 0.0
    %562 = vmatprep.subr.mxu0 0.0
    %563 = vmatpush2.msra.mxu0 0.0
    %564 = vmatprep.subr.mxu0 0.0
    %565 = vmatpush2.msra.mxu0 0.0
    %566 = vmatprep.mubr.f32.mxu0 0.0
    %567 = vmatmul.mubr.f32.gmra.mxu0 %v493
    %v568 = vpop.f32.mrf.mxu0
    %v569 = vadd.f32 0.0, %v568
    %v570 = vpop.f32.mrf.mxu0
    %571 = vmatprep.mubr.f32.mxu0 0.0
    %572 = vmatmul.mubr.f32.gmra.mxu0 %v496
    %v573 = vpop.f32.mrf.mxu0
    %v574 = vadd.f32 0.0, %v573
    %v575 = vpop.f32.mrf.mxu0
    %576 = vdwg.mxu0
    %577 = vrot.lane.b32.xlu0 %v378, 96
    %v578 = vpop.permute.xlu0 %577
    %579 = vrot.lane.b32.xlu0 %v379, 96
    %v580 = vpop.permute.xlu0 %579
    %581 = vrot.lane.b32.xlu0 %v331, 96
    %v582 = vpop.permute.xlu0 %581
    %583 = vrot.lane.b32.xlu0 %v335, 96
    %v584 = vpop.permute.xlu0 %583
    %v585 = vsel %vm380, %v578, 0
    %v587 = vsel %vm380, %v580, 0
    %v589 = vsel %vm380, %v582, 0
    %v591 = vsel %vm380, %v584, 0
    %593 = vmatprep.subr.mxu0 0.0
    %594 = vmatpush1.xpose.msra.mxu0 0.0
    %595 = vmatprep.subr.mxu0 0.0
    %596 = vmatpush1.xpose.msra.mxu0 0.0
    %597 = vmatprep.subr.mxu0 0.0
    %598 = vmatpush1.xpose.msra.mxu0 0.0
    %599 = vmatprep.subr.mxu0 0.0
    %600 = vmatpush1.xpose.msra.mxu0 0.0
    %601 = vmatprep.subr.mxu0 0.0
    %602 = vmatpush1.xpose.msra.mxu0 0.0
    %603 = vmatprep.subr.mxu0 0.0
    %604 = vmatpush1.xpose.msra.mxu0 0.0
    %605 = vmatprep.subr.mxu0 0.0
    %606 = vmatpush1.xpose.msra.mxu0 0.0
    %607 = vmatprep.subr.mxu0 0.0
    %608 = vmatpush1.xpose.msra.mxu0 0.0
    %609 = vmatprep.subr.mxu0 0.0
    %610 = vmatpush1.xpose.msra.mxu0 0.0
    %611 = vmatprep.subr.mxu0 0.0
    %612 = vmatpush1.xpose.msra.mxu0 0.0
    %613 = vmatprep.subr.mxu0 0.0
    %614 = vmatpush1.xpose.msra.mxu0 0.0
    %615 = vmatprep.subr.mxu0 0.0
    %616 = vmatpush1.xpose.msra.mxu0 0.0
    %617 = vmatprep.subr.mxu0 0.0
    %618 = vmatpush1.xpose.msra.mxu0 0.0
    %619 = vmatprep.subr.mxu0 0.0
    %620 = vmatpush1.xpose.msra.mxu0 0.0
    %621 = vmatprep.subr.mxu0 0.0
    %622 = vmatpush1.xpose.msra.mxu0 %v591
    %623 = vmatprep.subr.mxu0 0.0
    %624 = vmatpush1.xpose.msra.mxu0 %v589
    %625 = vmatprep.subr.mxu0 0.0
    %626 = vmatpush2.xpose.msra.mxu0 0.0
    %627 = vmatprep.subr.mxu0 0.0
    %628 = vmatpush2.xpose.msra.mxu0 0.0
    %629 = vmatprep.subr.mxu0 0.0
    %630 = vmatpush2.xpose.msra.mxu0 0.0
    %631 = vmatprep.subr.mxu0 0.0
    %632 = vmatpush2.xpose.msra.mxu0 0.0
    %633 = vmatprep.subr.mxu0 0.0
    %634 = vmatpush2.xpose.msra.mxu0 0.0
    %635 = vmatprep.subr.mxu0 0.0
    %636 = vmatpush2.xpose.msra.mxu0 0.0
    %637 = vmatprep.subr.mxu0 0.0
    %638 = vmatpush2.xpose.msra.mxu0 0.0
    %639 = vmatprep.subr.mxu0 0.0
    %640 = vmatpush2.xpose.msra.mxu0 0.0
    %641 = vmatprep.subr.mxu0 0.0
    %642 = vmatpush2.xpose.msra.mxu0 0.0
    %643 = vmatprep.subr.mxu0 0.0
    %644 = vmatpush2.xpose.msra.mxu0 0.0
    %645 = vmatprep.subr.mxu0 0.0
    %646 = vmatpush2.xpose.msra.mxu0 0.0
    %647 = vmatprep.subr.mxu0 0.0
    %648 = vmatpush2.xpose.msra.mxu0 0.0
    %649 = vmatprep.subr.mxu0 0.0
    %650 = vmatpush2.xpose.msra.mxu0 0.0
    %651 = vmatprep.subr.mxu0 0.0
    %652 = vmatpush2.xpose.msra.mxu0 0.0
    %653 = vmatprep.subr.mxu0 0.0
    %654 = vmatpush2.xpose.msra.mxu0 0.0
    %655 = vmatprep.subr.mxu0 0.0
    %656 = vmatpush2.xpose.msra.mxu0 0.0
    %657 = vmatprep.mubr.f32.mxu0 0.0
    %658 = vmatmul.mubr.f32.gmra.mxu0 %v585
    %v659 = vpop.f32.mrf.mxu0
    %v660 = vadd.f32 0.0, %v659
    %v661 = vpop.f32.mrf.mxu0
    %662 = vmatprep.mubr.f32.mxu0 0.0
    %663 = vmatmul.mubr.f32.gmra.mxu0 %v587
    %v664 = vpop.f32.mrf.mxu0
    %v665 = vadd.f32 0.0, %v664
    %v666 = vpop.f32.mrf.mxu0
    %667 = vdwg.mxu0
    %v668 = vsel %vm468, %v660, -inf
    %669 = vmax.xlane.f32.xlu0 %v668
    %v670 = vpop.xlane.xlu0 %669
    %v671 = vsel %vm472, %v665, -inf
    %672 = vmax.xlane.f32.xlu0 %v671
    %v673 = vpop.xlane.xlu0 %672
    %v674 = vsub.f32 %v660, %v670
    %v675 = vsub.f32 %v665, %v673
    %v676 = vmul.f32 %v674, 1.442695
    %v677 = vpow.pop %v676
    %v678 = vmul.f32 %v675, 1.442695
    %v679 = vpow.pop %v678
    %v680 = vsel %vm468, %v677, 0.0
    %681 = vadd.xlane.f32.xlu0 %v680
    %v682 = vpop.xlane.xlu0 %681
    %v683 = vsel %vm472, %v679, 0.0
    %684 = vadd.xlane.f32.xlu0 %v683
    %v685 = vpop.xlane.xlu0 %684
    %v686 = vrcp.pop %v682
    %v687 = vmul.f32 %v677, %v686
    %v688 = vrcp.pop %v685
    %v689 = vmul.f32 %v679, %v688
    %691 = vrot.lane.b32.xlu0 %v372, 96
    %v692 = vpop.permute.xlu0 %691
    %693 = vrot.lane.b32.xlu0 %v375, 96
    %v694 = vpop.permute.xlu0 %693
    %v697 = vsel %vm468, %v687, 0
    %v700 = vsel %vm468, %v689, 0
    %v702 = vsel %vm498, %v694, 0
    %704 = vmatprep.subr.mxu0 0.0
    %705 = vmatpush1.msra.mxu0 0.0
    %706 = vmatprep.subr.mxu0 0.0
    %707 = vmatpush1.msra.mxu0 0.0
    %708 = vmatprep.subr.mxu0 0.0
    %709 = vmatpush1.msra.mxu0 0.0
    %710 = vmatprep.subr.mxu0 0.0
    %711 = vmatpush1.msra.mxu0 0.0
    %712 = vmatprep.subr.mxu0 0.0
    %713 = vmatpush1.msra.mxu0 0.0
    %714 = vmatprep.subr.mxu0 0.0
    %715 = vmatpush1.msra.mxu0 0.0
    %716 = vmatprep.subr.mxu0 0.0
    %717 = vmatpush1.msra.mxu0 0.0
    %718 = vmatprep.subr.mxu0 0.0
    %719 = vmatpush1.msra.mxu0 0.0
    %720 = vmatprep.subr.mxu0 0.0
    %721 = vmatpush1.msra.mxu0 0.0
    %722 = vmatprep.subr.mxu0 0.0
    %723 = vmatpush1.msra.mxu0 0.0
    %724 = vmatprep.subr.mxu0 0.0
    %725 = vmatpush1.msra.mxu0 0.0
    %726 = vmatprep.subr.mxu0 0.0
    %727 = vmatpush1.msra.mxu0 0.0
    %728 = vmatprep.subr.mxu0 0.0
    %729 = vmatpush1.msra.mxu0 0.0
    %730 = vmatprep.subr.mxu0 0.0
    %731 = vmatpush1.msra.mxu0 0.0
    %732 = vmatprep.subr.mxu0 0.0
    %733 = vmatpush1.msra.mxu0 %v702
    %734 = vmatprep.subr.mxu0 0.0
    %735 = vmatpush1.msra.mxu0 %v692
    %736 = vmatprep.subr.mxu0 0.0
    %737 = vmatpush2.msra.mxu0 0.0
    %738 = vmatprep.subr.mxu0 0.0
    %739 = vmatpush2.msra.mxu0 0.0
    %740 = vmatprep.subr.mxu0 0.0
    %741 = vmatpush2.msra.mxu0 0.0
    %742 = vmatprep.subr.mxu0 0.0
    %743 = vmatpush2.msra.mxu0 0.0
    %744 = vmatprep.subr.mxu0 0.0
    %745 = vmatpush2.msra.mxu0 0.0
    %746 = vmatprep.subr.mxu0 0.0
    %747 = vmatpush2.msra.mxu0 0.0
    %748 = vmatprep.subr.mxu0 0.0
    %749 = vmatpush2.msra.mxu0 0.0
    %750 = vmatprep.subr.mxu0 0.0
    %751 = vmatpush2.msra.mxu0 0.0
    %752 = vmatprep.subr.mxu0 0.0
    %753 = vmatpush2.msra.mxu0 0.0
    %754 = vmatprep.subr.mxu0 0.0
    %755 = vmatpush2.msra.mxu0 0.0
    %756 = vmatprep.subr.mxu0 0.0
    %757 = vmatpush2.msra.mxu0 0.0
    %758 = vmatprep.subr.mxu0 0.0
    %759 = vmatpush2.msra.mxu0 0.0
    %760 = vmatprep.subr.mxu0 0.0
    %761 = vmatpush2.msra.mxu0 0.0
    %762 = vmatprep.subr.mxu0 0.0
    %763 = vmatpush2.msra.mxu0 0.0
    %764 = vmatprep.subr.mxu0 0.0
    %765 = vmatpush2.msra.mxu0 0.0
    %766 = vmatprep.subr.mxu0 0.0
    %767 = vmatpush2.msra.mxu0 0.0
    %768 = vmatprep.mubr.f32.mxu0 0.0
    %769 = vmatmul.mubr.f32.gmra.mxu0 %v697
    %v770 = vpop.f32.mrf.mxu0
    %v771 = vadd.f32 0.0, %v770
    %v772 = vpop.f32.mrf.mxu0
    %773 = vmatprep.mubr.f32.mxu0 0.0
    %774 = vmatmul.mubr.f32.gmra.mxu0 %v700
    %v775 = vpop.f32.mrf.mxu0
    %v776 = vadd.f32 0.0, %v775
    %v777 = vpop.f32.mrf.mxu0
    %778 = vdwg.mxu0
    %779 = vrot.lane.b32.xlu0 %v378, 64
    %v780 = vpop.permute.xlu0 %779
    %781 = vrot.lane.b32.xlu0 %v379, 64
    %v782 = vpop.permute.xlu0 %781
    %783 = vrot.lane.b32.xlu0 %v331, 64
    %v784 = vpop.permute.xlu0 %783
    %785 = vrot.lane.b32.xlu0 %v335, 64
    %v786 = vpop.permute.xlu0 %785
    %v787 = vsel %vm380, %v780, 0
    %v789 = vsel %vm380, %v782, 0
    %v791 = vsel %vm380, %v784, 0
    %v793 = vsel %vm380, %v786, 0
    %795 = vmatprep.subr.mxu0 0.0
    %796 = vmatpush1.xpose.msra.mxu0 0.0
    %797 = vmatprep.subr.mxu0 0.0
    %798 = vmatpush1.xpose.msra.mxu0 0.0
    %799 = vmatprep.subr.mxu0 0.0
    %800 = vmatpush1.xpose.msra.mxu0 0.0
    %801 = vmatprep.subr.mxu0 0.0
    %802 = vmatpush1.xpose.msra.mxu0 0.0
    %803 = vmatprep.subr.mxu0 0.0
    %804 = vmatpush1.xpose.msra.mxu0 0.0
    %805 = vmatprep.subr.mxu0 0.0
    %806 = vmatpush1.xpose.msra.mxu0 0.0
    %807 = vmatprep.subr.mxu0 0.0
    %808 = vmatpush1.xpose.msra.mxu0 0.0
    %809 = vmatprep.subr.mxu0 0.0
    %810 = vmatpush1.xpose.msra.mxu0 0.0
    %811 = vmatprep.subr.mxu0 0.0
    %812 = vmatpush1.xpose.msra.mxu0 0.0
    %813 = vmatprep.subr.mxu0 0.0
    %814 = vmatpush1.xpose.msra.mxu0 0.0
    %815 = vmatprep.subr.mxu0 0.0
    %816 = vmatpush1.xpose.msra.mxu0 0.0
    %817 = vmatprep.subr.mxu0 0.0
    %818 = vmatpush1.xpose.msra.mxu0 0.0
    %819 = vmatprep.subr.mxu0 0.0
    %820 = vmatpush1.xpose.msra.mxu0 0.0
    %821 = vmatprep.subr.mxu0 0.0
    %822 = vmatpush1.xpose.msra.mxu0 0.0
    %823 = vmatprep.subr.mxu0 0.0
    %824 = vmatpush1.xpose.msra.mxu0 %v793
    %825 = vmatprep.subr.mxu0 0.0
    %826 = vmatpush1.xpose.msra.mxu0 %v791
    %827 = vmatprep.subr.mxu0 0.0
    %828 = vmatpush2.xpose.msra.mxu0 0.0
    %829 = vmatprep.subr.mxu0 0.0
    %830 = vmatpush2.xpose.msra.mxu0 0.0
    %831 = vmatprep.subr.mxu0 0.0
    %832 = vmatpush2.xpose.msra.mxu0 0.0
    %833 = vmatprep.subr.mxu0 0.0
    %834 = vmatpush2.xpose.msra.mxu0 0.0
    %835 = vmatprep.subr.mxu0 0.0
    %836 = vmatpush2.xpose.msra.mxu0 0.0
    %837 = vmatprep.subr.mxu0 0.0
    %838 = vmatpush2.xpose.msra.mxu0 0.0
    %839 = vmatprep.subr.mxu0 0.0
    %840 = vmatpush2.xpose.msra.mxu0 0.0
    %841 = vmatprep.subr.mxu0 0.0
    %842 = vmatpush2.xpose.msra.mxu0 0.0
    %843 = vmatprep.subr.mxu0 0.0
    %844 = vmatpush2.xpose.msra.mxu0 0.0
    %845 = vmatprep.subr.mxu0 0.0
    %846 = vmatpush2.xpose.msra.mxu0 0.0
    %847 = vmatprep.subr.mxu0 0.0
    %848 = vmatpush2.xpose.msra.mxu0 0.0
    %849 = vmatprep.subr.mxu0 0.0
    %850 = vmatpush2.xpose.msra.mxu0 0.0
    %851 = vmatprep.subr.mxu0 0.0
    %852 = vmatpush2.xpose.msra.mxu0 0.0
    %853 = vmatprep.subr.mxu0 0.0
    %854 = vmatpush2.xpose.msra.mxu0 0.0
    %855 = vmatprep.subr.mxu0 0.0
    %856 = vmatpush2.xpose.msra.mxu0 0.0
    %857 = vmatprep.subr.mxu0 0.0
    %858 = vmatpush2.xpose.msra.mxu0 0.0
    %859 = vmatprep.mubr.f32.mxu0 0.0
    %860 = vmatmul.mubr.f32.gmra.mxu0 %v787
    %v861 = vpop.f32.mrf.mxu0
    %v862 = vadd.f32 0.0, %v861
    %v863 = vpop.f32.mrf.mxu0
    %864 = vmatprep.mubr.f32.mxu0 0.0
    %865 = vmatmul.mubr.f32.gmra.mxu0 %v789
    %v866 = vpop.f32.mrf.mxu0
    %v867 = vadd.f32 0.0, %v866
    %v868 = vpop.f32.mrf.mxu0
    %869 = vdwg.mxu0
    %v870 = vsel %vm468, %v862, -inf
    %871 = vmax.xlane.f32.xlu0 %v870
    %v872 = vpop.xlane.xlu0 %871
    %v873 = vsel %vm472, %v867, -inf
    %874 = vmax.xlane.f32.xlu0 %v873
    %v875 = vpop.xlane.xlu0 %874
    %v876 = vsub.f32 %v862, %v872
    %v877 = vsub.f32 %v867, %v875
    %v878 = vmul.f32 %v876, 1.442695
    %v879 = vpow.pop %v878
    %v880 = vmul.f32 %v877, 1.442695
    %v881 = vpow.pop %v880
    %v882 = vsel %vm468, %v879, 0.0
    %883 = vadd.xlane.f32.xlu0 %v882
    %v884 = vpop.xlane.xlu0 %883
    %v885 = vsel %vm472, %v881, 0.0
    %886 = vadd.xlane.f32.xlu0 %v885
    %v887 = vpop.xlane.xlu0 %886
    %v888 = vrcp.pop %v884
    %v889 = vmul.f32 %v879, %v888
    %v890 = vrcp.pop %v887
    %v891 = vmul.f32 %v881, %v890
    %892 = vrot.lane.b32.xlu0 %v372, 64
    %v893 = vpop.permute.xlu0 %892
    %894 = vrot.lane.b32.xlu0 %v375, 64
    %v895 = vpop.permute.xlu0 %894
    %v898 = vsel %vm468, %v889, 0
    %v901 = vsel %vm468, %v891, 0
    %v903 = vsel %vm498, %v895, 0
    %905 = vmatprep.subr.mxu0 0.0
    %906 = vmatpush1.msra.mxu0 0.0
    %907 = vmatprep.subr.mxu0 0.0
    %908 = vmatpush1.msra.mxu0 0.0
    %909 = vmatprep.subr.mxu0 0.0
    %910 = vmatpush1.msra.mxu0 0.0
    %911 = vmatprep.subr.mxu0 0.0
    %912 = vmatpush1.msra.mxu0 0.0
    %913 = vmatprep.subr.mxu0 0.0
    %914 = vmatpush1.msra.mxu0 0.0
    %915 = vmatprep.subr.mxu0 0.0
    %916 = vmatpush1.msra.mxu0 0.0
    %917 = vmatprep.subr.mxu0 0.0
    %918 = vmatpush1.msra.mxu0 0.0
    %919 = vmatprep.subr.mxu0 0.0
    %920 = vmatpush1.msra.mxu0 0.0
    %921 = vmatprep.subr.mxu0 0.0
    %922 = vmatpush1.msra.mxu0 0.0
    %923 = vmatprep.subr.mxu0 0.0
    %924 = vmatpush1.msra.mxu0 0.0
    %925 = vmatprep.subr.mxu0 0.0
    %926 = vmatpush1.msra.mxu0 0.0
    %927 = vmatprep.subr.mxu0 0.0
    %928 = vmatpush1.msra.mxu0 0.0
    %929 = vmatprep.subr.mxu0 0.0
    %930 = vmatpush1.msra.mxu0 0.0
    %931 = vmatprep.subr.mxu0 0.0
    %932 = vmatpush1.msra.mxu0 0.0
    %933 = vmatprep.subr.mxu0 0.0
    %934 = vmatpush1.msra.mxu0 %v903
    %935 = vmatprep.subr.mxu0 0.0
    %936 = vmatpush1.msra.mxu0 %v893
    %937 = vmatprep.subr.mxu0 0.0
    %938 = vmatpush2.msra.mxu0 0.0
    %939 = vmatprep.subr.mxu0 0.0
    %940 = vmatpush2.msra.mxu0 0.0
    %941 = vmatprep.subr.mxu0 0.0
    %942 = vmatpush2.msra.mxu0 0.0
    %943 = vmatprep.subr.mxu0 0.0
    %944 = vmatpush2.msra.mxu0 0.0
    %945 = vmatprep.subr.mxu0 0.0
    %946 = vmatpush2.msra.mxu0 0.0
    %947 = vmatprep.subr.mxu0 0.0
    %948 = vmatpush2.msra.mxu0 0.0
    %949 = vmatprep.subr.mxu0 0.0
    %950 = vmatpush2.msra.mxu0 0.0
    %951 = vmatprep.subr.mxu0 0.0
    %952 = vmatpush2.msra.mxu0 0.0
    %953 = vmatprep.subr.mxu0 0.0
    %954 = vmatpush2.msra.mxu0 0.0
    %955 = vmatprep.subr.mxu0 0.0
    %956 = vmatpush2.msra.mxu0 0.0
    %957 = vmatprep.subr.mxu0 0.0
    %958 = vmatpush2.msra.mxu0 0.0
    %959 = vmatprep.subr.mxu0 0.0
    %960 = vmatpush2.msra.mxu0 0.0
    %961 = vmatprep.subr.mxu0 0.0
    %962 = vmatpush2.msra.mxu0 0.0
    %963 = vmatprep.subr.mxu0 0.0
    %964 = vmatpush2.msra.mxu0 0.0
    %965 = vmatprep.subr.mxu0 0.0
    %966 = vmatpush2.msra.mxu0 0.0
    %967 = vmatprep.subr.mxu0 0.0
    %968 = vmatpush2.msra.mxu0 0.0
    %969 = vmatprep.mubr.f32.mxu0 0.0
    %970 = vmatmul.mubr.f32.gmra.mxu0 %v898
    %v971 = vpop.f32.mrf.mxu0
    %v972 = vadd.f32 0.0, %v971
    %v973 = vpop.f32.mrf.mxu0
    %974 = vmatprep.mubr.f32.mxu0 0.0
    %975 = vmatmul.mubr.f32.gmra.mxu0 %v901
    %v976 = vpop.f32.mrf.mxu0
    %v977 = vadd.f32 0.0, %v976
    %v978 = vpop.f32.mrf.mxu0
    %979 = vdwg.mxu0
    %980 = vrot.lane.b32.xlu0 %v378, 32
    %v981 = vpop.permute.xlu0 %980
    %982 = vrot.lane.b32.xlu0 %v379, 32
    %v983 = vpop.permute.xlu0 %982
    %984 = vrot.lane.b32.xlu0 %v331, 32
    %v985 = vpop.permute.xlu0 %984
    %986 = vrot.lane.b32.xlu0 %v335, 32
    %v987 = vpop.permute.xlu0 %986
    %v988 = vsel %vm380, %v981, 0
    %v990 = vsel %vm380, %v983, 0
    %v992 = vsel %vm380, %v985, 0
    %v994 = vsel %vm380, %v987, 0
    %996 = vmatprep.subr.mxu0 0.0
    %997 = vmatpush1.xpose.msra.mxu0 0.0
    %998 = vmatprep.subr.mxu0 0.0
    %999 = vmatpush1.xpose.msra.mxu0 0.0
    %1000 = vmatprep.subr.mxu0 0.0
    %1001 = vmatpush1.xpose.msra.mxu0 0.0
    %1002 = vmatprep.subr.mxu0 0.0
    %1003 = vmatpush1.xpose.msra.mxu0 0.0
    %1004 = vmatprep.subr.mxu0 0.0
    %1005 = vmatpush1.xpose.msra.mxu0 0.0
    %1006 = vmatprep.subr.mxu0 0.0
    %1007 = vmatpush1.xpose.msra.mxu0 0.0
    %1008 = vmatprep.subr.mxu0 0.0
    %1009 = vmatpush1.xpose.msra.mxu0 0.0
    %1010 = vmatprep.subr.mxu0 0.0
    %1011 = vmatpush1.xpose.msra.mxu0 0.0
    %1012 = vmatprep.subr.mxu0 0.0
    %1013 = vmatpush1.xpose.msra.mxu0 0.0
    %1014 = vmatprep.subr.mxu0 0.0
    %1015 = vmatpush1.xpose.msra.mxu0 0.0
    %1016 = vmatprep.subr.mxu0 0.0
    %1017 = vmatpush1.xpose.msra.mxu0 0.0
    %1018 = vmatprep.subr.mxu0 0.0
    %1019 = vmatpush1.xpose.msra.mxu0 0.0
    %1020 = vmatprep.subr.mxu0 0.0
    %1021 = vmatpush1.xpose.msra.mxu0 0.0
    %1022 = vmatprep.subr.mxu0 0.0
    %1023 = vmatpush1.xpose.msra.mxu0 0.0
    %1024 = vmatprep.subr.mxu0 0.0
    %1025 = vmatpush1.xpose.msra.mxu0 %v994
    %1026 = vmatprep.subr.mxu0 0.0
    %1027 = vmatpush1.xpose.msra.mxu0 %v992
    %1028 = vmatprep.subr.mxu0 0.0
    %1029 = vmatpush2.xpose.msra.mxu0 0.0
    %1030 = vmatprep.subr.mxu0 0.0
    %1031 = vmatpush2.xpose.msra.mxu0 0.0
    %1032 = vmatprep.subr.mxu0 0.0
    %1033 = vmatpush2.xpose.msra.mxu0 0.0
    %1034 = vmatprep.subr.mxu0 0.0
    %1035 = vmatpush2.xpose.msra.mxu0 0.0
    %1036 = vmatprep.subr.mxu0 0.0
    %1037 = vmatpush2.xpose.msra.mxu0 0.0
    %1038 = vmatprep.subr.mxu0 0.0
    %1039 = vmatpush2.xpose.msra.mxu0 0.0
    %1040 = vmatprep.subr.mxu0 0.0
    %1041 = vmatpush2.xpose.msra.mxu0 0.0
    %1042 = vmatprep.subr.mxu0 0.0
    %1043 = vmatpush2.xpose.msra.mxu0 0.0
    %1044 = vmatprep.subr.mxu0 0.0
    %1045 = vmatpush2.xpose.msra.mxu0 0.0
    %1046 = vmatprep.subr.mxu0 0.0
    %1047 = vmatpush2.xpose.msra.mxu0 0.0
    %1048 = vmatprep.subr.mxu0 0.0
    %1049 = vmatpush2.xpose.msra.mxu0 0.0
    %1050 = vmatprep.subr.mxu0 0.0
    %1051 = vmatpush2.xpose.msra.mxu0 0.0
    %1052 = vmatprep.subr.mxu0 0.0
    %1053 = vmatpush2.xpose.msra.mxu0 0.0
    %1054 = vmatprep.subr.mxu0 0.0
    %1055 = vmatpush2.xpose.msra.mxu0 0.0
    %1056 = vmatprep.subr.mxu0 0.0
    %1057 = vmatpush2.xpose.msra.mxu0 0.0
    %1058 = vmatprep.subr.mxu0 0.0
    %1059 = vmatpush2.xpose.msra.mxu0 0.0
    %1060 = vmatprep.mubr.f32.mxu0 0.0
    %1061 = vmatmul.mubr.f32.gmra.mxu0 %v988
    %v1062 = vpop.f32.mrf.mxu0
    %v1063 = vadd.f32 0.0, %v1062
    %v1064 = vpop.f32.mrf.mxu0
    %1065 = vmatprep.mubr.f32.mxu0 0.0
    %1066 = vmatmul.mubr.f32.gmra.mxu0 %v990
    %v1067 = vpop.f32.mrf.mxu0
    %v1068 = vadd.f32 0.0, %v1067
    %v1069 = vpop.f32.mrf.mxu0
    %1070 = vdwg.mxu0
    %v1071 = vsel %vm468, %v1063, -inf
    %1072 = vmax.xlane.f32.xlu0 %v1071
    %v1073 = vpop.xlane.xlu0 %1072
    %v1074 = vsel %vm472, %v1068, -inf
    %1075 = vmax.xlane.f32.xlu0 %v1074
    %v1076 = vpop.xlane.xlu0 %1075
    %v1077 = vsub.f32 %v1063, %v1073
    %v1078 = vsub.f32 %v1068, %v1076
    %v1079 = vmul.f32 %v1077, 1.442695
    %v1080 = vpow.pop %v1079
    %v1081 = vmul.f32 %v1078, 1.442695
    %v1082 = vpow.pop %v1081
    %v1083 = vsel %vm468, %v1080, 0.0
    %1084 = vadd.xlane.f32.xlu0 %v1083
    %v1085 = vpop.xlane.xlu0 %1084
    %v1086 = vsel %vm472, %v1082, 0.0
    %1087 = vadd.xlane.f32.xlu0 %v1086
    %v1088 = vpop.xlane.xlu0 %1087
    %v1089 = vrcp.pop %v1085
    %v1090 = vmul.f32 %v1080, %v1089
    %v1091 = vrcp.pop %v1088
    %v1092 = vmul.f32 %v1082, %v1091
    %1093 = vrot.lane.b32.xlu0 %v372, 32
    %v1094 = vpop.permute.xlu0 %1093
    %1095 = vrot.lane.b32.xlu0 %v375, 32
    %v1096 = vpop.permute.xlu0 %1095
    %v1099 = vsel %vm468, %v1090, 0
    %v1102 = vsel %vm468, %v1092, 0
    %v1104 = vsel %vm498, %v1096, 0
    %1106 = vmatprep.subr.mxu0 0.0
    %1107 = vmatpush1.msra.mxu0 0.0
    %1108 = vmatprep.subr.mxu0 0.0
    %1109 = vmatpush1.msra.mxu0 0.0
    %1110 = vmatprep.subr.mxu0 0.0
    %1111 = vmatpush1.msra.mxu0 0.0
    %1112 = vmatprep.subr.mxu0 0.0
    %1113 = vmatpush1.msra.mxu0 0.0
    %1114 = vmatprep.subr.mxu0 0.0
    %1115 = vmatpush1.msra.mxu0 0.0
    %1116 = vmatprep.subr.mxu0 0.0
    %1117 = vmatpush1.msra.mxu0 0.0
    %1118 = vmatprep.subr.mxu0 0.0
    %1119 = vmatpush1.msra.mxu0 0.0
    %1120 = vmatprep.subr.mxu0 0.0
    %1121 = vmatpush1.msra.mxu0 0.0
    %1122 = vmatprep.subr.mxu0 0.0
    %1123 = vmatpush1.msra.mxu0 0.0
    %1124 = vmatprep.subr.mxu0 0.0
    %1125 = vmatpush1.msra.mxu0 0.0
    %1126 = vmatprep.subr.mxu0 0.0
    %1127 = vmatpush1.msra.mxu0 0.0
    %1128 = vmatprep.subr.mxu0 0.0
    %1129 = vmatpush1.msra.mxu0 0.0
    %1130 = vmatprep.subr.mxu0 0.0
    %1131 = vmatpush1.msra.mxu0 0.0
    %1132 = vmatprep.subr.mxu0 0.0
    %1133 = vmatpush1.msra.mxu0 0.0
    %1134 = vmatprep.subr.mxu0 0.0
    %1135 = vmatpush1.msra.mxu0 %v1104
    %1136 = vmatprep.subr.mxu0 0.0
    %1137 = vmatpush1.msra.mxu0 %v1094
    %1138 = vmatprep.subr.mxu0 0.0
    %1139 = vmatpush2.msra.mxu0 0.0
    %1140 = vmatprep.subr.mxu0 0.0
    %1141 = vmatpush2.msra.mxu0 0.0
    %1142 = vmatprep.subr.mxu0 0.0
    %1143 = vmatpush2.msra.mxu0 0.0
    %1144 = vmatprep.subr.mxu0 0.0
    %1145 = vmatpush2.msra.mxu0 0.0
    %1146 = vmatprep.subr.mxu0 0.0
    %1147 = vmatpush2.msra.mxu0 0.0
    %1148 = vmatprep.subr.mxu0 0.0
    %1149 = vmatpush2.msra.mxu0 0.0
    %1150 = vmatprep.subr.mxu0 0.0
    %1151 = vmatpush2.msra.mxu0 0.0
    %1152 = vmatprep.subr.mxu0 0.0
    %1153 = vmatpush2.msra.mxu0 0.0
    %1154 = vmatprep.subr.mxu0 0.0
    %1155 = vmatpush2.msra.mxu0 0.0
    %1156 = vmatprep.subr.mxu0 0.0
    %1157 = vmatpush2.msra.mxu0 0.0
    %1158 = vmatprep.subr.mxu0 0.0
    %1159 = vmatpush2.msra.mxu0 0.0
    %1160 = vmatprep.subr.mxu0 0.0
    %1161 = vmatpush2.msra.mxu0 0.0
    %1162 = vmatprep.subr.mxu0 0.0
    %1163 = vmatpush2.msra.mxu0 0.0
    %1164 = vmatprep.subr.mxu0 0.0
    %1165 = vmatpush2.msra.mxu0 0.0
    %1166 = vmatprep.subr.mxu0 0.0
    %1167 = vmatpush2.msra.mxu0 0.0
    %1168 = vmatprep.subr.mxu0 0.0
    %1169 = vmatpush2.msra.mxu0 0.0
    %1170 = vmatprep.mubr.f32.mxu0 0.0
    %1171 = vmatmul.mubr.f32.gmra.mxu0 %v1099
    %v1172 = vpop.f32.mrf.mxu0
    %v1173 = vadd.f32 0.0, %v1172
    %v1174 = vpop.f32.mrf.mxu0
    %1175 = vmatprep.mubr.f32.mxu0 0.0
    %1176 = vmatmul.mubr.f32.gmra.mxu0 %v1102
    %v1177 = vpop.f32.mrf.mxu0
    %v1178 = vadd.f32 0.0, %v1177
    %v1179 = vpop.f32.mrf.mxu0
    %1180 = vdwg.mxu0
    %1183 = vrot.lane.b32.xlu0 %v771, 32
    %v1184 = vpop.permute.xlu0 %1183
    %1185 = vrot.lane.b32.xlu0 %v776, 32
    %v1186 = vpop.permute.xlu0 %1185
    %1191 = vrot.lane.b32.xlu0 %v972, 64
    %v1192 = vpop.permute.xlu0 %1191
    %1193 = vrot.lane.b32.xlu0 %v977, 64
    %v1194 = vpop.permute.xlu0 %1193
    %1199 = vrot.lane.b32.xlu0 %v1173, 96
    %v1200 = vpop.permute.xlu0 %1199
    %1201 = vrot.lane.b32.xlu0 %v1178, 96
    %v1202 = vpop.permute.xlu0 %1201
    %v1205 = vsel %vm380, %v569, %v1184
    %v1206 = vsel %vm380, %v574, %v1186
    %vm1207 = vcmask 523264
    %v1208 = vsel %vm1207, %v1205, %v1192
    %v1209 = vsel %vm1207, %v1206, %v1194
    %vm1210 = vcmask 785408
    %v1211 = vsel %vm1210, %v1208, %v1200
    %v1212 = vsel %vm1210, %v1209, %v1202
    %v1213 = vpack.c.bf16 %v1212, %v1211
    %v1214 = vld [vmem:[#allocation7] sm:$0xf]
    %v1215 = vld [vmem:[#allocation7 + $0x4] sm:$0xf]
    %v1216 = vld [vmem:[#allocation7 + $0x8] sm:$0xf]
    %v1217 = vld [vmem:[#allocation7 + $0xc] sm:$0xf]
    %v1218 = vld [vmem:[#allocation7 + $0x10] sm:$0xf]
    %v1219 = vld [vmem:[#allocation7 + $0x14] sm:$0xf]
    %v1220 = vld [vmem:[#allocation7 + $0x18] sm:$0xf]
    %v1221 = vld [vmem:[#allocation7 + $0x1c] sm:$0xf]
    %v1222 = vld [vmem:[#allocation7 + $0x20] sm:$0xf]
    %v1223 = vld [vmem:[#allocation7 + $0x24] sm:$0xf]
    %v1224 = vld [vmem:[#allocation7 + $0x28] sm:$0xf]
    %v1225 = vld [vmem:[#allocation7 + $0x2c] sm:$0xf]
    %v1226 = vld [vmem:[#allocation7 + $0x30] sm:$0xf]
    %v1227 = vld [vmem:[#allocation7 + $0x34] sm:$0xf]
    %v1228 = vld [vmem:[#allocation7 + $0x38] sm:$0xf]
    %v1229 = vld [vmem:[#allocation7 + $0x3c] sm:$0xf]
    %v1230 = vld [vmem:[#allocation9] sm:$0x1]
    %v1232 = vlaneseq
    %v1233 = vshrl.u32 %v1232, 7
    %v1234 = vsub.s32 0, %v1233
    %v1235 = vrot.slane %v1230, %v1234
    %v1253 = vunpack.c.l.b16 %v1214
    %v1254 = vunpack.c.l.b16 %v1215
    %v1255 = vunpack.c.l.b16 %v1216
    %v1256 = vunpack.c.l.b16 %v1217
    %v1257 = vunpack.c.l.b16 %v1218
    %v1258 = vunpack.c.l.b16 %v1219
    %v1259 = vunpack.c.l.b16 %v1220
    %v1260 = vunpack.c.l.b16 %v1221
    %v1261 = vunpack.c.l.b16 %v1222
    %v1262 = vunpack.c.l.b16 %v1223
    %v1263 = vunpack.c.l.b16 %v1224
    %v1264 = vunpack.c.l.b16 %v1225
    %v1265 = vunpack.c.l.b16 %v1226
    %v1266 = vunpack.c.l.b16 %v1227
    %v1267 = vunpack.c.l.b16 %v1228
    %v1268 = vunpack.c.l.b16 %v1229
    %v1269 = vpack.c.b16 %v1254, %v1253
    %v1270 = vpack.c.b16 %v1256, %v1255
    %v1271 = vpack.c.b16 %v1258, %v1257
    %v1272 = vpack.c.b16 %v1260, %v1259
    %v1273 = vpack.c.b16 %v1262, %v1261
    %v1274 = vpack.c.b16 %v1264, %v1263
    %v1275 = vpack.c.b16 %v1266, %v1265
    %v1276 = vpack.c.b16 %v1268, %v1267
    %1285 = vmatprep.subr.bf16.mxu0 0
    %1286 = vmatpush1.bf16.msra.mxu0 %v1276
    %1287 = vmatprep.subr.bf16.mxu0 0
    %1288 = vmatpush1.bf16.msra.mxu0 %v1275
    %1289 = vmatprep.subr.bf16.mxu0 0
    %1290 = vmatpush1.bf16.msra.mxu0 %v1274
    %1291 = vmatprep.subr.bf16.mxu0 0
    %1292 = vmatpush1.bf16.msra.mxu0 %v1273
    %1293 = vmatprep.subr.bf16.mxu0 0
    %1294 = vmatpush1.bf16.msra.mxu0 %v1272
    %1295 = vmatprep.subr.bf16.mxu0 0
    %1296 = vmatpush1.bf16.msra.mxu0 %v1271
    %1297 = vmatprep.subr.bf16.mxu0 0
    %1298 = vmatpush1.bf16.msra.mxu0 %v1270
    %1299 = vmatprep.subr.bf16.mxu0 0
    %1300 = vmatpush1.bf16.msra.mxu0 %v1269
    %1301 = vmatprep.subr.bf16.mxu0 0
    %1302 = vmatpush2.bf16.msra.mxu0 0
    %1303 = vmatprep.subr.bf16.mxu0 0
    %1304 = vmatpush2.bf16.msra.mxu0 0
    %1305 = vmatprep.subr.bf16.mxu0 0
    %1306 = vmatpush2.bf16.msra.mxu0 0
    %1307 = vmatprep.subr.bf16.mxu0 0
    %1308 = vmatpush2.bf16.msra.mxu0 0
    %1309 = vmatprep.subr.bf16.mxu0 0
    %1310 = vmatpush2.bf16.msra.mxu0 0
    %1311 = vmatprep.subr.bf16.mxu0 0
    %1312 = vmatpush2.bf16.msra.mxu0 0
    %1313 = vmatprep.subr.bf16.mxu0 0
    %1314 = vmatpush2.bf16.msra.mxu0 0
    %1315 = vmatprep.subr.bf16.mxu0 0
    %1316 = vmatpush2.bf16.msra.mxu0 0
    %1317 = vmatprep.mubr.bf16.mxu0 0
    %1318 = vmatmul.mubr.bf16.gmra.mxu0 %v1213
    %v1319 = vpop.f32.mrf.mxu0
    %v1320 = vadd.f32 %v1235, %v1319
    %v1321 = vpop.f32.mrf.mxu0
    %v1322 = vpop.f32.mrf.mxu0
    %v1323 = vadd.f32 %v1235, %v1322
    %v1324 = vpop.f32.mrf.mxu0
    %1325 = vdwg.mxu0
    %v1326 = vadd.f32 %v114, %v1320
    %v1327 = vadd.f32 %v115, %v1323
    %v1328 = vld [vmem:[#allocation10] sm:$0x1]
    %v1329 = vld [vmem:[#allocation12] sm:$0x1]
    %1330 = vadd.xlane.f32.xlu0 %v1326
    %v1331 = vpop.xlane.xlu0 %1330
    %v1332 = vsel %vm498, %v1327, 0.0
    %1333 = vadd.xlane.f32.xlu0 %v1332
    %v1334 = vpop.xlane.xlu0 %1333
    %v1335 = vrcp.pop 128.0
    %v1336 = vmul.f32 %v1331, %v1335
    %v1337 = vmul.f32 %v1334, %v1335
    %v1338 = vsub.f32 %v1326, %v1336
    %v1339 = vsub.f32 %v1327, %v1337
    %v1340 = vmul.f32 %v1338, %v1338
    %v1341 = vmul.f32 %v1339, %v1339
    %1342 = vadd.xlane.f32.xlu0 %v1340
    %v1343 = vpop.xlane.xlu0 %1342
    %v1344 = vsel %vm498, %v1341, 0.0
    %1345 = vadd.xlane.f32.xlu0 %v1344
    %v1346 = vpop.xlane.xlu0 %1345
    %v1347 = vmul.f32 %v1343, %v1335
    %v1348 = vmul.f32 %v1346, %v1335
    %v1349 = vadd.f32 %v1347, 1e-05
    %v1350 = vadd.f32 %v1348, 1e-05
    %v1351 = vrsqrt.pop %v1349
    %v1352 = vrsqrt.pop %v1350
    %v1353 = vmul.f32 %v1338, %v1351
    %v1354 = vmul.f32 %v1339, %v1352
    %v1356 = vlaneseq
    %v1357 = vshrl.u32 %v1356, 7
    %v1358 = vsub.s32 0, %v1357
    %v1359 = vrot.slane %v1328, %v1358
    %v1361 = vmul.f32 %v1353, %v1359
    %v1362 = vmul.f32 %v1354, %v1359
    %v1364 = vlaneseq
    %v1365 = vshrl.u32 %v1364, 7
    %v1366 = vsub.s32 0, %v1365
    %v1367 = vrot.slane %v1329, %v1366
    %v1369 = vadd.f32 %v1361, %v1367
    %v1370 = vadd.f32 %v1362, %v1367
    %1371 = vst [vmem:[%s7] sm:$0xff] %v1369
    %1372 = vst [vmem:[%s7 + $0x8] sm:$0xf] %v1370
    // Predicated region
    $region58: #{per_view_forward.4} parent=1 // pred_check
      _
    $region59: #{per_view_forward.4} parent=1 // pred_check_branch
      %1374 = sbr.rel (0) target = $region61
    $region60: #{per_view_forward.4} parent=1 // pred_region
      _
    $region61: #{per_view_forward.4} parent=1 // pred_fallthru
      _
    // Predicated region
    $region62: #{per_view_forward.4} parent=1 // pred_check
      _
    $region63: #{per_view_forward.4} parent=1 // pred_check_branch
      %1376 = sbr.rel (0) target = $region65
    $region64: #{per_view_forward.4} parent=1 // pred_region
      _
    $region65: #{per_view_forward.4} parent=1 // pred_fallthru
      _
    %1377 = vsyncpa [#allocation3], 1
    %1378 = vsyncpa [#allocation5], 1
    %1379 = vsyncpa [#allocation8], 1
    %1380 = vsyncpa [#allocation11], 1

// kernel: per_view_forward.5
$region0: #{per_view_forward.5}
  #allocation0 [shape = 'u32[]', space=smem, size = 0x4, offset = 0x4, fixed_abs, tag = 'smem constant byte address 0x4 - core index']
  #allocation1 [shape = 'u32[144,128]{1,0:T(1,128)}', space=vmem, size = 0x12000, scoped, tag = 'internal scratch']
  %s0 = inlined_call_operand.vmem [shape: f32[12,128], index: 0, kind: input, shape index: {}]
  %s1 = inlined_call_operand.hbm [shape: bf16[128,32768], index: 1, kind: input, shape index: {}]
  %s2 = inlined_call_operand.hbm [shape: f32[1,32768], index: 2, kind: input, shape index: {}]
  %s3 = inlined_call_operand.vmem [shape: f32[12,32768], index: 3, kind: output, shape index: {}]
  %s4 = sld [smem:[#allocation0]]
  $region72: #{per_view_forward.5} parent=0
    _
  %s6 = ssub.s32 1, %s4
  %s7 = scalar_select 0, %s6, %s4
  $region1: #{per_view_forward.5} parent=0
    #allocation2 [shape = 'u8[2097152]{0}', space=vmem, size = 0x200000, scoped, tag = 'input window, operand 1']
    #allocation3 [shape = 's32[2]{0}', space=sflag, size = 0x8, scoped, tag = 'scoped memory for per_view_forward.5']
    #allocation4 [shape = 'u8[32768]{0}', space=vmem, size = 0x8000, scoped, tag = 'input window, operand 2']
    #allocation5 [shape = 's32[2]{0}', space=sflag, size = 0x8, scoped, tag = 'scoped memory for per_view_forward.5']
    #allocation6 [shape = 'u8[524288]{0}', space=vmem, size = 0x80000, scoped, tag = 'output window, operand 0']
    %8 = vsyncpa [#allocation3], 0
    %s9 = scalar_lea.sflag [#allocation3], 1
    %10 = vsyncpa %s9, 0
    %11 = vsyncpa [#allocation5], 0
    %s12 = scalar_lea.sflag [#allocation5], 1
    %13 = vsyncpa %s12, 0
    loop: start=0, step=1, limit=10
    $region2: #{per_view_forward.5} parent=1 // loop_pre_header
      _
    $region3: #{per_view_forward.5} parent=1 // loop_header
      %s15 = sphi 0, %s19
      %p16 = scmp.ge.s32.totalorder %s15, 10
      %s23 = sphi 0, %s23
      %s25 = sphi 0, %s23
      %s26 = sphi 0, %s25
      %s40 = sphi 0, %s26
      %s46 = sphi 0, %s48
      %s49 = sphi 0, %s46
      %s50 = sphi 0, %s49
      %s66 = sphi 0, %s50
      %s72 = sphi 0, %s74
      %s75 = sphi 0, %s72
      %s76 = sphi 0, %s75
      %s92 = sphi 0, %s76
      %s98 = sphi 0, %s100
      %s101 = sphi 0, %s98
      %s102 = sphi 0, %s101
      %s118 = sphi 0, %s102
    $region4: #{per_view_forward.5} parent=1 // loop_header_branch
      %18 = sbr.rel (%p16) target = $region8
    $region5: #{per_view_forward.5} parent=1 // loop_body
      %s20 = ssub.s32 %s15, 1
      %s21 = ssub.s32 %s15, 2
      %s22 = sadd.s32 %s15, 1
      %s24 = sadd.s32 %s23, 1
      %p27 = scmp.eq.s32.totalorder %s15, 7
      %p28 = scmp.ne.s32.totalorder %s23, %s25
      %p29 = scmp.eq.s32.totalorder %s15, 0
      %p30 = por %p28, %p29
      %p31 = scmp.ne.s32.totalorder %s23, %s25
      %p32 = scmp.eq.s32.totalorder %s20, 7
      %p33 = por %p31, %p32
      %p34 = scmp.ne.s32.totalorder %s25, %s26
      %p35 = scmp.eq.s32.totalorder %s20, 0
      %p36 = por %p34, %p35
      %p37 = scmp.ne.s32.totalorder %s25, %s26
      %p38 = scmp.eq.s32.totalorder %s21, 7
      %p39 = por %p37, %p38
      %p41 = scmp.ne.s32.totalorder %s26, %s40
      %p42 = scmp.eq.s32.totalorder %s21, 0
      %p43 = por %p41, %p42
      %s44 = ssub.s32 %s15, %s22
      %p45 = scmp.eq.s32.totalorder %s44, 0
      %s47 = sadd.s32 %s46, 1
      %s48 = scalar_select %p45, %s46, %s47
      %p51 = pneg %p45
      %p52 = scmp.eq.s32.totalorder %s15, 7
      %p53 = por %p51, %p52
      %p54 = scmp.ne.s32.totalorder %s46, %s49
      %p55 = scmp.eq.s32.totalorder %s15, 0
      %p56 = por %p54, %p55
      %p57 = scmp.ne.s32.totalorder %s46, %s49
      %p58 = scmp.eq.s32.totalorder %s20, 7
      %p59 = por %p57, %p58
      %p60 = scmp.ne.s32.totalorder %s49, %s50
      %p61 = scmp.eq.s32.totalorder %s20, 0
      %p62 = por %p60, %p61
      %p63 = scmp.ne.s32.totalorder %s49, %s50
      %p64 = scmp.eq.s32.totalorder %s21, 7
      %p65 = por %p63, %p64
      %p67 = scmp.ne.s32.totalorder %s50, %s66
      %p68 = scmp.eq.s32.totalorder %s21, 0
      %p69 = por %p67, %p68
      %s70 = ssub.s32 %s15, %s22
      %p71 = scmp.eq.s32.totalorder %s70, 0
      %s73 = sadd.s32 %s72, 1
      %s74 = scalar_select %p71, %s72, %s73
      %p77 = pneg %p71
      %p78 = scmp.eq.s32.totalorder %s15, 7
      %p79 = por %p77, %p78
      %p80 = scmp.ne.s32.totalorder %s72, %s75
      %p81 = scmp.eq.s32.totalorder %s15, 0
      %p82 = por %p80, %p81
      %p83 = scmp.ne.s32.totalorder %s72, %s75
      %p84 = scmp.eq.s32.totalorder %s20, 7
      %p85 = por %p83, %p84
      %p86 = scmp.ne.s32.totalorder %s75, %s76
      %p87 = scmp.eq.s32.totalorder %s20, 0
      %p88 = por %p86, %p87
      %p89 = scmp.ne.s32.totalorder %s75, %s76
      %p90 = scmp.eq.s32.totalorder %s21, 7
      %p91 = por %p89, %p90
      %p93 = scmp.ne.s32.totalorder %s76, %s92
      %p94 = scmp.eq.s32.totalorder %s21, 0
      %p95 = por %p93, %p94
      %s96 = ssub.s32 %s15, %s22
      %p97 = scmp.eq.s32.totalorder %s96, 0
      %s99 = sadd.s32 %s98, 1
      %s100 = scalar_select %p97, %s98, %s99
      %p103 = pneg %p97
      %p104 = scmp.eq.s32.totalorder %s15, 7
      %p105 = por %p103, %p104
      %p106 = scmp.ne.s32.totalorder %s98, %s101
      %p107 = scmp.eq.s32.totalorder %s15, 0
      %p108 = por %p106, %p107
      %p109 = scmp.ne.s32.totalorder %s98, %s101
      %p110 = scmp.eq.s32.totalorder %s20, 7
      %p111 = por %p109, %p110
      %p112 = scmp.ne.s32.totalorder %s101, %s102
      %p113 = scmp.eq.s32.totalorder %s20, 0
      %p114 = por %p112, %p113
      %p115 = scmp.ne.s32.totalorder %s101, %s102
      %p116 = scmp.eq.s32.totalorder %s21, 7
      %p117 = por %p115, %p116
      %p119 = scmp.ne.s32.totalorder %s102, %s118
      %p120 = scmp.eq.s32.totalorder %s21, 0
      %p121 = por %p119, %p120
      %p122 = scmp.le.s32.totalorder 1, %s15
      %p123 = scmp.lt.s32.totalorder %s15, 9
      %p124 = pnand %p122, %p123
      %p125 = pneg %p124
      // Predicated region
      $region9: #{per_view_forward.5} parent=5 // pred_check
        _
      $region10: #{per_view_forward.5} parent=5 // pred_check_branch
        %127 = sbr.rel (%p124) target = $region12
      $region11: #{per_view_forward.5} parent=5 // pred_region
        %s128 = ssub.s32 %s15, 1
        // Predicated region
        $region13: #{per_view_forward.5} parent=11 // pred_check
          %p129 = pneg %p36
        $region14: #{per_view_forward.5} parent=11 // pred_check_branch
          %131 = sbr.rel (%p129) target = $region16
        $region15: #{per_view_forward.5} parent=11 // pred_region
          _
        $region16: #{per_view_forward.5} parent=11 // pred_fallthru
          _
      $region12: #{per_view_forward.5} parent=5 // pred_fallthru
        _
      %p132 = scmp.lt.s32.totalorder %s15, 8
      // Predicated region
      $region17: #{per_view_forward.5} parent=5 // pred_check
        %p133 = pneg %p132
      $region18: #{per_view_forward.5} parent=5 // pred_check_branch
        %135 = sbr.rel (%p133) target = $region20
      $region19: #{per_view_forward.5} parent=5 // pred_region
        // Predicated region
        $region21: #{per_view_forward.5} parent=19 // pred_check
          %p136 = pneg %p56
        $region22: #{per_view_forward.5} parent=19 // pred_check_branch
          %138 = sbr.rel (%p136) target = $region24
        $region23: #{per_view_forward.5} parent=19 // pred_region
          %s139 = sand.u32 %s46, 1
          %s140 = scalar_lea.sflag [#allocation3], %s139
          %s141 = sand.u32 %s46, 1
          %s142 = smul.addr %s141, 2048
          %s143 = scalar_lea.vmem [#allocation2], %s142
          %s144 = smul.u32 32, %s15
          %s146 = ssub.s32 32768, 32768
          %147 = vsyncadd %s140, %s146
          %s148 = smul.addr %s144, 64
          %s149 = scalar_lea.hbm %s1, %s148
          %s150 = sshll.u32 %s143, 4
          %s151 = int_to_ptr.vmem [resolvable:$true] %s150
          %156 = dma.hbm_to_vmem [thread:$0]  %s149, 32768, %s151, %s140, 16384, 2048, 128
        $region24: #{per_view_forward.5} parent=19 // pred_fallthru
          _
        // Predicated region
        $region25: #{per_view_forward.5} parent=19 // pred_check
          %p157 = pneg %p82
        $region26: #{per_view_forward.5} parent=19 // pred_check_branch
          %159 = sbr.rel (%p157) target = $region28
        $region27: #{per_view_forward.5} parent=19 // pred_region
          %s160 = sand.u32 %s72, 1
          %s161 = scalar_lea.sflag [#allocation5], %s160
          %s162 = sand.u32 %s72, 1
          %s163 = smul.addr %s162, 32
          %s164 = scalar_lea.vmem [#allocation4], %s163
          %s165 = smul.u32 32, %s15
          %s167 = ssub.s32 512, 512
          %168 = vsyncadd %s161, %s167
          %s169 = smul.addr %s165, 16
          %s170 = scalar_lea.hbm %s2, %s169
          %s172 = sshll.u32 %s164, 4
          %s173 = int_to_ptr.vmem [resolvable:$true] %s172
          %175 = dma.hbm_to_vmem [thread:$0]  %s170, 512, %s173, %s161
        $region28: #{per_view_forward.5} parent=19 // pred_fallthru
          _
      $region20: #{per_view_forward.5} parent=5 // pred_fallthru
        _
      %p176 = scmp.le.s32.totalorder 1, %s15
      %p177 = scmp.lt.s32.totalorder %s15, 9
      %p178 = pnand %p176, %p177
      %p179 = pneg %p178
      // Predicated region
      $region29: #{per_view_forward.5} parent=5 // pred_check
        _
      $region30: #{per_view_forward.5} parent=5 // pred_check_branch
        %181 = sbr.rel (%p178) target = $region32
      $region31: #{per_view_forward.5} parent=5 // pred_region
        %s182 = ssub.s32 %s15, 1
        %s183 = sand.u32 %s49, 1
        %s184 = scalar_lea.sflag [#allocation3], %s183
        %s185 = sand.u32 %s49, 1
        %s186 = smul.addr %s185, 2048
        %s187 = scalar_lea.vmem [#allocation2], %s186
        // Predicated region
        $region33: #{per_view_forward.5} parent=31 // pred_check
          %p188 = pneg %p62
        $region34: #{per_view_forward.5} parent=31 // pred_check_branch
          %190 = sbr.rel (%p188) target = $region36
        $region35: #{per_view_forward.5} parent=31 // pred_region
          %191 = dma.done %s184, 32768
        $region36: #{per_view_forward.5} parent=31 // pred_fallthru
          _
        %s192 = sand.u32 %s75, 1
        %s193 = scalar_lea.sflag [#allocation5], %s192
        %s194 = sand.u32 %s75, 1
        %s195 = smul.addr %s194, 32
        %s196 = scalar_lea.vmem [#allocation4], %s195
        // Predicated region
        $region37: #{per_view_forward.5} parent=31 // pred_check
          %p197 = pneg %p88
        $region38: #{per_view_forward.5} parent=31 // pred_check_branch
          %199 = sbr.rel (%p197) target = $region40
        $region39: #{per_view_forward.5} parent=31 // pred_region
          %200 = dma.done %s193, 512
        $region40: #{per_view_forward.5} parent=31 // pred_fallthru
          _
        %p201 = pneg %p36
        %p202 = pneg %p33
        %s203 = sand.u32 %s49, 1
        %s204 = scalar_lea.sflag [#allocation3], %s203
        %s205 = sand.u32 %s49, 1
        %s206 = smul.addr %s205, 2048
        %s207 = scalar_lea.vmem [#allocation2], %s206
        %p208 = pneg %p62
        %p209 = pneg %p59
        %s210 = sand.u32 %s75, 1
        %s211 = scalar_lea.sflag [#allocation5], %s210
        %s212 = sand.u32 %s75, 1
        %s213 = smul.addr %s212, 32
        %s214 = scalar_lea.vmem [#allocation4], %s213
        %p215 = pneg %p88
        %p216 = pneg %p85
        %p217 = pneg %p114
        %p218 = pneg %p111
        %s219 = sand.u32 %s101, 1
        %s220 = sand.u32 %s101, 1
        %s221 = smul.addr %s220, 512
        %s222 = scalar_lea.vmem [#allocation6], %s221
        %s223 = smul.u32 32, %s20
        %s224 = smul.u32 32, %s20
        %s225 = smul.u32 32, %s20
        %v227 = vld [vmem:[%s0] sm:$0xff]
        %v228 = vld [vmem:[%s0 + $0x8] sm:$0xf]
        %v229 = vpack.c.bf16 %v228, %v227
        %v230 = vld [vmem:[%s187] sm:$0xff]
        %v231 = vld [vmem:[%s187 + $0x8] sm:$0xff]
        %v232 = vld [vmem:[%s187 + $0x10] sm:$0xff]
        %v233 = vld [vmem:[%s187 + $0x18] sm:$0xff]
        %v234 = vld [vmem:[%s187 + $0x20] sm:$0xff]
        %v235 = vld [vmem:[%s187 + $0x28] sm:$0xff]
        %v236 = vld [vmem:[%s187 + $0x30] sm:$0xff]
        %v237 = vld [vmem:[%s187 + $0x38] sm:$0xff]
        %v238 = vld [vmem:[%s187 + $0x40] sm:$0xff]
        %v239 = vld [vmem:[%s187 + $0x48] sm:$0xff]
        %v240 = vld [vmem:[%s187 + $0x50] sm:$0xff]
        %v241 = vld [vmem:[%s187 + $0x58] sm:$0xff]
        %v242 = vld [vmem:[%s187 + $0x60] sm:$0xff]
        %v243 = vld [vmem:[%s187 + $0x68] sm:$0xff]
        %v244 = vld [vmem:[%s187 + $0x70] sm:$0xff]
        %v245 = vld [vmem:[%s187 + $0x78] sm:$0xff]
        %v246 = vld [vmem:[%s187 + $0x80] sm:$0xff]
        %v247 = vld [vmem:[%s187 + $0x88] sm:$0xff]
        %v248 = vld [vmem:[%s187 + $0x90] sm:$0xff]
        %v249 = vld [vmem:[%s187 + $0x98] sm:$0xff]
        %v250 = vld [vmem:[%s187 + $0xa0] sm:$0xff]
        %v251 = vld [vmem:[%s187 + $0xa8] sm:$0xff]
        %v252 = vld [vmem:[%s187 + $0xb0] sm:$0xff]
        %v253 = vld [vmem:[%s187 + $0xb8] sm:$0xff]
        %v254 = vld [vmem:[%s187 + $0xc0] sm:$0xff]
        %v255 = vld [vmem:[%s187 + $0xc8] sm:$0xff]
        %v256 = vld [vmem:[%s187 + $0xd0] sm:$0xff]
        %v257 = vld [vmem:[%s187 + $0xd8] sm:$0xff]
        %v258 = vld [vmem:[%s187 + $0xe0] sm:$0xff]
        %v259 = vld [vmem:[%s187 + $0xe8] sm:$0xff]
        %v260 = vld [vmem:[%s187 + $0xf0] sm:$0xff]
        %v261 = vld [vmem:[%s187 + $0xf8] sm:$0xff]
        %v262 = vld [vmem:[%s187 + $0x100] sm:$0xff]
        %v263 = vld [vmem:[%s187 + $0x108] sm:$0xff]
        %v264 = vld [vmem:[%s187 + $0x110] sm:$0xff]
        %v265 = vld [vmem:[%s187 + $0x118] sm:$0xff]
        %v266 = vld [vmem:[%s187 + $0x120] sm:$0xff]
        %v267 = vld [vmem:[%s187 + $0x128] sm:$0xff]
        %v268 = vld [vmem:[%s187 + $0x130] sm:$0xff]
        %v269 = vld [vmem:[%s187 + $0x138] sm:$0xff]
        %v270 = vld [vmem:[%s187 + $0x140] sm:$0xff]
        %v271 = vld [vmem:[%s187 + $0x148] sm:$0xff]
        %v272 = vld [vmem:[%s187 + $0x150] sm:$0xff]
        %v273 = vld [vmem:[%s187 + $0x158] sm:$0xff]
        %v274 = vld [vmem:[%s187 + $0x160] sm:$0xff]
        %v275 = vld [vmem:[%s187 + $0x168] sm:$0xff]
        %v276 = vld [vmem:[%s187 + $0x170] sm:$0xff]
        %v277 = vld [vmem:[%s187 + $0x178] sm:$0xff]
        %v278 = vld [vmem:[%s187 + $0x180] sm:$0xff]
        %v279 = vld [vmem:[%s187 + $0x188] sm:$0xff]
        %v280 = vld [vmem:[%s187 + $0x190] sm:$0xff]
        %v281 = vld [vmem:[%s187 + $0x198] sm:$0xff]
        %v282 = vld [vmem:[%s187 + $0x1a0] sm:$0xff]
        %v283 = vld [vmem:[%s187 + $0x1a8] sm:$0xff]
        %v284 = vld [vmem:[%s187 + $0x1b0] sm:$0xff]
        %v285 = vld [vmem:[%s187 + $0x1b8] sm:$0xff]
        %v286 = vld [vmem:[%s187 + $0x1c0] sm:$0xff]
        %v287 = vld [vmem:[%s187 + $0x1c8] sm:$0xff]
        %v288 = vld [vmem:[%s187 + $0x1d0] sm:$0xff]
        %v289 = vld [vmem:[%s187 + $0x1d8] sm:$0xff]
        %v290 = vld [vmem:[%s187 + $0x1e0] sm:$0xff]
        %v291 = vld [vmem:[%s187 + $0x1e8] sm:$0xff]
        %v292 = vld [vmem:[%s187 + $0x1f0] sm:$0xff]
        %v293 = vld [vmem:[%s187 + $0x1f8] sm:$0xff]
        %v294 = vld [vmem:[%s187 + $0x200] sm:$0xff]
        %v295 = vld [vmem:[%s187 + $0x208] sm:$0xff]
        %v296 = vld [vmem:[%s187 + $0x210] sm:$0xff]
        %v297 = vld [vmem:[%s187 + $0x218] sm:$0xff]
        %v298 = vld [vmem:[%s187 + $0x220] sm:$0xff]
        %v299 = vld [vmem:[%s187 + $0x228] sm:$0xff]
        %v300 = vld [vmem:[%s187 + $0x230] sm:$0xff]
        %v301 = vld [vmem:[%s187 + $0x238] sm:$0xff]
        %v302 = vld [vmem:[%s187 + $0x240] sm:$0xff]
        %v303 = vld [vmem:[%s187 + $0x248] sm:$0xff]
        %v304 = vld [vmem:[%s187 + $0x250] sm:$0xff]
        %v305 = vld [vmem:[%s187 + $0x258] sm:$0xff]
        %v306 = vld [vmem:[%s187 + $0x260] sm:$0xff]
        %v307 = vld [vmem:[%s187 + $0x268] sm:$0xff]
        %v308 = vld [vmem:[%s187 + $0x270] sm:$0xff]
        %v309 = vld [vmem:[%s187 + $0x278] sm:$0xff]
        %v310 = vld [vmem:[%s187 + $0x280] sm:$0xff]
        %v311 = vld [vmem:[%s187 + $0x288] sm:$0xff]
        %v312 = vld [vmem:[%s187 + $0x290] sm:$0xff]
        %v313 = vld [vmem:[%s187 + $0x298] sm:$0xff]
        %v314 = vld [vmem:[%s187 + $0x2a0] sm:$0xff]
        %v315 = vld [vmem:[%s187 + $0x2a8] sm:$0xff]
        %v316 = vld [vmem:[%s187 + $0x2b0] sm:$0xff]
        %v317 = vld [vmem:[%s187 + $0x2b8] sm:$0xff]
        %v318 = vld [vmem:[%s187 + $0x2c0] sm:$0xff]
        %v319 = vld [vmem:[%s187 + $0x2c8] sm:$0xff]
        %v320 = vld [vmem:[%s187 + $0x2d0] sm:$0xff]
        %v321 = vld [vmem:[%s187 + $0x2d8] sm:$0xff]
        %v322 = vld [vmem:[%s187 + $0x2e0] sm:$0xff]
        %v323 = vld [vmem:[%s187 + $0x2e8] sm:$0xff]
        %v324 = vld [vmem:[%s187 + $0x2f0] sm:$0xff]
        %v325 = vld [vmem:[%s187 + $0x2f8] sm:$0xff]
        %v326 = vld [vmem:[%s187 + $0x300] sm:$0xff]
        %v327 = vld [vmem:[%s187 + $0x308] sm:$0xff]
        %v328 = vld [vmem:[%s187 + $0x310] sm:$0xff]
        %v329 = vld [vmem:[%s187 + $0x318] sm:$0xff]
        %v330 = vld [vmem:[%s187 + $0x320] sm:$0xff]
        %v331 = vld [vmem:[%s187 + $0x328] sm:$0xff]
        %v332 = vld [vmem:[%s187 + $0x330] sm:$0xff]
        %v333 = vld [vmem:[%s187 + $0x338] sm:$0xff]
        %v334 = vld [vmem:[%s187 + $0x340] sm:$0xff]
        %v335 = vld [vmem:[%s187 + $0x348] sm:$0xff]
        %v336 = vld [vmem:[%s187 + $0x350] sm:$0xff]
        %v337 = vld [vmem:[%s187 + $0x358] sm:$0xff]
        %v338 = vld [vmem:[%s187 + $0x360] sm:$0xff]
        %v339 = vld [vmem:[%s187 + $0x368] sm:$0xff]
        %v340 = vld [vmem:[%s187 + $0x370] sm:$0xff]
        %v341 = vld [vmem:[%s187 + $0x378] sm:$0xff]
        %v342 = vld [vmem:[%s187 + $0x380] sm:$0xff]
        %v343 = vld [vmem:[%s187 + $0x388] sm:$0xff]
        %v344 = vld [vmem:[%s187 + $0x390] sm:$0xff]
        %v345 = vld [vmem:[%s187 + $0x398] sm:$0xff]
        %v346 = vld [vmem:[%s187 + $0x3a0] sm:$0xff]
        %v347 = vld [vmem:[%s187 + $0x3a8] sm:$0xff]
        %v348 = vld [vmem:[%s187 + $0x3b0] sm:$0xff]
        %v349 = vld [vmem:[%s187 + $0x3b8] sm:$0xff]
        %v350 = vld [vmem:[%s187 + $0x3c0] sm:$0xff]
        %v351 = vld [vmem:[%s187 + $0x3c8] sm:$0xff]
        %v352 = vld [vmem:[%s187 + $0x3d0] sm:$0xff]
        %v353 = vld [vmem:[%s187 + $0x3d8] sm:$0xff]
        %v354 = vld [vmem:[%s187 + $0x3e0] sm:$0xff]
        %v355 = vld [vmem:[%s187 + $0x3e8] sm:$0xff]
        %v356 = vld [vmem:[%s187 + $0x3f0] sm:$0xff]
        %v357 = vld [vmem:[%s187 + $0x3f8] sm:$0xff]
        %v358 = vld [vmem:[%s187 + $0x400] sm:$0xff]
        %v359 = vld [vmem:[%s187 + $0x408] sm:$0xff]
        %v360 = vld [vmem:[%s187 + $0x410] sm:$0xff]
        %v361 = vld [vmem:[%s187 + $0x418] sm:$0xff]
        %v362 = vld [vmem:[%s187 + $0x420] sm:$0xff]
        %v363 = vld [vmem:[%s187 + $0x428] sm:$0xff]
        %v364 = vld [vmem:[%s187 + $0x430] sm:$0xff]
        %v365 = vld [vmem:[%s187 + $0x438] sm:$0xff]
        %v366 = vld [vmem:[%s187 + $0x440] sm:$0xff]
        %v367 = vld [vmem:[%s187 + $0x448] sm:$0xff]
        %v368 = vld [vmem:[%s187 + $0x450] sm:$0xff]
        %v369 = vld [vmem:[%s187 + $0x458] sm:$0xff]
        %v370 = vld [vmem:[%s187 + $0x460] sm:$0xff]
        %v371 = vld [vmem:[%s187 + $0x468] sm:$0xff]
        %v372 = vld [vmem:[%s187 + $0x470] sm:$0xff]
        %v373 = vld [vmem:[%s187 + $0x478] sm:$0xff]
        %v374 = vld [vmem:[%s187 + $0x480] sm:$0xff]
        %v375 = vld [vmem:[%s187 + $0x488] sm:$0xff]
        %v376 = vld [vmem:[%s187 + $0x490] sm:$0xff]
        %v377 = vld [vmem:[%s187 + $0x498] sm:$0xff]
        %v378 = vld [vmem:[%s187 + $0x4a0] sm:$0xff]
        %v379 = vld [vmem:[%s187 + $0x4a8] sm:$0xff]
        %v380 = vld [vmem:[%s187 + $0x4b0] sm:$0xff]
        %v381 = vld [vmem:[%s187 + $0x4b8] sm:$0xff]
        %v382 = vld [vmem:[%s187 + $0x4c0] sm:$0xff]
        %v383 = vld [vmem:[%s187 + $0x4c8] sm:$0xff]
        %v384 = vld [vmem:[%s187 + $0x4d0] sm:$0xff]
        %v385 = vld [vmem:[%s187 + $0x4d8] sm:$0xff]
        %v386 = vld [vmem:[%s187 + $0x4e0] sm:$0xff]
        %v387 = vld [vmem:[%s187 + $0x4e8] sm:$0xff]
        %v388 = vld [vmem:[%s187 + $0x4f0] sm:$0xff]
        %v389 = vld [vmem:[%s187 + $0x4f8] sm:$0xff]
        %v390 = vld [vmem:[%s187 + $0x500] sm:$0xff]
        %v391 = vld [vmem:[%s187 + $0x508] sm:$0xff]
        %v392 = vld [vmem:[%s187 + $0x510] sm:$0xff]
        %v393 = vld [vmem:[%s187 + $0x518] sm:$0xff]
        %v394 = vld [vmem:[%s187 + $0x520] sm:$0xff]
        %v395 = vld [vmem:[%s187 + $0x528] sm:$0xff]
        %v396 = vld [vmem:[%s187 + $0x530] sm:$0xff]
        %v397 = vld [vmem:[%s187 + $0x538] sm:$0xff]
        %v398 = vld [vmem:[%s187 + $0x540] sm:$0xff]
        %v399 = vld [vmem:[%s187 + $0x548] sm:$0xff]
        %v400 = vld [vmem:[%s187 + $0x550] sm:$0xff]
        %v401 = vld [vmem:[%s187 + $0x558] sm:$0xff]
        %v402 = vld [vmem:[%s187 + $0x560] sm:$0xff]
        %v403 = vld [vmem:[%s187 + $0x568] sm:$0xff]
        %v404 = vld [vmem:[%s187 + $0x570] sm:$0xff]
        %v405 = vld [vmem:[%s187 + $0x578] sm:$0xff]
        %v406 = vld [vmem:[%s187 + $0x580] sm:$0xff]
        %v407 = vld [vmem:[%s187 + $0x588] sm:$0xff]
        %v408 = vld [vmem:[%s187 + $0x590] sm:$0xff]
        %v409 = vld [vmem:[%s187 + $0x598] sm:$0xff]
        %v410 = vld [vmem:[%s187 + $0x5a0] sm:$0xff]
        %v411 = vld [vmem:[%s187 + $0x5a8] sm:$0xff]
        %v412 = vld [vmem:[%s187 + $0x5b0] sm:$0xff]
        %v413 = vld [vmem:[%s187 + $0x5b8] sm:$0xff]
        %v414 = vld [vmem:[%s187 + $0x5c0] sm:$0xff]
        %v415 = vld [vmem:[%s187 + $0x5c8] sm:$0xff]
        %v416 = vld [vmem:[%s187 + $0x5d0] sm:$0xff]
        %v417 = vld [vmem:[%s187 + $0x5d8] sm:$0xff]
        %v418 = vld [vmem:[%s187 + $0x5e0] sm:$0xff]
        %v419 = vld [vmem:[%s187 + $0x5e8] sm:$0xff]
        %v420 = vld [vmem:[%s187 + $0x5f0] sm:$0xff]
        %v421 = vld [vmem:[%s187 + $0x5f8] sm:$0xff]
        %v422 = vld [vmem:[%s187 + $0x600] sm:$0xff]
        %v423 = vld [vmem:[%s187 + $0x608] sm:$0xff]
        %v424 = vld [vmem:[%s187 + $0x610] sm:$0xff]
        %v425 = vld [vmem:[%s187 + $0x618] sm:$0xff]
        %v426 = vld [vmem:[%s187 + $0x620] sm:$0xff]
        %v427 = vld [vmem:[%s187 + $0x628] sm:$0xff]
        %v428 = vld [vmem:[%s187 + $0x630] sm:$0xff]
        %v429 = vld [vmem:[%s187 + $0x638] sm:$0xff]
        %v430 = vld [vmem:[%s187 + $0x640] sm:$0xff]
        %v431 = vld [vmem:[%s187 + $0x648] sm:$0xff]
        %v432 = vld [vmem:[%s187 + $0x650] sm:$0xff]
        %v433 = vld [vmem:[%s187 + $0x658] sm:$0xff]
        %v434 = vld [vmem:[%s187 + $0x660] sm:$0xff]
        %v435 = vld [vmem:[%s187 + $0x668] sm:$0xff]
        %v436 = vld [vmem:[%s187 + $0x670] sm:$0xff]
        %v437 = vld [vmem:[%s187 + $0x678] sm:$0xff]
        %v438 = vld [vmem:[%s187 + $0x680] sm:$0xff]
        %v439 = vld [vmem:[%s187 + $0x688] sm:$0xff]
        %v440 = vld [vmem:[%s187 + $0x690] sm:$0xff]
        %v441 = vld [vmem:[%s187 + $0x698] sm:$0xff]
        %v442 = vld [vmem:[%s187 + $0x6a0] sm:$0xff]
        %v443 = vld [vmem:[%s187 + $0x6a8] sm:$0xff]
        %v444 = vld [vmem:[%s187 + $0x6b0] sm:$0xff]
        %v445 = vld [vmem:[%s187 + $0x6b8] sm:$0xff]
        %v446 = vld [vmem:[%s187 + $0x6c0] sm:$0xff]
        %v447 = vld [vmem:[%s187 + $0x6c8] sm:$0xff]
        %v448 = vld [vmem:[%s187 + $0x6d0] sm:$0xff]
        %v449 = vld [vmem:[%s187 + $0x6d8] sm:$0xff]
        %v450 = vld [vmem:[%s187 + $0x6e0] sm:$0xff]
        %v451 = vld [vmem:[%s187 + $0x6e8] sm:$0xff]
        %v452 = vld [vmem:[%s187 + $0x6f0] sm:$0xff]
        %v453 = vld [vmem:[%s187 + $0x6f8] sm:$0xff]
        %v454 = vld [vmem:[%s187 + $0x700] sm:$0xff]
        %v455 = vld [vmem:[%s187 + $0x708] sm:$0xff]
        %v456 = vld [vmem:[%s187 + $0x710] sm:$0xff]
        %v457 = vld [vmem:[%s187 + $0x718] sm:$0xff]
        %v458 = vld [vmem:[%s187 + $0x720] sm:$0xff]
        %v459 = vld [vmem:[%s187 + $0x728] sm:$0xff]
        %v460 = vld [vmem:[%s187 + $0x730] sm:$0xff]
        %v461 = vld [vmem:[%s187 + $0x738] sm:$0xff]
        %v462 = vld [vmem:[%s187 + $0x740] sm:$0xff]
        %v463 = vld [vmem:[%s187 + $0x748] sm:$0xff]
        %v464 = vld [vmem:[%s187 + $0x750] sm:$0xff]
        %v465 = vld [vmem:[%s187 + $0x758] sm:$0xff]
        %v466 = vld [vmem:[%s187 + $0x760] sm:$0xff]
        %v467 = vld [vmem:[%s187 + $0x768] sm:$0xff]
        %v468 = vld [vmem:[%s187 + $0x770] sm:$0xff]
        %v469 = vld [vmem:[%s187 + $0x778] sm:$0xff]
        %v470 = vld [vmem:[%s187 + $0x780] sm:$0xff]
        %v471 = vld [vmem:[%s187 + $0x788] sm:$0xff]
        %v472 = vld [vmem:[%s187 + $0x790] sm:$0xff]
        %v473 = vld [vmem:[%s187 + $0x798] sm:$0xff]
        %v474 = vld [vmem:[%s187 + $0x7a0] sm:$0xff]
        %v475 = vld [vmem:[%s187 + $0x7a8] sm:$0xff]
        %v476 = vld [vmem:[%s187 + $0x7b0] sm:$0xff]
        %v477 = vld [vmem:[%s187 + $0x7b8] sm:$0xff]
        %v478 = vld [vmem:[%s187 + $0x7c0] sm:$0xff]
        %v479 = vld [vmem:[%s187 + $0x7c8] sm:$0xff]
        %v480 = vld [vmem:[%s187 + $0x7d0] sm:$0xff]
        %v481 = vld [vmem:[%s187 + $0x7d8] sm:$0xff]
        %v482 = vld [vmem:[%s187 + $0x7e0] sm:$0xff]
        %v483 = vld [vmem:[%s187 + $0x7e8] sm:$0xff]
        %v484 = vld [vmem:[%s187 + $0x7f0] sm:$0xff]
        %v485 = vld [vmem:[%s187 + $0x7f8] sm:$0xff]
        %v486 = vld [vmem:[%s196] sm:$0xff]
        %v487 = vld [vmem:[%s196 + $0x8] sm:$0xff]
        %v488 = vld [vmem:[%s196 + $0x10] sm:$0xff]
        %v489 = vld [vmem:[%s196 + $0x18] sm:$0xff]
        %v494 = vlaneseq
        %v495 = vshrl.u32 %v494, 7
        %v496 = vsub.s32 0, %v495
        %v497 = vrot.slane %v486, %v496
        %v498 = vlaneseq
        %v499 = vshrl.u32 %v498, 7
        %v500 = vsub.s32 1, %v499
        %v501 = vrot.slane %v486, %v500
        %v502 = vlaneseq
        %v503 = vshrl.u32 %v502, 7
        %v504 = vsub.s32 2, %v503
        %v505 = vrot.slane %v486, %v504
        %v506 = vlaneseq
        %v507 = vshrl.u32 %v506, 7
        %v508 = vsub.s32 3, %v507
        %v509 = vrot.slane %v486, %v508
        %v510 = vlaneseq
        %v511 = vshrl.u32 %v510, 7
        %v512 = vsub.s32 4, %v511
        %v513 = vrot.slane %v486, %v512
        %v514 = vlaneseq
        %v515 = vshrl.u32 %v514, 7
        %v516 = vsub.s32 5, %v515
        %v517 = vrot.slane %v486, %v516
        %v518 = vlaneseq
        %v519 = vshrl.u32 %v518, 7
        %v520 = vsub.s32 6, %v519
        %v521 = vrot.slane %v486, %v520
        %v522 = vlaneseq
        %v523 = vshrl.u32 %v522, 7
        %v524 = vsub.s32 7, %v523
        %v525 = vrot.slane %v486, %v524
        %v526 = vlaneseq
        %v527 = vshrl.u32 %v526, 7
        %v528 = vsub.s32 0, %v527
        %v529 = vrot.slane %v487, %v528
        %v530 = vlaneseq
        %v531 = vshrl.u32 %v530, 7
        %v532 = vsub.s32 1, %v531
        %v533 = vrot.slane %v487, %v532
        %v534 = vlaneseq
        %v535 = vshrl.u32 %v534, 7
        %v536 = vsub.s32 2, %v535
        %v537 = vrot.slane %v487, %v536
        %v538 = vlaneseq
        %v539 = vshrl.u32 %v538, 7
        %v540 = vsub.s32 3, %v539
        %v541 = vrot.slane %v487, %v540
        %v542 = vlaneseq
        %v543 = vshrl.u32 %v542, 7
        %v544 = vsub.s32 4, %v543
        %v545 = vrot.slane %v487, %v544
        %v546 = vlaneseq
        %v547 = vshrl.u32 %v546, 7
        %v548 = vsub.s32 5, %v547
        %v549 = vrot.slane %v487, %v548
        %v550 = vlaneseq
        %v551 = vshrl.u32 %v550, 7
        %v552 = vsub.s32 6, %v551
        %v553 = vrot.slane %v487, %v552
        %v554 = vlaneseq
        %v555 = vshrl.u32 %v554, 7
        %v556 = vsub.s32 7, %v555
        %v557 = vrot.slane %v487, %v556
        %v558 = vlaneseq
        %v559 = vshrl.u32 %v558, 7
        %v560 = vsub.s32 0, %v559
        %v561 = vrot.slane %v488, %v560
        %v562 = vlaneseq
        %v563 = vshrl.u32 %v562, 7
        %v564 = vsub.s32 1, %v563
        %v565 = vrot.slane %v488, %v564
        %v566 = vlaneseq
        %v567 = vshrl.u32 %v566, 7
        %v568 = vsub.s32 2, %v567
        %v569 = vrot.slane %v488, %v568
        %v570 = vlaneseq
        %v571 = vshrl.u32 %v570, 7
        %v572 = vsub.s32 3, %v571
        %v573 = vrot.slane %v488, %v572
        %v574 = vlaneseq
        %v575 = vshrl.u32 %v574, 7
        %v576 = vsub.s32 4, %v575
        %v577 = vrot.slane %v488, %v576
        %v578 = vlaneseq
        %v579 = vshrl.u32 %v578, 7
        %v580 = vsub.s32 5, %v579
        %v581 = vrot.slane %v488, %v580
        %v582 = vlaneseq
        %v583 = vshrl.u32 %v582, 7
        %v584 = vsub.s32 6, %v583
        %v585 = vrot.slane %v488, %v584
        %v586 = vlaneseq
        %v587 = vshrl.u32 %v586, 7
        %v588 = vsub.s32 7, %v587
        %v589 = vrot.slane %v488, %v588
        %v590 = vlaneseq
        %v591 = vshrl.u32 %v590, 7
        %v592 = vsub.s32 0, %v591
        %v593 = vrot.slane %v489, %v592
        %v594 = vlaneseq
        %v595 = vshrl.u32 %v594, 7
        %v596 = vsub.s32 1, %v595
        %v597 = vrot.slane %v489, %v596
        %v598 = vlaneseq
        %v599 = vshrl.u32 %v598, 7
        %v600 = vsub.s32 2, %v599
        %v601 = vrot.slane %v489, %v600
        %v602 = vlaneseq
        %v603 = vshrl.u32 %v602, 7
        %v604 = vsub.s32 3, %v603
        %v605 = vrot.slane %v489, %v604
        %v606 = vlaneseq
        %v607 = vshrl.u32 %v606, 7
        %v608 = vsub.s32 4, %v607
        %v609 = vrot.slane %v489, %v608
        %v610 = vlaneseq
        %v611 = vshrl.u32 %v610, 7
        %v612 = vsub.s32 5, %v611
        %v613 = vrot.slane %v489, %v612
        %v614 = vlaneseq
        %v615 = vshrl.u32 %v614, 7
        %v616 = vsub.s32 6, %v615
        %v617 = vrot.slane %v489, %v616
        %v618 = vlaneseq
        %v619 = vshrl.u32 %v618, 7
        %v620 = vsub.s32 7, %v619
        %v621 = vrot.slane %v489, %v620
        %v910 = vunpack.c.l.b16 %v230
        %v911 = vunpack.c.h.b16 %v230
        %v912 = vunpack.c.l.b16 %v231
        %v913 = vunpack.c.h.b16 %v231
        %v914 = vunpack.c.l.b16 %v232
        %v915 = vunpack.c.h.b16 %v232
        %v916 = vunpack.c.l.b16 %v233
        %v917 = vunpack.c.h.b16 %v233
        %v918 = vunpack.c.l.b16 %v234
        %v919 = vunpack.c.h.b16 %v234
        %v920 = vunpack.c.l.b16 %v235
        %v921 = vunpack.c.h.b16 %v235
        %v922 = vunpack.c.l.b16 %v236
        %v923 = vunpack.c.h.b16 %v236
        %v924 = vunpack.c.l.b16 %v237
        %v925 = vunpack.c.h.b16 %v237
        %v926 = vunpack.c.l.b16 %v238
        %v927 = vunpack.c.h.b16 %v238
        %v928 = vunpack.c.l.b16 %v239
        %v929 = vunpack.c.h.b16 %v239
        %v930 = vunpack.c.l.b16 %v240
        %v931 = vunpack.c.h.b16 %v240
        %v932 = vunpack.c.l.b16 %v241
        %v933 = vunpack.c.h.b16 %v241
        %v934 = vunpack.c.l.b16 %v242
        %v935 = vunpack.c.h.b16 %v242
        %v936 = vunpack.c.l.b16 %v243
        %v937 = vunpack.c.h.b16 %v243
        %v938 = vunpack.c.l.b16 %v244
        %v939 = vunpack.c.h.b16 %v244
        %v940 = vunpack.c.l.b16 %v245
        %v941 = vunpack.c.h.b16 %v245
        %v942 = vunpack.c.l.b16 %v246
        %v943 = vunpack.c.h.b16 %v246
        %v944 = vunpack.c.l.b16 %v247
        %v945 = vunpack.c.h.b16 %v247
        %v946 = vunpack.c.l.b16 %v248
        %v947 = vunpack.c.h.b16 %v248
        %v948 = vunpack.c.l.b16 %v249
        %v949 = vunpack.c.h.b16 %v249
        %v950 = vunpack.c.l.b16 %v250
        %v951 = vunpack.c.h.b16 %v250
        %v952 = vunpack.c.l.b16 %v251
        %v953 = vunpack.c.h.b16 %v251
        %v954 = vunpack.c.l.b16 %v252
        %v955 = vunpack.c.h.b16 %v252
        %v956 = vunpack.c.l.b16 %v253
        %v957 = vunpack.c.h.b16 %v253
        %v958 = vunpack.c.l.b16 %v254
        %v959 = vunpack.c.h.b16 %v254
        %v960 = vunpack.c.l.b16 %v255
        %v961 = vunpack.c.h.b16 %v255
        %v962 = vunpack.c.l.b16 %v256
        %v963 = vunpack.c.h.b16 %v256
        %v964 = vunpack.c.l.b16 %v257
        %v965 = vunpack.c.h.b16 %v257
        %v966 = vunpack.c.l.b16 %v258
        %v967 = vunpack.c.h.b16 %v258
        %v968 = vunpack.c.l.b16 %v259
        %v969 = vunpack.c.h.b16 %v259
        %v970 = vunpack.c.l.b16 %v260
        %v971 = vunpack.c.h.b16 %v260
        %v972 = vunpack.c.l.b16 %v261
        %v973 = vunpack.c.h.b16 %v261
        %v974 = vunpack.c.l.b16 %v262
        %v975 = vunpack.c.h.b16 %v262
        %v976 = vunpack.c.l.b16 %v263
        %v977 = vunpack.c.h.b16 %v263
        %v978 = vunpack.c.l.b16 %v264
        %v979 = vunpack.c.h.b16 %v264
        %v980 = vunpack.c.l.b16 %v265
        %v981 = vunpack.c.h.b16 %v265
        %v982 = vunpack.c.l.b16 %v266
        %v983 = vunpack.c.h.b16 %v266
        %v984 = vunpack.c.l.b16 %v267
        %v985 = vunpack.c.h.b16 %v267
        %v986 = vunpack.c.l.b16 %v268
        %v987 = vunpack.c.h.b16 %v268
        %v988 = vunpack.c.l.b16 %v269
        %v989 = vunpack.c.h.b16 %v269
        %v990 = vunpack.c.l.b16 %v270
        %v991 = vunpack.c.h.b16 %v270
        %v992 = vunpack.c.l.b16 %v271
        %v993 = vunpack.c.h.b16 %v271
        %v994 = vunpack.c.l.b16 %v272
        %v995 = vunpack.c.h.b16 %v272
        %v996 = vunpack.c.l.b16 %v273
        %v997 = vunpack.c.h.b16 %v273
        %v998 = vunpack.c.l.b16 %v274
        %v999 = vunpack.c.h.b16 %v274
        %v1000 = vunpack.c.l.b16 %v275
        %v1001 = vunpack.c.h.b16 %v275
        %v1002 = vunpack.c.l.b16 %v276
        %v1003 = vunpack.c.h.b16 %v276
        %v1004 = vunpack.c.l.b16 %v277
        %v1005 = vunpack.c.h.b16 %v277
        %v1006 = vunpack.c.l.b16 %v278
        %v1007 = vunpack.c.h.b16 %v278
        %v1008 = vunpack.c.l.b16 %v279
        %v1009 = vunpack.c.h.b16 %v279
        %v1010 = vunpack.c.l.b16 %v280
        %v1011 = vunpack.c.h.b16 %v280
        %v1012 = vunpack.c.l.b16 %v281
        %v1013 = vunpack.c.h.b16 %v281
        %v1014 = vunpack.c.l.b16 %v282
        %v1015 = vunpack.c.h.b16 %v282
        %v1016 = vunpack.c.l.b16 %v283
        %v1017 = vunpack.c.h.b16 %v283
        %v1018 = vunpack.c.l.b16 %v284
        %v1019 = vunpack.c.h.b16 %v284
        %v1020 = vunpack.c.l.b16 %v285
        %v1021 = vunpack.c.h.b16 %v285
        %v1022 = vunpack.c.l.b16 %v286
        %v1023 = vunpack.c.h.b16 %v286
        %v1024 = vunpack.c.l.b16 %v287
        %v1025 = vunpack.c.h.b16 %v287
        %v1026 = vunpack.c.l.b16 %v288
        %v1027 = vunpack.c.h.b16 %v288
        %v1028 = vunpack.c.l.b16 %v289
        %v1029 = vunpack.c.h.b16 %v289
        %v1030 = vunpack.c.l.b16 %v290
        %v1031 = vunpack.c.h.b16 %v290
        %v1032 = vunpack.c.l.b16 %v291
        %v1033 = vunpack.c.h.b16 %v291
        %v1034 = vunpack.c.l.b16 %v292
        %v1035 = vunpack.c.h.b16 %v292
        %v1036 = vunpack.c.l.b16 %v293
        %v1037 = vunpack.c.h.b16 %v293
        %v1038 = vunpack.c.l.b16 %v294
        %v1039 = vunpack.c.h.b16 %v294
        %v1040 = vunpack.c.l.b16 %v295
        %v1041 = vunpack.c.h.b16 %v295
        %v1042 = vunpack.c.l.b16 %v296
        %v1043 = vunpack.c.h.b16 %v296
        %v1044 = vunpack.c.l.b16 %v297
        %v1045 = vunpack.c.h.b16 %v297
        %v1046 = vunpack.c.l.b16 %v298
        %v1047 = vunpack.c.h.b16 %v298
        %v1048 = vunpack.c.l.b16 %v299
        %v1049 = vunpack.c.h.b16 %v299
        %v1050 = vunpack.c.l.b16 %v300
        %v1051 = vunpack.c.h.b16 %v300
        %v1052 = vunpack.c.l.b16 %v301
        %v1053 = vunpack.c.h.b16 %v301
        %v1054 = vunpack.c.l.b16 %v302
        %v1055 = vunpack.c.h.b16 %v302
        %v1056 = vunpack.c.l.b16 %v303
        %v1057 = vunpack.c.h.b16 %v303
        %v1058 = vunpack.c.l.b16 %v304
        %v1059 = vunpack.c.h.b16 %v304
        %v1060 = vunpack.c.l.b16 %v305
        %v1061 = vunpack.c.h.b16 %v305
        %v1062 = vunpack.c.l.b16 %v306
        %v1063 = vunpack.c.h.b16 %v306
        %v1064 = vunpack.c.l.b16 %v307
        %v1065 = vunpack.c.h.b16 %v307
        %v1066 = vunpack.c.l.b16 %v308
        %v1067 = vunpack.c.h.b16 %v308
        %v1068 = vunpack.c.l.b16 %v309
        %v1069 = vunpack.c.h.b16 %v309
        %v1070 = vunpack.c.l.b16 %v310
        %v1071 = vunpack.c.h.b16 %v310
        %v1072 = vunpack.c.l.b16 %v311
        %v1073 = vunpack.c.h.b16 %v311
        %v1074 = vunpack.c.l.b16 %v312
        %v1075 = vunpack.c.h.b16 %v312
        %v1076 = vunpack.c.l.b16 %v313
        %v1077 = vunpack.c.h.b16 %v313
        %v1078 = vunpack.c.l.b16 %v314
        %v1079 = vunpack.c.h.b16 %v314
        %v1080 = vunpack.c.l.b16 %v315
        %v1081 = vunpack.c.h.b16 %v315
        %v1082 = vunpack.c.l.b16 %v316
        %v1083 = vunpack.c.h.b16 %v316
        %v1084 = vunpack.c.l.b16 %v317
        %v1085 = vunpack.c.h.b16 %v317
        %v1086 = vunpack.c.l.b16 %v318
        %v1087 = vunpack.c.h.b16 %v318
        %v1088 = vunpack.c.l.b16 %v319
        %v1089 = vunpack.c.h.b16 %v319
        %v1090 = vunpack.c.l.b16 %v320
        %v1091 = vunpack.c.h.b16 %v320
        %v1092 = vunpack.c.l.b16 %v321
        %v1093 = vunpack.c.h.b16 %v321
        %v1094 = vunpack.c.l.b16 %v322
        %v1095 = vunpack.c.h.b16 %v322
        %v1096 = vunpack.c.l.b16 %v323
        %v1097 = vunpack.c.h.b16 %v323
        %v1098 = vunpack.c.l.b16 %v324
        %v1099 = vunpack.c.h.b16 %v324
        %v1100 = vunpack.c.l.b16 %v325
        %v1101 = vunpack.c.h.b16 %v325
        %v1102 = vunpack.c.l.b16 %v326
        %v1103 = vunpack.c.h.b16 %v326
        %v1104 = vunpack.c.l.b16 %v327
        %v1105 = vunpack.c.h.b16 %v327
        %v1106 = vunpack.c.l.b16 %v328
        %v1107 = vunpack.c.h.b16 %v328
        %v1108 = vunpack.c.l.b16 %v329
        %v1109 = vunpack.c.h.b16 %v329
        %v1110 = vunpack.c.l.b16 %v330
        %v1111 = vunpack.c.h.b16 %v330
        %v1112 = vunpack.c.l.b16 %v331
        %v1113 = vunpack.c.h.b16 %v331
        %v1114 = vunpack.c.l.b16 %v332
        %v1115 = vunpack.c.h.b16 %v332
        %v1116 = vunpack.c.l.b16 %v333
        %v1117 = vunpack.c.h.b16 %v333
        %v1118 = vunpack.c.l.b16 %v334
        %v1119 = vunpack.c.h.b16 %v334
        %v1120 = vunpack.c.l.b16 %v335
        %v1121 = vunpack.c.h.b16 %v335
        %v1122 = vunpack.c.l.b16 %v336
        %v1123 = vunpack.c.h.b16 %v336
        %v1124 = vunpack.c.l.b16 %v337
        %v1125 = vunpack.c.h.b16 %v337
        %v1126 = vunpack.c.l.b16 %v338
        %v1127 = vunpack.c.h.b16 %v338
        %v1128 = vunpack.c.l.b16 %v339
        %v1129 = vunpack.c.h.b16 %v339
        %v1130 = vunpack.c.l.b16 %v340
        %v1131 = vunpack.c.h.b16 %v340
        %v1132 = vunpack.c.l.b16 %v341
        %v1133 = vunpack.c.h.b16 %v341
        %v1134 = vunpack.c.l.b16 %v342
        %v1135 = vunpack.c.h.b16 %v342
        %v1136 = vunpack.c.l.b16 %v343
        %v1137 = vunpack.c.h.b16 %v343
        %v1138 = vunpack.c.l.b16 %v344
        %v1139 = vunpack.c.h.b16 %v344
        %v1140 = vunpack.c.l.b16 %v345
        %v1141 = vunpack.c.h.b16 %v345
        %v1142 = vunpack.c.l.b16 %v346
        %v1143 = vunpack.c.h.b16 %v346
        %v1144 = vunpack.c.l.b16 %v347
        %v1145 = vunpack.c.h.b16 %v347
        %v1146 = vunpack.c.l.b16 %v348
        %v1147 = vunpack.c.h.b16 %v348
        %v1148 = vunpack.c.l.b16 %v349
        %v1149 = vunpack.c.h.b16 %v349
        %v1150 = vunpack.c.l.b16 %v350
        %v1151 = vunpack.c.h.b16 %v350
        %v1152 = vunpack.c.l.b16 %v351
        %v1153 = vunpack.c.h.b16 %v351
        %v1154 = vunpack.c.l.b16 %v352
        %v1155 = vunpack.c.h.b16 %v352
        %v1156 = vunpack.c.l.b16 %v353
        %v1157 = vunpack.c.h.b16 %v353
        %v1158 = vunpack.c.l.b16 %v354
        %v1159 = vunpack.c.h.b16 %v354
        %v1160 = vunpack.c.l.b16 %v355
        %v1161 = vunpack.c.h.b16 %v355
        %v1162 = vunpack.c.l.b16 %v356
        %v1163 = vunpack.c.h.b16 %v356
        %v1164 = vunpack.c.l.b16 %v357
        %v1165 = vunpack.c.h.b16 %v357
        %v1166 = vunpack.c.l.b16 %v358
        %v1167 = vunpack.c.h.b16 %v358
        %v1168 = vunpack.c.l.b16 %v359
        %v1169 = vunpack.c.h.b16 %v359
        %v1170 = vunpack.c.l.b16 %v360
        %v1171 = vunpack.c.h.b16 %v360
        %v1172 = vunpack.c.l.b16 %v361
        %v1173 = vunpack.c.h.b16 %v361
        %v1174 = vunpack.c.l.b16 %v362
        %v1175 = vunpack.c.h.b16 %v362
        %v1176 = vunpack.c.l.b16 %v363
        %v1177 = vunpack.c.h.b16 %v363
        %v1178 = vunpack.c.l.b16 %v364
        %v1179 = vunpack.c.h.b16 %v364
        %v1180 = vunpack.c.l.b16 %v365
        %v1181 = vunpack.c.h.b16 %v365
        %v1182 = vunpack.c.l.b16 %v366
        %v1183 = vunpack.c.h.b16 %v366
        %v1184 = vunpack.c.l.b16 %v367
        %v1185 = vunpack.c.h.b16 %v367
        %v1186 = vunpack.c.l.b16 %v368
        %v1187 = vunpack.c.h.b16 %v368
        %v1188 = vunpack.c.l.b16 %v369
        %v1189 = vunpack.c.h.b16 %v369
        %v1190 = vunpack.c.l.b16 %v370
        %v1191 = vunpack.c.h.b16 %v370
        %v1192 = vunpack.c.l.b16 %v371
        %v1193 = vunpack.c.h.b16 %v371
        %v1194 = vunpack.c.l.b16 %v372
        %v1195 = vunpack.c.h.b16 %v372
        %v1196 = vunpack.c.l.b16 %v373
        %v1197 = vunpack.c.h.b16 %v373
        %v1198 = vunpack.c.l.b16 %v374
        %v1199 = vunpack.c.h.b16 %v374
        %v1200 = vunpack.c.l.b16 %v375
        %v1201 = vunpack.c.h.b16 %v375
        %v1202 = vunpack.c.l.b16 %v376
        %v1203 = vunpack.c.h.b16 %v376
        %v1204 = vunpack.c.l.b16 %v377
        %v1205 = vunpack.c.h.b16 %v377
        %v1206 = vunpack.c.l.b16 %v378
        %v1207 = vunpack.c.h.b16 %v378
        %v1208 = vunpack.c.l.b16 %v379
        %v1209 = vunpack.c.h.b16 %v379
        %v1210 = vunpack.c.l.b16 %v380
        %v1211 = vunpack.c.h.b16 %v380
        %v1212 = vunpack.c.l.b16 %v381
        %v1213 = vunpack.c.h.b16 %v381
        %v1214 = vunpack.c.l.b16 %v382
        %v1215 = vunpack.c.h.b16 %v382
        %v1216 = vunpack.c.l.b16 %v383
        %v1217 = vunpack.c.h.b16 %v383
        %v1218 = vunpack.c.l.b16 %v384
        %v1219 = vunpack.c.h.b16 %v384
        %v1220 = vunpack.c.l.b16 %v385
        %v1221 = vunpack.c.h.b16 %v385
        %v1222 = vunpack.c.l.b16 %v386
        %v1223 = vunpack.c.h.b16 %v386
        %v1224 = vunpack.c.l.b16 %v387
        %v1225 = vunpack.c.h.b16 %v387
        %v1226 = vunpack.c.l.b16 %v388
        %v1227 = vunpack.c.h.b16 %v388
        %v1228 = vunpack.c.l.b16 %v389
        %v1229 = vunpack.c.h.b16 %v389
        %v1230 = vunpack.c.l.b16 %v390
        %v1231 = vunpack.c.h.b16 %v390
        %v1232 = vunpack.c.l.b16 %v391
        %v1233 = vunpack.c.h.b16 %v391
        %v1234 = vunpack.c.l.b16 %v392
        %v1235 = vunpack.c.h.b16 %v392
        %v1236 = vunpack.c.l.b16 %v393
        %v1237 = vunpack.c.h.b16 %v393
        %v1238 = vunpack.c.l.b16 %v394
        %v1239 = vunpack.c.h.b16 %v394
        %v1240 = vunpack.c.l.b16 %v395
        %v1241 = vunpack.c.h.b16 %v395
        %v1242 = vunpack.c.l.b16 %v396
        %v1243 = vunpack.c.h.b16 %v396
        %v1244 = vunpack.c.l.b16 %v397
        %v1245 = vunpack.c.h.b16 %v397
        %v1246 = vunpack.c.l.b16 %v398
        %v1247 = vunpack.c.h.b16 %v398
        %v1248 = vunpack.c.l.b16 %v399
        %v1249 = vunpack.c.h.b16 %v399
        %v1250 = vunpack.c.l.b16 %v400
        %v1251 = vunpack.c.h.b16 %v400
        %v1252 = vunpack.c.l.b16 %v401
        %v1253 = vunpack.c.h.b16 %v401
        %v1254 = vunpack.c.l.b16 %v402
        %v1255 = vunpack.c.h.b16 %v402
        %v1256 = vunpack.c.l.b16 %v403
        %v1257 = vunpack.c.h.b16 %v403
        %v1258 = vunpack.c.l.b16 %v404
        %v1259 = vunpack.c.h.b16 %v404
        %v1260 = vunpack.c.l.b16 %v405
        %v1261 = vunpack.c.h.b16 %v405
        %v1262 = vunpack.c.l.b16 %v406
        %v1263 = vunpack.c.h.b16 %v406
        %v1264 = vunpack.c.l.b16 %v407
        %v1265 = vunpack.c.h.b16 %v407
        %v1266 = vunpack.c.l.b16 %v408
        %v1267 = vunpack.c.h.b16 %v408
        %v1268 = vunpack.c.l.b16 %v409
        %v1269 = vunpack.c.h.b16 %v409
        %v1270 = vunpack.c.l.b16 %v410
        %v1271 = vunpack.c.h.b16 %v410
        %v1272 = vunpack.c.l.b16 %v411
        %v1273 = vunpack.c.h.b16 %v411
        %v1274 = vunpack.c.l.b16 %v412
        %v1275 = vunpack.c.h.b16 %v412
        %v1276 = vunpack.c.l.b16 %v413
        %v1277 = vunpack.c.h.b16 %v413
        %v1278 = vunpack.c.l.b16 %v414
        %v1279 = vunpack.c.h.b16 %v414
        %v1280 = vunpack.c.l.b16 %v415
        %v1281 = vunpack.c.h.b16 %v415
        %v1282 = vunpack.c.l.b16 %v416
        %v1283 = vunpack.c.h.b16 %v416
        %v1284 = vunpack.c.l.b16 %v417
        %v1285 = vunpack.c.h.b16 %v417
        %v1286 = vunpack.c.l.b16 %v418
        %v1287 = vunpack.c.h.b16 %v418
        %v1288 = vunpack.c.l.b16 %v419
        %v1289 = vunpack.c.h.b16 %v419
        %v1290 = vunpack.c.l.b16 %v420
        %v1291 = vunpack.c.h.b16 %v420
        %v1292 = vunpack.c.l.b16 %v421
        %v1293 = vunpack.c.h.b16 %v421
        %v1294 = vunpack.c.l.b16 %v422
        %v1295 = vunpack.c.h.b16 %v422
        %v1296 = vunpack.c.l.b16 %v423
        %v1297 = vunpack.c.h.b16 %v423
        %v1298 = vunpack.c.l.b16 %v424
        %v1299 = vunpack.c.h.b16 %v424
        %v1300 = vunpack.c.l.b16 %v425
        %v1301 = vunpack.c.h.b16 %v425
        %v1302 = vunpack.c.l.b16 %v426
        %v1303 = vunpack.c.h.b16 %v426
        %v1304 = vunpack.c.l.b16 %v427
        %v1305 = vunpack.c.h.b16 %v427
        %v1306 = vunpack.c.l.b16 %v428
        %v1307 = vunpack.c.h.b16 %v428
        %v1308 = vunpack.c.l.b16 %v429
        %v1309 = vunpack.c.h.b16 %v429
        %v1310 = vunpack.c.l.b16 %v430
        %v1311 = vunpack.c.h.b16 %v430
        %v1312 = vunpack.c.l.b16 %v431
        %v1313 = vunpack.c.h.b16 %v431
        %v1314 = vunpack.c.l.b16 %v432
        %v1315 = vunpack.c.h.b16 %v432
        %v1316 = vunpack.c.l.b16 %v433
        %v1317 = vunpack.c.h.b16 %v433
        %v1318 = vunpack.c.l.b16 %v434
        %v1319 = vunpack.c.h.b16 %v434
        %v1320 = vunpack.c.l.b16 %v435
        %v1321 = vunpack.c.h.b16 %v435
        %v1322 = vunpack.c.l.b16 %v436
        %v1323 = vunpack.c.h.b16 %v436
        %v1324 = vunpack.c.l.b16 %v437
        %v1325 = vunpack.c.h.b16 %v437
        %v1326 = vunpack.c.l.b16 %v438
        %v1327 = vunpack.c.h.b16 %v438
        %v1328 = vunpack.c.l.b16 %v439
        %v1329 = vunpack.c.h.b16 %v439
        %v1330 = vunpack.c.l.b16 %v440
        %v1331 = vunpack.c.h.b16 %v440
        %v1332 = vunpack.c.l.b16 %v441
        %v1333 = vunpack.c.h.b16 %v441
        %v1334 = vunpack.c.l.b16 %v442
        %v1335 = vunpack.c.h.b16 %v442
        %v1336 = vunpack.c.l.b16 %v443
        %v1337 = vunpack.c.h.b16 %v443
        %v1338 = vunpack.c.l.b16 %v444
        %v1339 = vunpack.c.h.b16 %v444
        %v1340 = vunpack.c.l.b16 %v445
        %v1341 = vunpack.c.h.b16 %v445
        %v1342 = vunpack.c.l.b16 %v446
        %v1343 = vunpack.c.h.b16 %v446
        %v1344 = vunpack.c.l.b16 %v447
        %v1345 = vunpack.c.h.b16 %v447
        %v1346 = vunpack.c.l.b16 %v448
        %v1347 = vunpack.c.h.b16 %v448
        %v1348 = vunpack.c.l.b16 %v449
        %v1349 = vunpack.c.h.b16 %v449
        %v1350 = vunpack.c.l.b16 %v450
        %v1351 = vunpack.c.h.b16 %v450
        %v1352 = vunpack.c.l.b16 %v451
        %v1353 = vunpack.c.h.b16 %v451
        %v1354 = vunpack.c.l.b16 %v452
        %v1355 = vunpack.c.h.b16 %v452
        %v1356 = vunpack.c.l.b16 %v453
        %v1357 = vunpack.c.h.b16 %v453
        %v1358 = vunpack.c.l.b16 %v454
        %v1359 = vunpack.c.h.b16 %v454
        %v1360 = vunpack.c.l.b16 %v455
        %v1361 = vunpack.c.h.b16 %v455
        %v1362 = vunpack.c.l.b16 %v456
        %v1363 = vunpack.c.h.b16 %v456
        %v1364 = vunpack.c.l.b16 %v457
        %v1365 = vunpack.c.h.b16 %v457
        %v1366 = vunpack.c.l.b16 %v458
        %v1367 = vunpack.c.h.b16 %v458
        %v1368 = vunpack.c.l.b16 %v459
        %v1369 = vunpack.c.h.b16 %v459
        %v1370 = vunpack.c.l.b16 %v460
        %v1371 = vunpack.c.h.b16 %v460
        %v1372 = vunpack.c.l.b16 %v461
        %v1373 = vunpack.c.h.b16 %v461
        %v1374 = vunpack.c.l.b16 %v462
        %v1375 = vunpack.c.h.b16 %v462
        %v1376 = vunpack.c.l.b16 %v463
        %v1377 = vunpack.c.h.b16 %v463
        %v1378 = vunpack.c.l.b16 %v464
        %v1379 = vunpack.c.h.b16 %v464
        %v1380 = vunpack.c.l.b16 %v465
        %v1381 = vunpack.c.h.b16 %v465
        %v1382 = vunpack.c.l.b16 %v466
        %v1383 = vunpack.c.h.b16 %v466
        %v1384 = vunpack.c.l.b16 %v467
        %v1385 = vunpack.c.h.b16 %v467
        %v1386 = vunpack.c.l.b16 %v468
        %v1387 = vunpack.c.h.b16 %v468
        %v1388 = vunpack.c.l.b16 %v469
        %v1389 = vunpack.c.h.b16 %v469
        %v1390 = vunpack.c.l.b16 %v470
        %v1391 = vunpack.c.h.b16 %v470
        %v1392 = vunpack.c.l.b16 %v471
        %v1393 = vunpack.c.h.b16 %v471
        %v1394 = vunpack.c.l.b16 %v472
        %v1395 = vunpack.c.h.b16 %v472
        %v1396 = vunpack.c.l.b16 %v473
        %v1397 = vunpack.c.h.b16 %v473
        %v1398 = vunpack.c.l.b16 %v474
        %v1399 = vunpack.c.h.b16 %v474
        %v1400 = vunpack.c.l.b16 %v475
        %v1401 = vunpack.c.h.b16 %v475
        %v1402 = vunpack.c.l.b16 %v476
        %v1403 = vunpack.c.h.b16 %v476
        %v1404 = vunpack.c.l.b16 %v477
        %v1405 = vunpack.c.h.b16 %v477
        %v1406 = vunpack.c.l.b16 %v478
        %v1407 = vunpack.c.h.b16 %v478
        %v1408 = vunpack.c.l.b16 %v479
        %v1409 = vunpack.c.h.b16 %v479
        %v1410 = vunpack.c.l.b16 %v480
        %v1411 = vunpack.c.h.b16 %v480
        %v1412 = vunpack.c.l.b16 %v481
        %v1413 = vunpack.c.h.b16 %v481
        %v1414 = vunpack.c.l.b16 %v482
        %v1415 = vunpack.c.h.b16 %v482
        %v1416 = vunpack.c.l.b16 %v483
        %v1417 = vunpack.c.h.b16 %v483
        %v1418 = vunpack.c.l.b16 %v484
        %v1419 = vunpack.c.h.b16 %v484
        %v1420 = vunpack.c.l.b16 %v485
        %v1421 = vunpack.c.h.b16 %v485
        %v1422 = vpack.c.b16 %v942, %v910
        %v1423 = vpack.c.b16 %v943, %v911
        %v1424 = vpack.c.b16 %v944, %v912
        %v1425 = vpack.c.b16 %v945, %v913
        %v1426 = vpack.c.b16 %v946, %v914
        %v1427 = vpack.c.b16 %v947, %v915
        %v1428 = vpack.c.b16 %v948, %v916
        %v1429 = vpack.c.b16 %v949, %v917
        %v1430 = vpack.c.b16 %v950, %v918
        %v1431 = vpack.c.b16 %v951, %v919
        %v1432 = vpack.c.b16 %v952, %v920
        %v1433 = vpack.c.b16 %v953, %v921
        %v1434 = vpack.c.b16 %v954, %v922
        %v1435 = vpack.c.b16 %v955, %v923
        %v1436 = vpack.c.b16 %v956, %v924
        %v1437 = vpack.c.b16 %v957, %v925
        %v1438 = vpack.c.b16 %v958, %v926
        %v1439 = vpack.c.b16 %v959, %v927
        %v1440 = vpack.c.b16 %v960, %v928
        %v1441 = vpack.c.b16 %v961, %v929
        %v1442 = vpack.c.b16 %v962, %v930
        %v1443 = vpack.c.b16 %v963, %v931
        %v1444 = vpack.c.b16 %v964, %v932
        %v1445 = vpack.c.b16 %v965, %v933
        %v1446 = vpack.c.b16 %v966, %v934
        %v1447 = vpack.c.b16 %v967, %v935
        %v1448 = vpack.c.b16 %v968, %v936
        %v1449 = vpack.c.b16 %v969, %v937
        %v1450 = vpack.c.b16 %v970, %v938
        %v1451 = vpack.c.b16 %v971, %v939
        %v1452 = vpack.c.b16 %v972, %v940
        %v1453 = vpack.c.b16 %v973, %v941
        %v1454 = vpack.c.b16 %v1006, %v974
        %v1455 = vpack.c.b16 %v1007, %v975
        %v1456 = vpack.c.b16 %v1008, %v976
        %v1457 = vpack.c.b16 %v1009, %v977
        %v1458 = vpack.c.b16 %v1010, %v978
        %v1459 = vpack.c.b16 %v1011, %v979
        %v1460 = vpack.c.b16 %v1012, %v980
        %v1461 = vpack.c.b16 %v1013, %v981
        %v1462 = vpack.c.b16 %v1014, %v982
        %v1463 = vpack.c.b16 %v1015, %v983
        %v1464 = vpack.c.b16 %v1016, %v984
        %v1465 = vpack.c.b16 %v1017, %v985
        %v1466 = vpack.c.b16 %v1018, %v986
        %v1467 = vpack.c.b16 %v1019, %v987
        %v1468 = vpack.c.b16 %v1020, %v988
        %v1469 = vpack.c.b16 %v1021, %v989
        %v1470 = vpack.c.b16 %v1022, %v990
        %v1471 = vpack.c.b16 %v1023, %v991
        %v1472 = vpack.c.b16 %v1024, %v992
        %v1473 = vpack.c.b16 %v1025, %v993
        %v1474 = vpack.c.b16 %v1026, %v994
        %v1475 = vpack.c.b16 %v1027, %v995
        %v1476 = vpack.c.b16 %v1028, %v996
        %v1477 = vpack.c.b16 %v1029, %v997
        %v1478 = vpack.c.b16 %v1030, %v998
        %v1479 = vpack.c.b16 %v1031, %v999
        %v1480 = vpack.c.b16 %v1032, %v1000
        %v1481 = vpack.c.b16 %v1033, %v1001
        %v1482 = vpack.c.b16 %v1034, %v1002
        %v1483 = vpack.c.b16 %v1035, %v1003
        %v1484 = vpack.c.b16 %v1036, %v1004
        %v1485 = vpack.c.b16 %v1037, %v1005
        %v1486 = vpack.c.b16 %v1070, %v1038
        %v1487 = vpack.c.b16 %v1071, %v1039
        %v1488 = vpack.c.b16 %v1072, %v1040
        %v1489 = vpack.c.b16 %v1073, %v1041
        %v1490 = vpack.c.b16 %v1074, %v1042
        %v1491 = vpack.c.b16 %v1075, %v1043
        %v1492 = vpack.c.b16 %v1076, %v1044
        %v1493 = vpack.c.b16 %v1077, %v1045
        %v1494 = vpack.c.b16 %v1078, %v1046
        %v1495 = vpack.c.b16 %v1079, %v1047
        %v1496 = vpack.c.b16 %v1080, %v1048
        %v1497 = vpack.c.b16 %v1081, %v1049
        %v1498 = vpack.c.b16 %v1082, %v1050
        %v1499 = vpack.c.b16 %v1083, %v1051
        %v1500 = vpack.c.b16 %v1084, %v1052
        %v1501 = vpack.c.b16 %v1085, %v1053
        %v1502 = vpack.c.b16 %v1086, %v1054
        %v1503 = vpack.c.b16 %v1087, %v1055
        %v1504 = vpack.c.b16 %v1088, %v1056
        %v1505 = vpack.c.b16 %v1089, %v1057
        %v1506 = vpack.c.b16 %v1090, %v1058
        %v1507 = vpack.c.b16 %v1091, %v1059
        %v1508 = vpack.c.b16 %v1092, %v1060
        %v1509 = vpack.c.b16 %v1093, %v1061
        %v1510 = vpack.c.b16 %v1094, %v1062
        %v1511 = vpack.c.b16 %v1095, %v1063
        %v1512 = vpack.c.b16 %v1096, %v1064
        %v1513 = vpack.c.b16 %v1097, %v1065
        %v1514 = vpack.c.b16 %v1098, %v1066
        %v1515 = vpack.c.b16 %v1099, %v1067
        %v1516 = vpack.c.b16 %v1100, %v1068
        %v1517 = vpack.c.b16 %v1101, %v1069
        %v1518 = vpack.c.b16 %v1134, %v1102
        %v1519 = vpack.c.b16 %v1135, %v1103
        %v1520 = vpack.c.b16 %v1136, %v1104
        %v1521 = vpack.c.b16 %v1137, %v1105
        %v1522 = vpack.c.b16 %v1138, %v1106
        %v1523 = vpack.c.b16 %v1139, %v1107
        %v1524 = vpack.c.b16 %v1140, %v1108
        %v1525 = vpack.c.b16 %v1141, %v1109
        %v1526 = vpack.c.b16 %v1142, %v1110
        %v1527 = vpack.c.b16 %v1143, %v1111
        %v1528 = vpack.c.b16 %v1144, %v1112
        %v1529 = vpack.c.b16 %v1145, %v1113
        %v1530 = vpack.c.b16 %v1146, %v1114
        %v1531 = vpack.c.b16 %v1147, %v1115
        %v1532 = vpack.c.b16 %v1148, %v1116
        %v1533 = vpack.c.b16 %v1149, %v1117
        %v1534 = vpack.c.b16 %v1150, %v1118
        %v1535 = vpack.c.b16 %v1151, %v1119
        %v1536 = vpack.c.b16 %v1152, %v1120
        %v1537 = vpack.c.b16 %v1153, %v1121
        %v1538 = vpack.c.b16 %v1154, %v1122
        %v1539 = vpack.c.b16 %v1155, %v1123
        %v1540 = vpack.c.b16 %v1156, %v1124
        %v1541 = vpack.c.b16 %v1157, %v1125
        %v1542 = vpack.c.b16 %v1158, %v1126
        %v1543 = vpack.c.b16 %v1159, %v1127
        %v1544 = vpack.c.b16 %v1160, %v1128
        %v1545 = vpack.c.b16 %v1161, %v1129
        %v1546 = vpack.c.b16 %v1162, %v1130
        %v1547 = vpack.c.b16 %v1163, %v1131
        %v1548 = vpack.c.b16 %v1164, %v1132
        %v1549 = vpack.c.b16 %v1165, %v1133
        %v1550 = vpack.c.b16 %v1198, %v1166
        %v1551 = vpack.c.b16 %v1199, %v1167
        %v1552 = vpack.c.b16 %v1200, %v1168
        %v1553 = vpack.c.b16 %v1201, %v1169
        %v1554 = vpack.c.b16 %v1202, %v1170
        %v1555 = vpack.c.b16 %v1203, %v1171
        %v1556 = vpack.c.b16 %v1204, %v1172
        %v1557 = vpack.c.b16 %v1205, %v1173
        %v1558 = vpack.c.b16 %v1206, %v1174
        %v1559 = vpack.c.b16 %v1207, %v1175
        %v1560 = vpack.c.b16 %v1208, %v1176
        %v1561 = vpack.c.b16 %v1209, %v1177
        %v1562 = vpack.c.b16 %v1210, %v1178
        %v1563 = vpack.c.b16 %v1211, %v1179
        %v1564 = vpack.c.b16 %v1212, %v1180
        %v1565 = vpack.c.b16 %v1213, %v1181
        %v1566 = vpack.c.b16 %v1214, %v1182
        %v1567 = vpack.c.b16 %v1215, %v1183
        %v1568 = vpack.c.b16 %v1216, %v1184
        %v1569 = vpack.c.b16 %v1217, %v1185
        %v1570 = vpack.c.b16 %v1218, %v1186
        %v1571 = vpack.c.b16 %v1219, %v1187
        %v1572 = vpack.c.b16 %v1220, %v1188
        %v1573 = vpack.c.b16 %v1221, %v1189
        %v1574 = vpack.c.b16 %v1222, %v1190
        %v1575 = vpack.c.b16 %v1223, %v1191
        %v1576 = vpack.c.b16 %v1224, %v1192
        %v1577 = vpack.c.b16 %v1225, %v1193
        %v1578 = vpack.c.b16 %v1226, %v1194
        %v1579 = vpack.c.b16 %v1227, %v1195
        %v1580 = vpack.c.b16 %v1228, %v1196
        %v1581 = vpack.c.b16 %v1229, %v1197
        %v1582 = vpack.c.b16 %v1262, %v1230
        %v1583 = vpack.c.b16 %v1263, %v1231
        %v1584 = vpack.c.b16 %v1264, %v1232
        %v1585 = vpack.c.b16 %v1265, %v1233
        %v1586 = vpack.c.b16 %v1266, %v1234
        %v1587 = vpack.c.b16 %v1267, %v1235
        %v1588 = vpack.c.b16 %v1268, %v1236
        %v1589 = vpack.c.b16 %v1269, %v1237
        %v1590 = vpack.c.b16 %v1270, %v1238
        %v1591 = vpack.c.b16 %v1271, %v1239
        %v1592 = vpack.c.b16 %v1272, %v1240
        %v1593 = vpack.c.b16 %v1273, %v1241
        %v1594 = vpack.c.b16 %v1274, %v1242
        %v1595 = vpack.c.b16 %v1275, %v1243
        %v1596 = vpack.c.b16 %v1276, %v1244
        %v1597 = vpack.c.b16 %v1277, %v1245
        %v1598 = vpack.c.b16 %v1278, %v1246
        %v1599 = vpack.c.b16 %v1279, %v1247
        %v1600 = vpack.c.b16 %v1280, %v1248
        %v1601 = vpack.c.b16 %v1281, %v1249
        %v1602 = vpack.c.b16 %v1282, %v1250
        %v1603 = vpack.c.b16 %v1283, %v1251
        %v1604 = vpack.c.b16 %v1284, %v1252
        %v1605 = vpack.c.b16 %v1285, %v1253
        %v1606 = vpack.c.b16 %v1286, %v1254
        %v1607 = vpack.c.b16 %v1287, %v1255
        %v1608 = vpack.c.b16 %v1288, %v1256
        %v1609 = vpack.c.b16 %v1289, %v1257
        %v1610 = vpack.c.b16 %v1290, %v1258
        %v1611 = vpack.c.b16 %v1291, %v1259
        %v1612 = vpack.c.b16 %v1292, %v1260
        %v1613 = vpack.c.b16 %v1293, %v1261
        %v1614 = vpack.c.b16 %v1326, %v1294
        %v1615 = vpack.c.b16 %v1327, %v1295
        %v1616 = vpack.c.b16 %v1328, %v1296
        %v1617 = vpack.c.b16 %v1329, %v1297
        %v1618 = vpack.c.b16 %v1330, %v1298
        %v1619 = vpack.c.b16 %v1331, %v1299
        %v1620 = vpack.c.b16 %v1332, %v1300
        %v1621 = vpack.c.b16 %v1333, %v1301
        %v1622 = vpack.c.b16 %v1334, %v1302
        %v1623 = vpack.c.b16 %v1335, %v1303
        %v1624 = vpack.c.b16 %v1336, %v1304
        %v1625 = vpack.c.b16 %v1337, %v1305
        %v1626 = vpack.c.b16 %v1338, %v1306
        %v1627 = vpack.c.b16 %v1339, %v1307
        %v1628 = vpack.c.b16 %v1340, %v1308
        %v1629 = vpack.c.b16 %v1341, %v1309
        %v1630 = vpack.c.b16 %v1342, %v1310
        %v1631 = vpack.c.b16 %v1343, %v1311
        %v1632 = vpack.c.b16 %v1344, %v1312
        %v1633 = vpack.c.b16 %v1345, %v1313
        %v1634 = vpack.c.b16 %v1346, %v1314
        %v1635 = vpack.c.b16 %v1347, %v1315
        %v1636 = vpack.c.b16 %v1348, %v1316
        %v1637 = vpack.c.b16 %v1349, %v1317
        %v1638 = vpack.c.b16 %v1350, %v1318
        %v1639 = vpack.c.b16 %v1351, %v1319
        %v1640 = vpack.c.b16 %v1352, %v1320
        %v1641 = vpack.c.b16 %v1353, %v1321
        %v1642 = vpack.c.b16 %v1354, %v1322
        %v1643 = vpack.c.b16 %v1355, %v1323
        %v1644 = vpack.c.b16 %v1356, %v1324
        %v1645 = vpack.c.b16 %v1357, %v1325
        %v1646 = vpack.c.b16 %v1390, %v1358
        %v1647 = vpack.c.b16 %v1391, %v1359
        %v1648 = vpack.c.b16 %v1392, %v1360
        %v1649 = vpack.c.b16 %v1393, %v1361
        %v1650 = vpack.c.b16 %v1394, %v1362
        %v1651 = vpack.c.b16 %v1395, %v1363
        %v1652 = vpack.c.b16 %v1396, %v1364
        %v1653 = vpack.c.b16 %v1397, %v1365
        %v1654 = vpack.c.b16 %v1398, %v1366
        %v1655 = vpack.c.b16 %v1399, %v1367
        %v1656 = vpack.c.b16 %v1400, %v1368
        %v1657 = vpack.c.b16 %v1401, %v1369
        %v1658 = vpack.c.b16 %v1402, %v1370
        %v1659 = vpack.c.b16 %v1403, %v1371
        %v1660 = vpack.c.b16 %v1404, %v1372
        %v1661 = vpack.c.b16 %v1405, %v1373
        %v1662 = vpack.c.b16 %v1406, %v1374
        %v1663 = vpack.c.b16 %v1407, %v1375
        %v1664 = vpack.c.b16 %v1408, %v1376
        %v1665 = vpack.c.b16 %v1409, %v1377
        %v1666 = vpack.c.b16 %v1410, %v1378
        %v1667 = vpack.c.b16 %v1411, %v1379
        %v1668 = vpack.c.b16 %v1412, %v1380
        %v1669 = vpack.c.b16 %v1413, %v1381
        %v1670 = vpack.c.b16 %v1414, %v1382
        %v1671 = vpack.c.b16 %v1415, %v1383
        %v1672 = vpack.c.b16 %v1416, %v1384
        %v1673 = vpack.c.b16 %v1417, %v1385
        %v1674 = vpack.c.b16 %v1418, %v1386
        %v1675 = vpack.c.b16 %v1419, %v1387
        %v1676 = vpack.c.b16 %v1420, %v1388
        %v1677 = vpack.c.b16 %v1421, %v1389
        %1934 = vmatprep.subr.bf16.mxu0 %v1647
        %1935 = vmatpush1.bf16.msra.mxu0 %v1646
        %1936 = vmatprep.subr.bf16.mxu0 %v1615
        %1937 = vmatpush1.bf16.msra.mxu0 %v1614
        %1938 = vmatprep.subr.bf16.mxu0 %v1583
        %1939 = vmatpush1.bf16.msra.mxu0 %v1582
        %1940 = vmatprep.subr.bf16.mxu0 %v1551
        %1941 = vmatpush1.bf16.msra.mxu0 %v1550
        %1942 = vmatprep.subr.bf16.mxu0 %v1519
        %1943 = vmatpush1.bf16.msra.mxu0 %v1518
        %1944 = vmatprep.subr.bf16.mxu0 %v1487
        %1945 = vmatpush1.bf16.msra.mxu0 %v1486
        %1946 = vmatprep.subr.bf16.mxu0 %v1455
        %1947 = vmatpush1.bf16.msra.mxu0 %v1454
        %1948 = vmatprep.subr.bf16.mxu0 %v1423
        %1949 = vmatpush1.bf16.msra.mxu0 %v1422
        %1950 = vmatprep.subr.bf16.mxu0 0
        %1951 = vmatpush2.bf16.msra.mxu0 0
        %1952 = vmatprep.subr.bf16.mxu0 0
        %1953 = vmatpush2.bf16.msra.mxu0 0
        %1954 = vmatprep.subr.bf16.mxu0 0
        %1955 = vmatpush2.bf16.msra.mxu0 0
        %1956 = vmatprep.subr.bf16.mxu0 0
        %1957 = vmatpush2.bf16.msra.mxu0 0
        %1958 = vmatprep.subr.bf16.mxu0 0
        %1959 = vmatpush2.bf16.msra.mxu0 0
        %1960 = vmatprep.subr.bf16.mxu0 0
        %1961 = vmatpush2.bf16.msra.mxu0 0
        %1962 = vmatprep.subr.bf16.mxu0 0
        %1963 = vmatpush2.bf16.msra.mxu0 0
        %1964 = vmatprep.subr.bf16.mxu0 0
        %1965 = vmatpush2.bf16.msra.mxu0 0
        %1966 = vmatprep.mubr.bf16.mxu0 0
        %1967 = vmatmul.mubr.bf16.gmra.mxu0 %v229
        %v1968 = vpop.f32.mrf.mxu0
        %v1969 = vadd.f32 %v497, %v1968
        %v1970 = vpop.f32.mrf.mxu0
        %v1971 = vadd.f32 %v501, %v1970
        %v1972 = vpop.f32.mrf.mxu0
        %v1973 = vadd.f32 %v497, %v1972
        %v1974 = vpop.f32.mrf.mxu0
        %v1975 = vadd.f32 %v501, %v1974
        %1976 = vdwg.mxu0
        %1977 = vmatprep.subr.bf16.mxu0 %v1649
        %1978 = vmatpush1.bf16.msra.mxu0 %v1648
        %1979 = vmatprep.subr.bf16.mxu0 %v1617
        %1980 = vmatpush1.bf16.msra.mxu0 %v1616
        %1981 = vmatprep.subr.bf16.mxu0 %v1585
        %1982 = vmatpush1.bf16.msra.mxu0 %v1584
        %1983 = vmatprep.subr.bf16.mxu0 %v1553
        %1984 = vmatpush1.bf16.msra.mxu0 %v1552
        %1985 = vmatprep.subr.bf16.mxu0 %v1521
        %1986 = vmatpush1.bf16.msra.mxu0 %v1520
        %1987 = vmatprep.subr.bf16.mxu0 %v1489
        %1988 = vmatpush1.bf16.msra.mxu0 %v1488
        %1989 = vmatprep.subr.bf16.mxu0 %v1457
        %1990 = vmatpush1.bf16.msra.mxu0 %v1456
        %1991 = vmatprep.subr.bf16.mxu0 %v1425
        %1992 = vmatpush1.bf16.msra.mxu0 %v1424
        %1993 = vmatprep.subr.bf16.mxu0 0
        %1994 = vmatpush2.bf16.msra.mxu0 0
        %1995 = vmatprep.subr.bf16.mxu0 0
        %1996 = vmatpush2.bf16.msra.mxu0 0
        %1997 = vmatprep.subr.bf16.mxu0 0
        %1998 = vmatpush2.bf16.msra.mxu0 0
        %1999 = vmatprep.subr.bf16.mxu0 0
        %2000 = vmatpush2.bf16.msra.mxu0 0
        %2001 = vmatprep.subr.bf16.mxu0 0
        %2002 = vmatpush2.bf16.msra.mxu0 0
        %2003 = vmatprep.subr.bf16.mxu0 0
        %2004 = vmatpush2.bf16.msra.mxu0 0
        %2005 = vmatprep.subr.bf16.mxu0 0
        %2006 = vmatpush2.bf16.msra.mxu0 0
        %2007 = vmatprep.subr.bf16.mxu0 0
        %2008 = vmatpush2.bf16.msra.mxu0 0
        %2009 = vmatprep.mubr.bf16.mxu0 0
        %2010 = vmatmul.mubr.bf16.gmra.mxu0 %v229
        %v2011 = vpop.f32.mrf.mxu0
        %v2012 = vadd.f32 %v505, %v2011
        %v2013 = vpop.f32.mrf.mxu0
        %v2014 = vadd.f32 %v509, %v2013
        %v2015 = vpop.f32.mrf.mxu0
        %v2016 = vadd.f32 %v505, %v2015
        %v2017 = vpop.f32.mrf.mxu0
        %v2018 = vadd.f32 %v509, %v2017
        %2019 = vdwg.mxu0
        %2020 = vmatprep.subr.bf16.mxu0 %v1651
        %2021 = vmatpush1.bf16.msra.mxu0 %v1650
        %2022 = vmatprep.subr.bf16.mxu0 %v1619
        %2023 = vmatpush1.bf16.msra.mxu0 %v1618
        %2024 = vmatprep.subr.bf16.mxu0 %v1587
        %2025 = vmatpush1.bf16.msra.mxu0 %v1586
        %2026 = vmatprep.subr.bf16.mxu0 %v1555
        %2027 = vmatpush1.bf16.msra.mxu0 %v1554
        %2028 = vmatprep.subr.bf16.mxu0 %v1523
        %2029 = vmatpush1.bf16.msra.mxu0 %v1522
        %2030 = vmatprep.subr.bf16.mxu0 %v1491
        %2031 = vmatpush1.bf16.msra.mxu0 %v1490
        %2032 = vmatprep.subr.bf16.mxu0 %v1459
        %2033 = vmatpush1.bf16.msra.mxu0 %v1458
        %2034 = vmatprep.subr.bf16.mxu0 %v1427
        %2035 = vmatpush1.bf16.msra.mxu0 %v1426
        %2036 = vmatprep.subr.bf16.mxu0 0
        %2037 = vmatpush2.bf16.msra.mxu0 0
        %2038 = vmatprep.subr.bf16.mxu0 0
        %2039 = vmatpush2.bf16.msra.mxu0 0
        %2040 = vmatprep.subr.bf16.mxu0 0
        %2041 = vmatpush2.bf16.msra.mxu0 0
        %2042 = vmatprep.subr.bf16.mxu0 0
        %2043 = vmatpush2.bf16.msra.mxu0 0
        %2044 = vmatprep.subr.bf16.mxu0 0
        %2045 = vmatpush2.bf16.msra.mxu0 0
        %2046 = vmatprep.subr.bf16.mxu0 0
        %2047 = vmatpush2.bf16.msra.mxu0 0
        %2048 = vmatprep.subr.bf16.mxu0 0
        %2049 = vmatpush2.bf16.msra.mxu0 0
        %2050 = vmatprep.subr.bf16.mxu0 0
        %2051 = vmatpush2.bf16.msra.mxu0 0
        %2052 = vmatprep.mubr.bf16.mxu0 0
        %2053 = vmatmul.mubr.bf16.gmra.mxu0 %v229
        %v2054 = vpop.f32.mrf.mxu0
        %v2055 = vadd.f32 %v513, %v2054
        %v2056 = vpop.f32.mrf.mxu0
        %v2057 = vadd.f32 %v517, %v2056
        %v2058 = vpop.f32.mrf.mxu0
        %v2059 = vadd.f32 %v513, %v2058
        %v2060 = vpop.f32.mrf.mxu0
        %v2061 = vadd.f32 %v517, %v2060
        %2062 = vdwg.mxu0
        %2063 = vmatprep.subr.bf16.mxu0 %v1653
        %2064 = vmatpush1.bf16.msra.mxu0 %v1652
        %2065 = vmatprep.subr.bf16.mxu0 %v1621
        %2066 = vmatpush1.bf16.msra.mxu0 %v1620
        %2067 = vmatprep.subr.bf16.mxu0 %v1589
        %2068 = vmatpush1.bf16.msra.mxu0 %v1588
        %2069 = vmatprep.subr.bf16.mxu0 %v1557
        %2070 = vmatpush1.bf16.msra.mxu0 %v1556
        %2071 = vmatprep.subr.bf16.mxu0 %v1525
        %2072 = vmatpush1.bf16.msra.mxu0 %v1524
        %2073 = vmatprep.subr.bf16.mxu0 %v1493
        %2074 = vmatpush1.bf16.msra.mxu0 %v1492
        %2075 = vmatprep.subr.bf16.mxu0 %v1461
        %2076 = vmatpush1.bf16.msra.mxu0 %v1460
        %2077 = vmatprep.subr.bf16.mxu0 %v1429
        %2078 = vmatpush1.bf16.msra.mxu0 %v1428
        %2079 = vmatprep.subr.bf16.mxu0 0
        %2080 = vmatpush2.bf16.msra.mxu0 0
        %2081 = vmatprep.subr.bf16.mxu0 0
        %2082 = vmatpush2.bf16.msra.mxu0 0
        %2083 = vmatprep.subr.bf16.mxu0 0
        %2084 = vmatpush2.bf16.msra.mxu0 0
        %2085 = vmatprep.subr.bf16.mxu0 0
        %2086 = vmatpush2.bf16.msra.mxu0 0
        %2087 = vmatprep.subr.bf16.mxu0 0
        %2088 = vmatpush2.bf16.msra.mxu0 0
        %2089 = vmatprep.subr.bf16.mxu0 0
        %2090 = vmatpush2.bf16.msra.mxu0 0
        %2091 = vmatprep.subr.bf16.mxu0 0
        %2092 = vmatpush2.bf16.msra.mxu0 0
        %2093 = vmatprep.subr.bf16.mxu0 0
        %2094 = vmatpush2.bf16.msra.mxu0 0
        %2095 = vmatprep.mubr.bf16.mxu0 0
        %2096 = vmatmul.mubr.bf16.gmra.mxu0 %v229
        %v2097 = vpop.f32.mrf.mxu0
        %v2098 = vadd.f32 %v521, %v2097
        %v2099 = vpop.f32.mrf.mxu0
        %v2100 = vadd.f32 %v525, %v2099
        %v2101 = vpop.f32.mrf.mxu0
        %v2102 = vadd.f32 %v521, %v2101
        %v2103 = vpop.f32.mrf.mxu0
        %v2104 = vadd.f32 %v525, %v2103
        %2105 = vdwg.mxu0
        %2106 = vmatprep.subr.bf16.mxu0 %v1655
        %2107 = vmatpush1.bf16.msra.mxu0 %v1654
        %2108 = vmatprep.subr.bf16.mxu0 %v1623
        %2109 = vmatpush1.bf16.msra.mxu0 %v1622
        %2110 = vmatprep.subr.bf16.mxu0 %v1591
        %2111 = vmatpush1.bf16.msra.mxu0 %v1590
        %2112 = vmatprep.subr.bf16.mxu0 %v1559
        %2113 = vmatpush1.bf16.msra.mxu0 %v1558
        %2114 = vmatprep.subr.bf16.mxu0 %v1527
        %2115 = vmatpush1.bf16.msra.mxu0 %v1526
        %2116 = vmatprep.subr.bf16.mxu0 %v1495
        %2117 = vmatpush1.bf16.msra.mxu0 %v1494
        %2118 = vmatprep.subr.bf16.mxu0 %v1463
        %2119 = vmatpush1.bf16.msra.mxu0 %v1462
        %2120 = vmatprep.subr.bf16.mxu0 %v1431
        %2121 = vmatpush1.bf16.msra.mxu0 %v1430
        %2122 = vmatprep.subr.bf16.mxu0 0
        %2123 = vmatpush2.bf16.msra.mxu0 0
        %2124 = vmatprep.subr.bf16.mxu0 0
        %2125 = vmatpush2.bf16.msra.mxu0 0
        %2126 = vmatprep.subr.bf16.mxu0 0
        %2127 = vmatpush2.bf16.msra.mxu0 0
        %2128 = vmatprep.subr.bf16.mxu0 0
        %2129 = vmatpush2.bf16.msra.mxu0 0
        %2130 = vmatprep.subr.bf16.mxu0 0
        %2131 = vmatpush2.bf16.msra.mxu0 0
        %2132 = vmatprep.subr.bf16.mxu0 0
        %2133 = vmatpush2.bf16.msra.mxu0 0
        %2134 = vmatprep.subr.bf16.mxu0 0
        %2135 = vmatpush2.bf16.msra.mxu0 0
        %2136 = vmatprep.subr.bf16.mxu0 0
        %2137 = vmatpush2.bf16.msra.mxu0 0
        %2138 = vmatprep.mubr.bf16.mxu0 0
        %2139 = vmatmul.mubr.bf16.gmra.mxu0 %v229
        %v2140 = vpop.f32.mrf.mxu0
        %v2141 = vadd.f32 %v529, %v2140
        %v2142 = vpop.f32.mrf.mxu0
        %v2143 = vadd.f32 %v533, %v2142
        %v2144 = vpop.f32.mrf.mxu0
        %v2145 = vadd.f32 %v529, %v2144
        %v2146 = vpop.f32.mrf.mxu0
        %v2147 = vadd.f32 %v533, %v2146
        %2148 = vdwg.mxu0
        %2149 = vmatprep.subr.bf16.mxu0 %v1657
        %2150 = vmatpush1.bf16.msra.mxu0 %v1656
        %2151 = vmatprep.subr.bf16.mxu0 %v1625
        %2152 = vmatpush1.bf16.msra.mxu0 %v1624
        %2153 = vmatprep.subr.bf16.mxu0 %v1593
        %2154 = vmatpush1.bf16.msra.mxu0 %v1592
        %2155 = vmatprep.subr.bf16.mxu0 %v1561
        %2156 = vmatpush1.bf16.msra.mxu0 %v1560
        %2157 = vmatprep.subr.bf16.mxu0 %v1529
        %2158 = vmatpush1.bf16.msra.mxu0 %v1528
        %2159 = vmatprep.subr.bf16.mxu0 %v1497
        %2160 = vmatpush1.bf16.msra.mxu0 %v1496
        %2161 = vmatprep.subr.bf16.mxu0 %v1465
        %2162 = vmatpush1.bf16.msra.mxu0 %v1464
        %2163 = vmatprep.subr.bf16.mxu0 %v1433
        %2164 = vmatpush1.bf16.msra.mxu0 %v1432
        %2165 = vmatprep.subr.bf16.mxu0 0
        %2166 = vmatpush2.bf16.msra.mxu0 0
        %2167 = vmatprep.subr.bf16.mxu0 0
        %2168 = vmatpush2.bf16.msra.mxu0 0
        %2169 = vmatprep.subr.bf16.mxu0 0
        %2170 = vmatpush2.bf16.msra.mxu0 0
        %2171 = vmatprep.subr.bf16.mxu0 0
        %2172 = vmatpush2.bf16.msra.mxu0 0
        %2173 = vmatprep.subr.bf16.mxu0 0
        %2174 = vmatpush2.bf16.msra.mxu0 0
        %2175 = vmatprep.subr.bf16.mxu0 0
        %2176 = vmatpush2.bf16.msra.mxu0 0
        %2177 = vmatprep.subr.bf16.mxu0 0
        %2178 = vmatpush2.bf16.msra.mxu0 0
        %2179 = vmatprep.subr.bf16.mxu0 0
        %2180 = vmatpush2.bf16.msra.mxu0 0
        %2181 = vmatprep.mubr.bf16.mxu0 0
        %2182 = vmatmul.mubr.bf16.gmra.mxu0 %v229
        %v2183 = vpop.f32.mrf.mxu0
        %v2184 = vadd.f32 %v537, %v2183
        %v2185 = vpop.f32.mrf.mxu0
        %v2186 = vadd.f32 %v541, %v2185
        %v2187 = vpop.f32.mrf.mxu0
        %v2188 = vadd.f32 %v537, %v2187
        %v2189 = vpop.f32.mrf.mxu0
        %v2190 = vadd.f32 %v541, %v2189
        %2191 = vdwg.mxu0
        %2192 = vmatprep.subr.bf16.mxu0 %v1659
        %2193 = vmatpush1.bf16.msra.mxu0 %v1658
        %2194 = vmatprep.subr.bf16.mxu0 %v1627
        %2195 = vmatpush1.bf16.msra.mxu0 %v1626
        %2196 = vmatprep.subr.bf16.mxu0 %v1595
        %2197 = vmatpush1.bf16.msra.mxu0 %v1594
        %2198 = vmatprep.subr.bf16.mxu0 %v1563
        %2199 = vmatpush1.bf16.msra.mxu0 %v1562
        %2200 = vmatprep.subr.bf16.mxu0 %v1531
        %2201 = vmatpush1.bf16.msra.mxu0 %v1530
        %2202 = vmatprep.subr.bf16.mxu0 %v1499
        %2203 = vmatpush1.bf16.msra.mxu0 %v1498
        %2204 = vmatprep.subr.bf16.mxu0 %v1467
        %2205 = vmatpush1.bf16.msra.mxu0 %v1466
        %2206 = vmatprep.subr.bf16.mxu0 %v1435
        %2207 = vmatpush1.bf16.msra.mxu0 %v1434
        %2208 = vmatprep.subr.bf16.mxu0 0
        %2209 = vmatpush2.bf16.msra.mxu0 0
        %2210 = vmatprep.subr.bf16.mxu0 0
        %2211 = vmatpush2.bf16.msra.mxu0 0
        %2212 = vmatprep.subr.bf16.mxu0 0
        %2213 = vmatpush2.bf16.msra.mxu0 0
        %2214 = vmatprep.subr.bf16.mxu0 0
        %2215 = vmatpush2.bf16.msra.mxu0 0
        %2216 = vmatprep.subr.bf16.mxu0 0
        %2217 = vmatpush2.bf16.msra.mxu0 0
        %2218 = vmatprep.subr.bf16.mxu0 0
        %2219 = vmatpush2.bf16.msra.mxu0 0
        %2220 = vmatprep.subr.bf16.mxu0 0
        %2221 = vmatpush2.bf16.msra.mxu0 0
        %2222 = vmatprep.subr.bf16.mxu0 0
        %2223 = vmatpush2.bf16.msra.mxu0 0
        %2224 = vmatprep.mubr.bf16.mxu0 0
        %2225 = vmatmul.mubr.bf16.gmra.mxu0 %v229
        %v2226 = vpop.f32.mrf.mxu0
        %v2227 = vadd.f32 %v545, %v2226
        %v2228 = vpop.f32.mrf.mxu0
        %v2229 = vadd.f32 %v549, %v2228
        %v2230 = vpop.f32.mrf.mxu0
        %v2231 = vadd.f32 %v545, %v2230
        %v2232 = vpop.f32.mrf.mxu0
        %v2233 = vadd.f32 %v549, %v2232
        %2234 = vdwg.mxu0
        %2235 = vmatprep.subr.bf16.mxu0 %v1661
        %2236 = vmatpush1.bf16.msra.mxu0 %v1660
        %2237 = vmatprep.subr.bf16.mxu0 %v1629
        %2238 = vmatpush1.bf16.msra.mxu0 %v1628
        %2239 = vmatprep.subr.bf16.mxu0 %v1597
        %2240 = vmatpush1.bf16.msra.mxu0 %v1596
        %2241 = vmatprep.subr.bf16.mxu0 %v1565
        %2242 = vmatpush1.bf16.msra.mxu0 %v1564
        %2243 = vmatprep.subr.bf16.mxu0 %v1533
        %2244 = vmatpush1.bf16.msra.mxu0 %v1532
        %2245 = vmatprep.subr.bf16.mxu0 %v1501
        %2246 = vmatpush1.bf16.msra.mxu0 %v1500
        %2247 = vmatprep.subr.bf16.mxu0 %v1469
        %2248 = vmatpush1.bf16.msra.mxu0 %v1468
        %2249 = vmatprep.subr.bf16.mxu0 %v1437
        %2250 = vmatpush1.bf16.msra.mxu0 %v1436
        %2251 = vmatprep.subr.bf16.mxu0 0
        %2252 = vmatpush2.bf16.msra.mxu0 0
        %2253 = vmatprep.subr.bf16.mxu0 0
        %2254 = vmatpush2.bf16.msra.mxu0 0
        %2255 = vmatprep.subr.bf16.mxu0 0
        %2256 = vmatpush2.bf16.msra.mxu0 0
        %2257 = vmatprep.subr.bf16.mxu0 0
        %2258 = vmatpush2.bf16.msra.mxu0 0
        %2259 = vmatprep.subr.bf16.mxu0 0
        %2260 = vmatpush2.bf16.msra.mxu0 0
        %2261 = vmatprep.subr.bf16.mxu0 0
        %2262 = vmatpush2.bf16.msra.mxu0 0
        %2263 = vmatprep.subr.bf16.mxu0 0
        %2264 = vmatpush2.bf16.msra.mxu0 0
        %2265 = vmatprep.subr.bf16.mxu0 0
        %2266 = vmatpush2.bf16.msra.mxu0 0
        %2267 = vmatprep.mubr.bf16.mxu0 0
        %2268 = vmatmul.mubr.bf16.gmra.mxu0 %v229
        %v2269 = vpop.f32.mrf.mxu0
        %v2270 = vadd.f32 %v553, %v2269
        %v2271 = vpop.f32.mrf.mxu0
        %v2272 = vadd.f32 %v557, %v2271
        %v2273 = vpop.f32.mrf.mxu0
        %v2274 = vadd.f32 %v553, %v2273
        %v2275 = vpop.f32.mrf.mxu0
        %v2276 = vadd.f32 %v557, %v2275
        %2277 = vdwg.mxu0
        %2278 = vmatprep.subr.bf16.mxu0 %v1663
        %2279 = vmatpush1.bf16.msra.mxu0 %v1662
        %2280 = vmatprep.subr.bf16.mxu0 %v1631
        %2281 = vmatpush1.bf16.msra.mxu0 %v1630
        %2282 = vmatprep.subr.bf16.mxu0 %v1599
        %2283 = vmatpush1.bf16.msra.mxu0 %v1598
        %2284 = vmatprep.subr.bf16.mxu0 %v1567
        %2285 = vmatpush1.bf16.msra.mxu0 %v1566
        %2286 = vmatprep.subr.bf16.mxu0 %v1535
        %2287 = vmatpush1.bf16.msra.mxu0 %v1534
        %2288 = vmatprep.subr.bf16.mxu0 %v1503
        %2289 = vmatpush1.bf16.msra.mxu0 %v1502
        %2290 = vmatprep.subr.bf16.mxu0 %v1471
        %2291 = vmatpush1.bf16.msra.mxu0 %v1470
        %2292 = vmatprep.subr.bf16.mxu0 %v1439
        %2293 = vmatpush1.bf16.msra.mxu0 %v1438
        %2294 = vmatprep.subr.bf16.mxu0 0
        %2295 = vmatpush2.bf16.msra.mxu0 0
        %2296 = vmatprep.subr.bf16.mxu0 0
        %2297 = vmatpush2.bf16.msra.mxu0 0
        %2298 = vmatprep.subr.bf16.mxu0 0
        %2299 = vmatpush2.bf16.msra.mxu0 0
        %2300 = vmatprep.subr.bf16.mxu0 0
        %2301 = vmatpush2.bf16.msra.mxu0 0
        %2302 = vmatprep.subr.bf16.mxu0 0
        %2303 = vmatpush2.bf16.msra.mxu0 0
        %2304 = vmatprep.subr.bf16.mxu0 0
        %2305 = vmatpush2.bf16.msra.mxu0 0
        %2306 = vmatprep.subr.bf16.mxu0 0
        %2307 = vmatpush2.bf16.msra.mxu0 0
        %2308 = vmatprep.subr.bf16.mxu0 0
        %2309 = vmatpush2.bf16.msra.mxu0 0
        %2310 = vmatprep.mubr.bf16.mxu0 0
        %2311 = vmatmul.mubr.bf16.gmra.mxu0 %v229
        %v2312 = vpop.f32.mrf.mxu0
        %v2313 = vadd.f32 %v561, %v2312
        %v2314 = vpop.f32.mrf.mxu0
        %v2315 = vadd.f32 %v565, %v2314
        %v2316 = vpop.f32.mrf.mxu0
        %v2317 = vadd.f32 %v561, %v2316
        %v2318 = vpop.f32.mrf.mxu0
        %v2319 = vadd.f32 %v565, %v2318
        %2320 = vdwg.mxu0
        %2321 = vmatprep.subr.bf16.mxu0 %v1665
        %2322 = vmatpush1.bf16.msra.mxu0 %v1664
        %2323 = vmatprep.subr.bf16.mxu0 %v1633
        %2324 = vmatpush1.bf16.msra.mxu0 %v1632
        %2325 = vmatprep.subr.bf16.mxu0 %v1601
        %2326 = vmatpush1.bf16.msra.mxu0 %v1600
        %2327 = vmatprep.subr.bf16.mxu0 %v1569
        %2328 = vmatpush1.bf16.msra.mxu0 %v1568
        %2329 = vmatprep.subr.bf16.mxu0 %v1537
        %2330 = vmatpush1.bf16.msra.mxu0 %v1536
        %2331 = vmatprep.subr.bf16.mxu0 %v1505
        %2332 = vmatpush1.bf16.msra.mxu0 %v1504
        %2333 = vmatprep.subr.bf16.mxu0 %v1473
        %2334 = vmatpush1.bf16.msra.mxu0 %v1472
        %2335 = vmatprep.subr.bf16.mxu0 %v1441
        %2336 = vmatpush1.bf16.msra.mxu0 %v1440
        %2337 = vmatprep.subr.bf16.mxu0 0
        %2338 = vmatpush2.bf16.msra.mxu0 0
        %2339 = vmatprep.subr.bf16.mxu0 0
        %2340 = vmatpush2.bf16.msra.mxu0 0
        %2341 = vmatprep.subr.bf16.mxu0 0
        %2342 = vmatpush2.bf16.msra.mxu0 0
        %2343 = vmatprep.subr.bf16.mxu0 0
        %2344 = vmatpush2.bf16.msra.mxu0 0
        %2345 = vmatprep.subr.bf16.mxu0 0
        %2346 = vmatpush2.bf16.msra.mxu0 0
        %2347 = vmatprep.subr.bf16.mxu0 0
        %2348 = vmatpush2.bf16.msra.mxu0 0
        %2349 = vmatprep.subr.bf16.mxu0 0
        %2350 = vmatpush2.bf16.msra.mxu0 0
        %2351 = vmatprep.subr.bf16.mxu0 0
        %2352 = vmatpush2.bf16.msra.mxu0 0
        %2353 = vmatprep.mubr.bf16.mxu0 0
        %2354 = vmatmul.mubr.bf16.gmra.mxu0 %v229
        %v2355 = vpop.f32.mrf.mxu0
        %v2356 = vadd.f32 %v569, %v2355
        %v2357 = vpop.f32.mrf.mxu0
        %v2358 = vadd.f32 %v573, %v2357
        %v2359 = vpop.f32.mrf.mxu0
        %v2360 = vadd.f32 %v569, %v2359
        %v2361 = vpop.f32.mrf.mxu0
        %v2362 = vadd.f32 %v573, %v2361
        %2363 = vdwg.mxu0
        %2364 = vmatprep.subr.bf16.mxu0 %v1667
        %2365 = vmatpush1.bf16.msra.mxu0 %v1666
        %2366 = vmatprep.subr.bf16.mxu0 %v1635
        %2367 = vmatpush1.bf16.msra.mxu0 %v1634
        %2368 = vmatprep.subr.bf16.mxu0 %v1603
        %2369 = vmatpush1.bf16.msra.mxu0 %v1602
        %2370 = vmatprep.subr.bf16.mxu0 %v1571
        %2371 = vmatpush1.bf16.msra.mxu0 %v1570
        %2372 = vmatprep.subr.bf16.mxu0 %v1539
        %2373 = vmatpush1.bf16.msra.mxu0 %v1538
        %2374 = vmatprep.subr.bf16.mxu0 %v1507
        %2375 = vmatpush1.bf16.msra.mxu0 %v1506
        %2376 = vmatprep.subr.bf16.mxu0 %v1475
        %2377 = vmatpush1.bf16.msra.mxu0 %v1474
        %2378 = vmatprep.subr.bf16.mxu0 %v1443
        %2379 = vmatpush1.bf16.msra.mxu0 %v1442
        %2380 = vmatprep.subr.bf16.mxu0 0
        %2381 = vmatpush2.bf16.msra.mxu0 0
        %2382 = vmatprep.subr.bf16.mxu0 0
        %2383 = vmatpush2.bf16.msra.mxu0 0
        %2384 = vmatprep.subr.bf16.mxu0 0
        %2385 = vmatpush2.bf16.msra.mxu0 0
        %2386 = vmatprep.subr.bf16.mxu0 0
        %2387 = vmatpush2.bf16.msra.mxu0 0
        %2388 = vmatprep.subr.bf16.mxu0 0
        %2389 = vmatpush2.bf16.msra.mxu0 0
        %2390 = vmatprep.subr.bf16.mxu0 0
        %2391 = vmatpush2.bf16.msra.mxu0 0
        %2392 = vmatprep.subr.bf16.mxu0 0
        %2393 = vmatpush2.bf16.msra.mxu0 0
        %2394 = vmatprep.subr.bf16.mxu0 0
        %2395 = vmatpush2.bf16.msra.mxu0 0
        %2396 = vmatprep.mubr.bf16.mxu0 0
        %2397 = vmatmul.mubr.bf16.gmra.mxu0 %v229
        %v2398 = vpop.f32.mrf.mxu0
        %v2399 = vadd.f32 %v577, %v2398
        %v2400 = vpop.f32.mrf.mxu0
        %v2401 = vadd.f32 %v581, %v2400
        %v2402 = vpop.f32.mrf.mxu0
        %v2403 = vadd.f32 %v577, %v2402
        %v2404 = vpop.f32.mrf.mxu0
        %v2405 = vadd.f32 %v581, %v2404
        %2406 = vdwg.mxu0
        %2407 = vmatprep.subr.bf16.mxu0 %v1669
        %2408 = vmatpush1.bf16.msra.mxu0 %v1668
        %2409 = vmatprep.subr.bf16.mxu0 %v1637
        %2410 = vmatpush1.bf16.msra.mxu0 %v1636
        %2411 = vmatprep.subr.bf16.mxu0 %v1605
        %2412 = vmatpush1.bf16.msra.mxu0 %v1604
        %2413 = vmatprep.subr.bf16.mxu0 %v1573
        %2414 = vmatpush1.bf16.msra.mxu0 %v1572
        %2415 = vmatprep.subr.bf16.mxu0 %v1541
        %2416 = vmatpush1.bf16.msra.mxu0 %v1540
        %2417 = vmatprep.subr.bf16.mxu0 %v1509
        %2418 = vmatpush1.bf16.msra.mxu0 %v1508
        %2419 = vmatprep.subr.bf16.mxu0 %v1477
        %2420 = vmatpush1.bf16.msra.mxu0 %v1476
        %2421 = vmatprep.subr.bf16.mxu0 %v1445
        %2422 = vmatpush1.bf16.msra.mxu0 %v1444
        %2423 = vmatprep.subr.bf16.mxu0 0
        %2424 = vmatpush2.bf16.msra.mxu0 0
        %2425 = vmatprep.subr.bf16.mxu0 0
        %2426 = vmatpush2.bf16.msra.mxu0 0
        %2427 = vmatprep.subr.bf16.mxu0 0
        %2428 = vmatpush2.bf16.msra.mxu0 0
        %2429 = vmatprep.subr.bf16.mxu0 0
        %2430 = vmatpush2.bf16.msra.mxu0 0
        %2431 = vmatprep.subr.bf16.mxu0 0
        %2432 = vmatpush2.bf16.msra.mxu0 0
        %2433 = vmatprep.subr.bf16.mxu0 0
        %2434 = vmatpush2.bf16.msra.mxu0 0
        %2435 = vmatprep.subr.bf16.mxu0 0
        %2436 = vmatpush2.bf16.msra.mxu0 0
        %2437 = vmatprep.subr.bf16.mxu0 0
        %2438 = vmatpush2.bf16.msra.mxu0 0
        %2439 = vmatprep.mubr.bf16.mxu0 0
        %2440 = vmatmul.mubr.bf16.gmra.mxu0 %v229
        %v2441 = vpop.f32.mrf.mxu0
        %v2442 = vadd.f32 %v585, %v2441
        %v2443 = vpop.f32.mrf.mxu0
        %v2444 = vadd.f32 %v589, %v2443
        %v2445 = vpop.f32.mrf.mxu0
        %v2446 = vadd.f32 %v585, %v2445
        %v2447 = vpop.f32.mrf.mxu0
        %v2448 = vadd.f32 %v589, %v2447
        %2449 = vdwg.mxu0
        %2450 = vmatprep.subr.bf16.mxu0 %v1671
        %2451 = vmatpush1.bf16.msra.mxu0 %v1670
        %2452 = vmatprep.subr.bf16.mxu0 %v1639
        %2453 = vmatpush1.bf16.msra.mxu0 %v1638
        %2454 = vmatprep.subr.bf16.mxu0 %v1607
        %2455 = vmatpush1.bf16.msra.mxu0 %v1606
        %2456 = vmatprep.subr.bf16.mxu0 %v1575
        %2457 = vmatpush1.bf16.msra.mxu0 %v1574
        %2458 = vmatprep.subr.bf16.mxu0 %v1543
        %2459 = vmatpush1.bf16.msra.mxu0 %v1542
        %2460 = vmatprep.subr.bf16.mxu0 %v1511
        %2461 = vmatpush1.bf16.msra.mxu0 %v1510
        %2462 = vmatprep.subr.bf16.mxu0 %v1479
        %2463 = vmatpush1.bf16.msra.mxu0 %v1478
        %2464 = vmatprep.subr.bf16.mxu0 %v1447
        %2465 = vmatpush1.bf16.msra.mxu0 %v1446
        %2466 = vmatprep.subr.bf16.mxu0 0
        %2467 = vmatpush2.bf16.msra.mxu0 0
        %2468 = vmatprep.subr.bf16.mxu0 0
        %2469 = vmatpush2.bf16.msra.mxu0 0
        %2470 = vmatprep.subr.bf16.mxu0 0
        %2471 = vmatpush2.bf16.msra.mxu0 0
        %2472 = vmatprep.subr.bf16.mxu0 0
        %2473 = vmatpush2.bf16.msra.mxu0 0
        %2474 = vmatprep.subr.bf16.mxu0 0
        %2475 = vmatpush2.bf16.msra.mxu0 0
        %2476 = vmatprep.subr.bf16.mxu0 0
        %2477 = vmatpush2.bf16.msra.mxu0 0
        %2478 = vmatprep.subr.bf16.mxu0 0
        %2479 = vmatpush2.bf16.msra.mxu0 0
        %2480 = vmatprep.subr.bf16.mxu0 0
        %2481 = vmatpush2.bf16.msra.mxu0 0
        %2482 = vmatprep.mubr.bf16.mxu0 0
        %2483 = vmatmul.mubr.bf16.gmra.mxu0 %v229
        %v2484 = vpop.f32.mrf.mxu0
        %v2485 = vadd.f32 %v593, %v2484
        %v2486 = vpop.f32.mrf.mxu0
        %v2487 = vadd.f32 %v597, %v2486
        %v2488 = vpop.f32.mrf.mxu0
        %v2489 = vadd.f32 %v593, %v2488
        %v2490 = vpop.f32.mrf.mxu0
        %v2491 = vadd.f32 %v597, %v2490
        %2492 = vdwg.mxu0
        %2493 = vmatprep.subr.bf16.mxu0 %v1673
        %2494 = vmatpush1.bf16.msra.mxu0 %v1672
        %2495 = vmatprep.subr.bf16.mxu0 %v1641
        %2496 = vmatpush1.bf16.msra.mxu0 %v1640
        %2497 = vmatprep.subr.bf16.mxu0 %v1609
        %2498 = vmatpush1.bf16.msra.mxu0 %v1608
        %2499 = vmatprep.subr.bf16.mxu0 %v1577
        %2500 = vmatpush1.bf16.msra.mxu0 %v1576
        %2501 = vmatprep.subr.bf16.mxu0 %v1545
        %2502 = vmatpush1.bf16.msra.mxu0 %v1544
        %2503 = vmatprep.subr.bf16.mxu0 %v1513
        %2504 = vmatpush1.bf16.msra.mxu0 %v1512
        %2505 = vmatprep.subr.bf16.mxu0 %v1481
        %2506 = vmatpush1.bf16.msra.mxu0 %v1480
        %2507 = vmatprep.subr.bf16.mxu0 %v1449
        %2508 = vmatpush1.bf16.msra.mxu0 %v1448
        %2509 = vmatprep.subr.bf16.mxu0 0
        %2510 = vmatpush2.bf16.msra.mxu0 0
        %2511 = vmatprep.subr.bf16.mxu0 0
        %2512 = vmatpush2.bf16.msra.mxu0 0
        %2513 = vmatprep.subr.bf16.mxu0 0
        %2514 = vmatpush2.bf16.msra.mxu0 0
        %2515 = vmatprep.subr.bf16.mxu0 0
        %2516 = vmatpush2.bf16.msra.mxu0 0
        %2517 = vmatprep.subr.bf16.mxu0 0
        %2518 = vmatpush2.bf16.msra.mxu0 0
        %2519 = vmatprep.subr.bf16.mxu0 0
        %2520 = vmatpush2.bf16.msra.mxu0 0
        %2521 = vmatprep.subr.bf16.mxu0 0
        %2522 = vmatpush2.bf16.msra.mxu0 0
        %2523 = vmatprep.subr.bf16.mxu0 0
        %2524 = vmatpush2.bf16.msra.mxu0 0
        %2525 = vmatprep.mubr.bf16.mxu0 0
        %2526 = vmatmul.mubr.bf16.gmra.mxu0 %v229
        %v2527 = vpop.f32.mrf.mxu0
        %v2528 = vadd.f32 %v601, %v2527
        %v2529 = vpop.f32.mrf.mxu0
        %v2530 = vadd.f32 %v605, %v2529
        %v2531 = vpop.f32.mrf.mxu0
        %v2532 = vadd.f32 %v601, %v2531
        %v2533 = vpop.f32.mrf.mxu0
        %v2534 = vadd.f32 %v605, %v2533
        %2535 = vdwg.mxu0
        %2536 = vmatprep.subr.bf16.mxu0 %v1675
        %2537 = vmatpush1.bf16.msra.mxu0 %v1674
        %2538 = vmatprep.subr.bf16.mxu0 %v1643
        %2539 = vmatpush1.bf16.msra.mxu0 %v1642
        %2540 = vmatprep.subr.bf16.mxu0 %v1611
        %2541 = vmatpush1.bf16.msra.mxu0 %v1610
        %2542 = vmatprep.subr.bf16.mxu0 %v1579
        %2543 = vmatpush1.bf16.msra.mxu0 %v1578
        %2544 = vmatprep.subr.bf16.mxu0 %v1547
        %2545 = vmatpush1.bf16.msra.mxu0 %v1546
        %2546 = vmatprep.subr.bf16.mxu0 %v1515
        %2547 = vmatpush1.bf16.msra.mxu0 %v1514
        %2548 = vmatprep.subr.bf16.mxu0 %v1483
        %2549 = vmatpush1.bf16.msra.mxu0 %v1482
        %2550 = vmatprep.subr.bf16.mxu0 %v1451
        %2551 = vmatpush1.bf16.msra.mxu0 %v1450
        %2552 = vmatprep.subr.bf16.mxu0 0
        %2553 = vmatpush2.bf16.msra.mxu0 0
        %2554 = vmatprep.subr.bf16.mxu0 0
        %2555 = vmatpush2.bf16.msra.mxu0 0
        %2556 = vmatprep.subr.bf16.mxu0 0
        %2557 = vmatpush2.bf16.msra.mxu0 0
        %2558 = vmatprep.subr.bf16.mxu0 0
        %2559 = vmatpush2.bf16.msra.mxu0 0
        %2560 = vmatprep.subr.bf16.mxu0 0
        %2561 = vmatpush2.bf16.msra.mxu0 0
        %2562 = vmatprep.subr.bf16.mxu0 0
        %2563 = vmatpush2.bf16.msra.mxu0 0
        %2564 = vmatprep.subr.bf16.mxu0 0
        %2565 = vmatpush2.bf16.msra.mxu0 0
        %2566 = vmatprep.subr.bf16.mxu0 0
        %2567 = vmatpush2.bf16.msra.mxu0 0
        %2568 = vmatprep.mubr.bf16.mxu0 0
        %2569 = vmatmul.mubr.bf16.gmra.mxu0 %v229
        %v2570 = vpop.f32.mrf.mxu0
        %v2571 = vadd.f32 %v609, %v2570
        %v2572 = vpop.f32.mrf.mxu0
        %v2573 = vadd.f32 %v613, %v2572
        %v2574 = vpop.f32.mrf.mxu0
        %v2575 = vadd.f32 %v609, %v2574
        %v2576 = vpop.f32.mrf.mxu0
        %v2577 = vadd.f32 %v613, %v2576
        %2578 = vdwg.mxu0
        %2579 = vmatprep.subr.bf16.mxu0 %v1677
        %2580 = vmatpush1.bf16.msra.mxu0 %v1676
        %2581 = vmatprep.subr.bf16.mxu0 %v1645
        %2582 = vmatpush1.bf16.msra.mxu0 %v1644
        %2583 = vmatprep.subr.bf16.mxu0 %v1613
        %2584 = vmatpush1.bf16.msra.mxu0 %v1612
        %2585 = vmatprep.subr.bf16.mxu0 %v1581
        %2586 = vmatpush1.bf16.msra.mxu0 %v1580
        %2587 = vmatprep.subr.bf16.mxu0 %v1549
        %2588 = vmatpush1.bf16.msra.mxu0 %v1548
        %2589 = vmatprep.subr.bf16.mxu0 %v1517
        %2590 = vmatpush1.bf16.msra.mxu0 %v1516
        %2591 = vmatprep.subr.bf16.mxu0 %v1485
        %2592 = vmatpush1.bf16.msra.mxu0 %v1484
        %2593 = vmatprep.subr.bf16.mxu0 %v1453
        %2594 = vmatpush1.bf16.msra.mxu0 %v1452
        %2595 = vmatprep.subr.bf16.mxu0 0
        %2596 = vmatpush2.bf16.msra.mxu0 0
        %2597 = vmatprep.subr.bf16.mxu0 0
        %2598 = vmatpush2.bf16.msra.mxu0 0
        %2599 = vmatprep.subr.bf16.mxu0 0
        %2600 = vmatpush2.bf16.msra.mxu0 0
        %2601 = vmatprep.subr.bf16.mxu0 0
        %2602 = vmatpush2.bf16.msra.mxu0 0
        %2603 = vmatprep.subr.bf16.mxu0 0
        %2604 = vmatpush2.bf16.msra.mxu0 0
        %2605 = vmatprep.subr.bf16.mxu0 0
        %2606 = vmatpush2.bf16.msra.mxu0 0
        %2607 = vmatprep.subr.bf16.mxu0 0
        %2608 = vmatpush2.bf16.msra.mxu0 0
        %2609 = vmatprep.subr.bf16.mxu0 0
        %2610 = vmatpush2.bf16.msra.mxu0 0
        %2611 = vmatprep.mubr.bf16.mxu0 0
        %2612 = vmatmul.mubr.bf16.gmra.mxu0 %v229
        %v2613 = vpop.f32.mrf.mxu0
        %v2614 = vadd.f32 %v617, %v2613
        %v2615 = vpop.f32.mrf.mxu0
        %v2616 = vadd.f32 %v621, %v2615
        %v2617 = vpop.f32.mrf.mxu0
        %v2618 = vadd.f32 %v617, %v2617
        %v2619 = vpop.f32.mrf.mxu0
        %v2620 = vadd.f32 %v621, %v2619
        %2621 = vdwg.mxu0
        %2622 = vst [vmem:[%s222] sm:$0xff] %v1969
        %2623 = vst [vmem:[%s222 + $0x8] sm:$0xff] %v1971
        %2624 = vst [vmem:[%s222 + $0x10] sm:$0xff] %v2012
        %2625 = vst [vmem:[%s222 + $0x18] sm:$0xff] %v2014
        %2626 = vst [vmem:[%s222 + $0x20] sm:$0xff] %v2055
        %2627 = vst [vmem:[%s222 + $0x28] sm:$0xff] %v2057
        %2628 = vst [vmem:[%s222 + $0x30] sm:$0xff] %v2098
        %2629 = vst [vmem:[%s222 + $0x38] sm:$0xff] %v2100
        %2630 = vst [vmem:[%s222 + $0x40] sm:$0xff] %v2141
        %2631 = vst [vmem:[%s222 + $0x48] sm:$0xff] %v2143
        %2632 = vst [vmem:[%s222 + $0x50] sm:$0xff] %v2184
        %2633 = vst [vmem:[%s222 + $0x58] sm:$0xff] %v2186
        %2634 = vst [vmem:[%s222 + $0x60] sm:$0xff] %v2227
        %2635 = vst [vmem:[%s222 + $0x68] sm:$0xff] %v2229
        %2636 = vst [vmem:[%s222 + $0x70] sm:$0xff] %v2270
        %2637 = vst [vmem:[%s222 + $0x78] sm:$0xff] %v2272
        %2638 = vst [vmem:[%s222 + $0x80] sm:$0xff] %v2313
        %2639 = vst [vmem:[%s222 + $0x88] sm:$0xff] %v2315
        %2640 = vst [vmem:[%s222 + $0x90] sm:$0xff] %v2356
        %2641 = vst [vmem:[%s222 + $0x98] sm:$0xff] %v2358
        %2642 = vst [vmem:[%s222 + $0xa0] sm:$0xff] %v2399
        %2643 = vst [vmem:[%s222 + $0xa8] sm:$0xff] %v2401
        %2644 = vst [vmem:[%s222 + $0xb0] sm:$0xff] %v2442
        %2645 = vst [vmem:[%s222 + $0xb8] sm:$0xff] %v2444
        %2646 = vst [vmem:[%s222 + $0xc0] sm:$0xff] %v2485
        %2647 = vst [vmem:[%s222 + $0xc8] sm:$0xff] %v2487
        %2648 = vst [vmem:[%s222 + $0xd0] sm:$0xff] %v2528
        %2649 = vst [vmem:[%s222 + $0xd8] sm:$0xff] %v2530
        %2650 = vst [vmem:[%s222 + $0xe0] sm:$0xff] %v2571
        %2651 = vst [vmem:[%s222 + $0xe8] sm:$0xff] %v2573
        %2652 = vst [vmem:[%s222 + $0xf0] sm:$0xff] %v2614
        %2653 = vst [vmem:[%s222 + $0xf8] sm:$0xff] %v2616
        %2654 = vst [vmem:[%s222 + $0x100] sm:$0xf] %v1973
        %2655 = vst [vmem:[%s222 + $0x108] sm:$0xf] %v1975
        %2656 = vst [vmem:[%s222 + $0x110] sm:$0xf] %v2016
        %2657 = vst [vmem:[%s222 + $0x118] sm:$0xf] %v2018
        %2658 = vst [vmem:[%s222 + $0x120] sm:$0xf] %v2059
        %2659 = vst [vmem:[%s222 + $0x128] sm:$0xf] %v2061
        %2660 = vst [vmem:[%s222 + $0x130] sm:$0xf] %v2102
        %2661 = vst [vmem:[%s222 + $0x138] sm:$0xf] %v2104
        %2662 = vst [vmem:[%s222 + $0x140] sm:$0xf] %v2145
        %2663 = vst [vmem:[%s222 + $0x148] sm:$0xf] %v2147
        %2664 = vst [vmem:[%s222 + $0x150] sm:$0xf] %v2188
        %2665 = vst [vmem:[%s222 + $0x158] sm:$0xf] %v2190
        %2666 = vst [vmem:[%s222 + $0x160] sm:$0xf] %v2231
        %2667 = vst [vmem:[%s222 + $0x168] sm:$0xf] %v2233
        %2668 = vst [vmem:[%s222 + $0x170] sm:$0xf] %v2274
        %2669 = vst [vmem:[%s222 + $0x178] sm:$0xf] %v2276
        %2670 = vst [vmem:[%s222 + $0x180] sm:$0xf] %v2317
        %2671 = vst [vmem:[%s222 + $0x188] sm:$0xf] %v2319
        %2672 = vst [vmem:[%s222 + $0x190] sm:$0xf] %v2360
        %2673 = vst [vmem:[%s222 + $0x198] sm:$0xf] %v2362
        %2674 = vst [vmem:[%s222 + $0x1a0] sm:$0xf] %v2403
        %2675 = vst [vmem:[%s222 + $0x1a8] sm:$0xf] %v2405
        %2676 = vst [vmem:[%s222 + $0x1b0] sm:$0xf] %v2446
        %2677 = vst [vmem:[%s222 + $0x1b8] sm:$0xf] %v2448
        %2678 = vst [vmem:[%s222 + $0x1c0] sm:$0xf] %v2489
        %2679 = vst [vmem:[%s222 + $0x1c8] sm:$0xf] %v2491
        %2680 = vst [vmem:[%s222 + $0x1d0] sm:$0xf] %v2532
        %2681 = vst [vmem:[%s222 + $0x1d8] sm:$0xf] %v2534
        %2682 = vst [vmem:[%s222 + $0x1e0] sm:$0xf] %v2575
        %2683 = vst [vmem:[%s222 + $0x1e8] sm:$0xf] %v2577
        %2684 = vst [vmem:[%s222 + $0x1f0] sm:$0xf] %v2618
        %2685 = vst [vmem:[%s222 + $0x1f8] sm:$0xf] %v2620
        %s2686 = sand.u32 %s101, 1
        %s2687 = sand.u32 %s101, 1
        %s2688 = smul.addr %s2687, 512
        %s2689 = scalar_lea.vmem [#allocation6], %s2688
        // Predicated region
        $region41: #{per_view_forward.5} parent=31 // pred_check
          %p2690 = pneg %p111
        $region42: #{per_view_forward.5} parent=31 // pred_check_branch
          %2692 = sbr.rel (%p2690) target = $region44
        $region43: #{per_view_forward.5} parent=31 // pred_region
          %s2693 = smul.u32 32, %s20
          %s2694 = smul.addr %s2693, 8
          %s2695 = scalar_lea.vmem %s3, %s2694
          // Predicated region
          $region45: #{per_view_forward.5} parent=43 // pred_check
            _
          $region46: #{per_view_forward.5} parent=43 // pred_check_branch
            %2697 = sbr.rel (0) target = $region48
          $region47: #{per_view_forward.5} parent=43 // pred_region
            // Predicated region
            $region49: #{per_view_forward.5} parent=47 // pred_check
              _
            $region50: #{per_view_forward.5} parent=47 // pred_check_branch
              %2699 = sbr.rel (0) target = $region52
            $region51: #{per_view_forward.5} parent=47 // pred_region
              loop: start=0, step=1, limit=1
              $region53: #{per_view_forward.5} parent=51 // loop_pre_header
                _
              $region54: #{per_view_forward.5} parent=51 // loop_header
                %s2701 = sphi 0, %s2705
                %p2702 = scmp.ge.s32.totalorder %s2701, 1
                %s2706 = sphi %s2689, %s2689
                %s2707 = sphi %s2695, %s2695
              $region55: #{per_view_forward.5} parent=51 // loop_header_branch
                %2704 = sbr.rel (%p2702) target = $region59
              $region56: #{per_view_forward.5} parent=51 // loop_body
                %v2708 = vld [vmem:[%s2706] sm:$0xff]
                %2709 = vst [vmem:[%s2707] sm:$0xff] %v2708
                %v2710 = vld [vmem:[%s2706 + $0x8] sm:$0xff]
                %2711 = vst [vmem:[%s2707 + $0x8] sm:$0xff] %v2710
                %v2712 = vld [vmem:[%s2706 + $0x10] sm:$0xff]
                %2713 = vst [vmem:[%s2707 + $0x10] sm:$0xff] %v2712
                %v2714 = vld [vmem:[%s2706 + $0x18] sm:$0xff]
                %2715 = vst [vmem:[%s2707 + $0x18] sm:$0xff] %v2714
                %v2716 = vld [vmem:[%s2706 + $0x20] sm:$0xff]
                %2717 = vst [vmem:[%s2707 + $0x20] sm:$0xff] %v2716
                %v2718 = vld [vmem:[%s2706 + $0x28] sm:$0xff]
                %2719 = vst [vmem:[%s2707 + $0x28] sm:$0xff] %v2718
                %v2720 = vld [vmem:[%s2706 + $0x30] sm:$0xff]
                %2721 = vst [vmem:[%s2707 + $0x30] sm:$0xff] %v2720
                %v2722 = vld [vmem:[%s2706 + $0x38] sm:$0xff]
                %2723 = vst [vmem:[%s2707 + $0x38] sm:$0xff] %v2722
                %v2724 = vld [vmem:[%s2706 + $0x40] sm:$0xff]
                %2725 = vst [vmem:[%s2707 + $0x40] sm:$0xff] %v2724
                %v2726 = vld [vmem:[%s2706 + $0x48] sm:$0xff]
                %2727 = vst [vmem:[%s2707 + $0x48] sm:$0xff] %v2726
                %v2728 = vld [vmem:[%s2706 + $0x50] sm:$0xff]
                %2729 = vst [vmem:[%s2707 + $0x50] sm:$0xff] %v2728
                %v2730 = vld [vmem:[%s2706 + $0x58] sm:$0xff]
                %2731 = vst [vmem:[%s2707 + $0x58] sm:$0xff] %v2730
                %v2732 = vld [vmem:[%s2706 + $0x60] sm:$0xff]
                %2733 = vst [vmem:[%s2707 + $0x60] sm:$0xff] %v2732
                %v2734 = vld [vmem:[%s2706 + $0x68] sm:$0xff]
                %2735 = vst [vmem:[%s2707 + $0x68] sm:$0xff] %v2734
                %v2736 = vld [vmem:[%s2706 + $0x70] sm:$0xff]
                %2737 = vst [vmem:[%s2707 + $0x70] sm:$0xff] %v2736
                %v2738 = vld [vmem:[%s2706 + $0x78] sm:$0xff]
                %2739 = vst [vmem:[%s2707 + $0x78] sm:$0xff] %v2738
                %v2740 = vld [vmem:[%s2706 + $0x80] sm:$0xff]
                %2741 = vst [vmem:[%s2707 + $0x80] sm:$0xff] %v2740
                %v2742 = vld [vmem:[%s2706 + $0x88] sm:$0xff]
                %2743 = vst [vmem:[%s2707 + $0x88] sm:$0xff] %v2742
                %v2744 = vld [vmem:[%s2706 + $0x90] sm:$0xff]
                %2745 = vst [vmem:[%s2707 + $0x90] sm:$0xff] %v2744
                %v2746 = vld [vmem:[%s2706 + $0x98] sm:$0xff]
                %2747 = vst [vmem:[%s2707 + $0x98] sm:$0xff] %v2746
                %v2748 = vld [vmem:[%s2706 + $0xa0] sm:$0xff]
                %2749 = vst [vmem:[%s2707 + $0xa0] sm:$0xff] %v2748
                %v2750 = vld [vmem:[%s2706 + $0xa8] sm:$0xff]
                %2751 = vst [vmem:[%s2707 + $0xa8] sm:$0xff] %v2750
                %v2752 = vld [vmem:[%s2706 + $0xb0] sm:$0xff]
                %2753 = vst [vmem:[%s2707 + $0xb0] sm:$0xff] %v2752
                %v2754 = vld [vmem:[%s2706 + $0xb8] sm:$0xff]
                %2755 = vst [vmem:[%s2707 + $0xb8] sm:$0xff] %v2754
                %v2756 = vld [vmem:[%s2706 + $0xc0] sm:$0xff]
                %2757 = vst [vmem:[%s2707 + $0xc0] sm:$0xff] %v2756
                %v2758 = vld [vmem:[%s2706 + $0xc8] sm:$0xff]
                %2759 = vst [vmem:[%s2707 + $0xc8] sm:$0xff] %v2758
                %v2760 = vld [vmem:[%s2706 + $0xd0] sm:$0xff]
                %2761 = vst [vmem:[%s2707 + $0xd0] sm:$0xff] %v2760
                %v2762 = vld [vmem:[%s2706 + $0xd8] sm:$0xff]
                %2763 = vst [vmem:[%s2707 + $0xd8] sm:$0xff] %v2762
                %v2764 = vld [vmem:[%s2706 + $0xe0] sm:$0xff]
                %2765 = vst [vmem:[%s2707 + $0xe0] sm:$0xff] %v2764
                %v2766 = vld [vmem:[%s2706 + $0xe8] sm:$0xff]
                %2767 = vst [vmem:[%s2707 + $0xe8] sm:$0xff] %v2766
                %v2768 = vld [vmem:[%s2706 + $0xf0] sm:$0xff]
                %2769 = vst [vmem:[%s2707 + $0xf0] sm:$0xff] %v2768
                %v2770 = vld [vmem:[%s2706 + $0xf8] sm:$0xff]
                %2771 = vst [vmem:[%s2707 + $0xf8] sm:$0xff] %v2770
                %v2772 = vld [vmem:[%s2706 + $0x100] sm:$0xff]
                %2773 = vst [vmem:[%s2707 + $0x800] sm:$0xff] %v2772
                %v2774 = vld [vmem:[%s2706 + $0x108] sm:$0xff]
                %2775 = vst [vmem:[%s2707 + $0x808] sm:$0xff] %v2774
                %v2776 = vld [vmem:[%s2706 + $0x110] sm:$0xff]
                %2777 = vst [vmem:[%s2707 + $0x810] sm:$0xff] %v2776
                %v2778 = vld [vmem:[%s2706 + $0x118] sm:$0xff]
                %2779 = vst [vmem:[%s2707 + $0x818] sm:$0xff] %v2778
                %v2780 = vld [vmem:[%s2706 + $0x120] sm:$0xff]
                %2781 = vst [vmem:[%s2707 + $0x820] sm:$0xff] %v2780
                %v2782 = vld [vmem:[%s2706 + $0x128] sm:$0xff]
                %2783 = vst [vmem:[%s2707 + $0x828] sm:$0xff] %v2782
                %v2784 = vld [vmem:[%s2706 + $0x130] sm:$0xff]
                %2785 = vst [vmem:[%s2707 + $0x830] sm:$0xff] %v2784
                %v2786 = vld [vmem:[%s2706 + $0x138] sm:$0xff]
                %2787 = vst [vmem:[%s2707 + $0x838] sm:$0xff] %v2786
                %v2788 = vld [vmem:[%s2706 + $0x140] sm:$0xff]
                %2789 = vst [vmem:[%s2707 + $0x840] sm:$0xff] %v2788
                %v2790 = vld [vmem:[%s2706 + $0x148] sm:$0xff]
                %2791 = vst [vmem:[%s2707 + $0x848] sm:$0xff] %v2790
                %v2792 = vld [vmem:[%s2706 + $0x150] sm:$0xff]
                %2793 = vst [vmem:[%s2707 + $0x850] sm:$0xff] %v2792
                %v2794 = vld [vmem:[%s2706 + $0x158] sm:$0xff]
                %2795 = vst [vmem:[%s2707 + $0x858] sm:$0xff] %v2794
                %v2796 = vld [vmem:[%s2706 + $0x160] sm:$0xff]
                %2797 = vst [vmem:[%s2707 + $0x860] sm:$0xff] %v2796
                %v2798 = vld [vmem:[%s2706 + $0x168] sm:$0xff]
                %2799 = vst [vmem:[%s2707 + $0x868] sm:$0xff] %v2798
                %v2800 = vld [vmem:[%s2706 + $0x170] sm:$0xff]
                %2801 = vst [vmem:[%s2707 + $0x870] sm:$0xff] %v2800
                %v2802 = vld [vmem:[%s2706 + $0x178] sm:$0xff]
                %2803 = vst [vmem:[%s2707 + $0x878] sm:$0xff] %v2802
                %v2804 = vld [vmem:[%s2706 + $0x180] sm:$0xff]
                %2805 = vst [vmem:[%s2707 + $0x880] sm:$0xff] %v2804
                %v2806 = vld [vmem:[%s2706 + $0x188] sm:$0xff]
                %2807 = vst [vmem:[%s2707 + $0x888] sm:$0xff] %v2806
                %v2808 = vld [vmem:[%s2706 + $0x190] sm:$0xff]
                %2809 = vst [vmem:[%s2707 + $0x890] sm:$0xff] %v2808
                %v2810 = vld [vmem:[%s2706 + $0x198] sm:$0xff]
                %2811 = vst [vmem:[%s2707 + $0x898] sm:$0xff] %v2810
                %v2812 = vld [vmem:[%s2706 + $0x1a0] sm:$0xff]
                %2813 = vst [vmem:[%s2707 + $0x8a0] sm:$0xff] %v2812
                %v2814 = vld [vmem:[%s2706 + $0x1a8] sm:$0xff]
                %2815 = vst [vmem:[%s2707 + $0x8a8] sm:$0xff] %v2814
                %v2816 = vld [vmem:[%s2706 + $0x1b0] sm:$0xff]
                %2817 = vst [vmem:[%s2707 + $0x8b0] sm:$0xff] %v2816
                %v2818 = vld [vmem:[%s2706 + $0x1b8] sm:$0xff]
                %2819 = vst [vmem:[%s2707 + $0x8b8] sm:$0xff] %v2818
                %v2820 = vld [vmem:[%s2706 + $0x1c0] sm:$0xff]
                %2821 = vst [vmem:[%s2707 + $0x8c0] sm:$0xff] %v2820
                %v2822 = vld [vmem:[%s2706 + $0x1c8] sm:$0xff]
                %2823 = vst [vmem:[%s2707 + $0x8c8] sm:$0xff] %v2822
                %v2824 = vld [vmem:[%s2706 + $0x1d0] sm:$0xff]
                %2825 = vst [vmem:[%s2707 + $0x8d0] sm:$0xff] %v2824
                %v2826 = vld [vmem:[%s2706 + $0x1d8] sm:$0xff]
                %2827 = vst [vmem:[%s2707 + $0x8d8] sm:$0xff] %v2826
                %v2828 = vld [vmem:[%s2706 + $0x1e0] sm:$0xff]
                %2829 = vst [vmem:[%s2707 + $0x8e0] sm:$0xff] %v2828
                %v2830 = vld [vmem:[%s2706 + $0x1e8] sm:$0xff]
                %2831 = vst [vmem:[%s2707 + $0x8e8] sm:$0xff] %v2830
                %v2832 = vld [vmem:[%s2706 + $0x1f0] sm:$0xff]
                %2833 = vst [vmem:[%s2707 + $0x8f0] sm:$0xff] %v2832
                %v2834 = vld [vmem:[%s2706 + $0x1f8] sm:$0xff]
                %2835 = vst [vmem:[%s2707 + $0x8f8] sm:$0xff] %v2834
              $region57: #{per_view_forward.5} parent=51 // loop_footer
                %s2705 = sadd.s32 1, %s2701
              $region58: #{per_view_forward.5} parent=51 // loop_footer_branch
                %2700 = sbr.rel target = $region54
              $region59: #{per_view_forward.5} parent=51 // loop_exit
                _
            $region52: #{per_view_forward.5} parent=47 // pred_fallthru
              _
            // Predicated region
            $region60: #{per_view_forward.5} parent=47 // pred_check
              _
            $region61: #{per_view_forward.5} parent=47 // pred_check_branch
              %2837 = sbr.rel target = $region63
            $region62: #{per_view_forward.5} parent=47 // pred_region
              _
            $region63: #{per_view_forward.5} parent=47 // pred_fallthru
              _
          $region48: #{per_view_forward.5} parent=43 // pred_fallthru
            _
          %2838 = vnop
        $region44: #{per_view_forward.5} parent=31 // pred_fallthru
          _
      $region32: #{per_view_forward.5} parent=5 // pred_fallthru
        _
      %p2839 = scmp.le.s32.totalorder 2, %s15
      // Predicated region
      $region64: #{per_view_forward.5} parent=5 // pred_check
        %p2840 = pneg %p2839
      $region65: #{per_view_forward.5} parent=5 // pred_check_branch
        %2842 = sbr.rel (%p2840) target = $region67
      $region66: #{per_view_forward.5} parent=5 // pred_region
        %s2843 = ssub.s32 %s15, 2
        // Predicated region
        $region68: #{per_view_forward.5} parent=66 // pred_check
          %p2844 = pneg %p117
        $region69: #{per_view_forward.5} parent=66 // pred_check_branch
          %2846 = sbr.rel (%p2844) target = $region71
        $region70: #{per_view_forward.5} parent=66 // pred_region
          %s2847 = sand.u32 %s102, 1
          %s2848 = sand.u32 %s102, 1
          %s2849 = smul.addr %s2848, 512
          %s2850 = scalar_lea.vmem [#allocation6], %s2849
        $region71: #{per_view_forward.5} parent=66 // pred_fallthru
          _
      $region67: #{per_view_forward.5} parent=5 // pred_fallthru
        _
    $region6: #{per_view_forward.5} parent=1 // loop_footer
      %s19 = sadd.s32 1, %s15
    $region7: #{per_view_forward.5} parent=1 // loop_footer_branch
      %14 = sbr.rel target = $region3
    $region8: #{per_view_forward.5} parent=1 // loop_exit
      _
    %2851 = vsyncpa [#allocation3], 1
    %s2852 = scalar_lea.sflag [#allocation3], 1
    %2853 = vsyncpa %s2852, 1
    %2854 = vsyncpa [#allocation5], 1
    %s2855 = scalar_lea.sflag [#allocation5], 1
    %2856 = vsyncpa %s2855, 1

// kernel: per_view_forward.7
$region0: #{per_view_forward.7}
  #allocation0 [shape = 'u32[]', space=smem, size = 0x4, offset = 0x4, fixed_abs, tag = 'smem constant byte address 0x4 - core index']
  #allocation1 [shape = 'u32[144,128]{1,0:T(1,128)}', space=vmem, size = 0x12000, scoped, tag = 'internal scratch']
  %s0 = inlined_call_operand.vmem [shape: f32[12,6272], index: 0, kind: input, shape index: {}]
  %s1 = inlined_call_operand.vmem [shape: bf16[6272,128], index: 1, kind: input, shape index: {}]
  %s2 = inlined_call_operand.vmem [shape: f32[1,128], index: 2, kind: input, shape index: {}]
  %s3 = inlined_call_operand.vmem [shape: f32[1,128], index: 3, kind: input, shape index: {}]
  %s4 = inlined_call_operand.vmem [shape: f32[1,128], index: 4, kind: input, shape index: {}]
  %s5 = inlined_call_operand.vmem [shape: f32[12,128], index: 5, kind: input, shape index: {}]
  %s6 = inlined_call_operand.vmem [shape: f32[1,128], index: 6, kind: input, shape index: {}]
  %s7 = inlined_call_operand.vmem [shape: f32[1,128], index: 7, kind: input, shape index: {}]
  %s8 = inlined_call_operand.vmem [shape: bf16[128,512], index: 8, kind: input, shape index: {}]
  %s9 = inlined_call_operand.vmem [shape: f32[1,512], index: 9, kind: input, shape index: {}]
  %s10 = inlined_call_operand.vmem [shape: bf16[512,128], index: 10, kind: input, shape index: {}]
  %s11 = inlined_call_operand.vmem [shape: f32[1,128], index: 11, kind: input, shape index: {}]
  %s12 = inlined_call_operand.vmem [shape: f32[1,128], index: 12, kind: input, shape index: {}]
  %s13 = inlined_call_operand.vmem [shape: f32[1,128], index: 13, kind: input, shape index: {}]
  %s14 = inlined_call_operand.hbm [shape: f32[12,128], index: 14, kind: output, shape index: {}]
  %s15 = sld [smem:[#allocation0]]
  $region66: #{per_view_forward.7} parent=0
    _
  %s17 = ssub.s32 1, %s15
  %s18 = scalar_select 0, %s17, %s15
  $region1: #{per_view_forward.7} parent=0
    #allocation2 [shape = 'u8[8192]{0}', space=vmem, size = 0x2000, scoped, tag = 'output window, operand 0, single buffered']
    #allocation3 [shape = 's32[1]{0}', space=sflag, size = 0x4, scoped, tag = 'scoped memory for per_view_forward.7']
    %19 = vsyncpa [#allocation3], 0
    // Predicated region
    $region2: #{per_view_forward.7} parent=1 // pred_check
      _
    $region3: #{per_view_forward.7} parent=1 // pred_check_branch
      %21 = sbr.rel (0) target = $region5
    $region4: #{per_view_forward.7} parent=1 // pred_region
      _
    $region5: #{per_view_forward.7} parent=1 // pred_fallthru
      _
    // Predicated region
    $region6: #{per_view_forward.7} parent=1 // pred_check
      _
    $region7: #{per_view_forward.7} parent=1 // pred_check_branch
      %23 = sbr.rel (0) target = $region9
    $region8: #{per_view_forward.7} parent=1 // pred_region
      _
    $region9: #{per_view_forward.7} parent=1 // pred_fallthru
      _
    // Predicated region
    $region10: #{per_view_forward.7} parent=1 // pred_check
      _
    $region11: #{per_view_forward.7} parent=1 // pred_check_branch
      %25 = sbr.rel (0) target = $region13
    $region12: #{per_view_forward.7} parent=1 // pred_region
      _
    $region13: #{per_view_forward.7} parent=1 // pred_fallthru
      _
    // Predicated region
    $region14: #{per_view_forward.7} parent=1 // pred_check
      _
    $region15: #{per_view_forward.7} parent=1 // pred_check_branch
      %27 = sbr.rel (0) target = $region17
    $region16: #{per_view_forward.7} parent=1 // pred_region
      _
    $region17: #{per_view_forward.7} parent=1 // pred_fallthru
      _
    // Predicated region
    $region18: #{per_view_forward.7} parent=1 // pred_check
      _
    $region19: #{per_view_forward.7} parent=1 // pred_check_branch
      %29 = sbr.rel (0) target = $region21
    $region20: #{per_view_forward.7} parent=1 // pred_region
      _
    $region21: #{per_view_forward.7} parent=1 // pred_fallthru
      _
    // Predicated region
    $region22: #{per_view_forward.7} parent=1 // pred_check
      _
    $region23: #{per_view_forward.7} parent=1 // pred_check_branch
      %31 = sbr.rel (0) target = $region25
    $region24: #{per_view_forward.7} parent=1 // pred_region
      _
    $region25: #{per_view_forward.7} parent=1 // pred_fallthru
      _
    // Predicated region
    $region26: #{per_view_forward.7} parent=1 // pred_check
      _
    $region27: #{per_view_forward.7} parent=1 // pred_check_branch
      %33 = sbr.rel (0) target = $region29
    $region28: #{per_view_forward.7} parent=1 // pred_region
      _
    $region29: #{per_view_forward.7} parent=1 // pred_fallthru
      _
    // Predicated region
    $region30: #{per_view_forward.7} parent=1 // pred_check
      _
    $region31: #{per_view_forward.7} parent=1 // pred_check_branch
      %35 = sbr.rel (0) target = $region33
    $region32: #{per_view_forward.7} parent=1 // pred_region
      _
    $region33: #{per_view_forward.7} parent=1 // pred_fallthru
      _
    // Predicated region
    $region34: #{per_view_forward.7} parent=1 // pred_check
      _
    $region35: #{per_view_forward.7} parent=1 // pred_check_branch
      %37 = sbr.rel (0) target = $region37
    $region36: #{per_view_forward.7} parent=1 // pred_region
      _
    $region37: #{per_view_forward.7} parent=1 // pred_fallthru
      _
    // Predicated region
    $region38: #{per_view_forward.7} parent=1 // pred_check
      _
    $region39: #{per_view_forward.7} parent=1 // pred_check_branch
      %39 = sbr.rel (0) target = $region41
    $region40: #{per_view_forward.7} parent=1 // pred_region
      _
    $region41: #{per_view_forward.7} parent=1 // pred_fallthru
      _
    // Predicated region
    $region42: #{per_view_forward.7} parent=1 // pred_check
      _
    $region43: #{per_view_forward.7} parent=1 // pred_check_branch
      %41 = sbr.rel (0) target = $region45
    $region44: #{per_view_forward.7} parent=1 // pred_region
      _
    $region45: #{per_view_forward.7} parent=1 // pred_fallthru
      _
    // Predicated region
    $region46: #{per_view_forward.7} parent=1 // pred_check
      _
    $region47: #{per_view_forward.7} parent=1 // pred_check_branch
      %43 = sbr.rel (0) target = $region49
    $region48: #{per_view_forward.7} parent=1 // pred_region
      _
    $region49: #{per_view_forward.7} parent=1 // pred_fallthru
      _
    // Predicated region
    $region50: #{per_view_forward.7} parent=1 // pred_check
      _
    $region51: #{per_view_forward.7} parent=1 // pred_check_branch
      %45 = sbr.rel (0) target = $region53
    $region52: #{per_view_forward.7} parent=1 // pred_region
      _
    $region53: #{per_view_forward.7} parent=1 // pred_fallthru
      _
    // Predicated region
    $region54: #{per_view_forward.7} parent=1 // pred_check
      _
    $region55: #{per_view_forward.7} parent=1 // pred_check_branch
      %47 = sbr.rel (0) target = $region57
    $region56: #{per_view_forward.7} parent=1 // pred_region
      _
    $region57: #{per_view_forward.7} parent=1 // pred_fallthru
      _
    %v49 = vld [vmem:[%s0] sm:$0xff]
    %v50 = vld [vmem:[%s0 + $0x8] sm:$0xff]
    %v51 = vld [vmem:[%s0 + $0x10] sm:$0xff]
    %v52 = vld [vmem:[%s0 + $0x18] sm:$0xff]
    %v53 = vld [vmem:[%s0 + $0x20] sm:$0xff]
    %v54 = vld [vmem:[%s0 + $0x28] sm:$0xff]
    %v55 = vld [vmem:[%s0 + $0x30] sm:$0xff]
    %v56 = vld [vmem:[%s0 + $0x38] sm:$0xff]
    %v57 = vld [vmem:[%s0 + $0x40] sm:$0xff]
    %v58 = vld [vmem:[%s0 + $0x48] sm:$0xff]
    %v59 = vld [vmem:[%s0 + $0x50] sm:$0xff]
    %v60 = vld [vmem:[%s0 + $0x58] sm:$0xff]
    %v61 = vld [vmem:[%s0 + $0x60] sm:$0xff]
    %v62 = vld [vmem:[%s0 + $0x68] sm:$0xff]
    %v63 = vld [vmem:[%s0 + $0x70] sm:$0xff]
    %v64 = vld [vmem:[%s0 + $0x78] sm:$0xff]
    %v65 = vld [vmem:[%s0 + $0x80] sm:$0xff]
    %v66 = vld [vmem:[%s0 + $0x88] sm:$0xff]
    %v67 = vld [vmem:[%s0 + $0x90] sm:$0xff]
    %v68 = vld [vmem:[%s0 + $0x98] sm:$0xff]
    %v69 = vld [vmem:[%s0 + $0xa0] sm:$0xff]
    %v70 = vld [vmem:[%s0 + $0xa8] sm:$0xff]
    %v71 = vld [vmem:[%s0 + $0xb0] sm:$0xff]
    %v72 = vld [vmem:[%s0 + $0xb8] sm:$0xff]
    %v73 = vld [vmem:[%s0 + $0xc0] sm:$0xff]
    %v74 = vld [vmem:[%s0 + $0xc8] sm:$0xff]
    %v75 = vld [vmem:[%s0 + $0xd0] sm:$0xff]
    %v76 = vld [vmem:[%s0 + $0xd8] sm:$0xff]
    %v77 = vld [vmem:[%s0 + $0xe0] sm:$0xff]
    %v78 = vld [vmem:[%s0 + $0xe8] sm:$0xff]
    %v79 = vld [vmem:[%s0 + $0xf0] sm:$0xff]
    %v80 = vld [vmem:[%s0 + $0xf8] sm:$0xff]
    %v81 = vld [vmem:[%s0 + $0x100] sm:$0xff]
    %v82 = vld [vmem:[%s0 + $0x108] sm:$0xff]
    %v83 = vld [vmem:[%s0 + $0x110] sm:$0xff]
    %v84 = vld [vmem:[%s0 + $0x118] sm:$0xff]
    %v85 = vld [vmem:[%s0 + $0x120] sm:$0xff]
    %v86 = vld [vmem:[%s0 + $0x128] sm:$0xff]
    %v87 = vld [vmem:[%s0 + $0x130] sm:$0xff]
    %v88 = vld [vmem:[%s0 + $0x138] sm:$0xff]
    %v89 = vld [vmem:[%s0 + $0x140] sm:$0xff]
    %v90 = vld [vmem:[%s0 + $0x148] sm:$0xff]
    %v91 = vld [vmem:[%s0 + $0x150] sm:$0xff]
    %v92 = vld [vmem:[%s0 + $0x158] sm:$0xff]
    %v93 = vld [vmem:[%s0 + $0x160] sm:$0xff]
    %v94 = vld [vmem:[%s0 + $0x168] sm:$0xff]
    %v95 = vld [vmem:[%s0 + $0x170] sm:$0xff]
    %v96 = vld [vmem:[%s0 + $0x178] sm:$0xff]
    %v97 = vld [vmem:[%s0 + $0x180] sm:$0xff]
    %v98 = vld [vmem:[%s0 + $0x188] sm:$0xf]
    %v99 = vld [vmem:[%s0 + $0x190] sm:$0xf]
    %v100 = vld [vmem:[%s0 + $0x198] sm:$0xf]
    %v101 = vld [vmem:[%s0 + $0x1a0] sm:$0xf]
    %v102 = vld [vmem:[%s0 + $0x1a8] sm:$0xf]
    %v103 = vld [vmem:[%s0 + $0x1b0] sm:$0xf]
    %v104 = vld [vmem:[%s0 + $0x1b8] sm:$0xf]
    %v105 = vld [vmem:[%s0 + $0x1c0] sm:$0xf]
    %v106 = vld [vmem:[%s0 + $0x1c8] sm:$0xf]
    %v107 = vld [vmem:[%s0 + $0x1d0] sm:$0xf]
    %v108 = vld [vmem:[%s0 + $0x1d8] sm:$0xf]
    %v109 = vld [vmem:[%s0 + $0x1e0] sm:$0xf]
    %v110 = vld [vmem:[%s0 + $0x1e8] sm:$0xf]
    %v111 = vld [vmem:[%s0 + $0x1f0] sm:$0xf]
    %v112 = vld [vmem:[%s0 + $0x1f8] sm:$0xf]
    %v113 = vld [vmem:[%s0 + $0x200] sm:$0xf]
    %v114 = vld [vmem:[%s0 + $0x208] sm:$0xf]
    %v115 = vld [vmem:[%s0 + $0x210] sm:$0xf]
    %v116 = vld [vmem:[%s0 + $0x218] sm:$0xf]
    %v117 = vld [vmem:[%s0 + $0x220] sm:$0xf]
    %v118 = vld [vmem:[%s0 + $0x228] sm:$0xf]
    %v119 = vld [vmem:[%s0 + $0x230] sm:$0xf]
    %v120 = vld [vmem:[%s0 + $0x238] sm:$0xf]
    %v121 = vld [vmem:[%s0 + $0x240] sm:$0xf]
    %v122 = vld [vmem:[%s0 + $0x248] sm:$0xf]
    %v123 = vld [vmem:[%s0 + $0x250] sm:$0xf]
    %v124 = vld [vmem:[%s0 + $0x258] sm:$0xf]
    %v125 = vld [vmem:[%s0 + $0x260] sm:$0xf]
    %v126 = vld [vmem:[%s0 + $0x268] sm:$0xf]
    %v127 = vld [vmem:[%s0 + $0x270] sm:$0xf]
    %v128 = vld [vmem:[%s0 + $0x278] sm:$0xf]
    %v129 = vld [vmem:[%s0 + $0x280] sm:$0xf]
    %v130 = vld [vmem:[%s0 + $0x288] sm:$0xf]
    %v131 = vld [vmem:[%s0 + $0x290] sm:$0xf]
    %v132 = vld [vmem:[%s0 + $0x298] sm:$0xf]
    %v133 = vld [vmem:[%s0 + $0x2a0] sm:$0xf]
    %v134 = vld [vmem:[%s0 + $0x2a8] sm:$0xf]
    %v135 = vld [vmem:[%s0 + $0x2b0] sm:$0xf]
    %v136 = vld [vmem:[%s0 + $0x2b8] sm:$0xf]
    %v137 = vld [vmem:[%s0 + $0x2c0] sm:$0xf]
    %v138 = vld [vmem:[%s0 + $0x2c8] sm:$0xf]
    %v139 = vld [vmem:[%s0 + $0x2d0] sm:$0xf]
    %v140 = vld [vmem:[%s0 + $0x2d8] sm:$0xf]
    %v141 = vld [vmem:[%s0 + $0x2e0] sm:$0xf]
    %v142 = vld [vmem:[%s0 + $0x2e8] sm:$0xf]
    %v143 = vld [vmem:[%s0 + $0x2f0] sm:$0xf]
    %v144 = vld [vmem:[%s0 + $0x2f8] sm:$0xf]
    %v145 = vld [vmem:[%s0 + $0x300] sm:$0xf]
    %v146 = vld [vmem:[%s0 + $0x308] sm:$0xf]
    %v147 = vpack.c.bf16 %v98, %v49
    %v148 = vpack.c.bf16 %v99, %v50
    %v149 = vpack.c.bf16 %v100, %v51
    %v150 = vpack.c.bf16 %v101, %v52
    %v151 = vpack.c.bf16 %v102, %v53
    %v152 = vpack.c.bf16 %v103, %v54
    %v153 = vpack.c.bf16 %v104, %v55
    %v154 = vpack.c.bf16 %v105, %v56
    %v155 = vpack.c.bf16 %v106, %v57
    %v156 = vpack.c.bf16 %v107, %v58
    %v157 = vpack.c.bf16 %v108, %v59
    %v158 = vpack.c.bf16 %v109, %v60
    %v159 = vpack.c.bf16 %v110, %v61
    %v160 = vpack.c.bf16 %v111, %v62
    %v161 = vpack.c.bf16 %v112, %v63
    %v162 = vpack.c.bf16 %v113, %v64
    %v163 = vpack.c.bf16 %v114, %v65
    %v164 = vpack.c.bf16 %v115, %v66
    %v165 = vpack.c.bf16 %v116, %v67
    %v166 = vpack.c.bf16 %v117, %v68
    %v167 = vpack.c.bf16 %v118, %v69
    %v168 = vpack.c.bf16 %v119, %v70
    %v169 = vpack.c.bf16 %v120, %v71
    %v170 = vpack.c.bf16 %v121, %v72
    %v171 = vpack.c.bf16 %v122, %v73
    %v172 = vpack.c.bf16 %v123, %v74
    %v173 = vpack.c.bf16 %v124, %v75
    %v174 = vpack.c.bf16 %v125, %v76
    %v175 = vpack.c.bf16 %v126, %v77
    %v176 = vpack.c.bf16 %v127, %v78
    %v177 = vpack.c.bf16 %v128, %v79
    %v178 = vpack.c.bf16 %v129, %v80
    %v179 = vpack.c.bf16 %v130, %v81
    %v180 = vpack.c.bf16 %v131, %v82
    %v181 = vpack.c.bf16 %v132, %v83
    %v182 = vpack.c.bf16 %v133, %v84
    %v183 = vpack.c.bf16 %v134, %v85
    %v184 = vpack.c.bf16 %v135, %v86
    %v185 = vpack.c.bf16 %v136, %v87
    %v186 = vpack.c.bf16 %v137, %v88
    %v187 = vpack.c.bf16 %v138, %v89
    %v188 = vpack.c.bf16 %v139, %v90
    %v189 = vpack.c.bf16 %v140, %v91
    %v190 = vpack.c.bf16 %v141, %v92
    %v191 = vpack.c.bf16 %v142, %v93
    %v192 = vpack.c.bf16 %v143, %v94
    %v193 = vpack.c.bf16 %v144, %v95
    %v194 = vpack.c.bf16 %v145, %v96
    %v195 = vpack.c.bf16 %v146, %v97
    %v196 = vld [vmem:[%s1] sm:$0xf]
    %v197 = vld [vmem:[%s1 + $0x4] sm:$0xf]
    %v198 = vld [vmem:[%s1 + $0x8] sm:$0xf]
    %v199 = vld [vmem:[%s1 + $0xc] sm:$0xf]
    %v200 = vld [vmem:[%s1 + $0x10] sm:$0xf]
    %v201 = vld [vmem:[%s1 + $0x14] sm:$0xf]
    %v202 = vld [vmem:[%s1 + $0x18] sm:$0xf]
    %v203 = vld [vmem:[%s1 + $0x1c] sm:$0xf]
    %v204 = vld [vmem:[%s1 + $0x20] sm:$0xf]
    %v205 = vld [vmem:[%s1 + $0x24] sm:$0xf]
    %v206 = vld [vmem:[%s1 + $0x28] sm:$0xf]
    %v207 = vld [vmem:[%s1 + $0x2c] sm:$0xf]
    %v208 = vld [vmem:[%s1 + $0x30] sm:$0xf]
    %v209 = vld [vmem:[%s1 + $0x34] sm:$0xf]
    %v210 = vld [vmem:[%s1 + $0x38] sm:$0xf]
    %v211 = vld [vmem:[%s1 + $0x3c] sm:$0xf]
    %v212 = vld [vmem:[%s1 + $0x40] sm:$0xf]
    %v213 = vld [vmem:[%s1 + $0x44] sm:$0xf]
    %v214 = vld [vmem:[%s1 + $0x48] sm:$0xf]
    %v215 = vld [vmem:[%s1 + $0x4c] sm:$0xf]
    %v216 = vld [vmem:[%s1 + $0x50] sm:$0xf]
    %v217 = vld [vmem:[%s1 + $0x54] sm:$0xf]
    %v218 = vld [vmem:[%s1 + $0x58] sm:$0xf]
    %v219 = vld [vmem:[%s1 + $0x5c] sm:$0xf]
    %v220 = vld [vmem:[%s1 + $0x60] sm:$0xf]
    %v221 = vld [vmem:[%s1 + $0x64] sm:$0xf]
    %v222 = vld [vmem:[%s1 + $0x68] sm:$0xf]
    %v223 = vld [vmem:[%s1 + $0x6c] sm:$0xf]
    %v224 = vld [vmem:[%s1 + $0x70] sm:$0xf]
    %v225 = vld [vmem:[%s1 + $0x74] sm:$0xf]
    %v226 = vld [vmem:[%s1 + $0x78] sm:$0xf]
    %v227 = vld [vmem:[%s1 + $0x7c] sm:$0xf]
    %v228 = vld [vmem:[%s1 + $0x80] sm:$0xf]
    %v229 = vld [vmem:[%s1 + $0x84] sm:$0xf]
    %v230 = vld [vmem:[%s1 + $0x88] sm:$0xf]
    %v231 = vld [vmem:[%s1 + $0x8c] sm:$0xf]
    %v232 = vld [vmem:[%s1 + $0x90] sm:$0xf]
    %v233 = vld [vmem:[%s1 + $0x94] sm:$0xf]
    %v234 = vld [vmem:[%s1 + $0x98] sm:$0xf]
    %v235 = vld [vmem:[%s1 + $0x9c] sm:$0xf]
    %v236 = vld [vmem:[%s1 + $0xa0] sm:$0xf]
    %v237 = vld [vmem:[%s1 + $0xa4] sm:$0xf]
    %v238 = vld [vmem:[%s1 + $0xa8] sm:$0xf]
    %v239 = vld [vmem:[%s1 + $0xac] sm:$0xf]
    %v240 = vld [vmem:[%s1 + $0xb0] sm:$0xf]
    %v241 = vld [vmem:[%s1 + $0xb4] sm:$0xf]
    %v242 = vld [vmem:[%s1 + $0xb8] sm:$0xf]
    %v243 = vld [vmem:[%s1 + $0xbc] sm:$0xf]
    %v244 = vld [vmem:[%s1 + $0xc0] sm:$0xf]
    %v245 = vld [vmem:[%s1 + $0xc4] sm:$0xf]
    %v246 = vld [vmem:[%s1 + $0xc8] sm:$0xf]
    %v247 = vld [vmem:[%s1 + $0xcc] sm:$0xf]
    %v248 = vld [vmem:[%s1 + $0xd0] sm:$0xf]
    %v249 = vld [vmem:[%s1 + $0xd4] sm:$0xf]
    %v250 = vld [vmem:[%s1 + $0xd8] sm:$0xf]
    %v251 = vld [vmem:[%s1 + $0xdc] sm:$0xf]
    %v252 = vld [vmem:[%s1 + $0xe0] sm:$0xf]
    %v253 = vld [vmem:[%s1 + $0xe4] sm:$0xf]
    %v254 = vld [vmem:[%s1 + $0xe8] sm:$0xf]
    %v255 = vld [vmem:[%s1 + $0xec] sm:$0xf]
    %v256 = vld [vmem:[%s1 + $0xf0] sm:$0xf]
    %v257 = vld [vmem:[%s1 + $0xf4] sm:$0xf]
    %v258 = vld [vmem:[%s1 + $0xf8] sm:$0xf]
    %v259 = vld [vmem:[%s1 + $0xfc] sm:$0xf]
    %v260 = vld [vmem:[%s1 + $0x100] sm:$0xf]
    %v261 = vld [vmem:[%s1 + $0x104] sm:$0xf]
    %v262 = vld [vmem:[%s1 + $0x108] sm:$0xf]
    %v263 = vld [vmem:[%s1 + $0x10c] sm:$0xf]
    %v264 = vld [vmem:[%s1 + $0x110] sm:$0xf]
    %v265 = vld [vmem:[%s1 + $0x114] sm:$0xf]
    %v266 = vld [vmem:[%s1 + $0x118] sm:$0xf]
    %v267 = vld [vmem:[%s1 + $0x11c] sm:$0xf]
    %v268 = vld [vmem:[%s1 + $0x120] sm:$0xf]
    %v269 = vld [vmem:[%s1 + $0x124] sm:$0xf]
    %v270 = vld [vmem:[%s1 + $0x128] sm:$0xf]
    %v271 = vld [vmem:[%s1 + $0x12c] sm:$0xf]
    %v272 = vld [vmem:[%s1 + $0x130] sm:$0xf]
    %v273 = vld [vmem:[%s1 + $0x134] sm:$0xf]
    %v274 = vld [vmem:[%s1 + $0x138] sm:$0xf]
    %v275 = vld [vmem:[%s1 + $0x13c] sm:$0xf]
    %v276 = vld [vmem:[%s1 + $0x140] sm:$0xf]
    %v277 = vld [vmem:[%s1 + $0x144] sm:$0xf]
    %v278 = vld [vmem:[%s1 + $0x148] sm:$0xf]
    %v279 = vld [vmem:[%s1 + $0x14c] sm:$0xf]
    %v280 = vld [vmem:[%s1 + $0x150] sm:$0xf]
    %v281 = vld [vmem:[%s1 + $0x154] sm:$0xf]
    %v282 = vld [vmem:[%s1 + $0x158] sm:$0xf]
    %v283 = vld [vmem:[%s1 + $0x15c] sm:$0xf]
    %v284 = vld [vmem:[%s1 + $0x160] sm:$0xf]
    %v285 = vld [vmem:[%s1 + $0x164] sm:$0xf]
    %v286 = vld [vmem:[%s1 + $0x168] sm:$0xf]
    %v287 = vld [vmem:[%s1 + $0x16c] sm:$0xf]
    %v288 = vld [vmem:[%s1 + $0x170] sm:$0xf]
    %v289 = vld [vmem:[%s1 + $0x174] sm:$0xf]
    %v290 = vld [vmem:[%s1 + $0x178] sm:$0xf]
    %v291 = vld [vmem:[%s1 + $0x17c] sm:$0xf]
    %v292 = vld [vmem:[%s1 + $0x180] sm:$0xf]
    %v293 = vld [vmem:[%s1 + $0x184] sm:$0xf]
    %v294 = vld [vmem:[%s1 + $0x188] sm:$0xf]
    %v295 = vld [vmem:[%s1 + $0x18c] sm:$0xf]
    %v296 = vld [vmem:[%s1 + $0x190] sm:$0xf]
    %v297 = vld [vmem:[%s1 + $0x194] sm:$0xf]
    %v298 = vld [vmem:[%s1 + $0x198] sm:$0xf]
    %v299 = vld [vmem:[%s1 + $0x19c] sm:$0xf]
    %v300 = vld [vmem:[%s1 + $0x1a0] sm:$0xf]
    %v301 = vld [vmem:[%s1 + $0x1a4] sm:$0xf]
    %v302 = vld [vmem:[%s1 + $0x1a8] sm:$0xf]
    %v303 = vld [vmem:[%s1 + $0x1ac] sm:$0xf]
    %v304 = vld [vmem:[%s1 + $0x1b0] sm:$0xf]
    %v305 = vld [vmem:[%s1 + $0x1b4] sm:$0xf]
    %v306 = vld [vmem:[%s1 + $0x1b8] sm:$0xf]
    %v307 = vld [vmem:[%s1 + $0x1bc] sm:$0xf]
    %v308 = vld [vmem:[%s1 + $0x1c0] sm:$0xf]
    %v309 = vld [vmem:[%s1 + $0x1c4] sm:$0xf]
    %v310 = vld [vmem:[%s1 + $0x1c8] sm:$0xf]
    %v311 = vld [vmem:[%s1 + $0x1cc] sm:$0xf]
    %v312 = vld [vmem:[%s1 + $0x1d0] sm:$0xf]
    %v313 = vld [vmem:[%s1 + $0x1d4] sm:$0xf]
    %v314 = vld [vmem:[%s1 + $0x1d8] sm:$0xf]
    %v315 = vld [vmem:[%s1 + $0x1dc] sm:$0xf]
    %v316 = vld [vmem:[%s1 + $0x1e0] sm:$0xf]
    %v317 = vld [vmem:[%s1 + $0x1e4] sm:$0xf]
    %v318 = vld [vmem:[%s1 + $0x1e8] sm:$0xf]
    %v319 = vld [vmem:[%s1 + $0x1ec] sm:$0xf]
    %v320 = vld [vmem:[%s1 + $0x1f0] sm:$0xf]
    %v321 = vld [vmem:[%s1 + $0x1f4] sm:$0xf]
    %v322 = vld [vmem:[%s1 + $0x1f8] sm:$0xf]
    %v323 = vld [vmem:[%s1 + $0x1fc] sm:$0xf]
    %v324 = vld [vmem:[%s1 + $0x200] sm:$0xf]
    %v325 = vld [vmem:[%s1 + $0x204] sm:$0xf]
    %v326 = vld [vmem:[%s1 + $0x208] sm:$0xf]
    %v327 = vld [vmem:[%s1 + $0x20c] sm:$0xf]
    %v328 = vld [vmem:[%s1 + $0x210] sm:$0xf]
    %v329 = vld [vmem:[%s1 + $0x214] sm:$0xf]
    %v330 = vld [vmem:[%s1 + $0x218] sm:$0xf]
    %v331 = vld [vmem:[%s1 + $0x21c] sm:$0xf]
    %v332 = vld [vmem:[%s1 + $0x220] sm:$0xf]
    %v333 = vld [vmem:[%s1 + $0x224] sm:$0xf]
    %v334 = vld [vmem:[%s1 + $0x228] sm:$0xf]
    %v335 = vld [vmem:[%s1 + $0x22c] sm:$0xf]
    %v336 = vld [vmem:[%s1 + $0x230] sm:$0xf]
    %v337 = vld [vmem:[%s1 + $0x234] sm:$0xf]
    %v338 = vld [vmem:[%s1 + $0x238] sm:$0xf]
    %v339 = vld [vmem:[%s1 + $0x23c] sm:$0xf]
    %v340 = vld [vmem:[%s1 + $0x240] sm:$0xf]
    %v341 = vld [vmem:[%s1 + $0x244] sm:$0xf]
    %v342 = vld [vmem:[%s1 + $0x248] sm:$0xf]
    %v343 = vld [vmem:[%s1 + $0x24c] sm:$0xf]
    %v344 = vld [vmem:[%s1 + $0x250] sm:$0xf]
    %v345 = vld [vmem:[%s1 + $0x254] sm:$0xf]
    %v346 = vld [vmem:[%s1 + $0x258] sm:$0xf]
    %v347 = vld [vmem:[%s1 + $0x25c] sm:$0xf]
    %v348 = vld [vmem:[%s1 + $0x260] sm:$0xf]
    %v349 = vld [vmem:[%s1 + $0x264] sm:$0xf]
    %v350 = vld [vmem:[%s1 + $0x268] sm:$0xf]
    %v351 = vld [vmem:[%s1 + $0x26c] sm:$0xf]
    %v352 = vld [vmem:[%s1 + $0x270] sm:$0xf]
    %v353 = vld [vmem:[%s1 + $0x274] sm:$0xf]
    %v354 = vld [vmem:[%s1 + $0x278] sm:$0xf]
    %v355 = vld [vmem:[%s1 + $0x27c] sm:$0xf]
    %v356 = vld [vmem:[%s1 + $0x280] sm:$0xf]
    %v357 = vld [vmem:[%s1 + $0x284] sm:$0xf]
    %v358 = vld [vmem:[%s1 + $0x288] sm:$0xf]
    %v359 = vld [vmem:[%s1 + $0x28c] sm:$0xf]
    %v360 = vld [vmem:[%s1 + $0x290] sm:$0xf]
    %v361 = vld [vmem:[%s1 + $0x294] sm:$0xf]
    %v362 = vld [vmem:[%s1 + $0x298] sm:$0xf]
    %v363 = vld [vmem:[%s1 + $0x29c] sm:$0xf]
    %v364 = vld [vmem:[%s1 + $0x2a0] sm:$0xf]
    %v365 = vld [vmem:[%s1 + $0x2a4] sm:$0xf]
    %v366 = vld [vmem:[%s1 + $0x2a8] sm:$0xf]
    %v367 = vld [vmem:[%s1 + $0x2ac] sm:$0xf]
    %v368 = vld [vmem:[%s1 + $0x2b0] sm:$0xf]
    %v369 = vld [vmem:[%s1 + $0x2b4] sm:$0xf]
    %v370 = vld [vmem:[%s1 + $0x2b8] sm:$0xf]
    %v371 = vld [vmem:[%s1 + $0x2bc] sm:$0xf]
    %v372 = vld [vmem:[%s1 + $0x2c0] sm:$0xf]
    %v373 = vld [vmem:[%s1 + $0x2c4] sm:$0xf]
    %v374 = vld [vmem:[%s1 + $0x2c8] sm:$0xf]
    %v375 = vld [vmem:[%s1 + $0x2cc] sm:$0xf]
    %v376 = vld [vmem:[%s1 + $0x2d0] sm:$0xf]
    %v377 = vld [vmem:[%s1 + $0x2d4] sm:$0xf]
    %v378 = vld [vmem:[%s1 + $0x2d8] sm:$0xf]
    %v379 = vld [vmem:[%s1 + $0x2dc] sm:$0xf]
    %v380 = vld [vmem:[%s1 + $0x2e0] sm:$0xf]
    %v381 = vld [vmem:[%s1 + $0x2e4] sm:$0xf]
    %v382 = vld [vmem:[%s1 + $0x2e8] sm:$0xf]
    %v383 = vld [vmem:[%s1 + $0x2ec] sm:$0xf]
    %v384 = vld [vmem:[%s1 + $0x2f0] sm:$0xf]
    %v385 = vld [vmem:[%s1 + $0x2f4] sm:$0xf]
    %v386 = vld [vmem:[%s1 + $0x2f8] sm:$0xf]
    %v387 = vld [vmem:[%s1 + $0x2fc] sm:$0xf]
    %v388 = vld [vmem:[%s1 + $0x300] sm:$0xf]
    %v389 = vld [vmem:[%s1 + $0x304] sm:$0xf]
    %v390 = vld [vmem:[%s1 + $0x308] sm:$0xf]
    %v391 = vld [vmem:[%s1 + $0x30c] sm:$0xf]
    %v392 = vld [vmem:[%s1 + $0x310] sm:$0xf]
    %v393 = vld [vmem:[%s1 + $0x314] sm:$0xf]
    %v394 = vld [vmem:[%s1 + $0x318] sm:$0xf]
    %v395 = vld [vmem:[%s1 + $0x31c] sm:$0xf]
    %v396 = vld [vmem:[%s1 + $0x320] sm:$0xf]
    %v397 = vld [vmem:[%s1 + $0x324] sm:$0xf]
    %v398 = vld [vmem:[%s1 + $0x328] sm:$0xf]
    %v399 = vld [vmem:[%s1 + $0x32c] sm:$0xf]
    %v400 = vld [vmem:[%s1 + $0x330] sm:$0xf]
    %v401 = vld [vmem:[%s1 + $0x334] sm:$0xf]
    %v402 = vld [vmem:[%s1 + $0x338] sm:$0xf]
    %v403 = vld [vmem:[%s1 + $0x33c] sm:$0xf]
    %v404 = vld [vmem:[%s1 + $0x340] sm:$0xf]
    %v405 = vld [vmem:[%s1 + $0x344] sm:$0xf]
    %v406 = vld [vmem:[%s1 + $0x348] sm:$0xf]
    %v407 = vld [vmem:[%s1 + $0x34c] sm:$0xf]
    %v408 = vld [vmem:[%s1 + $0x350] sm:$0xf]
    %v409 = vld [vmem:[%s1 + $0x354] sm:$0xf]
    %v410 = vld [vmem:[%s1 + $0x358] sm:$0xf]
    %v411 = vld [vmem:[%s1 + $0x35c] sm:$0xf]
    %v412 = vld [vmem:[%s1 + $0x360] sm:$0xf]
    %v413 = vld [vmem:[%s1 + $0x364] sm:$0xf]
    %v414 = vld [vmem:[%s1 + $0x368] sm:$0xf]
    %v415 = vld [vmem:[%s1 + $0x36c] sm:$0xf]
    %v416 = vld [vmem:[%s1 + $0x370] sm:$0xf]
    %v417 = vld [vmem:[%s1 + $0x374] sm:$0xf]
    %v418 = vld [vmem:[%s1 + $0x378] sm:$0xf]
    %v419 = vld [vmem:[%s1 + $0x37c] sm:$0xf]
    %v420 = vld [vmem:[%s1 + $0x380] sm:$0xf]
    %v421 = vld [vmem:[%s1 + $0x384] sm:$0xf]
    %v422 = vld [vmem:[%s1 + $0x388] sm:$0xf]
    %v423 = vld [vmem:[%s1 + $0x38c] sm:$0xf]
    %v424 = vld [vmem:[%s1 + $0x390] sm:$0xf]
    %v425 = vld [vmem:[%s1 + $0x394] sm:$0xf]
    %v426 = vld [vmem:[%s1 + $0x398] sm:$0xf]
    %v427 = vld [vmem:[%s1 + $0x39c] sm:$0xf]
    %v428 = vld [vmem:[%s1 + $0x3a0] sm:$0xf]
    %v429 = vld [vmem:[%s1 + $0x3a4] sm:$0xf]
    %v430 = vld [vmem:[%s1 + $0x3a8] sm:$0xf]
    %v431 = vld [vmem:[%s1 + $0x3ac] sm:$0xf]
    %v432 = vld [vmem:[%s1 + $0x3b0] sm:$0xf]
    %v433 = vld [vmem:[%s1 + $0x3b4] sm:$0xf]
    %v434 = vld [vmem:[%s1 + $0x3b8] sm:$0xf]
    %v435 = vld [vmem:[%s1 + $0x3bc] sm:$0xf]
    %v436 = vld [vmem:[%s1 + $0x3c0] sm:$0xf]
    %v437 = vld [vmem:[%s1 + $0x3c4] sm:$0xf]
    %v438 = vld [vmem:[%s1 + $0x3c8] sm:$0xf]
    %v439 = vld [vmem:[%s1 + $0x3cc] sm:$0xf]
    %v440 = vld [vmem:[%s1 + $0x3d0] sm:$0xf]
    %v441 = vld [vmem:[%s1 + $0x3d4] sm:$0xf]
    %v442 = vld [vmem:[%s1 + $0x3d8] sm:$0xf]
    %v443 = vld [vmem:[%s1 + $0x3dc] sm:$0xf]
    %v444 = vld [vmem:[%s1 + $0x3e0] sm:$0xf]
    %v445 = vld [vmem:[%s1 + $0x3e4] sm:$0xf]
    %v446 = vld [vmem:[%s1 + $0x3e8] sm:$0xf]
    %v447 = vld [vmem:[%s1 + $0x3ec] sm:$0xf]
    %v448 = vld [vmem:[%s1 + $0x3f0] sm:$0xf]
    %v449 = vld [vmem:[%s1 + $0x3f4] sm:$0xf]
    %v450 = vld [vmem:[%s1 + $0x3f8] sm:$0xf]
    %v451 = vld [vmem:[%s1 + $0x3fc] sm:$0xf]
    %v452 = vld [vmem:[%s1 + $0x400] sm:$0xf]
    %v453 = vld [vmem:[%s1 + $0x404] sm:$0xf]
    %v454 = vld [vmem:[%s1 + $0x408] sm:$0xf]
    %v455 = vld [vmem:[%s1 + $0x40c] sm:$0xf]
    %v456 = vld [vmem:[%s1 + $0x410] sm:$0xf]
    %v457 = vld [vmem:[%s1 + $0x414] sm:$0xf]
    %v458 = vld [vmem:[%s1 + $0x418] sm:$0xf]
    %v459 = vld [vmem:[%s1 + $0x41c] sm:$0xf]
    %v460 = vld [vmem:[%s1 + $0x420] sm:$0xf]
    %v461 = vld [vmem:[%s1 + $0x424] sm:$0xf]
    %v462 = vld [vmem:[%s1 + $0x428] sm:$0xf]
    %v463 = vld [vmem:[%s1 + $0x42c] sm:$0xf]
    %v464 = vld [vmem:[%s1 + $0x430] sm:$0xf]
    %v465 = vld [vmem:[%s1 + $0x434] sm:$0xf]
    %v466 = vld [vmem:[%s1 + $0x438] sm:$0xf]
    %v467 = vld [vmem:[%s1 + $0x43c] sm:$0xf]
    %v468 = vld [vmem:[%s1 + $0x440] sm:$0xf]
    %v469 = vld [vmem:[%s1 + $0x444] sm:$0xf]
    %v470 = vld [vmem:[%s1 + $0x448] sm:$0xf]
    %v471 = vld [vmem:[%s1 + $0x44c] sm:$0xf]
    %v472 = vld [vmem:[%s1 + $0x450] sm:$0xf]
    %v473 = vld [vmem:[%s1 + $0x454] sm:$0xf]
    %v474 = vld [vmem:[%s1 + $0x458] sm:$0xf]
    %v475 = vld [vmem:[%s1 + $0x45c] sm:$0xf]
    %v476 = vld [vmem:[%s1 + $0x460] sm:$0xf]
    %v477 = vld [vmem:[%s1 + $0x464] sm:$0xf]
    %v478 = vld [vmem:[%s1 + $0x468] sm:$0xf]
    %v479 = vld [vmem:[%s1 + $0x46c] sm:$0xf]
    %v480 = vld [vmem:[%s1 + $0x470] sm:$0xf]
    %v481 = vld [vmem:[%s1 + $0x474] sm:$0xf]
    %v482 = vld [vmem:[%s1 + $0x478] sm:$0xf]
    %v483 = vld [vmem:[%s1 + $0x47c] sm:$0xf]
    %v484 = vld [vmem:[%s1 + $0x480] sm:$0xf]
    %v485 = vld [vmem:[%s1 + $0x484] sm:$0xf]
    %v486 = vld [vmem:[%s1 + $0x488] sm:$0xf]
    %v487 = vld [vmem:[%s1 + $0x48c] sm:$0xf]
    %v488 = vld [vmem:[%s1 + $0x490] sm:$0xf]
    %v489 = vld [vmem:[%s1 + $0x494] sm:$0xf]
    %v490 = vld [vmem:[%s1 + $0x498] sm:$0xf]
    %v491 = vld [vmem:[%s1 + $0x49c] sm:$0xf]
    %v492 = vld [vmem:[%s1 + $0x4a0] sm:$0xf]
    %v493 = vld [vmem:[%s1 + $0x4a4] sm:$0xf]
    %v494 = vld [vmem:[%s1 + $0x4a8] sm:$0xf]
    %v495 = vld [vmem:[%s1 + $0x4ac] sm:$0xf]
    %v496 = vld [vmem:[%s1 + $0x4b0] sm:$0xf]
    %v497 = vld [vmem:[%s1 + $0x4b4] sm:$0xf]
    %v498 = vld [vmem:[%s1 + $0x4b8] sm:$0xf]
    %v499 = vld [vmem:[%s1 + $0x4bc] sm:$0xf]
    %v500 = vld [vmem:[%s1 + $0x4c0] sm:$0xf]
    %v501 = vld [vmem:[%s1 + $0x4c4] sm:$0xf]
    %v502 = vld [vmem:[%s1 + $0x4c8] sm:$0xf]
    %v503 = vld [vmem:[%s1 + $0x4cc] sm:$0xf]
    %v504 = vld [vmem:[%s1 + $0x4d0] sm:$0xf]
    %v505 = vld [vmem:[%s1 + $0x4d4] sm:$0xf]
    %v506 = vld [vmem:[%s1 + $0x4d8] sm:$0xf]
    %v507 = vld [vmem:[%s1 + $0x4dc] sm:$0xf]
    %v508 = vld [vmem:[%s1 + $0x4e0] sm:$0xf]
    %v509 = vld [vmem:[%s1 + $0x4e4] sm:$0xf]
    %v510 = vld [vmem:[%s1 + $0x4e8] sm:$0xf]
    %v511 = vld [vmem:[%s1 + $0x4ec] sm:$0xf]
    %v512 = vld [vmem:[%s1 + $0x4f0] sm:$0xf]
    %v513 = vld [vmem:[%s1 + $0x4f4] sm:$0xf]
    %v514 = vld [vmem:[%s1 + $0x4f8] sm:$0xf]
    %v515 = vld [vmem:[%s1 + $0x4fc] sm:$0xf]
    %v516 = vld [vmem:[%s1 + $0x500] sm:$0xf]
    %v517 = vld [vmem:[%s1 + $0x504] sm:$0xf]
    %v518 = vld [vmem:[%s1 + $0x508] sm:$0xf]
    %v519 = vld [vmem:[%s1 + $0x50c] sm:$0xf]
    %v520 = vld [vmem:[%s1 + $0x510] sm:$0xf]
    %v521 = vld [vmem:[%s1 + $0x514] sm:$0xf]
    %v522 = vld [vmem:[%s1 + $0x518] sm:$0xf]
    %v523 = vld [vmem:[%s1 + $0x51c] sm:$0xf]
    %v524 = vld [vmem:[%s1 + $0x520] sm:$0xf]
    %v525 = vld [vmem:[%s1 + $0x524] sm:$0xf]
    %v526 = vld [vmem:[%s1 + $0x528] sm:$0xf]
    %v527 = vld [vmem:[%s1 + $0x52c] sm:$0xf]
    %v528 = vld [vmem:[%s1 + $0x530] sm:$0xf]
    %v529 = vld [vmem:[%s1 + $0x534] sm:$0xf]
    %v530 = vld [vmem:[%s1 + $0x538] sm:$0xf]
    %v531 = vld [vmem:[%s1 + $0x53c] sm:$0xf]
    %v532 = vld [vmem:[%s1 + $0x540] sm:$0xf]
    %v533 = vld [vmem:[%s1 + $0x544] sm:$0xf]
    %v534 = vld [vmem:[%s1 + $0x548] sm:$0xf]
    %v535 = vld [vmem:[%s1 + $0x54c] sm:$0xf]
    %v536 = vld [vmem:[%s1 + $0x550] sm:$0xf]
    %v537 = vld [vmem:[%s1 + $0x554] sm:$0xf]
    %v538 = vld [vmem:[%s1 + $0x558] sm:$0xf]
    %v539 = vld [vmem:[%s1 + $0x55c] sm:$0xf]
    %v540 = vld [vmem:[%s1 + $0x560] sm:$0xf]
    %v541 = vld [vmem:[%s1 + $0x564] sm:$0xf]
    %v542 = vld [vmem:[%s1 + $0x568] sm:$0xf]
    %v543 = vld [vmem:[%s1 + $0x56c] sm:$0xf]
    %v544 = vld [vmem:[%s1 + $0x570] sm:$0xf]
    %v545 = vld [vmem:[%s1 + $0x574] sm:$0xf]
    %v546 = vld [vmem:[%s1 + $0x578] sm:$0xf]
    %v547 = vld [vmem:[%s1 + $0x57c] sm:$0xf]
    %v548 = vld [vmem:[%s1 + $0x580] sm:$0xf]
    %v549 = vld [vmem:[%s1 + $0x584] sm:$0xf]
    %v550 = vld [vmem:[%s1 + $0x588] sm:$0xf]
    %v551 = vld [vmem:[%s1 + $0x58c] sm:$0xf]
    %v552 = vld [vmem:[%s1 + $0x590] sm:$0xf]
    %v553 = vld [vmem:[%s1 + $0x594] sm:$0xf]
    %v554 = vld [vmem:[%s1 + $0x598] sm:$0xf]
    %v555 = vld [vmem:[%s1 + $0x59c] sm:$0xf]
    %v556 = vld [vmem:[%s1 + $0x5a0] sm:$0xf]
    %v557 = vld [vmem:[%s1 + $0x5a4] sm:$0xf]
    %v558 = vld [vmem:[%s1 + $0x5a8] sm:$0xf]
    %v559 = vld [vmem:[%s1 + $0x5ac] sm:$0xf]
    %v560 = vld [vmem:[%s1 + $0x5b0] sm:$0xf]
    %v561 = vld [vmem:[%s1 + $0x5b4] sm:$0xf]
    %v562 = vld [vmem:[%s1 + $0x5b8] sm:$0xf]
    %v563 = vld [vmem:[%s1 + $0x5bc] sm:$0xf]
    %v564 = vld [vmem:[%s1 + $0x5c0] sm:$0xf]
    %v565 = vld [vmem:[%s1 + $0x5c4] sm:$0xf]
    %v566 = vld [vmem:[%s1 + $0x5c8] sm:$0xf]
    %v567 = vld [vmem:[%s1 + $0x5cc] sm:$0xf]
    %v568 = vld [vmem:[%s1 + $0x5d0] sm:$0xf]
    %v569 = vld [vmem:[%s1 + $0x5d4] sm:$0xf]
    %v570 = vld [vmem:[%s1 + $0x5d8] sm:$0xf]
    %v571 = vld [vmem:[%s1 + $0x5dc] sm:$0xf]
    %v572 = vld [vmem:[%s1 + $0x5e0] sm:$0xf]
    %v573 = vld [vmem:[%s1 + $0x5e4] sm:$0xf]
    %v574 = vld [vmem:[%s1 + $0x5e8] sm:$0xf]
    %v575 = vld [vmem:[%s1 + $0x5ec] sm:$0xf]
    %v576 = vld [vmem:[%s1 + $0x5f0] sm:$0xf]
    %v577 = vld [vmem:[%s1 + $0x5f4] sm:$0xf]
    %v578 = vld [vmem:[%s1 + $0x5f8] sm:$0xf]
    %v579 = vld [vmem:[%s1 + $0x5fc] sm:$0xf]
    %v580 = vld [vmem:[%s1 + $0x600] sm:$0xf]
    %v581 = vld [vmem:[%s1 + $0x604] sm:$0xf]
    %v582 = vld [vmem:[%s1 + $0x608] sm:$0xf]
    %v583 = vld [vmem:[%s1 + $0x60c] sm:$0xf]
    %v584 = vld [vmem:[%s1 + $0x610] sm:$0xf]
    %v585 = vld [vmem:[%s1 + $0x614] sm:$0xf]
    %v586 = vld [vmem:[%s1 + $0x618] sm:$0xf]
    %v587 = vld [vmem:[%s1 + $0x61c] sm:$0xf]
    %v588 = vld [vmem:[%s1 + $0x620] sm:$0xf]
    %v589 = vld [vmem:[%s1 + $0x624] sm:$0xf]
    %v590 = vld [vmem:[%s1 + $0x628] sm:$0xf]
    %v591 = vld [vmem:[%s1 + $0x62c] sm:$0xf]
    %v592 = vld [vmem:[%s1 + $0x630] sm:$0xf]
    %v593 = vld [vmem:[%s1 + $0x634] sm:$0xf]
    %v594 = vld [vmem:[%s1 + $0x638] sm:$0xf]
    %v595 = vld [vmem:[%s1 + $0x63c] sm:$0xf]
    %v596 = vld [vmem:[%s1 + $0x640] sm:$0xf]
    %v597 = vld [vmem:[%s1 + $0x644] sm:$0xf]
    %v598 = vld [vmem:[%s1 + $0x648] sm:$0xf]
    %v599 = vld [vmem:[%s1 + $0x64c] sm:$0xf]
    %v600 = vld [vmem:[%s1 + $0x650] sm:$0xf]
    %v601 = vld [vmem:[%s1 + $0x654] sm:$0xf]
    %v602 = vld [vmem:[%s1 + $0x658] sm:$0xf]
    %v603 = vld [vmem:[%s1 + $0x65c] sm:$0xf]
    %v604 = vld [vmem:[%s1 + $0x660] sm:$0xf]
    %v605 = vld [vmem:[%s1 + $0x664] sm:$0xf]
    %v606 = vld [vmem:[%s1 + $0x668] sm:$0xf]
    %v607 = vld [vmem:[%s1 + $0x66c] sm:$0xf]
    %v608 = vld [vmem:[%s1 + $0x670] sm:$0xf]
    %v609 = vld [vmem:[%s1 + $0x674] sm:$0xf]
    %v610 = vld [vmem:[%s1 + $0x678] sm:$0xf]
    %v611 = vld [vmem:[%s1 + $0x67c] sm:$0xf]
    %v612 = vld [vmem:[%s1 + $0x680] sm:$0xf]
    %v613 = vld [vmem:[%s1 + $0x684] sm:$0xf]
    %v614 = vld [vmem:[%s1 + $0x688] sm:$0xf]
    %v615 = vld [vmem:[%s1 + $0x68c] sm:$0xf]
    %v616 = vld [vmem:[%s1 + $0x690] sm:$0xf]
    %v617 = vld [vmem:[%s1 + $0x694] sm:$0xf]
    %v618 = vld [vmem:[%s1 + $0x698] sm:$0xf]
    %v619 = vld [vmem:[%s1 + $0x69c] sm:$0xf]
    %v620 = vld [vmem:[%s1 + $0x6a0] sm:$0xf]
    %v621 = vld [vmem:[%s1 + $0x6a4] sm:$0xf]
    %v622 = vld [vmem:[%s1 + $0x6a8] sm:$0xf]
    %v623 = vld [vmem:[%s1 + $0x6ac] sm:$0xf]
    %v624 = vld [vmem:[%s1 + $0x6b0] sm:$0xf]
    %v625 = vld [vmem:[%s1 + $0x6b4] sm:$0xf]
    %v626 = vld [vmem:[%s1 + $0x6b8] sm:$0xf]
    %v627 = vld [vmem:[%s1 + $0x6bc] sm:$0xf]
    %v628 = vld [vmem:[%s1 + $0x6c0] sm:$0xf]
    %v629 = vld [vmem:[%s1 + $0x6c4] sm:$0xf]
    %v630 = vld [vmem:[%s1 + $0x6c8] sm:$0xf]
    %v631 = vld [vmem:[%s1 + $0x6cc] sm:$0xf]
    %v632 = vld [vmem:[%s1 + $0x6d0] sm:$0xf]
    %v633 = vld [vmem:[%s1 + $0x6d4] sm:$0xf]
    %v634 = vld [vmem:[%s1 + $0x6d8] sm:$0xf]
    %v635 = vld [vmem:[%s1 + $0x6dc] sm:$0xf]
    %v636 = vld [vmem:[%s1 + $0x6e0] sm:$0xf]
    %v637 = vld [vmem:[%s1 + $0x6e4] sm:$0xf]
    %v638 = vld [vmem:[%s1 + $0x6e8] sm:$0xf]
    %v639 = vld [vmem:[%s1 + $0x6ec] sm:$0xf]
    %v640 = vld [vmem:[%s1 + $0x6f0] sm:$0xf]
    %v641 = vld [vmem:[%s1 + $0x6f4] sm:$0xf]
    %v642 = vld [vmem:[%s1 + $0x6f8] sm:$0xf]
    %v643 = vld [vmem:[%s1 + $0x6fc] sm:$0xf]
    %v644 = vld [vmem:[%s1 + $0x700] sm:$0xf]
    %v645 = vld [vmem:[%s1 + $0x704] sm:$0xf]
    %v646 = vld [vmem:[%s1 + $0x708] sm:$0xf]
    %v647 = vld [vmem:[%s1 + $0x70c] sm:$0xf]
    %v648 = vld [vmem:[%s1 + $0x710] sm:$0xf]
    %v649 = vld [vmem:[%s1 + $0x714] sm:$0xf]
    %v650 = vld [vmem:[%s1 + $0x718] sm:$0xf]
    %v651 = vld [vmem:[%s1 + $0x71c] sm:$0xf]
    %v652 = vld [vmem:[%s1 + $0x720] sm:$0xf]
    %v653 = vld [vmem:[%s1 + $0x724] sm:$0xf]
    %v654 = vld [vmem:[%s1 + $0x728] sm:$0xf]
    %v655 = vld [vmem:[%s1 + $0x72c] sm:$0xf]
    %v656 = vld [vmem:[%s1 + $0x730] sm:$0xf]
    %v657 = vld [vmem:[%s1 + $0x734] sm:$0xf]
    %v658 = vld [vmem:[%s1 + $0x738] sm:$0xf]
    %v659 = vld [vmem:[%s1 + $0x73c] sm:$0xf]
    %v660 = vld [vmem:[%s1 + $0x740] sm:$0xf]
    %v661 = vld [vmem:[%s1 + $0x744] sm:$0xf]
    %v662 = vld [vmem:[%s1 + $0x748] sm:$0xf]
    %v663 = vld [vmem:[%s1 + $0x74c] sm:$0xf]
    %v664 = vld [vmem:[%s1 + $0x750] sm:$0xf]
    %v665 = vld [vmem:[%s1 + $0x754] sm:$0xf]
    %v666 = vld [vmem:[%s1 + $0x758] sm:$0xf]
    %v667 = vld [vmem:[%s1 + $0x75c] sm:$0xf]
    %v668 = vld [vmem:[%s1 + $0x760] sm:$0xf]
    %v669 = vld [vmem:[%s1 + $0x764] sm:$0xf]
    %v670 = vld [vmem:[%s1 + $0x768] sm:$0xf]
    %v671 = vld [vmem:[%s1 + $0x76c] sm:$0xf]
    %v672 = vld [vmem:[%s1 + $0x770] sm:$0xf]
    %v673 = vld [vmem:[%s1 + $0x774] sm:$0xf]
    %v674 = vld [vmem:[%s1 + $0x778] sm:$0xf]
    %v675 = vld [vmem:[%s1 + $0x77c] sm:$0xf]
    %v676 = vld [vmem:[%s1 + $0x780] sm:$0xf]
    %v677 = vld [vmem:[%s1 + $0x784] sm:$0xf]
    %v678 = vld [vmem:[%s1 + $0x788] sm:$0xf]
    %v679 = vld [vmem:[%s1 + $0x78c] sm:$0xf]
    %v680 = vld [vmem:[%s1 + $0x790] sm:$0xf]
    %v681 = vld [vmem:[%s1 + $0x794] sm:$0xf]
    %v682 = vld [vmem:[%s1 + $0x798] sm:$0xf]
    %v683 = vld [vmem:[%s1 + $0x79c] sm:$0xf]
    %v684 = vld [vmem:[%s1 + $0x7a0] sm:$0xf]
    %v685 = vld [vmem:[%s1 + $0x7a4] sm:$0xf]
    %v686 = vld [vmem:[%s1 + $0x7a8] sm:$0xf]
    %v687 = vld [vmem:[%s1 + $0x7ac] sm:$0xf]
    %v688 = vld [vmem:[%s1 + $0x7b0] sm:$0xf]
    %v689 = vld [vmem:[%s1 + $0x7b4] sm:$0xf]
    %v690 = vld [vmem:[%s1 + $0x7b8] sm:$0xf]
    %v691 = vld [vmem:[%s1 + $0x7bc] sm:$0xf]
    %v692 = vld [vmem:[%s1 + $0x7c0] sm:$0xf]
    %v693 = vld [vmem:[%s1 + $0x7c4] sm:$0xf]
    %v694 = vld [vmem:[%s1 + $0x7c8] sm:$0xf]
    %v695 = vld [vmem:[%s1 + $0x7cc] sm:$0xf]
    %v696 = vld [vmem:[%s1 + $0x7d0] sm:$0xf]
    %v697 = vld [vmem:[%s1 + $0x7d4] sm:$0xf]
    %v698 = vld [vmem:[%s1 + $0x7d8] sm:$0xf]
    %v699 = vld [vmem:[%s1 + $0x7dc] sm:$0xf]
    %v700 = vld [vmem:[%s1 + $0x7e0] sm:$0xf]
    %v701 = vld [vmem:[%s1 + $0x7e4] sm:$0xf]
    %v702 = vld [vmem:[%s1 + $0x7e8] sm:$0xf]
    %v703 = vld [vmem:[%s1 + $0x7ec] sm:$0xf]
    %v704 = vld [vmem:[%s1 + $0x7f0] sm:$0xf]
    %v705 = vld [vmem:[%s1 + $0x7f4] sm:$0xf]
    %v706 = vld [vmem:[%s1 + $0x7f8] sm:$0xf]
    %v707 = vld [vmem:[%s1 + $0x7fc] sm:$0xf]
    %v708 = vld [vmem:[%s1 + $0x800] sm:$0xf]
    %v709 = vld [vmem:[%s1 + $0x804] sm:$0xf]
    %v710 = vld [vmem:[%s1 + $0x808] sm:$0xf]
    %v711 = vld [vmem:[%s1 + $0x80c] sm:$0xf]
    %v712 = vld [vmem:[%s1 + $0x810] sm:$0xf]
    %v713 = vld [vmem:[%s1 + $0x814] sm:$0xf]
    %v714 = vld [vmem:[%s1 + $0x818] sm:$0xf]
    %v715 = vld [vmem:[%s1 + $0x81c] sm:$0xf]
    %v716 = vld [vmem:[%s1 + $0x820] sm:$0xf]
    %v717 = vld [vmem:[%s1 + $0x824] sm:$0xf]
    %v718 = vld [vmem:[%s1 + $0x828] sm:$0xf]
    %v719 = vld [vmem:[%s1 + $0x82c] sm:$0xf]
    %v720 = vld [vmem:[%s1 + $0x830] sm:$0xf]
    %v721 = vld [vmem:[%s1 + $0x834] sm:$0xf]
    %v722 = vld [vmem:[%s1 + $0x838] sm:$0xf]
    %v723 = vld [vmem:[%s1 + $0x83c] sm:$0xf]
    %v724 = vld [vmem:[%s1 + $0x840] sm:$0xf]
    %v725 = vld [vmem:[%s1 + $0x844] sm:$0xf]
    %v726 = vld [vmem:[%s1 + $0x848] sm:$0xf]
    %v727 = vld [vmem:[%s1 + $0x84c] sm:$0xf]
    %v728 = vld [vmem:[%s1 + $0x850] sm:$0xf]
    %v729 = vld [vmem:[%s1 + $0x854] sm:$0xf]
    %v730 = vld [vmem:[%s1 + $0x858] sm:$0xf]
    %v731 = vld [vmem:[%s1 + $0x85c] sm:$0xf]
    %v732 = vld [vmem:[%s1 + $0x860] sm:$0xf]
    %v733 = vld [vmem:[%s1 + $0x864] sm:$0xf]
    %v734 = vld [vmem:[%s1 + $0x868] sm:$0xf]
    %v735 = vld [vmem:[%s1 + $0x86c] sm:$0xf]
    %v736 = vld [vmem:[%s1 + $0x870] sm:$0xf]
    %v737 = vld [vmem:[%s1 + $0x874] sm:$0xf]
    %v738 = vld [vmem:[%s1 + $0x878] sm:$0xf]
    %v739 = vld [vmem:[%s1 + $0x87c] sm:$0xf]
    %v740 = vld [vmem:[%s1 + $0x880] sm:$0xf]
    %v741 = vld [vmem:[%s1 + $0x884] sm:$0xf]
    %v742 = vld [vmem:[%s1 + $0x888] sm:$0xf]
    %v743 = vld [vmem:[%s1 + $0x88c] sm:$0xf]
    %v744 = vld [vmem:[%s1 + $0x890] sm:$0xf]
    %v745 = vld [vmem:[%s1 + $0x894] sm:$0xf]
    %v746 = vld [vmem:[%s1 + $0x898] sm:$0xf]
    %v747 = vld [vmem:[%s1 + $0x89c] sm:$0xf]
    %v748 = vld [vmem:[%s1 + $0x8a0] sm:$0xf]
    %v749 = vld [vmem:[%s1 + $0x8a4] sm:$0xf]
    %v750 = vld [vmem:[%s1 + $0x8a8] sm:$0xf]
    %v751 = vld [vmem:[%s1 + $0x8ac] sm:$0xf]
    %v752 = vld [vmem:[%s1 + $0x8b0] sm:$0xf]
    %v753 = vld [vmem:[%s1 + $0x8b4] sm:$0xf]
    %v754 = vld [vmem:[%s1 + $0x8b8] sm:$0xf]
    %v755 = vld [vmem:[%s1 + $0x8bc] sm:$0xf]
    %v756 = vld [vmem:[%s1 + $0x8c0] sm:$0xf]
    %v757 = vld [vmem:[%s1 + $0x8c4] sm:$0xf]
    %v758 = vld [vmem:[%s1 + $0x8c8] sm:$0xf]
    %v759 = vld [vmem:[%s1 + $0x8cc] sm:$0xf]
    %v760 = vld [vmem:[%s1 + $0x8d0] sm:$0xf]
    %v761 = vld [vmem:[%s1 + $0x8d4] sm:$0xf]
    %v762 = vld [vmem:[%s1 + $0x8d8] sm:$0xf]
    %v763 = vld [vmem:[%s1 + $0x8dc] sm:$0xf]
    %v764 = vld [vmem:[%s1 + $0x8e0] sm:$0xf]
    %v765 = vld [vmem:[%s1 + $0x8e4] sm:$0xf]
    %v766 = vld [vmem:[%s1 + $0x8e8] sm:$0xf]
    %v767 = vld [vmem:[%s1 + $0x8ec] sm:$0xf]
    %v768 = vld [vmem:[%s1 + $0x8f0] sm:$0xf]
    %v769 = vld [vmem:[%s1 + $0x8f4] sm:$0xf]
    %v770 = vld [vmem:[%s1 + $0x8f8] sm:$0xf]
    %v771 = vld [vmem:[%s1 + $0x8fc] sm:$0xf]
    %v772 = vld [vmem:[%s1 + $0x900] sm:$0xf]
    %v773 = vld [vmem:[%s1 + $0x904] sm:$0xf]
    %v774 = vld [vmem:[%s1 + $0x908] sm:$0xf]
    %v775 = vld [vmem:[%s1 + $0x90c] sm:$0xf]
    %v776 = vld [vmem:[%s1 + $0x910] sm:$0xf]
    %v777 = vld [vmem:[%s1 + $0x914] sm:$0xf]
    %v778 = vld [vmem:[%s1 + $0x918] sm:$0xf]
    %v779 = vld [vmem:[%s1 + $0x91c] sm:$0xf]
    %v780 = vld [vmem:[%s1 + $0x920] sm:$0xf]
    %v781 = vld [vmem:[%s1 + $0x924] sm:$0xf]
    %v782 = vld [vmem:[%s1 + $0x928] sm:$0xf]
    %v783 = vld [vmem:[%s1 + $0x92c] sm:$0xf]
    %v784 = vld [vmem:[%s1 + $0x930] sm:$0xf]
    %v785 = vld [vmem:[%s1 + $0x934] sm:$0xf]
    %v786 = vld [vmem:[%s1 + $0x938] sm:$0xf]
    %v787 = vld [vmem:[%s1 + $0x93c] sm:$0xf]
    %v788 = vld [vmem:[%s1 + $0x940] sm:$0xf]
    %v789 = vld [vmem:[%s1 + $0x944] sm:$0xf]
    %v790 = vld [vmem:[%s1 + $0x948] sm:$0xf]
    %v791 = vld [vmem:[%s1 + $0x94c] sm:$0xf]
    %v792 = vld [vmem:[%s1 + $0x950] sm:$0xf]
    %v793 = vld [vmem:[%s1 + $0x954] sm:$0xf]
    %v794 = vld [vmem:[%s1 + $0x958] sm:$0xf]
    %v795 = vld [vmem:[%s1 + $0x95c] sm:$0xf]
    %v796 = vld [vmem:[%s1 + $0x960] sm:$0xf]
    %v797 = vld [vmem:[%s1 + $0x964] sm:$0xf]
    %v798 = vld [vmem:[%s1 + $0x968] sm:$0xf]
    %v799 = vld [vmem:[%s1 + $0x96c] sm:$0xf]
    %v800 = vld [vmem:[%s1 + $0x970] sm:$0xf]
    %v801 = vld [vmem:[%s1 + $0x974] sm:$0xf]
    %v802 = vld [vmem:[%s1 + $0x978] sm:$0xf]
    %v803 = vld [vmem:[%s1 + $0x97c] sm:$0xf]
    %v804 = vld [vmem:[%s1 + $0x980] sm:$0xf]
    %v805 = vld [vmem:[%s1 + $0x984] sm:$0xf]
    %v806 = vld [vmem:[%s1 + $0x988] sm:$0xf]
    %v807 = vld [vmem:[%s1 + $0x98c] sm:$0xf]
    %v808 = vld [vmem:[%s1 + $0x990] sm:$0xf]
    %v809 = vld [vmem:[%s1 + $0x994] sm:$0xf]
    %v810 = vld [vmem:[%s1 + $0x998] sm:$0xf]
    %v811 = vld [vmem:[%s1 + $0x99c] sm:$0xf]
    %v812 = vld [vmem:[%s1 + $0x9a0] sm:$0xf]
    %v813 = vld [vmem:[%s1 + $0x9a4] sm:$0xf]
    %v814 = vld [vmem:[%s1 + $0x9a8] sm:$0xf]
    %v815 = vld [vmem:[%s1 + $0x9ac] sm:$0xf]
    %v816 = vld [vmem:[%s1 + $0x9b0] sm:$0xf]
    %v817 = vld [vmem:[%s1 + $0x9b4] sm:$0xf]
    %v818 = vld [vmem:[%s1 + $0x9b8] sm:$0xf]
    %v819 = vld [vmem:[%s1 + $0x9bc] sm:$0xf]
    %v820 = vld [vmem:[%s1 + $0x9c0] sm:$0xf]
    %v821 = vld [vmem:[%s1 + $0x9c4] sm:$0xf]
    %v822 = vld [vmem:[%s1 + $0x9c8] sm:$0xf]
    %v823 = vld [vmem:[%s1 + $0x9cc] sm:$0xf]
    %v824 = vld [vmem:[%s1 + $0x9d0] sm:$0xf]
    %v825 = vld [vmem:[%s1 + $0x9d4] sm:$0xf]
    %v826 = vld [vmem:[%s1 + $0x9d8] sm:$0xf]
    %v827 = vld [vmem:[%s1 + $0x9dc] sm:$0xf]
    %v828 = vld [vmem:[%s1 + $0x9e0] sm:$0xf]
    %v829 = vld [vmem:[%s1 + $0x9e4] sm:$0xf]
    %v830 = vld [vmem:[%s1 + $0x9e8] sm:$0xf]
    %v831 = vld [vmem:[%s1 + $0x9ec] sm:$0xf]
    %v832 = vld [vmem:[%s1 + $0x9f0] sm:$0xf]
    %v833 = vld [vmem:[%s1 + $0x9f4] sm:$0xf]
    %v834 = vld [vmem:[%s1 + $0x9f8] sm:$0xf]
    %v835 = vld [vmem:[%s1 + $0x9fc] sm:$0xf]
    %v836 = vld [vmem:[%s1 + $0xa00] sm:$0xf]
    %v837 = vld [vmem:[%s1 + $0xa04] sm:$0xf]
    %v838 = vld [vmem:[%s1 + $0xa08] sm:$0xf]
    %v839 = vld [vmem:[%s1 + $0xa0c] sm:$0xf]
    %v840 = vld [vmem:[%s1 + $0xa10] sm:$0xf]
    %v841 = vld [vmem:[%s1 + $0xa14] sm:$0xf]
    %v842 = vld [vmem:[%s1 + $0xa18] sm:$0xf]
    %v843 = vld [vmem:[%s1 + $0xa1c] sm:$0xf]
    %v844 = vld [vmem:[%s1 + $0xa20] sm:$0xf]
    %v845 = vld [vmem:[%s1 + $0xa24] sm:$0xf]
    %v846 = vld [vmem:[%s1 + $0xa28] sm:$0xf]
    %v847 = vld [vmem:[%s1 + $0xa2c] sm:$0xf]
    %v848 = vld [vmem:[%s1 + $0xa30] sm:$0xf]
    %v849 = vld [vmem:[%s1 + $0xa34] sm:$0xf]
    %v850 = vld [vmem:[%s1 + $0xa38] sm:$0xf]
    %v851 = vld [vmem:[%s1 + $0xa3c] sm:$0xf]
    %v852 = vld [vmem:[%s1 + $0xa40] sm:$0xf]
    %v853 = vld [vmem:[%s1 + $0xa44] sm:$0xf]
    %v854 = vld [vmem:[%s1 + $0xa48] sm:$0xf]
    %v855 = vld [vmem:[%s1 + $0xa4c] sm:$0xf]
    %v856 = vld [vmem:[%s1 + $0xa50] sm:$0xf]
    %v857 = vld [vmem:[%s1 + $0xa54] sm:$0xf]
    %v858 = vld [vmem:[%s1 + $0xa58] sm:$0xf]
    %v859 = vld [vmem:[%s1 + $0xa5c] sm:$0xf]
    %v860 = vld [vmem:[%s1 + $0xa60] sm:$0xf]
    %v861 = vld [vmem:[%s1 + $0xa64] sm:$0xf]
    %v862 = vld [vmem:[%s1 + $0xa68] sm:$0xf]
    %v863 = vld [vmem:[%s1 + $0xa6c] sm:$0xf]
    %v864 = vld [vmem:[%s1 + $0xa70] sm:$0xf]
    %v865 = vld [vmem:[%s1 + $0xa74] sm:$0xf]
    %v866 = vld [vmem:[%s1 + $0xa78] sm:$0xf]
    %v867 = vld [vmem:[%s1 + $0xa7c] sm:$0xf]
    %v868 = vld [vmem:[%s1 + $0xa80] sm:$0xf]
    %v869 = vld [vmem:[%s1 + $0xa84] sm:$0xf]
    %v870 = vld [vmem:[%s1 + $0xa88] sm:$0xf]
    %v871 = vld [vmem:[%s1 + $0xa8c] sm:$0xf]
    %v872 = vld [vmem:[%s1 + $0xa90] sm:$0xf]
    %v873 = vld [vmem:[%s1 + $0xa94] sm:$0xf]
    %v874 = vld [vmem:[%s1 + $0xa98] sm:$0xf]
    %v875 = vld [vmem:[%s1 + $0xa9c] sm:$0xf]
    %v876 = vld [vmem:[%s1 + $0xaa0] sm:$0xf]
    %v877 = vld [vmem:[%s1 + $0xaa4] sm:$0xf]
    %v878 = vld [vmem:[%s1 + $0xaa8] sm:$0xf]
    %v879 = vld [vmem:[%s1 + $0xaac] sm:$0xf]
    %v880 = vld [vmem:[%s1 + $0xab0] sm:$0xf]
    %v881 = vld [vmem:[%s1 + $0xab4] sm:$0xf]
    %v882 = vld [vmem:[%s1 + $0xab8] sm:$0xf]
    %v883 = vld [vmem:[%s1 + $0xabc] sm:$0xf]
    %v884 = vld [vmem:[%s1 + $0xac0] sm:$0xf]
    %v885 = vld [vmem:[%s1 + $0xac4] sm:$0xf]
    %v886 = vld [vmem:[%s1 + $0xac8] sm:$0xf]
    %v887 = vld [vmem:[%s1 + $0xacc] sm:$0xf]
    %v888 = vld [vmem:[%s1 + $0xad0] sm:$0xf]
    %v889 = vld [vmem:[%s1 + $0xad4] sm:$0xf]
    %v890 = vld [vmem:[%s1 + $0xad8] sm:$0xf]
    %v891 = vld [vmem:[%s1 + $0xadc] sm:$0xf]
    %v892 = vld [vmem:[%s1 + $0xae0] sm:$0xf]
    %v893 = vld [vmem:[%s1 + $0xae4] sm:$0xf]
    %v894 = vld [vmem:[%s1 + $0xae8] sm:$0xf]
    %v895 = vld [vmem:[%s1 + $0xaec] sm:$0xf]
    %v896 = vld [vmem:[%s1 + $0xaf0] sm:$0xf]
    %v897 = vld [vmem:[%s1 + $0xaf4] sm:$0xf]
    %v898 = vld [vmem:[%s1 + $0xaf8] sm:$0xf]
    %v899 = vld [vmem:[%s1 + $0xafc] sm:$0xf]
    %v900 = vld [vmem:[%s1 + $0xb00] sm:$0xf]
    %v901 = vld [vmem:[%s1 + $0xb04] sm:$0xf]
    %v902 = vld [vmem:[%s1 + $0xb08] sm:$0xf]
    %v903 = vld [vmem:[%s1 + $0xb0c] sm:$0xf]
    %v904 = vld [vmem:[%s1 + $0xb10] sm:$0xf]
    %v905 = vld [vmem:[%s1 + $0xb14] sm:$0xf]
    %v906 = vld [vmem:[%s1 + $0xb18] sm:$0xf]
    %v907 = vld [vmem:[%s1 + $0xb1c] sm:$0xf]
    %v908 = vld [vmem:[%s1 + $0xb20] sm:$0xf]
    %v909 = vld [vmem:[%s1 + $0xb24] sm:$0xf]
    %v910 = vld [vmem:[%s1 + $0xb28] sm:$0xf]
    %v911 = vld [vmem:[%s1 + $0xb2c] sm:$0xf]
    %v912 = vld [vmem:[%s1 + $0xb30] sm:$0xf]
    %v913 = vld [vmem:[%s1 + $0xb34] sm:$0xf]
    %v914 = vld [vmem:[%s1 + $0xb38] sm:$0xf]
    %v915 = vld [vmem:[%s1 + $0xb3c] sm:$0xf]
    %v916 = vld [vmem:[%s1 + $0xb40] sm:$0xf]
    %v917 = vld [vmem:[%s1 + $0xb44] sm:$0xf]
    %v918 = vld [vmem:[%s1 + $0xb48] sm:$0xf]
    %v919 = vld [vmem:[%s1 + $0xb4c] sm:$0xf]
    %v920 = vld [vmem:[%s1 + $0xb50] sm:$0xf]
    %v921 = vld [vmem:[%s1 + $0xb54] sm:$0xf]
    %v922 = vld [vmem:[%s1 + $0xb58] sm:$0xf]
    %v923 = vld [vmem:[%s1 + $0xb5c] sm:$0xf]
    %v924 = vld [vmem:[%s1 + $0xb60] sm:$0xf]
    %v925 = vld [vmem:[%s1 + $0xb64] sm:$0xf]
    %v926 = vld [vmem:[%s1 + $0xb68] sm:$0xf]
    %v927 = vld [vmem:[%s1 + $0xb6c] sm:$0xf]
    %v928 = vld [vmem:[%s1 + $0xb70] sm:$0xf]
    %v929 = vld [vmem:[%s1 + $0xb74] sm:$0xf]
    %v930 = vld [vmem:[%s1 + $0xb78] sm:$0xf]
    %v931 = vld [vmem:[%s1 + $0xb7c] sm:$0xf]
    %v932 = vld [vmem:[%s1 + $0xb80] sm:$0xf]
    %v933 = vld [vmem:[%s1 + $0xb84] sm:$0xf]
    %v934 = vld [vmem:[%s1 + $0xb88] sm:$0xf]
    %v935 = vld [vmem:[%s1 + $0xb8c] sm:$0xf]
    %v936 = vld [vmem:[%s1 + $0xb90] sm:$0xf]
    %v937 = vld [vmem:[%s1 + $0xb94] sm:$0xf]
    %v938 = vld [vmem:[%s1 + $0xb98] sm:$0xf]
    %v939 = vld [vmem:[%s1 + $0xb9c] sm:$0xf]
    %v940 = vld [vmem:[%s1 + $0xba0] sm:$0xf]
    %v941 = vld [vmem:[%s1 + $0xba4] sm:$0xf]
    %v942 = vld [vmem:[%s1 + $0xba8] sm:$0xf]
    %v943 = vld [vmem:[%s1 + $0xbac] sm:$0xf]
    %v944 = vld [vmem:[%s1 + $0xbb0] sm:$0xf]
    %v945 = vld [vmem:[%s1 + $0xbb4] sm:$0xf]
    %v946 = vld [vmem:[%s1 + $0xbb8] sm:$0xf]
    %v947 = vld [vmem:[%s1 + $0xbbc] sm:$0xf]
    %v948 = vld [vmem:[%s1 + $0xbc0] sm:$0xf]
    %v949 = vld [vmem:[%s1 + $0xbc4] sm:$0xf]
    %v950 = vld [vmem:[%s1 + $0xbc8] sm:$0xf]
    %v951 = vld [vmem:[%s1 + $0xbcc] sm:$0xf]
    %v952 = vld [vmem:[%s1 + $0xbd0] sm:$0xf]
    %v953 = vld [vmem:[%s1 + $0xbd4] sm:$0xf]
    %v954 = vld [vmem:[%s1 + $0xbd8] sm:$0xf]
    %v955 = vld [vmem:[%s1 + $0xbdc] sm:$0xf]
    %v956 = vld [vmem:[%s1 + $0xbe0] sm:$0xf]
    %v957 = vld [vmem:[%s1 + $0xbe4] sm:$0xf]
    %v958 = vld [vmem:[%s1 + $0xbe8] sm:$0xf]
    %v959 = vld [vmem:[%s1 + $0xbec] sm:$0xf]
    %v960 = vld [vmem:[%s1 + $0xbf0] sm:$0xf]
    %v961 = vld [vmem:[%s1 + $0xbf4] sm:$0xf]
    %v962 = vld [vmem:[%s1 + $0xbf8] sm:$0xf]
    %v963 = vld [vmem:[%s1 + $0xbfc] sm:$0xf]
    %v964 = vld [vmem:[%s1 + $0xc00] sm:$0xf]
    %v965 = vld [vmem:[%s1 + $0xc04] sm:$0xf]
    %v966 = vld [vmem:[%s1 + $0xc08] sm:$0xf]
    %v967 = vld [vmem:[%s1 + $0xc0c] sm:$0xf]
    %v968 = vld [vmem:[%s1 + $0xc10] sm:$0xf]
    %v969 = vld [vmem:[%s1 + $0xc14] sm:$0xf]
    %v970 = vld [vmem:[%s1 + $0xc18] sm:$0xf]
    %v971 = vld [vmem:[%s1 + $0xc1c] sm:$0xf]
    %v972 = vld [vmem:[%s1 + $0xc20] sm:$0xf]
    %v973 = vld [vmem:[%s1 + $0xc24] sm:$0xf]
    %v974 = vld [vmem:[%s1 + $0xc28] sm:$0xf]
    %v975 = vld [vmem:[%s1 + $0xc2c] sm:$0xf]
    %v976 = vld [vmem:[%s1 + $0xc30] sm:$0xf]
    %v977 = vld [vmem:[%s1 + $0xc34] sm:$0xf]
    %v978 = vld [vmem:[%s1 + $0xc38] sm:$0xf]
    %v979 = vld [vmem:[%s1 + $0xc3c] sm:$0xf]
    %v980 = vld [vmem:[%s2] sm:$0x1]
    %v982 = vlaneseq
    %v983 = vshrl.u32 %v982, 7
    %v984 = vsub.s32 0, %v983
    %v985 = vrot.slane %v980, %v984
    %v1771 = vunpack.c.l.b16 %v196
    %v1772 = vunpack.c.l.b16 %v197
    %v1773 = vunpack.c.l.b16 %v198
    %v1774 = vunpack.c.l.b16 %v199
    %v1775 = vunpack.c.l.b16 %v200
    %v1776 = vunpack.c.l.b16 %v201
    %v1777 = vunpack.c.l.b16 %v202
    %v1778 = vunpack.c.l.b16 %v203
    %v1779 = vunpack.c.l.b16 %v204
    %v1780 = vunpack.c.l.b16 %v205
    %v1781 = vunpack.c.l.b16 %v206
    %v1782 = vunpack.c.l.b16 %v207
    %v1783 = vunpack.c.l.b16 %v208
    %v1784 = vunpack.c.l.b16 %v209
    %v1785 = vunpack.c.l.b16 %v210
    %v1786 = vunpack.c.l.b16 %v211
    %v1787 = vunpack.c.l.b16 %v212
    %v1788 = vunpack.c.l.b16 %v213
    %v1789 = vunpack.c.l.b16 %v214
    %v1790 = vunpack.c.l.b16 %v215
    %v1791 = vunpack.c.l.b16 %v216
    %v1792 = vunpack.c.l.b16 %v217
    %v1793 = vunpack.c.l.b16 %v218
    %v1794 = vunpack.c.l.b16 %v219
    %v1795 = vunpack.c.l.b16 %v220
    %v1796 = vunpack.c.l.b16 %v221
    %v1797 = vunpack.c.l.b16 %v222
    %v1798 = vunpack.c.l.b16 %v223
    %v1799 = vunpack.c.l.b16 %v224
    %v1800 = vunpack.c.l.b16 %v225
    %v1801 = vunpack.c.l.b16 %v226
    %v1802 = vunpack.c.l.b16 %v227
    %v1803 = vunpack.c.l.b16 %v228
    %v1804 = vunpack.c.l.b16 %v229
    %v1805 = vunpack.c.l.b16 %v230
    %v1806 = vunpack.c.l.b16 %v231
    %v1807 = vunpack.c.l.b16 %v232
    %v1808 = vunpack.c.l.b16 %v233
    %v1809 = vunpack.c.l.b16 %v234
    %v1810 = vunpack.c.l.b16 %v235
    %v1811 = vunpack.c.l.b16 %v236
    %v1812 = vunpack.c.l.b16 %v237
    %v1813 = vunpack.c.l.b16 %v238
    %v1814 = vunpack.c.l.b16 %v239
    %v1815 = vunpack.c.l.b16 %v240
    %v1816 = vunpack.c.l.b16 %v241
    %v1817 = vunpack.c.l.b16 %v242
    %v1818 = vunpack.c.l.b16 %v243
    %v1819 = vunpack.c.l.b16 %v244
    %v1820 = vunpack.c.l.b16 %v245
    %v1821 = vunpack.c.l.b16 %v246
    %v1822 = vunpack.c.l.b16 %v247
    %v1823 = vunpack.c.l.b16 %v248
    %v1824 = vunpack.c.l.b16 %v249
    %v1825 = vunpack.c.l.b16 %v250
    %v1826 = vunpack.c.l.b16 %v251
    %v1827 = vunpack.c.l.b16 %v252
    %v1828 = vunpack.c.l.b16 %v253
    %v1829 = vunpack.c.l.b16 %v254
    %v1830 = vunpack.c.l.b16 %v255
    %v1831 = vunpack.c.l.b16 %v256
    %v1832 = vunpack.c.l.b16 %v257
    %v1833 = vunpack.c.l.b16 %v258
    %v1834 = vunpack.c.l.b16 %v259
    %v1835 = vunpack.c.l.b16 %v260
    %v1836 = vunpack.c.l.b16 %v261
    %v1837 = vunpack.c.l.b16 %v262
    %v1838 = vunpack.c.l.b16 %v263
    %v1839 = vunpack.c.l.b16 %v264
    %v1840 = vunpack.c.l.b16 %v265
    %v1841 = vunpack.c.l.b16 %v266
    %v1842 = vunpack.c.l.b16 %v267
    %v1843 = vunpack.c.l.b16 %v268
    %v1844 = vunpack.c.l.b16 %v269
    %v1845 = vunpack.c.l.b16 %v270
    %v1846 = vunpack.c.l.b16 %v271
    %v1847 = vunpack.c.l.b16 %v272
    %v1848 = vunpack.c.l.b16 %v273
    %v1849 = vunpack.c.l.b16 %v274
    %v1850 = vunpack.c.l.b16 %v275
    %v1851 = vunpack.c.l.b16 %v276
    %v1852 = vunpack.c.l.b16 %v277
    %v1853 = vunpack.c.l.b16 %v278
    %v1854 = vunpack.c.l.b16 %v279
    %v1855 = vunpack.c.l.b16 %v280
    %v1856 = vunpack.c.l.b16 %v281
    %v1857 = vunpack.c.l.b16 %v282
    %v1858 = vunpack.c.l.b16 %v283
    %v1859 = vunpack.c.l.b16 %v284
    %v1860 = vunpack.c.l.b16 %v285
    %v1861 = vunpack.c.l.b16 %v286
    %v1862 = vunpack.c.l.b16 %v287
    %v1863 = vunpack.c.l.b16 %v288
    %v1864 = vunpack.c.l.b16 %v289
    %v1865 = vunpack.c.l.b16 %v290
    %v1866 = vunpack.c.l.b16 %v291
    %v1867 = vunpack.c.l.b16 %v292
    %v1868 = vunpack.c.l.b16 %v293
    %v1869 = vunpack.c.l.b16 %v294
    %v1870 = vunpack.c.l.b16 %v295
    %v1871 = vunpack.c.l.b16 %v296
    %v1872 = vunpack.c.l.b16 %v297
    %v1873 = vunpack.c.l.b16 %v298
    %v1874 = vunpack.c.l.b16 %v299
    %v1875 = vunpack.c.l.b16 %v300
    %v1876 = vunpack.c.l.b16 %v301
    %v1877 = vunpack.c.l.b16 %v302
    %v1878 = vunpack.c.l.b16 %v303
    %v1879 = vunpack.c.l.b16 %v304
    %v1880 = vunpack.c.l.b16 %v305
    %v1881 = vunpack.c.l.b16 %v306
    %v1882 = vunpack.c.l.b16 %v307
    %v1883 = vunpack.c.l.b16 %v308
    %v1884 = vunpack.c.l.b16 %v309
    %v1885 = vunpack.c.l.b16 %v310
    %v1886 = vunpack.c.l.b16 %v311
    %v1887 = vunpack.c.l.b16 %v312
    %v1888 = vunpack.c.l.b16 %v313
    %v1889 = vunpack.c.l.b16 %v314
    %v1890 = vunpack.c.l.b16 %v315
    %v1891 = vunpack.c.l.b16 %v316
    %v1892 = vunpack.c.l.b16 %v317
    %v1893 = vunpack.c.l.b16 %v318
    %v1894 = vunpack.c.l.b16 %v319
    %v1895 = vunpack.c.l.b16 %v320
    %v1896 = vunpack.c.l.b16 %v321
    %v1897 = vunpack.c.l.b16 %v322
    %v1898 = vunpack.c.l.b16 %v323
    %v1899 = vunpack.c.l.b16 %v324
    %v1900 = vunpack.c.l.b16 %v325
    %v1901 = vunpack.c.l.b16 %v326
    %v1902 = vunpack.c.l.b16 %v327
    %v1903 = vunpack.c.l.b16 %v328
    %v1904 = vunpack.c.l.b16 %v329
    %v1905 = vunpack.c.l.b16 %v330
    %v1906 = vunpack.c.l.b16 %v331
    %v1907 = vunpack.c.l.b16 %v332
    %v1908 = vunpack.c.l.b16 %v333
    %v1909 = vunpack.c.l.b16 %v334
    %v1910 = vunpack.c.l.b16 %v335
    %v1911 = vunpack.c.l.b16 %v336
    %v1912 = vunpack.c.l.b16 %v337
    %v1913 = vunpack.c.l.b16 %v338
    %v1914 = vunpack.c.l.b16 %v339
    %v1915 = vunpack.c.l.b16 %v340
    %v1916 = vunpack.c.l.b16 %v341
    %v1917 = vunpack.c.l.b16 %v342
    %v1918 = vunpack.c.l.b16 %v343
    %v1919 = vunpack.c.l.b16 %v344
    %v1920 = vunpack.c.l.b16 %v345
    %v1921 = vunpack.c.l.b16 %v346
    %v1922 = vunpack.c.l.b16 %v347
    %v1923 = vunpack.c.l.b16 %v348
    %v1924 = vunpack.c.l.b16 %v349
    %v1925 = vunpack.c.l.b16 %v350
    %v1926 = vunpack.c.l.b16 %v351
    %v1927 = vunpack.c.l.b16 %v352
    %v1928 = vunpack.c.l.b16 %v353
    %v1929 = vunpack.c.l.b16 %v354
    %v1930 = vunpack.c.l.b16 %v355
    %v1931 = vunpack.c.l.b16 %v356
    %v1932 = vunpack.c.l.b16 %v357
    %v1933 = vunpack.c.l.b16 %v358
    %v1934 = vunpack.c.l.b16 %v359
    %v1935 = vunpack.c.l.b16 %v360
    %v1936 = vunpack.c.l.b16 %v361
    %v1937 = vunpack.c.l.b16 %v362
    %v1938 = vunpack.c.l.b16 %v363
    %v1939 = vunpack.c.l.b16 %v364
    %v1940 = vunpack.c.l.b16 %v365
    %v1941 = vunpack.c.l.b16 %v366
    %v1942 = vunpack.c.l.b16 %v367
    %v1943 = vunpack.c.l.b16 %v368
    %v1944 = vunpack.c.l.b16 %v369
    %v1945 = vunpack.c.l.b16 %v370
    %v1946 = vunpack.c.l.b16 %v371
    %v1947 = vunpack.c.l.b16 %v372
    %v1948 = vunpack.c.l.b16 %v373
    %v1949 = vunpack.c.l.b16 %v374
    %v1950 = vunpack.c.l.b16 %v375
    %v1951 = vunpack.c.l.b16 %v376
    %v1952 = vunpack.c.l.b16 %v377
    %v1953 = vunpack.c.l.b16 %v378
    %v1954 = vunpack.c.l.b16 %v379
    %v1955 = vunpack.c.l.b16 %v380
    %v1956 = vunpack.c.l.b16 %v381
    %v1957 = vunpack.c.l.b16 %v382
    %v1958 = vunpack.c.l.b16 %v383
    %v1959 = vunpack.c.l.b16 %v384
    %v1960 = vunpack.c.l.b16 %v385
    %v1961 = vunpack.c.l.b16 %v386
    %v1962 = vunpack.c.l.b16 %v387
    %v1963 = vunpack.c.l.b16 %v388
    %v1964 = vunpack.c.l.b16 %v389
    %v1965 = vunpack.c.l.b16 %v390
    %v1966 = vunpack.c.l.b16 %v391
    %v1967 = vunpack.c.l.b16 %v392
    %v1968 = vunpack.c.l.b16 %v393
    %v1969 = vunpack.c.l.b16 %v394
    %v1970 = vunpack.c.l.b16 %v395
    %v1971 = vunpack.c.l.b16 %v396
    %v1972 = vunpack.c.l.b16 %v397
    %v1973 = vunpack.c.l.b16 %v398
    %v1974 = vunpack.c.l.b16 %v399
    %v1975 = vunpack.c.l.b16 %v400
    %v1976 = vunpack.c.l.b16 %v401
    %v1977 = vunpack.c.l.b16 %v402
    %v1978 = vunpack.c.l.b16 %v403
    %v1979 = vunpack.c.l.b16 %v404
    %v1980 = vunpack.c.l.b16 %v405
    %v1981 = vunpack.c.l.b16 %v406
    %v1982 = vunpack.c.l.b16 %v407
    %v1983 = vunpack.c.l.b16 %v408
    %v1984 = vunpack.c.l.b16 %v409
    %v1985 = vunpack.c.l.b16 %v410
    %v1986 = vunpack.c.l.b16 %v411
    %v1987 = vunpack.c.l.b16 %v412
    %v1988 = vunpack.c.l.b16 %v413
    %v1989 = vunpack.c.l.b16 %v414
    %v1990 = vunpack.c.l.b16 %v415
    %v1991 = vunpack.c.l.b16 %v416
    %v1992 = vunpack.c.l.b16 %v417
    %v1993 = vunpack.c.l.b16 %v418
    %v1994 = vunpack.c.l.b16 %v419
    %v1995 = vunpack.c.l.b16 %v420
    %v1996 = vunpack.c.l.b16 %v421
    %v1997 = vunpack.c.l.b16 %v422
    %v1998 = vunpack.c.l.b16 %v423
    %v1999 = vunpack.c.l.b16 %v424
    %v2000 = vunpack.c.l.b16 %v425
    %v2001 = vunpack.c.l.b16 %v426
    %v2002 = vunpack.c.l.b16 %v427
    %v2003 = vunpack.c.l.b16 %v428
    %v2004 = vunpack.c.l.b16 %v429
    %v2005 = vunpack.c.l.b16 %v430
    %v2006 = vunpack.c.l.b16 %v431
    %v2007 = vunpack.c.l.b16 %v432
    %v2008 = vunpack.c.l.b16 %v433
    %v2009 = vunpack.c.l.b16 %v434
    %v2010 = vunpack.c.l.b16 %v435
    %v2011 = vunpack.c.l.b16 %v436
    %v2012 = vunpack.c.l.b16 %v437
    %v2013 = vunpack.c.l.b16 %v438
    %v2014 = vunpack.c.l.b16 %v439
    %v2015 = vunpack.c.l.b16 %v440
    %v2016 = vunpack.c.l.b16 %v441
    %v2017 = vunpack.c.l.b16 %v442
    %v2018 = vunpack.c.l.b16 %v443
    %v2019 = vunpack.c.l.b16 %v444
    %v2020 = vunpack.c.l.b16 %v445
    %v2021 = vunpack.c.l.b16 %v446
    %v2022 = vunpack.c.l.b16 %v447
    %v2023 = vunpack.c.l.b16 %v448
    %v2024 = vunpack.c.l.b16 %v449
    %v2025 = vunpack.c.l.b16 %v450
    %v2026 = vunpack.c.l.b16 %v451
    %v2027 = vunpack.c.l.b16 %v452
    %v2028 = vunpack.c.l.b16 %v453
    %v2029 = vunpack.c.l.b16 %v454
    %v2030 = vunpack.c.l.b16 %v455
    %v2031 = vunpack.c.l.b16 %v456
    %v2032 = vunpack.c.l.b16 %v457
    %v2033 = vunpack.c.l.b16 %v458
    %v2034 = vunpack.c.l.b16 %v459
    %v2035 = vunpack.c.l.b16 %v460
    %v2036 = vunpack.c.l.b16 %v461
    %v2037 = vunpack.c.l.b16 %v462
    %v2038 = vunpack.c.l.b16 %v463
    %v2039 = vunpack.c.l.b16 %v464
    %v2040 = vunpack.c.l.b16 %v465
    %v2041 = vunpack.c.l.b16 %v466
    %v2042 = vunpack.c.l.b16 %v467
    %v2043 = vunpack.c.l.b16 %v468
    %v2044 = vunpack.c.l.b16 %v469
    %v2045 = vunpack.c.l.b16 %v470
    %v2046 = vunpack.c.l.b16 %v471
    %v2047 = vunpack.c.l.b16 %v472
    %v2048 = vunpack.c.l.b16 %v473
    %v2049 = vunpack.c.l.b16 %v474
    %v2050 = vunpack.c.l.b16 %v475
    %v2051 = vunpack.c.l.b16 %v476
    %v2052 = vunpack.c.l.b16 %v477
    %v2053 = vunpack.c.l.b16 %v478
    %v2054 = vunpack.c.l.b16 %v479
    %v2055 = vunpack.c.l.b16 %v480
    %v2056 = vunpack.c.l.b16 %v481
    %v2057 = vunpack.c.l.b16 %v482
    %v2058 = vunpack.c.l.b16 %v483
    %v2059 = vunpack.c.l.b16 %v484
    %v2060 = vunpack.c.l.b16 %v485
    %v2061 = vunpack.c.l.b16 %v486
    %v2062 = vunpack.c.l.b16 %v487
    %v2063 = vunpack.c.l.b16 %v488
    %v2064 = vunpack.c.l.b16 %v489
    %v2065 = vunpack.c.l.b16 %v490
    %v2066 = vunpack.c.l.b16 %v491
    %v2067 = vunpack.c.l.b16 %v492
    %v2068 = vunpack.c.l.b16 %v493
    %v2069 = vunpack.c.l.b16 %v494
    %v2070 = vunpack.c.l.b16 %v495
    %v2071 = vunpack.c.l.b16 %v496
    %v2072 = vunpack.c.l.b16 %v497
    %v2073 = vunpack.c.l.b16 %v498
    %v2074 = vunpack.c.l.b16 %v499
    %v2075 = vunpack.c.l.b16 %v500
    %v2076 = vunpack.c.l.b16 %v501
    %v2077 = vunpack.c.l.b16 %v502
    %v2078 = vunpack.c.l.b16 %v503
    %v2079 = vunpack.c.l.b16 %v504
    %v2080 = vunpack.c.l.b16 %v505
    %v2081 = vunpack.c.l.b16 %v506
    %v2082 = vunpack.c.l.b16 %v507
    %v2083 = vunpack.c.l.b16 %v508
    %v2084 = vunpack.c.l.b16 %v509
    %v2085 = vunpack.c.l.b16 %v510
    %v2086 = vunpack.c.l.b16 %v511
    %v2087 = vunpack.c.l.b16 %v512
    %v2088 = vunpack.c.l.b16 %v513
    %v2089 = vunpack.c.l.b16 %v514
    %v2090 = vunpack.c.l.b16 %v515
    %v2091 = vunpack.c.l.b16 %v516
    %v2092 = vunpack.c.l.b16 %v517
    %v2093 = vunpack.c.l.b16 %v518
    %v2094 = vunpack.c.l.b16 %v519
    %v2095 = vunpack.c.l.b16 %v520
    %v2096 = vunpack.c.l.b16 %v521
    %v2097 = vunpack.c.l.b16 %v522
    %v2098 = vunpack.c.l.b16 %v523
    %v2099 = vunpack.c.l.b16 %v524
    %v2100 = vunpack.c.l.b16 %v525
    %v2101 = vunpack.c.l.b16 %v526
    %v2102 = vunpack.c.l.b16 %v527
    %v2103 = vunpack.c.l.b16 %v528
    %v2104 = vunpack.c.l.b16 %v529
    %v2105 = vunpack.c.l.b16 %v530
    %v2106 = vunpack.c.l.b16 %v531
    %v2107 = vunpack.c.l.b16 %v532
    %v2108 = vunpack.c.l.b16 %v533
    %v2109 = vunpack.c.l.b16 %v534
    %v2110 = vunpack.c.l.b16 %v535
    %v2111 = vunpack.c.l.b16 %v536
    %v2112 = vunpack.c.l.b16 %v537
    %v2113 = vunpack.c.l.b16 %v538
    %v2114 = vunpack.c.l.b16 %v539
    %v2115 = vunpack.c.l.b16 %v540
    %v2116 = vunpack.c.l.b16 %v541
    %v2117 = vunpack.c.l.b16 %v542
    %v2118 = vunpack.c.l.b16 %v543
    %v2119 = vunpack.c.l.b16 %v544
    %v2120 = vunpack.c.l.b16 %v545
    %v2121 = vunpack.c.l.b16 %v546
    %v2122 = vunpack.c.l.b16 %v547
    %v2123 = vunpack.c.l.b16 %v548
    %v2124 = vunpack.c.l.b16 %v549
    %v2125 = vunpack.c.l.b16 %v550
    %v2126 = vunpack.c.l.b16 %v551
    %v2127 = vunpack.c.l.b16 %v552
    %v2128 = vunpack.c.l.b16 %v553
    %v2129 = vunpack.c.l.b16 %v554
    %v2130 = vunpack.c.l.b16 %v555
    %v2131 = vunpack.c.l.b16 %v556
    %v2132 = vunpack.c.l.b16 %v557
    %v2133 = vunpack.c.l.b16 %v558
    %v2134 = vunpack.c.l.b16 %v559
    %v2135 = vunpack.c.l.b16 %v560
    %v2136 = vunpack.c.l.b16 %v561
    %v2137 = vunpack.c.l.b16 %v562
    %v2138 = vunpack.c.l.b16 %v563
    %v2139 = vunpack.c.l.b16 %v564
    %v2140 = vunpack.c.l.b16 %v565
    %v2141 = vunpack.c.l.b16 %v566
    %v2142 = vunpack.c.l.b16 %v567
    %v2143 = vunpack.c.l.b16 %v568
    %v2144 = vunpack.c.l.b16 %v569
    %v2145 = vunpack.c.l.b16 %v570
    %v2146 = vunpack.c.l.b16 %v571
    %v2147 = vunpack.c.l.b16 %v572
    %v2148 = vunpack.c.l.b16 %v573
    %v2149 = vunpack.c.l.b16 %v574
    %v2150 = vunpack.c.l.b16 %v575
    %v2151 = vunpack.c.l.b16 %v576
    %v2152 = vunpack.c.l.b16 %v577
    %v2153 = vunpack.c.l.b16 %v578
    %v2154 = vunpack.c.l.b16 %v579
    %v2155 = vunpack.c.l.b16 %v580
    %v2156 = vunpack.c.l.b16 %v581
    %v2157 = vunpack.c.l.b16 %v582
    %v2158 = vunpack.c.l.b16 %v583
    %v2159 = vunpack.c.l.b16 %v584
    %v2160 = vunpack.c.l.b16 %v585
    %v2161 = vunpack.c.l.b16 %v586
    %v2162 = vunpack.c.l.b16 %v587
    %v2163 = vunpack.c.l.b16 %v588
    %v2164 = vunpack.c.l.b16 %v589
    %v2165 = vunpack.c.l.b16 %v590
    %v2166 = vunpack.c.l.b16 %v591
    %v2167 = vunpack.c.l.b16 %v592
    %v2168 = vunpack.c.l.b16 %v593
    %v2169 = vunpack.c.l.b16 %v594
    %v2170 = vunpack.c.l.b16 %v595
    %v2171 = vunpack.c.l.b16 %v596
    %v2172 = vunpack.c.l.b16 %v597
    %v2173 = vunpack.c.l.b16 %v598
    %v2174 = vunpack.c.l.b16 %v599
    %v2175 = vunpack.c.l.b16 %v600
    %v2176 = vunpack.c.l.b16 %v601
    %v2177 = vunpack.c.l.b16 %v602
    %v2178 = vunpack.c.l.b16 %v603
    %v2179 = vunpack.c.l.b16 %v604
    %v2180 = vunpack.c.l.b16 %v605
    %v2181 = vunpack.c.l.b16 %v606
    %v2182 = vunpack.c.l.b16 %v607
    %v2183 = vunpack.c.l.b16 %v608
    %v2184 = vunpack.c.l.b16 %v609
    %v2185 = vunpack.c.l.b16 %v610
    %v2186 = vunpack.c.l.b16 %v611
    %v2187 = vunpack.c.l.b16 %v612
    %v2188 = vunpack.c.l.b16 %v613
    %v2189 = vunpack.c.l.b16 %v614
    %v2190 = vunpack.c.l.b16 %v615
    %v2191 = vunpack.c.l.b16 %v616
    %v2192 = vunpack.c.l.b16 %v617
    %v2193 = vunpack.c.l.b16 %v618
    %v2194 = vunpack.c.l.b16 %v619
    %v2195 = vunpack.c.l.b16 %v620
    %v2196 = vunpack.c.l.b16 %v621
    %v2197 = vunpack.c.l.b16 %v622
    %v2198 = vunpack.c.l.b16 %v623
    %v2199 = vunpack.c.l.b16 %v624
    %v2200 = vunpack.c.l.b16 %v625
    %v2201 = vunpack.c.l.b16 %v626
    %v2202 = vunpack.c.l.b16 %v627
    %v2203 = vunpack.c.l.b16 %v628
    %v2204 = vunpack.c.l.b16 %v629
    %v2205 = vunpack.c.l.b16 %v630
    %v2206 = vunpack.c.l.b16 %v631
    %v2207 = vunpack.c.l.b16 %v632
    %v2208 = vunpack.c.l.b16 %v633
    %v2209 = vunpack.c.l.b16 %v634
    %v2210 = vunpack.c.l.b16 %v635
    %v2211 = vunpack.c.l.b16 %v636
    %v2212 = vunpack.c.l.b16 %v637
    %v2213 = vunpack.c.l.b16 %v638
    %v2214 = vunpack.c.l.b16 %v639
    %v2215 = vunpack.c.l.b16 %v640
    %v2216 = vunpack.c.l.b16 %v641
    %v2217 = vunpack.c.l.b16 %v642
    %v2218 = vunpack.c.l.b16 %v643
    %v2219 = vunpack.c.l.b16 %v644
    %v2220 = vunpack.c.l.b16 %v645
    %v2221 = vunpack.c.l.b16 %v646
    %v2222 = vunpack.c.l.b16 %v647
    %v2223 = vunpack.c.l.b16 %v648
    %v2224 = vunpack.c.l.b16 %v649
    %v2225 = vunpack.c.l.b16 %v650
    %v2226 = vunpack.c.l.b16 %v651
    %v2227 = vunpack.c.l.b16 %v652
    %v2228 = vunpack.c.l.b16 %v653
    %v2229 = vunpack.c.l.b16 %v654
    %v2230 = vunpack.c.l.b16 %v655
    %v2231 = vunpack.c.l.b16 %v656
    %v2232 = vunpack.c.l.b16 %v657
    %v2233 = vunpack.c.l.b16 %v658
    %v2234 = vunpack.c.l.b16 %v659
    %v2235 = vunpack.c.l.b16 %v660
    %v2236 = vunpack.c.l.b16 %v661
    %v2237 = vunpack.c.l.b16 %v662
    %v2238 = vunpack.c.l.b16 %v663
    %v2239 = vunpack.c.l.b16 %v664
    %v2240 = vunpack.c.l.b16 %v665
    %v2241 = vunpack.c.l.b16 %v666
    %v2242 = vunpack.c.l.b16 %v667
    %v2243 = vunpack.c.l.b16 %v668
    %v2244 = vunpack.c.l.b16 %v669
    %v2245 = vunpack.c.l.b16 %v670
    %v2246 = vunpack.c.l.b16 %v671
    %v2247 = vunpack.c.l.b16 %v672
    %v2248 = vunpack.c.l.b16 %v673
    %v2249 = vunpack.c.l.b16 %v674
    %v2250 = vunpack.c.l.b16 %v675
    %v2251 = vunpack.c.l.b16 %v676
    %v2252 = vunpack.c.l.b16 %v677
    %v2253 = vunpack.c.l.b16 %v678
    %v2254 = vunpack.c.l.b16 %v679
    %v2255 = vunpack.c.l.b16 %v680
    %v2256 = vunpack.c.l.b16 %v681
    %v2257 = vunpack.c.l.b16 %v682
    %v2258 = vunpack.c.l.b16 %v683
    %v2259 = vunpack.c.l.b16 %v684
    %v2260 = vunpack.c.l.b16 %v685
    %v2261 = vunpack.c.l.b16 %v686
    %v2262 = vunpack.c.l.b16 %v687
    %v2263 = vunpack.c.l.b16 %v688
    %v2264 = vunpack.c.l.b16 %v689
    %v2265 = vunpack.c.l.b16 %v690
    %v2266 = vunpack.c.l.b16 %v691
    %v2267 = vunpack.c.l.b16 %v692
    %v2268 = vunpack.c.l.b16 %v693
    %v2269 = vunpack.c.l.b16 %v694
    %v2270 = vunpack.c.l.b16 %v695
    %v2271 = vunpack.c.l.b16 %v696
    %v2272 = vunpack.c.l.b16 %v697
    %v2273 = vunpack.c.l.b16 %v698
    %v2274 = vunpack.c.l.b16 %v699
    %v2275 = vunpack.c.l.b16 %v700
    %v2276 = vunpack.c.l.b16 %v701
    %v2277 = vunpack.c.l.b16 %v702
    %v2278 = vunpack.c.l.b16 %v703
    %v2279 = vunpack.c.l.b16 %v704
    %v2280 = vunpack.c.l.b16 %v705
    %v2281 = vunpack.c.l.b16 %v706
    %v2282 = vunpack.c.l.b16 %v707
    %v2283 = vunpack.c.l.b16 %v708
    %v2284 = vunpack.c.l.b16 %v709
    %v2285 = vunpack.c.l.b16 %v710
    %v2286 = vunpack.c.l.b16 %v711
    %v2287 = vunpack.c.l.b16 %v712
    %v2288 = vunpack.c.l.b16 %v713
    %v2289 = vunpack.c.l.b16 %v714
    %v2290 = vunpack.c.l.b16 %v715
    %v2291 = vunpack.c.l.b16 %v716
    %v2292 = vunpack.c.l.b16 %v717
    %v2293 = vunpack.c.l.b16 %v718
    %v2294 = vunpack.c.l.b16 %v719
    %v2295 = vunpack.c.l.b16 %v720
    %v2296 = vunpack.c.l.b16 %v721
    %v2297 = vunpack.c.l.b16 %v722
    %v2298 = vunpack.c.l.b16 %v723
    %v2299 = vunpack.c.l.b16 %v724
    %v2300 = vunpack.c.l.b16 %v725
    %v2301 = vunpack.c.l.b16 %v726
    %v2302 = vunpack.c.l.b16 %v727
    %v2303 = vunpack.c.l.b16 %v728
    %v2304 = vunpack.c.l.b16 %v729
    %v2305 = vunpack.c.l.b16 %v730
    %v2306 = vunpack.c.l.b16 %v731
    %v2307 = vunpack.c.l.b16 %v732
    %v2308 = vunpack.c.l.b16 %v733
    %v2309 = vunpack.c.l.b16 %v734
    %v2310 = vunpack.c.l.b16 %v735
    %v2311 = vunpack.c.l.b16 %v736
    %v2312 = vunpack.c.l.b16 %v737
    %v2313 = vunpack.c.l.b16 %v738
    %v2314 = vunpack.c.l.b16 %v739
    %v2315 = vunpack.c.l.b16 %v740
    %v2316 = vunpack.c.l.b16 %v741
    %v2317 = vunpack.c.l.b16 %v742
    %v2318 = vunpack.c.l.b16 %v743
    %v2319 = vunpack.c.l.b16 %v744
    %v2320 = vunpack.c.l.b16 %v745
    %v2321 = vunpack.c.l.b16 %v746
    %v2322 = vunpack.c.l.b16 %v747
    %v2323 = vunpack.c.l.b16 %v748
    %v2324 = vunpack.c.l.b16 %v749
    %v2325 = vunpack.c.l.b16 %v750
    %v2326 = vunpack.c.l.b16 %v751
    %v2327 = vunpack.c.l.b16 %v752
    %v2328 = vunpack.c.l.b16 %v753
    %v2329 = vunpack.c.l.b16 %v754
    %v2330 = vunpack.c.l.b16 %v755
    %v2331 = vunpack.c.l.b16 %v756
    %v2332 = vunpack.c.l.b16 %v757
    %v2333 = vunpack.c.l.b16 %v758
    %v2334 = vunpack.c.l.b16 %v759
    %v2335 = vunpack.c.l.b16 %v760
    %v2336 = vunpack.c.l.b16 %v761
    %v2337 = vunpack.c.l.b16 %v762
    %v2338 = vunpack.c.l.b16 %v763
    %v2339 = vunpack.c.l.b16 %v764
    %v2340 = vunpack.c.l.b16 %v765
    %v2341 = vunpack.c.l.b16 %v766
    %v2342 = vunpack.c.l.b16 %v767
    %v2343 = vunpack.c.l.b16 %v768
    %v2344 = vunpack.c.l.b16 %v769
    %v2345 = vunpack.c.l.b16 %v770
    %v2346 = vunpack.c.l.b16 %v771
    %v2347 = vunpack.c.l.b16 %v772
    %v2348 = vunpack.c.l.b16 %v773
    %v2349 = vunpack.c.l.b16 %v774
    %v2350 = vunpack.c.l.b16 %v775
    %v2351 = vunpack.c.l.b16 %v776
    %v2352 = vunpack.c.l.b16 %v777
    %v2353 = vunpack.c.l.b16 %v778
    %v2354 = vunpack.c.l.b16 %v779
    %v2355 = vunpack.c.l.b16 %v780
    %v2356 = vunpack.c.l.b16 %v781
    %v2357 = vunpack.c.l.b16 %v782
    %v2358 = vunpack.c.l.b16 %v783
    %v2359 = vunpack.c.l.b16 %v784
    %v2360 = vunpack.c.l.b16 %v785
    %v2361 = vunpack.c.l.b16 %v786
    %v2362 = vunpack.c.l.b16 %v787
    %v2363 = vunpack.c.l.b16 %v788
    %v2364 = vunpack.c.l.b16 %v789
    %v2365 = vunpack.c.l.b16 %v790
    %v2366 = vunpack.c.l.b16 %v791
    %v2367 = vunpack.c.l.b16 %v792
    %v2368 = vunpack.c.l.b16 %v793
    %v2369 = vunpack.c.l.b16 %v794
    %v2370 = vunpack.c.l.b16 %v795
    %v2371 = vunpack.c.l.b16 %v796
    %v2372 = vunpack.c.l.b16 %v797
    %v2373 = vunpack.c.l.b16 %v798
    %v2374 = vunpack.c.l.b16 %v799
    %v2375 = vunpack.c.l.b16 %v800
    %v2376 = vunpack.c.l.b16 %v801
    %v2377 = vunpack.c.l.b16 %v802
    %v2378 = vunpack.c.l.b16 %v803
    %v2379 = vunpack.c.l.b16 %v804
    %v2380 = vunpack.c.l.b16 %v805
    %v2381 = vunpack.c.l.b16 %v806
    %v2382 = vunpack.c.l.b16 %v807
    %v2383 = vunpack.c.l.b16 %v808
    %v2384 = vunpack.c.l.b16 %v809
    %v2385 = vunpack.c.l.b16 %v810
    %v2386 = vunpack.c.l.b16 %v811
    %v2387 = vunpack.c.l.b16 %v812
    %v2388 = vunpack.c.l.b16 %v813
    %v2389 = vunpack.c.l.b16 %v814
    %v2390 = vunpack.c.l.b16 %v815
    %v2391 = vunpack.c.l.b16 %v816
    %v2392 = vunpack.c.l.b16 %v817
    %v2393 = vunpack.c.l.b16 %v818
    %v2394 = vunpack.c.l.b16 %v819
    %v2395 = vunpack.c.l.b16 %v820
    %v2396 = vunpack.c.l.b16 %v821
    %v2397 = vunpack.c.l.b16 %v822
    %v2398 = vunpack.c.l.b16 %v823
    %v2399 = vunpack.c.l.b16 %v824
    %v2400 = vunpack.c.l.b16 %v825
    %v2401 = vunpack.c.l.b16 %v826
    %v2402 = vunpack.c.l.b16 %v827
    %v2403 = vunpack.c.l.b16 %v828
    %v2404 = vunpack.c.l.b16 %v829
    %v2405 = vunpack.c.l.b16 %v830
    %v2406 = vunpack.c.l.b16 %v831
    %v2407 = vunpack.c.l.b16 %v832
    %v2408 = vunpack.c.l.b16 %v833
    %v2409 = vunpack.c.l.b16 %v834
    %v2410 = vunpack.c.l.b16 %v835
    %v2411 = vunpack.c.l.b16 %v836
    %v2412 = vunpack.c.l.b16 %v837
    %v2413 = vunpack.c.l.b16 %v838
    %v2414 = vunpack.c.l.b16 %v839
    %v2415 = vunpack.c.l.b16 %v840
    %v2416 = vunpack.c.l.b16 %v841
    %v2417 = vunpack.c.l.b16 %v842
    %v2418 = vunpack.c.l.b16 %v843
    %v2419 = vunpack.c.l.b16 %v844
    %v2420 = vunpack.c.l.b16 %v845
    %v2421 = vunpack.c.l.b16 %v846
    %v2422 = vunpack.c.l.b16 %v847
    %v2423 = vunpack.c.l.b16 %v848
    %v2424 = vunpack.c.l.b16 %v849
    %v2425 = vunpack.c.l.b16 %v850
    %v2426 = vunpack.c.l.b16 %v851
    %v2427 = vunpack.c.l.b16 %v852
    %v2428 = vunpack.c.l.b16 %v853
    %v2429 = vunpack.c.l.b16 %v854
    %v2430 = vunpack.c.l.b16 %v855
    %v2431 = vunpack.c.l.b16 %v856
    %v2432 = vunpack.c.l.b16 %v857
    %v2433 = vunpack.c.l.b16 %v858
    %v2434 = vunpack.c.l.b16 %v859
    %v2435 = vunpack.c.l.b16 %v860
    %v2436 = vunpack.c.l.b16 %v861
    %v2437 = vunpack.c.l.b16 %v862
    %v2438 = vunpack.c.l.b16 %v863
    %v2439 = vunpack.c.l.b16 %v864
    %v2440 = vunpack.c.l.b16 %v865
    %v2441 = vunpack.c.l.b16 %v866
    %v2442 = vunpack.c.l.b16 %v867
    %v2443 = vunpack.c.l.b16 %v868
    %v2444 = vunpack.c.l.b16 %v869
    %v2445 = vunpack.c.l.b16 %v870
    %v2446 = vunpack.c.l.b16 %v871
    %v2447 = vunpack.c.l.b16 %v872
    %v2448 = vunpack.c.l.b16 %v873
    %v2449 = vunpack.c.l.b16 %v874
    %v2450 = vunpack.c.l.b16 %v875
    %v2451 = vunpack.c.l.b16 %v876
    %v2452 = vunpack.c.l.b16 %v877
    %v2453 = vunpack.c.l.b16 %v878
    %v2454 = vunpack.c.l.b16 %v879
    %v2455 = vunpack.c.l.b16 %v880
    %v2456 = vunpack.c.l.b16 %v881
    %v2457 = vunpack.c.l.b16 %v882
    %v2458 = vunpack.c.l.b16 %v883
    %v2459 = vunpack.c.l.b16 %v884
    %v2460 = vunpack.c.l.b16 %v885
    %v2461 = vunpack.c.l.b16 %v886
    %v2462 = vunpack.c.l.b16 %v887
    %v2463 = vunpack.c.l.b16 %v888
    %v2464 = vunpack.c.l.b16 %v889
    %v2465 = vunpack.c.l.b16 %v890
    %v2466 = vunpack.c.l.b16 %v891
    %v2467 = vunpack.c.l.b16 %v892
    %v2468 = vunpack.c.l.b16 %v893
    %v2469 = vunpack.c.l.b16 %v894
    %v2470 = vunpack.c.l.b16 %v895
    %v2471 = vunpack.c.l.b16 %v896
    %v2472 = vunpack.c.l.b16 %v897
    %v2473 = vunpack.c.l.b16 %v898
    %v2474 = vunpack.c.l.b16 %v899
    %v2475 = vunpack.c.l.b16 %v900
    %v2476 = vunpack.c.l.b16 %v901
    %v2477 = vunpack.c.l.b16 %v902
    %v2478 = vunpack.c.l.b16 %v903
    %v2479 = vunpack.c.l.b16 %v904
    %v2480 = vunpack.c.l.b16 %v905
    %v2481 = vunpack.c.l.b16 %v906
    %v2482 = vunpack.c.l.b16 %v907
    %v2483 = vunpack.c.l.b16 %v908
    %v2484 = vunpack.c.l.b16 %v909
    %v2485 = vunpack.c.l.b16 %v910
    %v2486 = vunpack.c.l.b16 %v911
    %v2487 = vunpack.c.l.b16 %v912
    %v2488 = vunpack.c.l.b16 %v913
    %v2489 = vunpack.c.l.b16 %v914
    %v2490 = vunpack.c.l.b16 %v915
    %v2491 = vunpack.c.l.b16 %v916
    %v2492 = vunpack.c.l.b16 %v917
    %v2493 = vunpack.c.l.b16 %v918
    %v2494 = vunpack.c.l.b16 %v919
    %v2495 = vunpack.c.l.b16 %v920
    %v2496 = vunpack.c.l.b16 %v921
    %v2497 = vunpack.c.l.b16 %v922
    %v2498 = vunpack.c.l.b16 %v923
    %v2499 = vunpack.c.l.b16 %v924
    %v2500 = vunpack.c.l.b16 %v925
    %v2501 = vunpack.c.l.b16 %v926
    %v2502 = vunpack.c.l.b16 %v927
    %v2503 = vunpack.c.l.b16 %v928
    %v2504 = vunpack.c.l.b16 %v929
    %v2505 = vunpack.c.l.b16 %v930
    %v2506 = vunpack.c.l.b16 %v931
    %v2507 = vunpack.c.l.b16 %v932
    %v2508 = vunpack.c.l.b16 %v933
    %v2509 = vunpack.c.l.b16 %v934
    %v2510 = vunpack.c.l.b16 %v935
    %v2511 = vunpack.c.l.b16 %v936
    %v2512 = vunpack.c.l.b16 %v937
    %v2513 = vunpack.c.l.b16 %v938
    %v2514 = vunpack.c.l.b16 %v939
    %v2515 = vunpack.c.l.b16 %v940
    %v2516 = vunpack.c.l.b16 %v941
    %v2517 = vunpack.c.l.b16 %v942
    %v2518 = vunpack.c.l.b16 %v943
    %v2519 = vunpack.c.l.b16 %v944
    %v2520 = vunpack.c.l.b16 %v945
    %v2521 = vunpack.c.l.b16 %v946
    %v2522 = vunpack.c.l.b16 %v947
    %v2523 = vunpack.c.l.b16 %v948
    %v2524 = vunpack.c.l.b16 %v949
    %v2525 = vunpack.c.l.b16 %v950
    %v2526 = vunpack.c.l.b16 %v951
    %v2527 = vunpack.c.l.b16 %v952
    %v2528 = vunpack.c.l.b16 %v953
    %v2529 = vunpack.c.l.b16 %v954
    %v2530 = vunpack.c.l.b16 %v955
    %v2531 = vunpack.c.l.b16 %v956
    %v2532 = vunpack.c.l.b16 %v957
    %v2533 = vunpack.c.l.b16 %v958
    %v2534 = vunpack.c.l.b16 %v959
    %v2535 = vunpack.c.l.b16 %v960
    %v2536 = vunpack.c.l.b16 %v961
    %v2537 = vunpack.c.l.b16 %v962
    %v2538 = vunpack.c.l.b16 %v963
    %v2539 = vunpack.c.l.b16 %v964
    %v2540 = vunpack.c.l.b16 %v965
    %v2541 = vunpack.c.l.b16 %v966
    %v2542 = vunpack.c.l.b16 %v967
    %v2543 = vunpack.c.l.b16 %v968
    %v2544 = vunpack.c.l.b16 %v969
    %v2545 = vunpack.c.l.b16 %v970
    %v2546 = vunpack.c.l.b16 %v971
    %v2547 = vunpack.c.l.b16 %v972
    %v2548 = vunpack.c.l.b16 %v973
    %v2549 = vunpack.c.l.b16 %v974
    %v2550 = vunpack.c.l.b16 %v975
    %v2551 = vunpack.c.l.b16 %v976
    %v2552 = vunpack.c.l.b16 %v977
    %v2553 = vunpack.c.l.b16 %v978
    %v2554 = vunpack.c.l.b16 %v979
    %v2555 = vpack.c.b16 %v1772, %v1771
    %v2556 = vpack.c.b16 %v1774, %v1773
    %v2557 = vpack.c.b16 %v1776, %v1775
    %v2558 = vpack.c.b16 %v1778, %v1777
    %v2559 = vpack.c.b16 %v1780, %v1779
    %v2560 = vpack.c.b16 %v1782, %v1781
    %v2561 = vpack.c.b16 %v1784, %v1783
    %v2562 = vpack.c.b16 %v1786, %v1785
    %v2563 = vpack.c.b16 %v1788, %v1787
    %v2564 = vpack.c.b16 %v1790, %v1789
    %v2565 = vpack.c.b16 %v1792, %v1791
    %v2566 = vpack.c.b16 %v1794, %v1793
    %v2567 = vpack.c.b16 %v1796, %v1795
    %v2568 = vpack.c.b16 %v1798, %v1797
    %v2569 = vpack.c.b16 %v1800, %v1799
    %v2570 = vpack.c.b16 %v1802, %v1801
    %v2571 = vpack.c.b16 %v1804, %v1803
    %v2572 = vpack.c.b16 %v1806, %v1805
    %v2573 = vpack.c.b16 %v1808, %v1807
    %v2574 = vpack.c.b16 %v1810, %v1809
    %v2575 = vpack.c.b16 %v1812, %v1811
    %v2576 = vpack.c.b16 %v1814, %v1813
    %v2577 = vpack.c.b16 %v1816, %v1815
    %v2578 = vpack.c.b16 %v1818, %v1817
    %v2579 = vpack.c.b16 %v1820, %v1819
    %v2580 = vpack.c.b16 %v1822, %v1821
    %v2581 = vpack.c.b16 %v1824, %v1823
    %v2582 = vpack.c.b16 %v1826, %v1825
    %v2583 = vpack.c.b16 %v1828, %v1827
    %v2584 = vpack.c.b16 %v1830, %v1829
    %v2585 = vpack.c.b16 %v1832, %v1831
    %v2586 = vpack.c.b16 %v1834, %v1833
    %v2587 = vpack.c.b16 %v1836, %v1835
    %v2588 = vpack.c.b16 %v1838, %v1837
    %v2589 = vpack.c.b16 %v1840, %v1839
    %v2590 = vpack.c.b16 %v1842, %v1841
    %v2591 = vpack.c.b16 %v1844, %v1843
    %v2592 = vpack.c.b16 %v1846, %v1845
    %v2593 = vpack.c.b16 %v1848, %v1847
    %v2594 = vpack.c.b16 %v1850, %v1849
    %v2595 = vpack.c.b16 %v1852, %v1851
    %v2596 = vpack.c.b16 %v1854, %v1853
    %v2597 = vpack.c.b16 %v1856, %v1855
    %v2598 = vpack.c.b16 %v1858, %v1857
    %v2599 = vpack.c.b16 %v1860, %v1859
    %v2600 = vpack.c.b16 %v1862, %v1861
    %v2601 = vpack.c.b16 %v1864, %v1863
    %v2602 = vpack.c.b16 %v1866, %v1865
    %v2603 = vpack.c.b16 %v1868, %v1867
    %v2604 = vpack.c.b16 %v1870, %v1869
    %v2605 = vpack.c.b16 %v1872, %v1871
    %v2606 = vpack.c.b16 %v1874, %v1873
    %v2607 = vpack.c.b16 %v1876, %v1875
    %v2608 = vpack.c.b16 %v1878, %v1877
    %v2609 = vpack.c.b16 %v1880, %v1879
    %v2610 = vpack.c.b16 %v1882, %v1881
    %v2611 = vpack.c.b16 %v1884, %v1883
    %v2612 = vpack.c.b16 %v1886, %v1885
    %v2613 = vpack.c.b16 %v1888, %v1887
    %v2614 = vpack.c.b16 %v1890, %v1889
    %v2615 = vpack.c.b16 %v1892, %v1891
    %v2616 = vpack.c.b16 %v1894, %v1893
    %v2617 = vpack.c.b16 %v1896, %v1895
    %v2618 = vpack.c.b16 %v1898, %v1897
    %v2619 = vpack.c.b16 %v1900, %v1899
    %v2620 = vpack.c.b16 %v1902, %v1901
    %v2621 = vpack.c.b16 %v1904, %v1903
    %v2622 = vpack.c.b16 %v1906, %v1905
    %v2623 = vpack.c.b16 %v1908, %v1907
    %v2624 = vpack.c.b16 %v1910, %v1909
    %v2625 = vpack.c.b16 %v1912, %v1911
    %v2626 = vpack.c.b16 %v1914, %v1913
    %v2627 = vpack.c.b16 %v1916, %v1915
    %v2628 = vpack.c.b16 %v1918, %v1917
    %v2629 = vpack.c.b16 %v1920, %v1919
    %v2630 = vpack.c.b16 %v1922, %v1921
    %v2631 = vpack.c.b16 %v1924, %v1923
    %v2632 = vpack.c.b16 %v1926, %v1925
    %v2633 = vpack.c.b16 %v1928, %v1927
    %v2634 = vpack.c.b16 %v1930, %v1929
    %v2635 = vpack.c.b16 %v1932, %v1931
    %v2636 = vpack.c.b16 %v1934, %v1933
    %v2637 = vpack.c.b16 %v1936, %v1935
    %v2638 = vpack.c.b16 %v1938, %v1937
    %v2639 = vpack.c.b16 %v1940, %v1939
    %v2640 = vpack.c.b16 %v1942, %v1941
    %v2641 = vpack.c.b16 %v1944, %v1943
    %v2642 = vpack.c.b16 %v1946, %v1945
    %v2643 = vpack.c.b16 %v1948, %v1947
    %v2644 = vpack.c.b16 %v1950, %v1949
    %v2645 = vpack.c.b16 %v1952, %v1951
    %v2646 = vpack.c.b16 %v1954, %v1953
    %v2647 = vpack.c.b16 %v1956, %v1955
    %v2648 = vpack.c.b16 %v1958, %v1957
    %v2649 = vpack.c.b16 %v1960, %v1959
    %v2650 = vpack.c.b16 %v1962, %v1961
    %v2651 = vpack.c.b16 %v1964, %v1963
    %v2652 = vpack.c.b16 %v1966, %v1965
    %v2653 = vpack.c.b16 %v1968, %v1967
    %v2654 = vpack.c.b16 %v1970, %v1969
    %v2655 = vpack.c.b16 %v1972, %v1971
    %v2656 = vpack.c.b16 %v1974, %v1973
    %v2657 = vpack.c.b16 %v1976, %v1975
    %v2658 = vpack.c.b16 %v1978, %v1977
    %v2659 = vpack.c.b16 %v1980, %v1979
    %v2660 = vpack.c.b16 %v1982, %v1981
    %v2661 = vpack.c.b16 %v1984, %v1983
    %v2662 = vpack.c.b16 %v1986, %v1985
    %v2663 = vpack.c.b16 %v1988, %v1987
    %v2664 = vpack.c.b16 %v1990, %v1989
    %v2665 = vpack.c.b16 %v1992, %v1991
    %v2666 = vpack.c.b16 %v1994, %v1993
    %v2667 = vpack.c.b16 %v1996, %v1995
    %v2668 = vpack.c.b16 %v1998, %v1997
    %v2669 = vpack.c.b16 %v2000, %v1999
    %v2670 = vpack.c.b16 %v2002, %v2001
    %v2671 = vpack.c.b16 %v2004, %v2003
    %v2672 = vpack.c.b16 %v2006, %v2005
    %v2673 = vpack.c.b16 %v2008, %v2007
    %v2674 = vpack.c.b16 %v2010, %v2009
    %v2675 = vpack.c.b16 %v2012, %v2011
    %v2676 = vpack.c.b16 %v2014, %v2013
    %v2677 = vpack.c.b16 %v2016, %v2015
    %v2678 = vpack.c.b16 %v2018, %v2017
    %v2679 = vpack.c.b16 %v2020, %v2019
    %v2680 = vpack.c.b16 %v2022, %v2021
    %v2681 = vpack.c.b16 %v2024, %v2023
    %v2682 = vpack.c.b16 %v2026, %v2025
    %v2683 = vpack.c.b16 %v2028, %v2027
    %v2684 = vpack.c.b16 %v2030, %v2029
    %v2685 = vpack.c.b16 %v2032, %v2031
    %v2686 = vpack.c.b16 %v2034, %v2033
    %v2687 = vpack.c.b16 %v2036, %v2035
    %v2688 = vpack.c.b16 %v2038, %v2037
    %v2689 = vpack.c.b16 %v2040, %v2039
    %v2690 = vpack.c.b16 %v2042, %v2041
    %v2691 = vpack.c.b16 %v2044, %v2043
    %v2692 = vpack.c.b16 %v2046, %v2045
    %v2693 = vpack.c.b16 %v2048, %v2047
    %v2694 = vpack.c.b16 %v2050, %v2049
    %v2695 = vpack.c.b16 %v2052, %v2051
    %v2696 = vpack.c.b16 %v2054, %v2053
    %v2697 = vpack.c.b16 %v2056, %v2055
    %v2698 = vpack.c.b16 %v2058, %v2057
    %v2699 = vpack.c.b16 %v2060, %v2059
    %v2700 = vpack.c.b16 %v2062, %v2061
    %v2701 = vpack.c.b16 %v2064, %v2063
    %v2702 = vpack.c.b16 %v2066, %v2065
    %v2703 = vpack.c.b16 %v2068, %v2067
    %v2704 = vpack.c.b16 %v2070, %v2069
    %v2705 = vpack.c.b16 %v2072, %v2071
    %v2706 = vpack.c.b16 %v2074, %v2073
    %v2707 = vpack.c.b16 %v2076, %v2075
    %v2708 = vpack.c.b16 %v2078, %v2077
    %v2709 = vpack.c.b16 %v2080, %v2079
    %v2710 = vpack.c.b16 %v2082, %v2081
    %v2711 = vpack.c.b16 %v2084, %v2083
    %v2712 = vpack.c.b16 %v2086, %v2085
    %v2713 = vpack.c.b16 %v2088, %v2087
    %v2714 = vpack.c.b16 %v2090, %v2089
    %v2715 = vpack.c.b16 %v2092, %v2091
    %v2716 = vpack.c.b16 %v2094, %v2093
    %v2717 = vpack.c.b16 %v2096, %v2095
    %v2718 = vpack.c.b16 %v2098, %v2097
    %v2719 = vpack.c.b16 %v2100, %v2099
    %v2720 = vpack.c.b16 %v2102, %v2101
    %v2721 = vpack.c.b16 %v2104, %v2103
    %v2722 = vpack.c.b16 %v2106, %v2105
    %v2723 = vpack.c.b16 %v2108, %v2107
    %v2724 = vpack.c.b16 %v2110, %v2109
    %v2725 = vpack.c.b16 %v2112, %v2111
    %v2726 = vpack.c.b16 %v2114, %v2113
    %v2727 = vpack.c.b16 %v2116, %v2115
    %v2728 = vpack.c.b16 %v2118, %v2117
    %v2729 = vpack.c.b16 %v2120, %v2119
    %v2730 = vpack.c.b16 %v2122, %v2121
    %v2731 = vpack.c.b16 %v2124, %v2123
    %v2732 = vpack.c.b16 %v2126, %v2125
    %v2733 = vpack.c.b16 %v2128, %v2127
    %v2734 = vpack.c.b16 %v2130, %v2129
    %v2735 = vpack.c.b16 %v2132, %v2131
    %v2736 = vpack.c.b16 %v2134, %v2133
    %v2737 = vpack.c.b16 %v2136, %v2135
    %v2738 = vpack.c.b16 %v2138, %v2137
    %v2739 = vpack.c.b16 %v2140, %v2139
    %v2740 = vpack.c.b16 %v2142, %v2141
    %v2741 = vpack.c.b16 %v2144, %v2143
    %v2742 = vpack.c.b16 %v2146, %v2145
    %v2743 = vpack.c.b16 %v2148, %v2147
    %v2744 = vpack.c.b16 %v2150, %v2149
    %v2745 = vpack.c.b16 %v2152, %v2151
    %v2746 = vpack.c.b16 %v2154, %v2153
    %v2747 = vpack.c.b16 %v2156, %v2155
    %v2748 = vpack.c.b16 %v2158, %v2157
    %v2749 = vpack.c.b16 %v2160, %v2159
    %v2750 = vpack.c.b16 %v2162, %v2161
    %v2751 = vpack.c.b16 %v2164, %v2163
    %v2752 = vpack.c.b16 %v2166, %v2165
    %v2753 = vpack.c.b16 %v2168, %v2167
    %v2754 = vpack.c.b16 %v2170, %v2169
    %v2755 = vpack.c.b16 %v2172, %v2171
    %v2756 = vpack.c.b16 %v2174, %v2173
    %v2757 = vpack.c.b16 %v2176, %v2175
    %v2758 = vpack.c.b16 %v2178, %v2177
    %v2759 = vpack.c.b16 %v2180, %v2179
    %v2760 = vpack.c.b16 %v2182, %v2181
    %v2761 = vpack.c.b16 %v2184, %v2183
    %v2762 = vpack.c.b16 %v2186, %v2185
    %v2763 = vpack.c.b16 %v2188, %v2187
    %v2764 = vpack.c.b16 %v2190, %v2189
    %v2765 = vpack.c.b16 %v2192, %v2191
    %v2766 = vpack.c.b16 %v2194, %v2193
    %v2767 = vpack.c.b16 %v2196, %v2195
    %v2768 = vpack.c.b16 %v2198, %v2197
    %v2769 = vpack.c.b16 %v2200, %v2199
    %v2770 = vpack.c.b16 %v2202, %v2201
    %v2771 = vpack.c.b16 %v2204, %v2203
    %v2772 = vpack.c.b16 %v2206, %v2205
    %v2773 = vpack.c.b16 %v2208, %v2207
    %v2774 = vpack.c.b16 %v2210, %v2209
    %v2775 = vpack.c.b16 %v2212, %v2211
    %v2776 = vpack.c.b16 %v2214, %v2213
    %v2777 = vpack.c.b16 %v2216, %v2215
    %v2778 = vpack.c.b16 %v2218, %v2217
    %v2779 = vpack.c.b16 %v2220, %v2219
    %v2780 = vpack.c.b16 %v2222, %v2221
    %v2781 = vpack.c.b16 %v2224, %v2223
    %v2782 = vpack.c.b16 %v2226, %v2225
    %v2783 = vpack.c.b16 %v2228, %v2227
    %v2784 = vpack.c.b16 %v2230, %v2229
    %v2785 = vpack.c.b16 %v2232, %v2231
    %v2786 = vpack.c.b16 %v2234, %v2233
    %v2787 = vpack.c.b16 %v2236, %v2235
    %v2788 = vpack.c.b16 %v2238, %v2237
    %v2789 = vpack.c.b16 %v2240, %v2239
    %v2790 = vpack.c.b16 %v2242, %v2241
    %v2791 = vpack.c.b16 %v2244, %v2243
    %v2792 = vpack.c.b16 %v2246, %v2245
    %v2793 = vpack.c.b16 %v2248, %v2247
    %v2794 = vpack.c.b16 %v2250, %v2249
    %v2795 = vpack.c.b16 %v2252, %v2251
    %v2796 = vpack.c.b16 %v2254, %v2253
    %v2797 = vpack.c.b16 %v2256, %v2255
    %v2798 = vpack.c.b16 %v2258, %v2257
    %v2799 = vpack.c.b16 %v2260, %v2259
    %v2800 = vpack.c.b16 %v2262, %v2261
    %v2801 = vpack.c.b16 %v2264, %v2263
    %v2802 = vpack.c.b16 %v2266, %v2265
    %v2803 = vpack.c.b16 %v2268, %v2267
    %v2804 = vpack.c.b16 %v2270, %v2269
    %v2805 = vpack.c.b16 %v2272, %v2271
    %v2806 = vpack.c.b16 %v2274, %v2273
    %v2807 = vpack.c.b16 %v2276, %v2275
    %v2808 = vpack.c.b16 %v2278, %v2277
    %v2809 = vpack.c.b16 %v2280, %v2279
    %v2810 = vpack.c.b16 %v2282, %v2281
    %v2811 = vpack.c.b16 %v2284, %v2283
    %v2812 = vpack.c.b16 %v2286, %v2285
    %v2813 = vpack.c.b16 %v2288, %v2287
    %v2814 = vpack.c.b16 %v2290, %v2289
    %v2815 = vpack.c.b16 %v2292, %v2291
    %v2816 = vpack.c.b16 %v2294, %v2293
    %v2817 = vpack.c.b16 %v2296, %v2295
    %v2818 = vpack.c.b16 %v2298, %v2297
    %v2819 = vpack.c.b16 %v2300, %v2299
    %v2820 = vpack.c.b16 %v2302, %v2301
    %v2821 = vpack.c.b16 %v2304, %v2303
    %v2822 = vpack.c.b16 %v2306, %v2305
    %v2823 = vpack.c.b16 %v2308, %v2307
    %v2824 = vpack.c.b16 %v2310, %v2309
    %v2825 = vpack.c.b16 %v2312, %v2311
    %v2826 = vpack.c.b16 %v2314, %v2313
    %v2827 = vpack.c.b16 %v2316, %v2315
    %v2828 = vpack.c.b16 %v2318, %v2317
    %v2829 = vpack.c.b16 %v2320, %v2319
    %v2830 = vpack.c.b16 %v2322, %v2321
    %v2831 = vpack.c.b16 %v2324, %v2323
    %v2832 = vpack.c.b16 %v2326, %v2325
    %v2833 = vpack.c.b16 %v2328, %v2327
    %v2834 = vpack.c.b16 %v2330, %v2329
    %v2835 = vpack.c.b16 %v2332, %v2331
    %v2836 = vpack.c.b16 %v2334, %v2333
    %v2837 = vpack.c.b16 %v2336, %v2335
    %v2838 = vpack.c.b16 %v2338, %v2337
    %v2839 = vpack.c.b16 %v2340, %v2339
    %v2840 = vpack.c.b16 %v2342, %v2341
    %v2841 = vpack.c.b16 %v2344, %v2343
    %v2842 = vpack.c.b16 %v2346, %v2345
    %v2843 = vpack.c.b16 %v2348, %v2347
    %v2844 = vpack.c.b16 %v2350, %v2349
    %v2845 = vpack.c.b16 %v2352, %v2351
    %v2846 = vpack.c.b16 %v2354, %v2353
    %v2847 = vpack.c.b16 %v2356, %v2355
    %v2848 = vpack.c.b16 %v2358, %v2357
    %v2849 = vpack.c.b16 %v2360, %v2359
    %v2850 = vpack.c.b16 %v2362, %v2361
    %v2851 = vpack.c.b16 %v2364, %v2363
    %v2852 = vpack.c.b16 %v2366, %v2365
    %v2853 = vpack.c.b16 %v2368, %v2367
    %v2854 = vpack.c.b16 %v2370, %v2369
    %v2855 = vpack.c.b16 %v2372, %v2371
    %v2856 = vpack.c.b16 %v2374, %v2373
    %v2857 = vpack.c.b16 %v2376, %v2375
    %v2858 = vpack.c.b16 %v2378, %v2377
    %v2859 = vpack.c.b16 %v2380, %v2379
    %v2860 = vpack.c.b16 %v2382, %v2381
    %v2861 = vpack.c.b16 %v2384, %v2383
    %v2862 = vpack.c.b16 %v2386, %v2385
    %v2863 = vpack.c.b16 %v2388, %v2387
    %v2864 = vpack.c.b16 %v2390, %v2389
    %v2865 = vpack.c.b16 %v2392, %v2391
    %v2866 = vpack.c.b16 %v2394, %v2393
    %v2867 = vpack.c.b16 %v2396, %v2395
    %v2868 = vpack.c.b16 %v2398, %v2397
    %v2869 = vpack.c.b16 %v2400, %v2399
    %v2870 = vpack.c.b16 %v2402, %v2401
    %v2871 = vpack.c.b16 %v2404, %v2403
    %v2872 = vpack.c.b16 %v2406, %v2405
    %v2873 = vpack.c.b16 %v2408, %v2407
    %v2874 = vpack.c.b16 %v2410, %v2409
    %v2875 = vpack.c.b16 %v2412, %v2411
    %v2876 = vpack.c.b16 %v2414, %v2413
    %v2877 = vpack.c.b16 %v2416, %v2415
    %v2878 = vpack.c.b16 %v2418, %v2417
    %v2879 = vpack.c.b16 %v2420, %v2419
    %v2880 = vpack.c.b16 %v2422, %v2421
    %v2881 = vpack.c.b16 %v2424, %v2423
    %v2882 = vpack.c.b16 %v2426, %v2425
    %v2883 = vpack.c.b16 %v2428, %v2427
    %v2884 = vpack.c.b16 %v2430, %v2429
    %v2885 = vpack.c.b16 %v2432, %v2431
    %v2886 = vpack.c.b16 %v2434, %v2433
    %v2887 = vpack.c.b16 %v2436, %v2435
    %v2888 = vpack.c.b16 %v2438, %v2437
    %v2889 = vpack.c.b16 %v2440, %v2439
    %v2890 = vpack.c.b16 %v2442, %v2441
    %v2891 = vpack.c.b16 %v2444, %v2443
    %v2892 = vpack.c.b16 %v2446, %v2445
    %v2893 = vpack.c.b16 %v2448, %v2447
    %v2894 = vpack.c.b16 %v2450, %v2449
    %v2895 = vpack.c.b16 %v2452, %v2451
    %v2896 = vpack.c.b16 %v2454, %v2453
    %v2897 = vpack.c.b16 %v2456, %v2455
    %v2898 = vpack.c.b16 %v2458, %v2457
    %v2899 = vpack.c.b16 %v2460, %v2459
    %v2900 = vpack.c.b16 %v2462, %v2461
    %v2901 = vpack.c.b16 %v2464, %v2463
    %v2902 = vpack.c.b16 %v2466, %v2465
    %v2903 = vpack.c.b16 %v2468, %v2467
    %v2904 = vpack.c.b16 %v2470, %v2469
    %v2905 = vpack.c.b16 %v2472, %v2471
    %v2906 = vpack.c.b16 %v2474, %v2473
    %v2907 = vpack.c.b16 %v2476, %v2475
    %v2908 = vpack.c.b16 %v2478, %v2477
    %v2909 = vpack.c.b16 %v2480, %v2479
    %v2910 = vpack.c.b16 %v2482, %v2481
    %v2911 = vpack.c.b16 %v2484, %v2483
    %v2912 = vpack.c.b16 %v2486, %v2485
    %v2913 = vpack.c.b16 %v2488, %v2487
    %v2914 = vpack.c.b16 %v2490, %v2489
    %v2915 = vpack.c.b16 %v2492, %v2491
    %v2916 = vpack.c.b16 %v2494, %v2493
    %v2917 = vpack.c.b16 %v2496, %v2495
    %v2918 = vpack.c.b16 %v2498, %v2497
    %v2919 = vpack.c.b16 %v2500, %v2499
    %v2920 = vpack.c.b16 %v2502, %v2501
    %v2921 = vpack.c.b16 %v2504, %v2503
    %v2922 = vpack.c.b16 %v2506, %v2505
    %v2923 = vpack.c.b16 %v2508, %v2507
    %v2924 = vpack.c.b16 %v2510, %v2509
    %v2925 = vpack.c.b16 %v2512, %v2511
    %v2926 = vpack.c.b16 %v2514, %v2513
    %v2927 = vpack.c.b16 %v2516, %v2515
    %v2928 = vpack.c.b16 %v2518, %v2517
    %v2929 = vpack.c.b16 %v2520, %v2519
    %v2930 = vpack.c.b16 %v2522, %v2521
    %v2931 = vpack.c.b16 %v2524, %v2523
    %v2932 = vpack.c.b16 %v2526, %v2525
    %v2933 = vpack.c.b16 %v2528, %v2527
    %v2934 = vpack.c.b16 %v2530, %v2529
    %v2935 = vpack.c.b16 %v2532, %v2531
    %v2936 = vpack.c.b16 %v2534, %v2533
    %v2937 = vpack.c.b16 %v2536, %v2535
    %v2938 = vpack.c.b16 %v2538, %v2537
    %v2939 = vpack.c.b16 %v2540, %v2539
    %v2940 = vpack.c.b16 %v2542, %v2541
    %v2941 = vpack.c.b16 %v2544, %v2543
    %v2942 = vpack.c.b16 %v2546, %v2545
    %v2943 = vpack.c.b16 %v2548, %v2547
    %v2944 = vpack.c.b16 %v2550, %v2549
    %v2945 = vpack.c.b16 %v2552, %v2551
    %v2946 = vpack.c.b16 %v2554, %v2553
    %3339 = vmatprep.subr.bf16.mxu0 0
    %3340 = vmatpush1.bf16.msra.mxu0 %v2562
    %3341 = vmatprep.subr.bf16.mxu0 0
    %3342 = vmatpush1.bf16.msra.mxu0 %v2561
    %3343 = vmatprep.subr.bf16.mxu0 0
    %3344 = vmatpush1.bf16.msra.mxu0 %v2560
    %3345 = vmatprep.subr.bf16.mxu0 0
    %3346 = vmatpush1.bf16.msra.mxu0 %v2559
    %3347 = vmatprep.subr.bf16.mxu0 0
    %3348 = vmatpush1.bf16.msra.mxu0 %v2558
    %3349 = vmatprep.subr.bf16.mxu0 0
    %3350 = vmatpush1.bf16.msra.mxu0 %v2557
    %3351 = vmatprep.subr.bf16.mxu0 0
    %3352 = vmatpush1.bf16.msra.mxu0 %v2556
    %3353 = vmatprep.subr.bf16.mxu0 0
    %3354 = vmatpush1.bf16.msra.mxu0 %v2555
    %3355 = vmatprep.subr.bf16.mxu0 0
    %3356 = vmatpush2.bf16.msra.mxu0 %v2570
    %3357 = vmatprep.subr.bf16.mxu0 0
    %3358 = vmatpush2.bf16.msra.mxu0 %v2569
    %3359 = vmatprep.subr.bf16.mxu0 0
    %3360 = vmatpush2.bf16.msra.mxu0 %v2568
    %3361 = vmatprep.subr.bf16.mxu0 0
    %3362 = vmatpush2.bf16.msra.mxu0 %v2567
    %3363 = vmatprep.subr.bf16.mxu0 0
    %3364 = vmatpush2.bf16.msra.mxu0 %v2566
    %3365 = vmatprep.subr.bf16.mxu0 0
    %3366 = vmatpush2.bf16.msra.mxu0 %v2565
    %3367 = vmatprep.subr.bf16.mxu0 0
    %3368 = vmatpush2.bf16.msra.mxu0 %v2564
    %3369 = vmatprep.subr.bf16.mxu0 0
    %3370 = vmatpush2.bf16.msra.mxu0 %v2563
    %3371 = vmatprep.mubr.bf16.mxu0 %v148
    %3372 = vmatmul.mubr.bf16.gmra.mxu0 %v147
    %v3373 = vpop.f32.mrf.mxu0
    %v3374 = vadd.f32 %v985, %v3373
    %v3375 = vpop.f32.mrf.mxu0
    %v3376 = vpop.f32.mrf.mxu0
    %v3377 = vadd.f32 %v985, %v3376
    %v3378 = vpop.f32.mrf.mxu0
    %3379 = vdwg.mxu0
    %3380 = vmatprep.subr.bf16.mxu0 0
    %3381 = vmatpush1.bf16.msra.mxu0 %v2578
    %3382 = vmatprep.subr.bf16.mxu0 0
    %3383 = vmatpush1.bf16.msra.mxu0 %v2577
    %3384 = vmatprep.subr.bf16.mxu0 0
    %3385 = vmatpush1.bf16.msra.mxu0 %v2576
    %3386 = vmatprep.subr.bf16.mxu0 0
    %3387 = vmatpush1.bf16.msra.mxu0 %v2575
    %3388 = vmatprep.subr.bf16.mxu0 0
    %3389 = vmatpush1.bf16.msra.mxu0 %v2574
    %3390 = vmatprep.subr.bf16.mxu0 0
    %3391 = vmatpush1.bf16.msra.mxu0 %v2573
    %3392 = vmatprep.subr.bf16.mxu0 0
    %3393 = vmatpush1.bf16.msra.mxu0 %v2572
    %3394 = vmatprep.subr.bf16.mxu0 0
    %3395 = vmatpush1.bf16.msra.mxu0 %v2571
    %3396 = vmatprep.subr.bf16.mxu0 0
    %3397 = vmatpush2.bf16.msra.mxu0 %v2586
    %3398 = vmatprep.subr.bf16.mxu0 0
    %3399 = vmatpush2.bf16.msra.mxu0 %v2585
    %3400 = vmatprep.subr.bf16.mxu0 0
    %3401 = vmatpush2.bf16.msra.mxu0 %v2584
    %3402 = vmatprep.subr.bf16.mxu0 0
    %3403 = vmatpush2.bf16.msra.mxu0 %v2583
    %3404 = vmatprep.subr.bf16.mxu0 0
    %3405 = vmatpush2.bf16.msra.mxu0 %v2582
    %3406 = vmatprep.subr.bf16.mxu0 0
    %3407 = vmatpush2.bf16.msra.mxu0 %v2581
    %3408 = vmatprep.subr.bf16.mxu0 0
    %3409 = vmatpush2.bf16.msra.mxu0 %v2580
    %3410 = vmatprep.subr.bf16.mxu0 0
    %3411 = vmatpush2.bf16.msra.mxu0 %v2579
    %3412 = vmatprep.mubr.bf16.mxu0 %v150
    %3413 = vmatmul.mubr.bf16.gmra.mxu0 %v149
    %v3414 = vpop.f32.mrf.mxu0
    %v3415 = vadd.f32 %v3374, %v3414
    %v3416 = vpop.f32.mrf.mxu0
    %v3417 = vpop.f32.mrf.mxu0
    %v3418 = vadd.f32 %v3377, %v3417
    %v3419 = vpop.f32.mrf.mxu0
    %3420 = vdwg.mxu0
    %3421 = vmatprep.subr.bf16.mxu0 0
    %3422 = vmatpush1.bf16.msra.mxu0 %v2594
    %3423 = vmatprep.subr.bf16.mxu0 0
    %3424 = vmatpush1.bf16.msra.mxu0 %v2593
    %3425 = vmatprep.subr.bf16.mxu0 0
    %3426 = vmatpush1.bf16.msra.mxu0 %v2592
    %3427 = vmatprep.subr.bf16.mxu0 0
    %3428 = vmatpush1.bf16.msra.mxu0 %v2591
    %3429 = vmatprep.subr.bf16.mxu0 0
    %3430 = vmatpush1.bf16.msra.mxu0 %v2590
    %3431 = vmatprep.subr.bf16.mxu0 0
    %3432 = vmatpush1.bf16.msra.mxu0 %v2589
    %3433 = vmatprep.subr.bf16.mxu0 0
    %3434 = vmatpush1.bf16.msra.mxu0 %v2588
    %3435 = vmatprep.subr.bf16.mxu0 0
    %3436 = vmatpush1.bf16.msra.mxu0 %v2587
    %3437 = vmatprep.subr.bf16.mxu0 0
    %3438 = vmatpush2.bf16.msra.mxu0 %v2602
    %3439 = vmatprep.subr.bf16.mxu0 0
    %3440 = vmatpush2.bf16.msra.mxu0 %v2601
    %3441 = vmatprep.subr.bf16.mxu0 0
    %3442 = vmatpush2.bf16.msra.mxu0 %v2600
    %3443 = vmatprep.subr.bf16.mxu0 0
    %3444 = vmatpush2.bf16.msra.mxu0 %v2599
    %3445 = vmatprep.subr.bf16.mxu0 0
    %3446 = vmatpush2.bf16.msra.mxu0 %v2598
    %3447 = vmatprep.subr.bf16.mxu0 0
    %3448 = vmatpush2.bf16.msra.mxu0 %v2597
    %3449 = vmatprep.subr.bf16.mxu0 0
    %3450 = vmatpush2.bf16.msra.mxu0 %v2596
    %3451 = vmatprep.subr.bf16.mxu0 0
    %3452 = vmatpush2.bf16.msra.mxu0 %v2595
    %3453 = vmatprep.mubr.bf16.mxu0 %v152
    %3454 = vmatmul.mubr.bf16.gmra.mxu0 %v151
    %v3455 = vpop.f32.mrf.mxu0
    %v3456 = vadd.f32 %v3415, %v3455
    %v3457 = vpop.f32.mrf.mxu0
    %v3458 = vpop.f32.mrf.mxu0
    %v3459 = vadd.f32 %v3418, %v3458
    %v3460 = vpop.f32.mrf.mxu0
    %3461 = vdwg.mxu0
    %3462 = vmatprep.subr.bf16.mxu0 0
    %3463 = vmatpush1.bf16.msra.mxu0 %v2610
    %3464 = vmatprep.subr.bf16.mxu0 0
    %3465 = vmatpush1.bf16.msra.mxu0 %v2609
    %3466 = vmatprep.subr.bf16.mxu0 0
    %3467 = vmatpush1.bf16.msra.mxu0 %v2608
    %3468 = vmatprep.subr.bf16.mxu0 0
    %3469 = vmatpush1.bf16.msra.mxu0 %v2607
    %3470 = vmatprep.subr.bf16.mxu0 0
    %3471 = vmatpush1.bf16.msra.mxu0 %v2606
    %3472 = vmatprep.subr.bf16.mxu0 0
    %3473 = vmatpush1.bf16.msra.mxu0 %v2605
    %3474 = vmatprep.subr.bf16.mxu0 0
    %3475 = vmatpush1.bf16.msra.mxu0 %v2604
    %3476 = vmatprep.subr.bf16.mxu0 0
    %3477 = vmatpush1.bf16.msra.mxu0 %v2603
    %3478 = vmatprep.subr.bf16.mxu0 0
    %3479 = vmatpush2.bf16.msra.mxu0 %v2618
    %3480 = vmatprep.subr.bf16.mxu0 0
    %3481 = vmatpush2.bf16.msra.mxu0 %v2617
    %3482 = vmatprep.subr.bf16.mxu0 0
    %3483 = vmatpush2.bf16.msra.mxu0 %v2616
    %3484 = vmatprep.subr.bf16.mxu0 0
    %3485 = vmatpush2.bf16.msra.mxu0 %v2615
    %3486 = vmatprep.subr.bf16.mxu0 0
    %3487 = vmatpush2.bf16.msra.mxu0 %v2614
    %3488 = vmatprep.subr.bf16.mxu0 0
    %3489 = vmatpush2.bf16.msra.mxu0 %v2613
    %3490 = vmatprep.subr.bf16.mxu0 0
    %3491 = vmatpush2.bf16.msra.mxu0 %v2612
    %3492 = vmatprep.subr.bf16.mxu0 0
    %3493 = vmatpush2.bf16.msra.mxu0 %v2611
    %3494 = vmatprep.mubr.bf16.mxu0 %v154
    %3495 = vmatmul.mubr.bf16.gmra.mxu0 %v153
    %v3496 = vpop.f32.mrf.mxu0
    %v3497 = vadd.f32 %v3456, %v3496
    %v3498 = vpop.f32.mrf.mxu0
    %v3499 = vpop.f32.mrf.mxu0
    %v3500 = vadd.f32 %v3459, %v3499
    %v3501 = vpop.f32.mrf.mxu0
    %3502 = vdwg.mxu0
    %3503 = vmatprep.subr.bf16.mxu0 0
    %3504 = vmatpush1.bf16.msra.mxu0 %v2626
    %3505 = vmatprep.subr.bf16.mxu0 0
    %3506 = vmatpush1.bf16.msra.mxu0 %v2625
    %3507 = vmatprep.subr.bf16.mxu0 0
    %3508 = vmatpush1.bf16.msra.mxu0 %v2624
    %3509 = vmatprep.subr.bf16.mxu0 0
    %3510 = vmatpush1.bf16.msra.mxu0 %v2623
    %3511 = vmatprep.subr.bf16.mxu0 0
    %3512 = vmatpush1.bf16.msra.mxu0 %v2622
    %3513 = vmatprep.subr.bf16.mxu0 0
    %3514 = vmatpush1.bf16.msra.mxu0 %v2621
    %3515 = vmatprep.subr.bf16.mxu0 0
    %3516 = vmatpush1.bf16.msra.mxu0 %v2620
    %3517 = vmatprep.subr.bf16.mxu0 0
    %3518 = vmatpush1.bf16.msra.mxu0 %v2619
    %3519 = vmatprep.subr.bf16.mxu0 0
    %3520 = vmatpush2.bf16.msra.mxu0 %v2634
    %3521 = vmatprep.subr.bf16.mxu0 0
    %3522 = vmatpush2.bf16.msra.mxu0 %v2633
    %3523 = vmatprep.subr.bf16.mxu0 0
    %3524 = vmatpush2.bf16.msra.mxu0 %v2632
    %3525 = vmatprep.subr.bf16.mxu0 0
    %3526 = vmatpush2.bf16.msra.mxu0 %v2631
    %3527 = vmatprep.subr.bf16.mxu0 0
    %3528 = vmatpush2.bf16.msra.mxu0 %v2630
    %3529 = vmatprep.subr.bf16.mxu0 0
    %3530 = vmatpush2.bf16.msra.mxu0 %v2629
    %3531 = vmatprep.subr.bf16.mxu0 0
    %3532 = vmatpush2.bf16.msra.mxu0 %v2628
    %3533 = vmatprep.subr.bf16.mxu0 0
    %3534 = vmatpush2.bf16.msra.mxu0 %v2627
    %3535 = vmatprep.mubr.bf16.mxu0 %v156
    %3536 = vmatmul.mubr.bf16.gmra.mxu0 %v155
    %v3537 = vpop.f32.mrf.mxu0
    %v3538 = vadd.f32 %v3497, %v3537
    %v3539 = vpop.f32.mrf.mxu0
    %v3540 = vpop.f32.mrf.mxu0
    %v3541 = vadd.f32 %v3500, %v3540
    %v3542 = vpop.f32.mrf.mxu0
    %3543 = vdwg.mxu0
    %3544 = vmatprep.subr.bf16.mxu0 0
    %3545 = vmatpush1.bf16.msra.mxu0 %v2642
    %3546 = vmatprep.subr.bf16.mxu0 0
    %3547 = vmatpush1.bf16.msra.mxu0 %v2641
    %3548 = vmatprep.subr.bf16.mxu0 0
    %3549 = vmatpush1.bf16.msra.mxu0 %v2640
    %3550 = vmatprep.subr.bf16.mxu0 0
    %3551 = vmatpush1.bf16.msra.mxu0 %v2639
    %3552 = vmatprep.subr.bf16.mxu0 0
    %3553 = vmatpush1.bf16.msra.mxu0 %v2638
    %3554 = vmatprep.subr.bf16.mxu0 0
    %3555 = vmatpush1.bf16.msra.mxu0 %v2637
    %3556 = vmatprep.subr.bf16.mxu0 0
    %3557 = vmatpush1.bf16.msra.mxu0 %v2636
    %3558 = vmatprep.subr.bf16.mxu0 0
    %3559 = vmatpush1.bf16.msra.mxu0 %v2635
    %3560 = vmatprep.subr.bf16.mxu0 0
    %3561 = vmatpush2.bf16.msra.mxu0 %v2650
    %3562 = vmatprep.subr.bf16.mxu0 0
    %3563 = vmatpush2.bf16.msra.mxu0 %v2649
    %3564 = vmatprep.subr.bf16.mxu0 0
    %3565 = vmatpush2.bf16.msra.mxu0 %v2648
    %3566 = vmatprep.subr.bf16.mxu0 0
    %3567 = vmatpush2.bf16.msra.mxu0 %v2647
    %3568 = vmatprep.subr.bf16.mxu0 0
    %3569 = vmatpush2.bf16.msra.mxu0 %v2646
    %3570 = vmatprep.subr.bf16.mxu0 0
    %3571 = vmatpush2.bf16.msra.mxu0 %v2645
    %3572 = vmatprep.subr.bf16.mxu0 0
    %3573 = vmatpush2.bf16.msra.mxu0 %v2644
    %3574 = vmatprep.subr.bf16.mxu0 0
    %3575 = vmatpush2.bf16.msra.mxu0 %v2643
    %3576 = vmatprep.mubr.bf16.mxu0 %v158
    %3577 = vmatmul.mubr.bf16.gmra.mxu0 %v157
    %v3578 = vpop.f32.mrf.mxu0
    %v3579 = vadd.f32 %v3538, %v3578
    %v3580 = vpop.f32.mrf.mxu0
    %v3581 = vpop.f32.mrf.mxu0
    %v3582 = vadd.f32 %v3541, %v3581
    %v3583 = vpop.f32.mrf.mxu0
    %3584 = vdwg.mxu0
    %3585 = vmatprep.subr.bf16.mxu0 0
    %3586 = vmatpush1.bf16.msra.mxu0 %v2658
    %3587 = vmatprep.subr.bf16.mxu0 0
    %3588 = vmatpush1.bf16.msra.mxu0 %v2657
    %3589 = vmatprep.subr.bf16.mxu0 0
    %3590 = vmatpush1.bf16.msra.mxu0 %v2656
    %3591 = vmatprep.subr.bf16.mxu0 0
    %3592 = vmatpush1.bf16.msra.mxu0 %v2655
    %3593 = vmatprep.subr.bf16.mxu0 0
    %3594 = vmatpush1.bf16.msra.mxu0 %v2654
    %3595 = vmatprep.subr.bf16.mxu0 0
    %3596 = vmatpush1.bf16.msra.mxu0 %v2653
    %3597 = vmatprep.subr.bf16.mxu0 0
    %3598 = vmatpush1.bf16.msra.mxu0 %v2652
    %3599 = vmatprep.subr.bf16.mxu0 0
    %3600 = vmatpush1.bf16.msra.mxu0 %v2651
    %3601 = vmatprep.subr.bf16.mxu0 0
    %3602 = vmatpush2.bf16.msra.mxu0 %v2666
    %3603 = vmatprep.subr.bf16.mxu0 0
    %3604 = vmatpush2.bf16.msra.mxu0 %v2665
    %3605 = vmatprep.subr.bf16.mxu0 0
    %3606 = vmatpush2.bf16.msra.mxu0 %v2664
    %3607 = vmatprep.subr.bf16.mxu0 0
    %3608 = vmatpush2.bf16.msra.mxu0 %v2663
    %3609 = vmatprep.subr.bf16.mxu0 0
    %3610 = vmatpush2.bf16.msra.mxu0 %v2662
    %3611 = vmatprep.subr.bf16.mxu0 0
    %3612 = vmatpush2.bf16.msra.mxu0 %v2661
    %3613 = vmatprep.subr.bf16.mxu0 0
    %3614 = vmatpush2.bf16.msra.mxu0 %v2660
    %3615 = vmatprep.subr.bf16.mxu0 0
    %3616 = vmatpush2.bf16.msra.mxu0 %v2659
    %3617 = vmatprep.mubr.bf16.mxu0 %v160
    %3618 = vmatmul.mubr.bf16.gmra.mxu0 %v159
    %v3619 = vpop.f32.mrf.mxu0
    %v3620 = vadd.f32 %v3579, %v3619
    %v3621 = vpop.f32.mrf.mxu0
    %v3622 = vpop.f32.mrf.mxu0
    %v3623 = vadd.f32 %v3582, %v3622
    %v3624 = vpop.f32.mrf.mxu0
    %3625 = vdwg.mxu0
    %3626 = vmatprep.subr.bf16.mxu0 0
    %3627 = vmatpush1.bf16.msra.mxu0 %v2674
    %3628 = vmatprep.subr.bf16.mxu0 0
    %3629 = vmatpush1.bf16.msra.mxu0 %v2673
    %3630 = vmatprep.subr.bf16.mxu0 0
    %3631 = vmatpush1.bf16.msra.mxu0 %v2672
    %3632 = vmatprep.subr.bf16.mxu0 0
    %3633 = vmatpush1.bf16.msra.mxu0 %v2671
    %3634 = vmatprep.subr.bf16.mxu0 0
    %3635 = vmatpush1.bf16.msra.mxu0 %v2670
    %3636 = vmatprep.subr.bf16.mxu0 0
    %3637 = vmatpush1.bf16.msra.mxu0 %v2669
    %3638 = vmatprep.subr.bf16.mxu0 0
    %3639 = vmatpush1.bf16.msra.mxu0 %v2668
    %3640 = vmatprep.subr.bf16.mxu0 0
    %3641 = vmatpush1.bf16.msra.mxu0 %v2667
    %3642 = vmatprep.subr.bf16.mxu0 0
    %3643 = vmatpush2.bf16.msra.mxu0 %v2682
    %3644 = vmatprep.subr.bf16.mxu0 0
    %3645 = vmatpush2.bf16.msra.mxu0 %v2681
    %3646 = vmatprep.subr.bf16.mxu0 0
    %3647 = vmatpush2.bf16.msra.mxu0 %v2680
    %3648 = vmatprep.subr.bf16.mxu0 0
    %3649 = vmatpush2.bf16.msra.mxu0 %v2679
    %3650 = vmatprep.subr.bf16.mxu0 0
    %3651 = vmatpush2.bf16.msra.mxu0 %v2678
    %3652 = vmatprep.subr.bf16.mxu0 0
    %3653 = vmatpush2.bf16.msra.mxu0 %v2677
    %3654 = vmatprep.subr.bf16.mxu0 0
    %3655 = vmatpush2.bf16.msra.mxu0 %v2676
    %3656 = vmatprep.subr.bf16.mxu0 0
    %3657 = vmatpush2.bf16.msra.mxu0 %v2675
    %3658 = vmatprep.mubr.bf16.mxu0 %v162
    %3659 = vmatmul.mubr.bf16.gmra.mxu0 %v161
    %v3660 = vpop.f32.mrf.mxu0
    %v3661 = vadd.f32 %v3620, %v3660
    %v3662 = vpop.f32.mrf.mxu0
    %v3663 = vpop.f32.mrf.mxu0
    %v3664 = vadd.f32 %v3623, %v3663
    %v3665 = vpop.f32.mrf.mxu0
    %3666 = vdwg.mxu0
    %3667 = vmatprep.subr.bf16.mxu0 0
    %3668 = vmatpush1.bf16.msra.mxu0 %v2690
    %3669 = vmatprep.subr.bf16.mxu0 0
    %3670 = vmatpush1.bf16.msra.mxu0 %v2689
    %3671 = vmatprep.subr.bf16.mxu0 0
    %3672 = vmatpush1.bf16.msra.mxu0 %v2688
    %3673 = vmatprep.subr.bf16.mxu0 0
    %3674 = vmatpush1.bf16.msra.mxu0 %v2687
    %3675 = vmatprep.subr.bf16.mxu0 0
    %3676 = vmatpush1.bf16.msra.mxu0 %v2686
    %3677 = vmatprep.subr.bf16.mxu0 0
    %3678 = vmatpush1.bf16.msra.mxu0 %v2685
    %3679 = vmatprep.subr.bf16.mxu0 0
    %3680 = vmatpush1.bf16.msra.mxu0 %v2684
    %3681 = vmatprep.subr.bf16.mxu0 0
    %3682 = vmatpush1.bf16.msra.mxu0 %v2683
    %3683 = vmatprep.subr.bf16.mxu0 0
    %3684 = vmatpush2.bf16.msra.mxu0 %v2698
    %3685 = vmatprep.subr.bf16.mxu0 0
    %3686 = vmatpush2.bf16.msra.mxu0 %v2697
    %3687 = vmatprep.subr.bf16.mxu0 0
    %3688 = vmatpush2.bf16.msra.mxu0 %v2696
    %3689 = vmatprep.subr.bf16.mxu0 0
    %3690 = vmatpush2.bf16.msra.mxu0 %v2695
    %3691 = vmatprep.subr.bf16.mxu0 0
    %3692 = vmatpush2.bf16.msra.mxu0 %v2694
    %3693 = vmatprep.subr.bf16.mxu0 0
    %3694 = vmatpush2.bf16.msra.mxu0 %v2693
    %3695 = vmatprep.subr.bf16.mxu0 0
    %3696 = vmatpush2.bf16.msra.mxu0 %v2692
    %3697 = vmatprep.subr.bf16.mxu0 0
    %3698 = vmatpush2.bf16.msra.mxu0 %v2691
    %3699 = vmatprep.mubr.bf16.mxu0 %v164
    %3700 = vmatmul.mubr.bf16.gmra.mxu0 %v163
    %v3701 = vpop.f32.mrf.mxu0
    %v3702 = vadd.f32 %v3661, %v3701
    %v3703 = vpop.f32.mrf.mxu0
    %v3704 = vpop.f32.mrf.mxu0
    %v3705 = vadd.f32 %v3664, %v3704
    %v3706 = vpop.f32.mrf.mxu0
    %3707 = vdwg.mxu0
    %3708 = vmatprep.subr.bf16.mxu0 0
    %3709 = vmatpush1.bf16.msra.mxu0 %v2706
    %3710 = vmatprep.subr.bf16.mxu0 0
    %3711 = vmatpush1.bf16.msra.mxu0 %v2705
    %3712 = vmatprep.subr.bf16.mxu0 0
    %3713 = vmatpush1.bf16.msra.mxu0 %v2704
    %3714 = vmatprep.subr.bf16.mxu0 0
    %3715 = vmatpush1.bf16.msra.mxu0 %v2703
    %3716 = vmatprep.subr.bf16.mxu0 0
    %3717 = vmatpush1.bf16.msra.mxu0 %v2702
    %3718 = vmatprep.subr.bf16.mxu0 0
    %3719 = vmatpush1.bf16.msra.mxu0 %v2701
    %3720 = vmatprep.subr.bf16.mxu0 0
    %3721 = vmatpush1.bf16.msra.mxu0 %v2700
    %3722 = vmatprep.subr.bf16.mxu0 0
    %3723 = vmatpush1.bf16.msra.mxu0 %v2699
    %3724 = vmatprep.subr.bf16.mxu0 0
    %3725 = vmatpush2.bf16.msra.mxu0 %v2714
    %3726 = vmatprep.subr.bf16.mxu0 0
    %3727 = vmatpush2.bf16.msra.mxu0 %v2713
    %3728 = vmatprep.subr.bf16.mxu0 0
    %3729 = vmatpush2.bf16.msra.mxu0 %v2712
    %3730 = vmatprep.subr.bf16.mxu0 0
    %3731 = vmatpush2.bf16.msra.mxu0 %v2711
    %3732 = vmatprep.subr.bf16.mxu0 0
    %3733 = vmatpush2.bf16.msra.mxu0 %v2710
    %3734 = vmatprep.subr.bf16.mxu0 0
    %3735 = vmatpush2.bf16.msra.mxu0 %v2709
    %3736 = vmatprep.subr.bf16.mxu0 0
    %3737 = vmatpush2.bf16.msra.mxu0 %v2708
    %3738 = vmatprep.subr.bf16.mxu0 0
    %3739 = vmatpush2.bf16.msra.mxu0 %v2707
    %3740 = vmatprep.mubr.bf16.mxu0 %v166
    %3741 = vmatmul.mubr.bf16.gmra.mxu0 %v165
    %v3742 = vpop.f32.mrf.mxu0
    %v3743 = vadd.f32 %v3702, %v3742
    %v3744 = vpop.f32.mrf.mxu0
    %v3745 = vpop.f32.mrf.mxu0
    %v3746 = vadd.f32 %v3705, %v3745
    %v3747 = vpop.f32.mrf.mxu0
    %3748 = vdwg.mxu0
    %3749 = vmatprep.subr.bf16.mxu0 0
    %3750 = vmatpush1.bf16.msra.mxu0 %v2722
    %3751 = vmatprep.subr.bf16.mxu0 0
    %3752 = vmatpush1.bf16.msra.mxu0 %v2721
    %3753 = vmatprep.subr.bf16.mxu0 0
    %3754 = vmatpush1.bf16.msra.mxu0 %v2720
    %3755 = vmatprep.subr.bf16.mxu0 0
    %3756 = vmatpush1.bf16.msra.mxu0 %v2719
    %3757 = vmatprep.subr.bf16.mxu0 0
    %3758 = vmatpush1.bf16.msra.mxu0 %v2718
    %3759 = vmatprep.subr.bf16.mxu0 0
    %3760 = vmatpush1.bf16.msra.mxu0 %v2717
    %3761 = vmatprep.subr.bf16.mxu0 0
    %3762 = vmatpush1.bf16.msra.mxu0 %v2716
    %3763 = vmatprep.subr.bf16.mxu0 0
    %3764 = vmatpush1.bf16.msra.mxu0 %v2715
    %3765 = vmatprep.subr.bf16.mxu0 0
    %3766 = vmatpush2.bf16.msra.mxu0 %v2730
    %3767 = vmatprep.subr.bf16.mxu0 0
    %3768 = vmatpush2.bf16.msra.mxu0 %v2729
    %3769 = vmatprep.subr.bf16.mxu0 0
    %3770 = vmatpush2.bf16.msra.mxu0 %v2728
    %3771 = vmatprep.subr.bf16.mxu0 0
    %3772 = vmatpush2.bf16.msra.mxu0 %v2727
    %3773 = vmatprep.subr.bf16.mxu0 0
    %3774 = vmatpush2.bf16.msra.mxu0 %v2726
    %3775 = vmatprep.subr.bf16.mxu0 0
    %3776 = vmatpush2.bf16.msra.mxu0 %v2725
    %3777 = vmatprep.subr.bf16.mxu0 0
    %3778 = vmatpush2.bf16.msra.mxu0 %v2724
    %3779 = vmatprep.subr.bf16.mxu0 0
    %3780 = vmatpush2.bf16.msra.mxu0 %v2723
    %3781 = vmatprep.mubr.bf16.mxu0 %v168
    %3782 = vmatmul.mubr.bf16.gmra.mxu0 %v167
    %v3783 = vpop.f32.mrf.mxu0
    %v3784 = vadd.f32 %v3743, %v3783
    %v3785 = vpop.f32.mrf.mxu0
    %v3786 = vpop.f32.mrf.mxu0
    %v3787 = vadd.f32 %v3746, %v3786
    %v3788 = vpop.f32.mrf.mxu0
    %3789 = vdwg.mxu0
    %3790 = vmatprep.subr.bf16.mxu0 0
    %3791 = vmatpush1.bf16.msra.mxu0 %v2738
    %3792 = vmatprep.subr.bf16.mxu0 0
    %3793 = vmatpush1.bf16.msra.mxu0 %v2737
    %3794 = vmatprep.subr.bf16.mxu0 0
    %3795 = vmatpush1.bf16.msra.mxu0 %v2736
    %3796 = vmatprep.subr.bf16.mxu0 0
    %3797 = vmatpush1.bf16.msra.mxu0 %v2735
    %3798 = vmatprep.subr.bf16.mxu0 0
    %3799 = vmatpush1.bf16.msra.mxu0 %v2734
    %3800 = vmatprep.subr.bf16.mxu0 0
    %3801 = vmatpush1.bf16.msra.mxu0 %v2733
    %3802 = vmatprep.subr.bf16.mxu0 0
    %3803 = vmatpush1.bf16.msra.mxu0 %v2732
    %3804 = vmatprep.subr.bf16.mxu0 0
    %3805 = vmatpush1.bf16.msra.mxu0 %v2731
    %3806 = vmatprep.subr.bf16.mxu0 0
    %3807 = vmatpush2.bf16.msra.mxu0 %v2746
    %3808 = vmatprep.subr.bf16.mxu0 0
    %3809 = vmatpush2.bf16.msra.mxu0 %v2745
    %3810 = vmatprep.subr.bf16.mxu0 0
    %3811 = vmatpush2.bf16.msra.mxu0 %v2744
    %3812 = vmatprep.subr.bf16.mxu0 0
    %3813 = vmatpush2.bf16.msra.mxu0 %v2743
    %3814 = vmatprep.subr.bf16.mxu0 0
    %3815 = vmatpush2.bf16.msra.mxu0 %v2742
    %3816 = vmatprep.subr.bf16.mxu0 0
    %3817 = vmatpush2.bf16.msra.mxu0 %v2741
    %3818 = vmatprep.subr.bf16.mxu0 0
    %3819 = vmatpush2.bf16.msra.mxu0 %v2740
    %3820 = vmatprep.subr.bf16.mxu0 0
    %3821 = vmatpush2.bf16.msra.mxu0 %v2739
    %3822 = vmatprep.mubr.bf16.mxu0 %v170
    %3823 = vmatmul.mubr.bf16.gmra.mxu0 %v169
    %v3824 = vpop.f32.mrf.mxu0
    %v3825 = vadd.f32 %v3784, %v3824
    %v3826 = vpop.f32.mrf.mxu0
    %v3827 = vpop.f32.mrf.mxu0
    %v3828 = vadd.f32 %v3787, %v3827
    %v3829 = vpop.f32.mrf.mxu0
    %3830 = vdwg.mxu0
    %3831 = vmatprep.subr.bf16.mxu0 0
    %3832 = vmatpush1.bf16.msra.mxu0 %v2754
    %3833 = vmatprep.subr.bf16.mxu0 0
    %3834 = vmatpush1.bf16.msra.mxu0 %v2753
    %3835 = vmatprep.subr.bf16.mxu0 0
    %3836 = vmatpush1.bf16.msra.mxu0 %v2752
    %3837 = vmatprep.subr.bf16.mxu0 0
    %3838 = vmatpush1.bf16.msra.mxu0 %v2751
    %3839 = vmatprep.subr.bf16.mxu0 0
    %3840 = vmatpush1.bf16.msra.mxu0 %v2750
    %3841 = vmatprep.subr.bf16.mxu0 0
    %3842 = vmatpush1.bf16.msra.mxu0 %v2749
    %3843 = vmatprep.subr.bf16.mxu0 0
    %3844 = vmatpush1.bf16.msra.mxu0 %v2748
    %3845 = vmatprep.subr.bf16.mxu0 0
    %3846 = vmatpush1.bf16.msra.mxu0 %v2747
    %3847 = vmatprep.subr.bf16.mxu0 0
    %3848 = vmatpush2.bf16.msra.mxu0 %v2762
    %3849 = vmatprep.subr.bf16.mxu0 0
    %3850 = vmatpush2.bf16.msra.mxu0 %v2761
    %3851 = vmatprep.subr.bf16.mxu0 0
    %3852 = vmatpush2.bf16.msra.mxu0 %v2760
    %3853 = vmatprep.subr.bf16.mxu0 0
    %3854 = vmatpush2.bf16.msra.mxu0 %v2759
    %3855 = vmatprep.subr.bf16.mxu0 0
    %3856 = vmatpush2.bf16.msra.mxu0 %v2758
    %3857 = vmatprep.subr.bf16.mxu0 0
    %3858 = vmatpush2.bf16.msra.mxu0 %v2757
    %3859 = vmatprep.subr.bf16.mxu0 0
    %3860 = vmatpush2.bf16.msra.mxu0 %v2756
    %3861 = vmatprep.subr.bf16.mxu0 0
    %3862 = vmatpush2.bf16.msra.mxu0 %v2755
    %3863 = vmatprep.mubr.bf16.mxu0 %v172
    %3864 = vmatmul.mubr.bf16.gmra.mxu0 %v171
    %v3865 = vpop.f32.mrf.mxu0
    %v3866 = vadd.f32 %v3825, %v3865
    %v3867 = vpop.f32.mrf.mxu0
    %v3868 = vpop.f32.mrf.mxu0
    %v3869 = vadd.f32 %v3828, %v3868
    %v3870 = vpop.f32.mrf.mxu0
    %3871 = vdwg.mxu0
    %3872 = vmatprep.subr.bf16.mxu0 0
    %3873 = vmatpush1.bf16.msra.mxu0 %v2770
    %3874 = vmatprep.subr.bf16.mxu0 0
    %3875 = vmatpush1.bf16.msra.mxu0 %v2769
    %3876 = vmatprep.subr.bf16.mxu0 0
    %3877 = vmatpush1.bf16.msra.mxu0 %v2768
    %3878 = vmatprep.subr.bf16.mxu0 0
    %3879 = vmatpush1.bf16.msra.mxu0 %v2767
    %3880 = vmatprep.subr.bf16.mxu0 0
    %3881 = vmatpush1.bf16.msra.mxu0 %v2766
    %3882 = vmatprep.subr.bf16.mxu0 0
    %3883 = vmatpush1.bf16.msra.mxu0 %v2765
    %3884 = vmatprep.subr.bf16.mxu0 0
    %3885 = vmatpush1.bf16.msra.mxu0 %v2764
    %3886 = vmatprep.subr.bf16.mxu0 0
    %3887 = vmatpush1.bf16.msra.mxu0 %v2763
    %3888 = vmatprep.subr.bf16.mxu0 0
    %3889 = vmatpush2.bf16.msra.mxu0 %v2778
    %3890 = vmatprep.subr.bf16.mxu0 0
    %3891 = vmatpush2.bf16.msra.mxu0 %v2777
    %3892 = vmatprep.subr.bf16.mxu0 0
    %3893 = vmatpush2.bf16.msra.mxu0 %v2776
    %3894 = vmatprep.subr.bf16.mxu0 0
    %3895 = vmatpush2.bf16.msra.mxu0 %v2775
    %3896 = vmatprep.subr.bf16.mxu0 0
    %3897 = vmatpush2.bf16.msra.mxu0 %v2774
    %3898 = vmatprep.subr.bf16.mxu0 0
    %3899 = vmatpush2.bf16.msra.mxu0 %v2773
    %3900 = vmatprep.subr.bf16.mxu0 0
    %3901 = vmatpush2.bf16.msra.mxu0 %v2772
    %3902 = vmatprep.subr.bf16.mxu0 0
    %3903 = vmatpush2.bf16.msra.mxu0 %v2771
    %3904 = vmatprep.mubr.bf16.mxu0 %v174
    %3905 = vmatmul.mubr.bf16.gmra.mxu0 %v173
    %v3906 = vpop.f32.mrf.mxu0
    %v3907 = vadd.f32 %v3866, %v3906
    %v3908 = vpop.f32.mrf.mxu0
    %v3909 = vpop.f32.mrf.mxu0
    %v3910 = vadd.f32 %v3869, %v3909
    %v3911 = vpop.f32.mrf.mxu0
    %3912 = vdwg.mxu0
    %3913 = vmatprep.subr.bf16.mxu0 0
    %3914 = vmatpush1.bf16.msra.mxu0 %v2786
    %3915 = vmatprep.subr.bf16.mxu0 0
    %3916 = vmatpush1.bf16.msra.mxu0 %v2785
    %3917 = vmatprep.subr.bf16.mxu0 0
    %3918 = vmatpush1.bf16.msra.mxu0 %v2784
    %3919 = vmatprep.subr.bf16.mxu0 0
    %3920 = vmatpush1.bf16.msra.mxu0 %v2783
    %3921 = vmatprep.subr.bf16.mxu0 0
    %3922 = vmatpush1.bf16.msra.mxu0 %v2782
    %3923 = vmatprep.subr.bf16.mxu0 0
    %3924 = vmatpush1.bf16.msra.mxu0 %v2781
    %3925 = vmatprep.subr.bf16.mxu0 0
    %3926 = vmatpush1.bf16.msra.mxu0 %v2780
    %3927 = vmatprep.subr.bf16.mxu0 0
    %3928 = vmatpush1.bf16.msra.mxu0 %v2779
    %3929 = vmatprep.subr.bf16.mxu0 0
    %3930 = vmatpush2.bf16.msra.mxu0 %v2794
    %3931 = vmatprep.subr.bf16.mxu0 0
    %3932 = vmatpush2.bf16.msra.mxu0 %v2793
    %3933 = vmatprep.subr.bf16.mxu0 0
    %3934 = vmatpush2.bf16.msra.mxu0 %v2792
    %3935 = vmatprep.subr.bf16.mxu0 0
    %3936 = vmatpush2.bf16.msra.mxu0 %v2791
    %3937 = vmatprep.subr.bf16.mxu0 0
    %3938 = vmatpush2.bf16.msra.mxu0 %v2790
    %3939 = vmatprep.subr.bf16.mxu0 0
    %3940 = vmatpush2.bf16.msra.mxu0 %v2789
    %3941 = vmatprep.subr.bf16.mxu0 0
    %3942 = vmatpush2.bf16.msra.mxu0 %v2788
    %3943 = vmatprep.subr.bf16.mxu0 0
    %3944 = vmatpush2.bf16.msra.mxu0 %v2787
    %3945 = vmatprep.mubr.bf16.mxu0 %v176
    %3946 = vmatmul.mubr.bf16.gmra.mxu0 %v175
    %v3947 = vpop.f32.mrf.mxu0
    %v3948 = vadd.f32 %v3907, %v3947
    %v3949 = vpop.f32.mrf.mxu0
    %v3950 = vpop.f32.mrf.mxu0
    %v3951 = vadd.f32 %v3910, %v3950
    %v3952 = vpop.f32.mrf.mxu0
    %3953 = vdwg.mxu0
    %3954 = vmatprep.subr.bf16.mxu0 0
    %3955 = vmatpush1.bf16.msra.mxu0 %v2802
    %3956 = vmatprep.subr.bf16.mxu0 0
    %3957 = vmatpush1.bf16.msra.mxu0 %v2801
    %3958 = vmatprep.subr.bf16.mxu0 0
    %3959 = vmatpush1.bf16.msra.mxu0 %v2800
    %3960 = vmatprep.subr.bf16.mxu0 0
    %3961 = vmatpush1.bf16.msra.mxu0 %v2799
    %3962 = vmatprep.subr.bf16.mxu0 0
    %3963 = vmatpush1.bf16.msra.mxu0 %v2798
    %3964 = vmatprep.subr.bf16.mxu0 0
    %3965 = vmatpush1.bf16.msra.mxu0 %v2797
    %3966 = vmatprep.subr.bf16.mxu0 0
    %3967 = vmatpush1.bf16.msra.mxu0 %v2796
    %3968 = vmatprep.subr.bf16.mxu0 0
    %3969 = vmatpush1.bf16.msra.mxu0 %v2795
    %3970 = vmatprep.subr.bf16.mxu0 0
    %3971 = vmatpush2.bf16.msra.mxu0 %v2810
    %3972 = vmatprep.subr.bf16.mxu0 0
    %3973 = vmatpush2.bf16.msra.mxu0 %v2809
    %3974 = vmatprep.subr.bf16.mxu0 0
    %3975 = vmatpush2.bf16.msra.mxu0 %v2808
    %3976 = vmatprep.subr.bf16.mxu0 0
    %3977 = vmatpush2.bf16.msra.mxu0 %v2807
    %3978 = vmatprep.subr.bf16.mxu0 0
    %3979 = vmatpush2.bf16.msra.mxu0 %v2806
    %3980 = vmatprep.subr.bf16.mxu0 0
    %3981 = vmatpush2.bf16.msra.mxu0 %v2805
    %3982 = vmatprep.subr.bf16.mxu0 0
    %3983 = vmatpush2.bf16.msra.mxu0 %v2804
    %3984 = vmatprep.subr.bf16.mxu0 0
    %3985 = vmatpush2.bf16.msra.mxu0 %v2803
    %3986 = vmatprep.mubr.bf16.mxu0 %v178
    %3987 = vmatmul.mubr.bf16.gmra.mxu0 %v177
    %v3988 = vpop.f32.mrf.mxu0
    %v3989 = vadd.f32 %v3948, %v3988
    %v3990 = vpop.f32.mrf.mxu0
    %v3991 = vpop.f32.mrf.mxu0
    %v3992 = vadd.f32 %v3951, %v3991
    %v3993 = vpop.f32.mrf.mxu0
    %3994 = vdwg.mxu0
    %3995 = vmatprep.subr.bf16.mxu0 0
    %3996 = vmatpush1.bf16.msra.mxu0 %v2818
    %3997 = vmatprep.subr.bf16.mxu0 0
    %3998 = vmatpush1.bf16.msra.mxu0 %v2817
    %3999 = vmatprep.subr.bf16.mxu0 0
    %4000 = vmatpush1.bf16.msra.mxu0 %v2816
    %4001 = vmatprep.subr.bf16.mxu0 0
    %4002 = vmatpush1.bf16.msra.mxu0 %v2815
    %4003 = vmatprep.subr.bf16.mxu0 0
    %4004 = vmatpush1.bf16.msra.mxu0 %v2814
    %4005 = vmatprep.subr.bf16.mxu0 0
    %4006 = vmatpush1.bf16.msra.mxu0 %v2813
    %4007 = vmatprep.subr.bf16.mxu0 0
    %4008 = vmatpush1.bf16.msra.mxu0 %v2812
    %4009 = vmatprep.subr.bf16.mxu0 0
    %4010 = vmatpush1.bf16.msra.mxu0 %v2811
    %4011 = vmatprep.subr.bf16.mxu0 0
    %4012 = vmatpush2.bf16.msra.mxu0 %v2826
    %4013 = vmatprep.subr.bf16.mxu0 0
    %4014 = vmatpush2.bf16.msra.mxu0 %v2825
    %4015 = vmatprep.subr.bf16.mxu0 0
    %4016 = vmatpush2.bf16.msra.mxu0 %v2824
    %4017 = vmatprep.subr.bf16.mxu0 0
    %4018 = vmatpush2.bf16.msra.mxu0 %v2823
    %4019 = vmatprep.subr.bf16.mxu0 0
    %4020 = vmatpush2.bf16.msra.mxu0 %v2822
    %4021 = vmatprep.subr.bf16.mxu0 0
    %4022 = vmatpush2.bf16.msra.mxu0 %v2821
    %4023 = vmatprep.subr.bf16.mxu0 0
    %4024 = vmatpush2.bf16.msra.mxu0 %v2820
    %4025 = vmatprep.subr.bf16.mxu0 0
    %4026 = vmatpush2.bf16.msra.mxu0 %v2819
    %4027 = vmatprep.mubr.bf16.mxu0 %v180
    %4028 = vmatmul.mubr.bf16.gmra.mxu0 %v179
    %v4029 = vpop.f32.mrf.mxu0
    %v4030 = vadd.f32 %v3989, %v4029
    %v4031 = vpop.f32.mrf.mxu0
    %v4032 = vpop.f32.mrf.mxu0
    %v4033 = vadd.f32 %v3992, %v4032
    %v4034 = vpop.f32.mrf.mxu0
    %4035 = vdwg.mxu0
    %4036 = vmatprep.subr.bf16.mxu0 0
    %4037 = vmatpush1.bf16.msra.mxu0 %v2834
    %4038 = vmatprep.subr.bf16.mxu0 0
    %4039 = vmatpush1.bf16.msra.mxu0 %v2833
    %4040 = vmatprep.subr.bf16.mxu0 0
    %4041 = vmatpush1.bf16.msra.mxu0 %v2832
    %4042 = vmatprep.subr.bf16.mxu0 0
    %4043 = vmatpush1.bf16.msra.mxu0 %v2831
    %4044 = vmatprep.subr.bf16.mxu0 0
    %4045 = vmatpush1.bf16.msra.mxu0 %v2830
    %4046 = vmatprep.subr.bf16.mxu0 0
    %4047 = vmatpush1.bf16.msra.mxu0 %v2829
    %4048 = vmatprep.subr.bf16.mxu0 0
    %4049 = vmatpush1.bf16.msra.mxu0 %v2828
    %4050 = vmatprep.subr.bf16.mxu0 0
    %4051 = vmatpush1.bf16.msra.mxu0 %v2827
    %4052 = vmatprep.subr.bf16.mxu0 0
    %4053 = vmatpush2.bf16.msra.mxu0 %v2842
    %4054 = vmatprep.subr.bf16.mxu0 0
    %4055 = vmatpush2.bf16.msra.mxu0 %v2841
    %4056 = vmatprep.subr.bf16.mxu0 0
    %4057 = vmatpush2.bf16.msra.mxu0 %v2840
    %4058 = vmatprep.subr.bf16.mxu0 0
    %4059 = vmatpush2.bf16.msra.mxu0 %v2839
    %4060 = vmatprep.subr.bf16.mxu0 0
    %4061 = vmatpush2.bf16.msra.mxu0 %v2838
    %4062 = vmatprep.subr.bf16.mxu0 0
    %4063 = vmatpush2.bf16.msra.mxu0 %v2837
    %4064 = vmatprep.subr.bf16.mxu0 0
    %4065 = vmatpush2.bf16.msra.mxu0 %v2836
    %4066 = vmatprep.subr.bf16.mxu0 0
    %4067 = vmatpush2.bf16.msra.mxu0 %v2835
    %4068 = vmatprep.mubr.bf16.mxu0 %v182
    %4069 = vmatmul.mubr.bf16.gmra.mxu0 %v181
    %v4070 = vpop.f32.mrf.mxu0
    %v4071 = vadd.f32 %v4030, %v4070
    %v4072 = vpop.f32.mrf.mxu0
    %v4073 = vpop.f32.mrf.mxu0
    %v4074 = vadd.f32 %v4033, %v4073
    %v4075 = vpop.f32.mrf.mxu0
    %4076 = vdwg.mxu0
    %4077 = vmatprep.subr.bf16.mxu0 0
    %4078 = vmatpush1.bf16.msra.mxu0 %v2850
    %4079 = vmatprep.subr.bf16.mxu0 0
    %4080 = vmatpush1.bf16.msra.mxu0 %v2849
    %4081 = vmatprep.subr.bf16.mxu0 0
    %4082 = vmatpush1.bf16.msra.mxu0 %v2848
    %4083 = vmatprep.subr.bf16.mxu0 0
    %4084 = vmatpush1.bf16.msra.mxu0 %v2847
    %4085 = vmatprep.subr.bf16.mxu0 0
    %4086 = vmatpush1.bf16.msra.mxu0 %v2846
    %4087 = vmatprep.subr.bf16.mxu0 0
    %4088 = vmatpush1.bf16.msra.mxu0 %v2845
    %4089 = vmatprep.subr.bf16.mxu0 0
    %4090 = vmatpush1.bf16.msra.mxu0 %v2844
    %4091 = vmatprep.subr.bf16.mxu0 0
    %4092 = vmatpush1.bf16.msra.mxu0 %v2843
    %4093 = vmatprep.subr.bf16.mxu0 0
    %4094 = vmatpush2.bf16.msra.mxu0 %v2858
    %4095 = vmatprep.subr.bf16.mxu0 0
    %4096 = vmatpush2.bf16.msra.mxu0 %v2857
    %4097 = vmatprep.subr.bf16.mxu0 0
    %4098 = vmatpush2.bf16.msra.mxu0 %v2856
    %4099 = vmatprep.subr.bf16.mxu0 0
    %4100 = vmatpush2.bf16.msra.mxu0 %v2855
    %4101 = vmatprep.subr.bf16.mxu0 0
    %4102 = vmatpush2.bf16.msra.mxu0 %v2854
    %4103 = vmatprep.subr.bf16.mxu0 0
    %4104 = vmatpush2.bf16.msra.mxu0 %v2853
    %4105 = vmatprep.subr.bf16.mxu0 0
    %4106 = vmatpush2.bf16.msra.mxu0 %v2852
    %4107 = vmatprep.subr.bf16.mxu0 0
    %4108 = vmatpush2.bf16.msra.mxu0 %v2851
    %4109 = vmatprep.mubr.bf16.mxu0 %v184
    %4110 = vmatmul.mubr.bf16.gmra.mxu0 %v183
    %v4111 = vpop.f32.mrf.mxu0
    %v4112 = vadd.f32 %v4071, %v4111
    %v4113 = vpop.f32.mrf.mxu0
    %v4114 = vpop.f32.mrf.mxu0
    %v4115 = vadd.f32 %v4074, %v4114
    %v4116 = vpop.f32.mrf.mxu0
    %4117 = vdwg.mxu0
    %4118 = vmatprep.subr.bf16.mxu0 0
    %4119 = vmatpush1.bf16.msra.mxu0 %v2866
    %4120 = vmatprep.subr.bf16.mxu0 0
    %4121 = vmatpush1.bf16.msra.mxu0 %v2865
    %4122 = vmatprep.subr.bf16.mxu0 0
    %4123 = vmatpush1.bf16.msra.mxu0 %v2864
    %4124 = vmatprep.subr.bf16.mxu0 0
    %4125 = vmatpush1.bf16.msra.mxu0 %v2863
    %4126 = vmatprep.subr.bf16.mxu0 0
    %4127 = vmatpush1.bf16.msra.mxu0 %v2862
    %4128 = vmatprep.subr.bf16.mxu0 0
    %4129 = vmatpush1.bf16.msra.mxu0 %v2861
    %4130 = vmatprep.subr.bf16.mxu0 0
    %4131 = vmatpush1.bf16.msra.mxu0 %v2860
    %4132 = vmatprep.subr.bf16.mxu0 0
    %4133 = vmatpush1.bf16.msra.mxu0 %v2859
    %4134 = vmatprep.subr.bf16.mxu0 0
    %4135 = vmatpush2.bf16.msra.mxu0 %v2874
    %4136 = vmatprep.subr.bf16.mxu0 0
    %4137 = vmatpush2.bf16.msra.mxu0 %v2873
    %4138 = vmatprep.subr.bf16.mxu0 0
    %4139 = vmatpush2.bf16.msra.mxu0 %v2872
    %4140 = vmatprep.subr.bf16.mxu0 0
    %4141 = vmatpush2.bf16.msra.mxu0 %v2871
    %4142 = vmatprep.subr.bf16.mxu0 0
    %4143 = vmatpush2.bf16.msra.mxu0 %v2870
    %4144 = vmatprep.subr.bf16.mxu0 0
    %4145 = vmatpush2.bf16.msra.mxu0 %v2869
    %4146 = vmatprep.subr.bf16.mxu0 0
    %4147 = vmatpush2.bf16.msra.mxu0 %v2868
    %4148 = vmatprep.subr.bf16.mxu0 0
    %4149 = vmatpush2.bf16.msra.mxu0 %v2867
    %4150 = vmatprep.mubr.bf16.mxu0 %v186
    %4151 = vmatmul.mubr.bf16.gmra.mxu0 %v185
    %v4152 = vpop.f32.mrf.mxu0
    %v4153 = vadd.f32 %v4112, %v4152
    %v4154 = vpop.f32.mrf.mxu0
    %v4155 = vpop.f32.mrf.mxu0
    %v4156 = vadd.f32 %v4115, %v4155
    %v4157 = vpop.f32.mrf.mxu0
    %4158 = vdwg.mxu0
    %4159 = vmatprep.subr.bf16.mxu0 0
    %4160 = vmatpush1.bf16.msra.mxu0 %v2882
    %4161 = vmatprep.subr.bf16.mxu0 0
    %4162 = vmatpush1.bf16.msra.mxu0 %v2881
    %4163 = vmatprep.subr.bf16.mxu0 0
    %4164 = vmatpush1.bf16.msra.mxu0 %v2880
    %4165 = vmatprep.subr.bf16.mxu0 0
    %4166 = vmatpush1.bf16.msra.mxu0 %v2879
    %4167 = vmatprep.subr.bf16.mxu0 0
    %4168 = vmatpush1.bf16.msra.mxu0 %v2878
    %4169 = vmatprep.subr.bf16.mxu0 0
    %4170 = vmatpush1.bf16.msra.mxu0 %v2877
    %4171 = vmatprep.subr.bf16.mxu0 0
    %4172 = vmatpush1.bf16.msra.mxu0 %v2876
    %4173 = vmatprep.subr.bf16.mxu0 0
    %4174 = vmatpush1.bf16.msra.mxu0 %v2875
    %4175 = vmatprep.subr.bf16.mxu0 0
    %4176 = vmatpush2.bf16.msra.mxu0 %v2890
    %4177 = vmatprep.subr.bf16.mxu0 0
    %4178 = vmatpush2.bf16.msra.mxu0 %v2889
    %4179 = vmatprep.subr.bf16.mxu0 0
    %4180 = vmatpush2.bf16.msra.mxu0 %v2888
    %4181 = vmatprep.subr.bf16.mxu0 0
    %4182 = vmatpush2.bf16.msra.mxu0 %v2887
    %4183 = vmatprep.subr.bf16.mxu0 0
    %4184 = vmatpush2.bf16.msra.mxu0 %v2886
    %4185 = vmatprep.subr.bf16.mxu0 0
    %4186 = vmatpush2.bf16.msra.mxu0 %v2885
    %4187 = vmatprep.subr.bf16.mxu0 0
    %4188 = vmatpush2.bf16.msra.mxu0 %v2884
    %4189 = vmatprep.subr.bf16.mxu0 0
    %4190 = vmatpush2.bf16.msra.mxu0 %v2883
    %4191 = vmatprep.mubr.bf16.mxu0 %v188
    %4192 = vmatmul.mubr.bf16.gmra.mxu0 %v187
    %v4193 = vpop.f32.mrf.mxu0
    %v4194 = vadd.f32 %v4153, %v4193
    %v4195 = vpop.f32.mrf.mxu0
    %v4196 = vpop.f32.mrf.mxu0
    %v4197 = vadd.f32 %v4156, %v4196
    %v4198 = vpop.f32.mrf.mxu0
    %4199 = vdwg.mxu0
    %4200 = vmatprep.subr.bf16.mxu0 0
    %4201 = vmatpush1.bf16.msra.mxu0 %v2898
    %4202 = vmatprep.subr.bf16.mxu0 0
    %4203 = vmatpush1.bf16.msra.mxu0 %v2897
    %4204 = vmatprep.subr.bf16.mxu0 0
    %4205 = vmatpush1.bf16.msra.mxu0 %v2896
    %4206 = vmatprep.subr.bf16.mxu0 0
    %4207 = vmatpush1.bf16.msra.mxu0 %v2895
    %4208 = vmatprep.subr.bf16.mxu0 0
    %4209 = vmatpush1.bf16.msra.mxu0 %v2894
    %4210 = vmatprep.subr.bf16.mxu0 0
    %4211 = vmatpush1.bf16.msra.mxu0 %v2893
    %4212 = vmatprep.subr.bf16.mxu0 0
    %4213 = vmatpush1.bf16.msra.mxu0 %v2892
    %4214 = vmatprep.subr.bf16.mxu0 0
    %4215 = vmatpush1.bf16.msra.mxu0 %v2891
    %4216 = vmatprep.subr.bf16.mxu0 0
    %4217 = vmatpush2.bf16.msra.mxu0 %v2906
    %4218 = vmatprep.subr.bf16.mxu0 0
    %4219 = vmatpush2.bf16.msra.mxu0 %v2905
    %4220 = vmatprep.subr.bf16.mxu0 0
    %4221 = vmatpush2.bf16.msra.mxu0 %v2904
    %4222 = vmatprep.subr.bf16.mxu0 0
    %4223 = vmatpush2.bf16.msra.mxu0 %v2903
    %4224 = vmatprep.subr.bf16.mxu0 0
    %4225 = vmatpush2.bf16.msra.mxu0 %v2902
    %4226 = vmatprep.subr.bf16.mxu0 0
    %4227 = vmatpush2.bf16.msra.mxu0 %v2901
    %4228 = vmatprep.subr.bf16.mxu0 0
    %4229 = vmatpush2.bf16.msra.mxu0 %v2900
    %4230 = vmatprep.subr.bf16.mxu0 0
    %4231 = vmatpush2.bf16.msra.mxu0 %v2899
    %4232 = vmatprep.mubr.bf16.mxu0 %v190
    %4233 = vmatmul.mubr.bf16.gmra.mxu0 %v189
    %v4234 = vpop.f32.mrf.mxu0
    %v4235 = vadd.f32 %v4194, %v4234
    %v4236 = vpop.f32.mrf.mxu0
    %v4237 = vpop.f32.mrf.mxu0
    %v4238 = vadd.f32 %v4197, %v4237
    %v4239 = vpop.f32.mrf.mxu0
    %4240 = vdwg.mxu0
    %4241 = vmatprep.subr.bf16.mxu0 0
    %4242 = vmatpush1.bf16.msra.mxu0 %v2914
    %4243 = vmatprep.subr.bf16.mxu0 0
    %4244 = vmatpush1.bf16.msra.mxu0 %v2913
    %4245 = vmatprep.subr.bf16.mxu0 0
    %4246 = vmatpush1.bf16.msra.mxu0 %v2912
    %4247 = vmatprep.subr.bf16.mxu0 0
    %4248 = vmatpush1.bf16.msra.mxu0 %v2911
    %4249 = vmatprep.subr.bf16.mxu0 0
    %4250 = vmatpush1.bf16.msra.mxu0 %v2910
    %4251 = vmatprep.subr.bf16.mxu0 0
    %4252 = vmatpush1.bf16.msra.mxu0 %v2909
    %4253 = vmatprep.subr.bf16.mxu0 0
    %4254 = vmatpush1.bf16.msra.mxu0 %v2908
    %4255 = vmatprep.subr.bf16.mxu0 0
    %4256 = vmatpush1.bf16.msra.mxu0 %v2907
    %4257 = vmatprep.subr.bf16.mxu0 0
    %4258 = vmatpush2.bf16.msra.mxu0 %v2922
    %4259 = vmatprep.subr.bf16.mxu0 0
    %4260 = vmatpush2.bf16.msra.mxu0 %v2921
    %4261 = vmatprep.subr.bf16.mxu0 0
    %4262 = vmatpush2.bf16.msra.mxu0 %v2920
    %4263 = vmatprep.subr.bf16.mxu0 0
    %4264 = vmatpush2.bf16.msra.mxu0 %v2919
    %4265 = vmatprep.subr.bf16.mxu0 0
    %4266 = vmatpush2.bf16.msra.mxu0 %v2918
    %4267 = vmatprep.subr.bf16.mxu0 0
    %4268 = vmatpush2.bf16.msra.mxu0 %v2917
    %4269 = vmatprep.subr.bf16.mxu0 0
    %4270 = vmatpush2.bf16.msra.mxu0 %v2916
    %4271 = vmatprep.subr.bf16.mxu0 0
    %4272 = vmatpush2.bf16.msra.mxu0 %v2915
    %4273 = vmatprep.mubr.bf16.mxu0 %v192
    %4274 = vmatmul.mubr.bf16.gmra.mxu0 %v191
    %v4275 = vpop.f32.mrf.mxu0
    %v4276 = vadd.f32 %v4235, %v4275
    %v4277 = vpop.f32.mrf.mxu0
    %v4278 = vpop.f32.mrf.mxu0
    %v4279 = vadd.f32 %v4238, %v4278
    %v4280 = vpop.f32.mrf.mxu0
    %4281 = vdwg.mxu0
    %4282 = vmatprep.subr.bf16.mxu0 0
    %4283 = vmatpush1.bf16.msra.mxu0 %v2930
    %4284 = vmatprep.subr.bf16.mxu0 0
    %4285 = vmatpush1.bf16.msra.mxu0 %v2929
    %4286 = vmatprep.subr.bf16.mxu0 0
    %4287 = vmatpush1.bf16.msra.mxu0 %v2928
    %4288 = vmatprep.subr.bf16.mxu0 0
    %4289 = vmatpush1.bf16.msra.mxu0 %v2927
    %4290 = vmatprep.subr.bf16.mxu0 0
    %4291 = vmatpush1.bf16.msra.mxu0 %v2926
    %4292 = vmatprep.subr.bf16.mxu0 0
    %4293 = vmatpush1.bf16.msra.mxu0 %v2925
    %4294 = vmatprep.subr.bf16.mxu0 0
    %4295 = vmatpush1.bf16.msra.mxu0 %v2924
    %4296 = vmatprep.subr.bf16.mxu0 0
    %4297 = vmatpush1.bf16.msra.mxu0 %v2923
    %4298 = vmatprep.subr.bf16.mxu0 0
    %4299 = vmatpush2.bf16.msra.mxu0 %v2938
    %4300 = vmatprep.subr.bf16.mxu0 0
    %4301 = vmatpush2.bf16.msra.mxu0 %v2937
    %4302 = vmatprep.subr.bf16.mxu0 0
    %4303 = vmatpush2.bf16.msra.mxu0 %v2936
    %4304 = vmatprep.subr.bf16.mxu0 0
    %4305 = vmatpush2.bf16.msra.mxu0 %v2935
    %4306 = vmatprep.subr.bf16.mxu0 0
    %4307 = vmatpush2.bf16.msra.mxu0 %v2934
    %4308 = vmatprep.subr.bf16.mxu0 0
    %4309 = vmatpush2.bf16.msra.mxu0 %v2933
    %4310 = vmatprep.subr.bf16.mxu0 0
    %4311 = vmatpush2.bf16.msra.mxu0 %v2932
    %4312 = vmatprep.subr.bf16.mxu0 0
    %4313 = vmatpush2.bf16.msra.mxu0 %v2931
    %4314 = vmatprep.mubr.bf16.mxu0 %v194
    %4315 = vmatmul.mubr.bf16.gmra.mxu0 %v193
    %v4316 = vpop.f32.mrf.mxu0
    %v4317 = vadd.f32 %v4276, %v4316
    %v4318 = vpop.f32.mrf.mxu0
    %v4319 = vpop.f32.mrf.mxu0
    %v4320 = vadd.f32 %v4279, %v4319
    %v4321 = vpop.f32.mrf.mxu0
    %4322 = vdwg.mxu0
    %4323 = vmatprep.subr.bf16.mxu0 0
    %4324 = vmatpush1.bf16.msra.mxu0 %v2946
    %4325 = vmatprep.subr.bf16.mxu0 0
    %4326 = vmatpush1.bf16.msra.mxu0 %v2945
    %4327 = vmatprep.subr.bf16.mxu0 0
    %4328 = vmatpush1.bf16.msra.mxu0 %v2944
    %4329 = vmatprep.subr.bf16.mxu0 0
    %4330 = vmatpush1.bf16.msra.mxu0 %v2943
    %4331 = vmatprep.subr.bf16.mxu0 0
    %4332 = vmatpush1.bf16.msra.mxu0 %v2942
    %4333 = vmatprep.subr.bf16.mxu0 0
    %4334 = vmatpush1.bf16.msra.mxu0 %v2941
    %4335 = vmatprep.subr.bf16.mxu0 0
    %4336 = vmatpush1.bf16.msra.mxu0 %v2940
    %4337 = vmatprep.subr.bf16.mxu0 0
    %4338 = vmatpush1.bf16.msra.mxu0 %v2939
    %4339 = vmatprep.subr.bf16.mxu0 0
    %4340 = vmatpush2.bf16.msra.mxu0 0
    %4341 = vmatprep.subr.bf16.mxu0 0
    %4342 = vmatpush2.bf16.msra.mxu0 0
    %4343 = vmatprep.subr.bf16.mxu0 0
    %4344 = vmatpush2.bf16.msra.mxu0 0
    %4345 = vmatprep.subr.bf16.mxu0 0
    %4346 = vmatpush2.bf16.msra.mxu0 0
    %4347 = vmatprep.subr.bf16.mxu0 0
    %4348 = vmatpush2.bf16.msra.mxu0 0
    %4349 = vmatprep.subr.bf16.mxu0 0
    %4350 = vmatpush2.bf16.msra.mxu0 0
    %4351 = vmatprep.subr.bf16.mxu0 0
    %4352 = vmatpush2.bf16.msra.mxu0 0
    %4353 = vmatprep.subr.bf16.mxu0 0
    %4354 = vmatpush2.bf16.msra.mxu0 0
    %4355 = vmatprep.mubr.bf16.mxu0 0
    %4356 = vmatmul.mubr.bf16.gmra.mxu0 %v195
    %v4357 = vpop.f32.mrf.mxu0
    %v4358 = vadd.f32 %v4317, %v4357
    %v4359 = vpop.f32.mrf.mxu0
    %v4360 = vpop.f32.mrf.mxu0
    %v4361 = vadd.f32 %v4320, %v4360
    %v4362 = vpop.f32.mrf.mxu0
    %4363 = vdwg.mxu0
    %v4364 = vld [vmem:[%s3] sm:$0x1]
    %v4365 = vld [vmem:[%s4] sm:$0x1]
    %4366 = vadd.xlane.f32.xlu0 %v4358
    %v4367 = vpop.xlane.xlu0 %4366
    %vm4368 = vcmask 1043456
    %v4369 = vsel %vm4368, %v4361, 0.0
    %4370 = vadd.xlane.f32.xlu0 %v4369
    %v4371 = vpop.xlane.xlu0 %4370
    %v4372 = vrcp.pop 128.0
    %v4373 = vmul.f32 %v4367, %v4372
    %v4374 = vmul.f32 %v4371, %v4372
    %v4375 = vsub.f32 %v4358, %v4373
    %v4376 = vsub.f32 %v4361, %v4374
    %v4377 = vmul.f32 %v4375, %v4375
    %v4378 = vmul.f32 %v4376, %v4376
    %4379 = vadd.xlane.f32.xlu0 %v4377
    %v4380 = vpop.xlane.xlu0 %4379
    %v4381 = vsel %vm4368, %v4378, 0.0
    %4382 = vadd.xlane.f32.xlu0 %v4381
    %v4383 = vpop.xlane.xlu0 %4382
    %v4384 = vmul.f32 %v4380, %v4372
    %v4385 = vmul.f32 %v4383, %v4372
    %v4386 = vadd.f32 %v4384, 1e-05
    %v4387 = vadd.f32 %v4385, 1e-05
    %v4388 = vrsqrt.pop %v4386
    %v4389 = vrsqrt.pop %v4387
    %v4390 = vmul.f32 %v4375, %v4388
    %v4391 = vmul.f32 %v4376, %v4389
    %v4393 = vlaneseq
    %v4394 = vshrl.u32 %v4393, 7
    %v4395 = vsub.s32 0, %v4394
    %v4396 = vrot.slane %v4364, %v4395
    %v4398 = vmul.f32 %v4390, %v4396
    %v4399 = vmul.f32 %v4391, %v4396
    %v4401 = vlaneseq
    %v4402 = vshrl.u32 %v4401, 7
    %v4403 = vsub.s32 0, %v4402
    %v4404 = vrot.slane %v4365, %v4403
    %v4406 = vadd.f32 %v4398, %v4404
    %v4407 = vadd.f32 %v4399, %v4404
    %v4408 = vmax.f32 %v4406, 0.0
    %v4409 = vmax.f32 %v4407, 0.0
    %v4410 = vld [vmem:[%s5] sm:$0xff]
    %v4411 = vld [vmem:[%s5 + $0x8] sm:$0xf]
    %v4412 = vadd.f32 %v4410, %v4408
    %v4413 = vadd.f32 %v4411, %v4409
    %v4414 = vld [vmem:[%s6] sm:$0x1]
    %v4415 = vld [vmem:[%s7] sm:$0x1]
    %4416 = vadd.xlane.f32.xlu0 %v4412
    %v4417 = vpop.xlane.xlu0 %4416
    %v4418 = vsel %vm4368, %v4413, 0.0
    %4419 = vadd.xlane.f32.xlu0 %v4418
    %v4420 = vpop.xlane.xlu0 %4419
    %v4421 = vmul.f32 %v4417, %v4372
    %v4422 = vmul.f32 %v4420, %v4372
    %v4423 = vsub.f32 %v4412, %v4421
    %v4424 = vsub.f32 %v4413, %v4422
    %v4425 = vmul.f32 %v4423, %v4423
    %v4426 = vmul.f32 %v4424, %v4424
    %4427 = vadd.xlane.f32.xlu0 %v4425
    %v4428 = vpop.xlane.xlu0 %4427
    %v4429 = vsel %vm4368, %v4426, 0.0
    %4430 = vadd.xlane.f32.xlu0 %v4429
    %v4431 = vpop.xlane.xlu0 %4430
    %v4432 = vmul.f32 %v4428, %v4372
    %v4433 = vmul.f32 %v4431, %v4372
    %v4434 = vadd.f32 %v4432, 1e-05
    %v4435 = vadd.f32 %v4433, 1e-05
    %v4436 = vrsqrt.pop %v4434
    %v4437 = vrsqrt.pop %v4435
    %v4438 = vmul.f32 %v4423, %v4436
    %v4439 = vmul.f32 %v4424, %v4437
    %v4441 = vlaneseq
    %v4442 = vshrl.u32 %v4441, 7
    %v4443 = vsub.s32 0, %v4442
    %v4444 = vrot.slane %v4414, %v4443
    %v4446 = vmul.f32 %v4438, %v4444
    %v4447 = vmul.f32 %v4439, %v4444
    %v4449 = vlaneseq
    %v4450 = vshrl.u32 %v4449, 7
    %v4451 = vsub.s32 0, %v4450
    %v4452 = vrot.slane %v4415, %v4451
    %v4454 = vadd.f32 %v4446, %v4452
    %v4455 = vadd.f32 %v4447, %v4452
    %v4456 = vpack.c.bf16 %v4455, %v4454
    %v4457 = vld [vmem:[%s8] sm:$0xff]
    %v4458 = vld [vmem:[%s8 + $0x8] sm:$0xff]
    %v4459 = vld [vmem:[%s8 + $0x10] sm:$0xff]
    %v4460 = vld [vmem:[%s8 + $0x18] sm:$0xff]
    %v4461 = vld [vmem:[%s8 + $0x20] sm:$0xff]
    %v4462 = vld [vmem:[%s8 + $0x28] sm:$0xff]
    %v4463 = vld [vmem:[%s8 + $0x30] sm:$0xff]
    %v4464 = vld [vmem:[%s8 + $0x38] sm:$0xff]
    %v4465 = vld [vmem:[%s8 + $0x40] sm:$0xff]
    %v4466 = vld [vmem:[%s8 + $0x48] sm:$0xff]
    %v4467 = vld [vmem:[%s8 + $0x50] sm:$0xff]
    %v4468 = vld [vmem:[%s8 + $0x58] sm:$0xff]
    %v4469 = vld [vmem:[%s8 + $0x60] sm:$0xff]
    %v4470 = vld [vmem:[%s8 + $0x68] sm:$0xff]
    %v4471 = vld [vmem:[%s8 + $0x70] sm:$0xff]
    %v4472 = vld [vmem:[%s8 + $0x78] sm:$0xff]
    %v4473 = vld [vmem:[%s8 + $0x80] sm:$0xff]
    %v4474 = vld [vmem:[%s8 + $0x88] sm:$0xff]
    %v4475 = vld [vmem:[%s8 + $0x90] sm:$0xff]
    %v4476 = vld [vmem:[%s8 + $0x98] sm:$0xff]
    %v4477 = vld [vmem:[%s8 + $0xa0] sm:$0xff]
    %v4478 = vld [vmem:[%s8 + $0xa8] sm:$0xff]
    %v4479 = vld [vmem:[%s8 + $0xb0] sm:$0xff]
    %v4480 = vld [vmem:[%s8 + $0xb8] sm:$0xff]
    %v4481 = vld [vmem:[%s8 + $0xc0] sm:$0xff]
    %v4482 = vld [vmem:[%s8 + $0xc8] sm:$0xff]
    %v4483 = vld [vmem:[%s8 + $0xd0] sm:$0xff]
    %v4484 = vld [vmem:[%s8 + $0xd8] sm:$0xff]
    %v4485 = vld [vmem:[%s8 + $0xe0] sm:$0xff]
    %v4486 = vld [vmem:[%s8 + $0xe8] sm:$0xff]
    %v4487 = vld [vmem:[%s8 + $0xf0] sm:$0xff]
    %v4488 = vld [vmem:[%s8 + $0xf8] sm:$0xff]
    %v4489 = vld [vmem:[%s9] sm:$0xf]
    %v4491 = vlaneseq
    %v4492 = vshrl.u32 %v4491, 7
    %v4493 = vsub.s32 0, %v4492
    %v4494 = vrot.slane %v4489, %v4493
    %v4495 = vlaneseq
    %v4496 = vshrl.u32 %v4495, 7
    %v4497 = vsub.s32 1, %v4496
    %v4498 = vrot.slane %v4489, %v4497
    %v4499 = vlaneseq
    %v4500 = vshrl.u32 %v4499, 7
    %v4501 = vsub.s32 2, %v4500
    %v4502 = vrot.slane %v4489, %v4501
    %v4503 = vlaneseq
    %v4504 = vshrl.u32 %v4503, 7
    %v4505 = vsub.s32 3, %v4504
    %v4506 = vrot.slane %v4489, %v4505
    %v4543 = vunpack.c.l.b16 %v4457
    %v4544 = vunpack.c.h.b16 %v4457
    %v4545 = vunpack.c.l.b16 %v4458
    %v4546 = vunpack.c.h.b16 %v4458
    %v4547 = vunpack.c.l.b16 %v4459
    %v4548 = vunpack.c.h.b16 %v4459
    %v4549 = vunpack.c.l.b16 %v4460
    %v4550 = vunpack.c.h.b16 %v4460
    %v4551 = vunpack.c.l.b16 %v4461
    %v4552 = vunpack.c.h.b16 %v4461
    %v4553 = vunpack.c.l.b16 %v4462
    %v4554 = vunpack.c.h.b16 %v4462
    %v4555 = vunpack.c.l.b16 %v4463
    %v4556 = vunpack.c.h.b16 %v4463
    %v4557 = vunpack.c.l.b16 %v4464
    %v4558 = vunpack.c.h.b16 %v4464
    %v4559 = vunpack.c.l.b16 %v4465
    %v4560 = vunpack.c.h.b16 %v4465
    %v4561 = vunpack.c.l.b16 %v4466
    %v4562 = vunpack.c.h.b16 %v4466
    %v4563 = vunpack.c.l.b16 %v4467
    %v4564 = vunpack.c.h.b16 %v4467
    %v4565 = vunpack.c.l.b16 %v4468
    %v4566 = vunpack.c.h.b16 %v4468
    %v4567 = vunpack.c.l.b16 %v4469
    %v4568 = vunpack.c.h.b16 %v4469
    %v4569 = vunpack.c.l.b16 %v4470
    %v4570 = vunpack.c.h.b16 %v4470
    %v4571 = vunpack.c.l.b16 %v4471
    %v4572 = vunpack.c.h.b16 %v4471
    %v4573 = vunpack.c.l.b16 %v4472
    %v4574 = vunpack.c.h.b16 %v4472
    %v4575 = vunpack.c.l.b16 %v4473
    %v4576 = vunpack.c.h.b16 %v4473
    %v4577 = vunpack.c.l.b16 %v4474
    %v4578 = vunpack.c.h.b16 %v4474
    %v4579 = vunpack.c.l.b16 %v4475
    %v4580 = vunpack.c.h.b16 %v4475
    %v4581 = vunpack.c.l.b16 %v4476
    %v4582 = vunpack.c.h.b16 %v4476
    %v4583 = vunpack.c.l.b16 %v4477
    %v4584 = vunpack.c.h.b16 %v4477
    %v4585 = vunpack.c.l.b16 %v4478
    %v4586 = vunpack.c.h.b16 %v4478
    %v4587 = vunpack.c.l.b16 %v4479
    %v4588 = vunpack.c.h.b16 %v4479
    %v4589 = vunpack.c.l.b16 %v4480
    %v4590 = vunpack.c.h.b16 %v4480
    %v4591 = vunpack.c.l.b16 %v4481
    %v4592 = vunpack.c.h.b16 %v4481
    %v4593 = vunpack.c.l.b16 %v4482
    %v4594 = vunpack.c.h.b16 %v4482
    %v4595 = vunpack.c.l.b16 %v4483
    %v4596 = vunpack.c.h.b16 %v4483
    %v4597 = vunpack.c.l.b16 %v4484
    %v4598 = vunpack.c.h.b16 %v4484
    %v4599 = vunpack.c.l.b16 %v4485
    %v4600 = vunpack.c.h.b16 %v4485
    %v4601 = vunpack.c.l.b16 %v4486
    %v4602 = vunpack.c.h.b16 %v4486
    %v4603 = vunpack.c.l.b16 %v4487
    %v4604 = vunpack.c.h.b16 %v4487
    %v4605 = vunpack.c.l.b16 %v4488
    %v4606 = vunpack.c.h.b16 %v4488
    %v4607 = vpack.c.b16 %v4547, %v4543
    %v4608 = vpack.c.b16 %v4548, %v4544
    %v4609 = vpack.c.b16 %v4549, %v4545
    %v4610 = vpack.c.b16 %v4550, %v4546
    %v4611 = vpack.c.b16 %v4555, %v4551
    %v4612 = vpack.c.b16 %v4556, %v4552
    %v4613 = vpack.c.b16 %v4557, %v4553
    %v4614 = vpack.c.b16 %v4558, %v4554
    %v4615 = vpack.c.b16 %v4563, %v4559
    %v4616 = vpack.c.b16 %v4564, %v4560
    %v4617 = vpack.c.b16 %v4565, %v4561
    %v4618 = vpack.c.b16 %v4566, %v4562
    %v4619 = vpack.c.b16 %v4571, %v4567
    %v4620 = vpack.c.b16 %v4572, %v4568
    %v4621 = vpack.c.b16 %v4573, %v4569
    %v4622 = vpack.c.b16 %v4574, %v4570
    %v4623 = vpack.c.b16 %v4579, %v4575
    %v4624 = vpack.c.b16 %v4580, %v4576
    %v4625 = vpack.c.b16 %v4581, %v4577
    %v4626 = vpack.c.b16 %v4582, %v4578
    %v4627 = vpack.c.b16 %v4587, %v4583
    %v4628 = vpack.c.b16 %v4588, %v4584
    %v4629 = vpack.c.b16 %v4589, %v4585
    %v4630 = vpack.c.b16 %v4590, %v4586
    %v4631 = vpack.c.b16 %v4595, %v4591
    %v4632 = vpack.c.b16 %v4596, %v4592
    %v4633 = vpack.c.b16 %v4597, %v4593
    %v4634 = vpack.c.b16 %v4598, %v4594
    %v4635 = vpack.c.b16 %v4603, %v4599
    %v4636 = vpack.c.b16 %v4604, %v4600
    %v4637 = vpack.c.b16 %v4605, %v4601
    %v4638 = vpack.c.b16 %v4606, %v4602
    %4671 = vmatprep.subr.bf16.mxu0 %v4636
    %4672 = vmatpush1.bf16.msra.mxu0 %v4635
    %4673 = vmatprep.subr.bf16.mxu0 %v4632
    %4674 = vmatpush1.bf16.msra.mxu0 %v4631
    %4675 = vmatprep.subr.bf16.mxu0 %v4628
    %4676 = vmatpush1.bf16.msra.mxu0 %v4627
    %4677 = vmatprep.subr.bf16.mxu0 %v4624
    %4678 = vmatpush1.bf16.msra.mxu0 %v4623
    %4679 = vmatprep.subr.bf16.mxu0 %v4620
    %4680 = vmatpush1.bf16.msra.mxu0 %v4619
    %4681 = vmatprep.subr.bf16.mxu0 %v4616
    %4682 = vmatpush1.bf16.msra.mxu0 %v4615
    %4683 = vmatprep.subr.bf16.mxu0 %v4612
    %4684 = vmatpush1.bf16.msra.mxu0 %v4611
    %4685 = vmatprep.subr.bf16.mxu0 %v4608
    %4686 = vmatpush1.bf16.msra.mxu0 %v4607
    %4687 = vmatprep.subr.bf16.mxu0 0
    %4688 = vmatpush2.bf16.msra.mxu0 0
    %4689 = vmatprep.subr.bf16.mxu0 0
    %4690 = vmatpush2.bf16.msra.mxu0 0
    %4691 = vmatprep.subr.bf16.mxu0 0
    %4692 = vmatpush2.bf16.msra.mxu0 0
    %4693 = vmatprep.subr.bf16.mxu0 0
    %4694 = vmatpush2.bf16.msra.mxu0 0
    %4695 = vmatprep.subr.bf16.mxu0 0
    %4696 = vmatpush2.bf16.msra.mxu0 0
    %4697 = vmatprep.subr.bf16.mxu0 0
    %4698 = vmatpush2.bf16.msra.mxu0 0
    %4699 = vmatprep.subr.bf16.mxu0 0
    %4700 = vmatpush2.bf16.msra.mxu0 0
    %4701 = vmatprep.subr.bf16.mxu0 0
    %4702 = vmatpush2.bf16.msra.mxu0 0
    %4703 = vmatprep.mubr.bf16.mxu0 0
    %4704 = vmatmul.mubr.bf16.gmra.mxu0 %v4456
    %v4705 = vpop.f32.mrf.mxu0
    %v4706 = vadd.f32 %v4494, %v4705
    %v4707 = vpop.f32.mrf.mxu0
    %v4708 = vadd.f32 %v4498, %v4707
    %v4709 = vpop.f32.mrf.mxu0
    %v4710 = vadd.f32 %v4494, %v4709
    %v4711 = vpop.f32.mrf.mxu0
    %v4712 = vadd.f32 %v4498, %v4711
    %4713 = vdwg.mxu0
    %4714 = vmatprep.subr.bf16.mxu0 %v4638
    %4715 = vmatpush1.bf16.msra.mxu0 %v4637
    %4716 = vmatprep.subr.bf16.mxu0 %v4634
    %4717 = vmatpush1.bf16.msra.mxu0 %v4633
    %4718 = vmatprep.subr.bf16.mxu0 %v4630
    %4719 = vmatpush1.bf16.msra.mxu0 %v4629
    %4720 = vmatprep.subr.bf16.mxu0 %v4626
    %4721 = vmatpush1.bf16.msra.mxu0 %v4625
    %4722 = vmatprep.subr.bf16.mxu0 %v4622
    %4723 = vmatpush1.bf16.msra.mxu0 %v4621
    %4724 = vmatprep.subr.bf16.mxu0 %v4618
    %4725 = vmatpush1.bf16.msra.mxu0 %v4617
    %4726 = vmatprep.subr.bf16.mxu0 %v4614
    %4727 = vmatpush1.bf16.msra.mxu0 %v4613
    %4728 = vmatprep.subr.bf16.mxu0 %v4610
    %4729 = vmatpush1.bf16.msra.mxu0 %v4609
    %4730 = vmatprep.subr.bf16.mxu0 0
    %4731 = vmatpush2.bf16.msra.mxu0 0
    %4732 = vmatprep.subr.bf16.mxu0 0
    %4733 = vmatpush2.bf16.msra.mxu0 0
    %4734 = vmatprep.subr.bf16.mxu0 0
    %4735 = vmatpush2.bf16.msra.mxu0 0
    %4736 = vmatprep.subr.bf16.mxu0 0
    %4737 = vmatpush2.bf16.msra.mxu0 0
    %4738 = vmatprep.subr.bf16.mxu0 0
    %4739 = vmatpush2.bf16.msra.mxu0 0
    %4740 = vmatprep.subr.bf16.mxu0 0
    %4741 = vmatpush2.bf16.msra.mxu0 0
    %4742 = vmatprep.subr.bf16.mxu0 0
    %4743 = vmatpush2.bf16.msra.mxu0 0
    %4744 = vmatprep.subr.bf16.mxu0 0
    %4745 = vmatpush2.bf16.msra.mxu0 0
    %4746 = vmatprep.mubr.bf16.mxu0 0
    %4747 = vmatmul.mubr.bf16.gmra.mxu0 %v4456
    %v4748 = vpop.f32.mrf.mxu0
    %v4749 = vadd.f32 %v4502, %v4748
    %v4750 = vpop.f32.mrf.mxu0
    %v4751 = vadd.f32 %v4506, %v4750
    %v4752 = vpop.f32.mrf.mxu0
    %v4753 = vadd.f32 %v4502, %v4752
    %v4754 = vpop.f32.mrf.mxu0
    %v4755 = vadd.f32 %v4506, %v4754
    %4756 = vdwg.mxu0
    %v4757 = vmul.f32 %v4706, %v4706
    %v4758 = vmul.f32 %v4708, %v4708
    %v4759 = vmul.f32 %v4749, %v4749
    %v4760 = vmul.f32 %v4751, %v4751
    %v4761 = vmul.f32 %v4710, %v4710
    %v4762 = vmul.f32 %v4712, %v4712
    %v4763 = vmul.f32 %v4753, %v4753
    %v4764 = vmul.f32 %v4755, %v4755
    %v4765 = vmul.f32 %v4706, %v4757
    %v4766 = vmul.f32 %v4708, %v4758
    %v4767 = vmul.f32 %v4749, %v4759
    %v4768 = vmul.f32 %v4751, %v4760
    %v4769 = vmul.f32 %v4710, %v4761
    %v4770 = vmul.f32 %v4712, %v4762
    %v4771 = vmul.f32 %v4753, %v4763
    %v4772 = vmul.f32 %v4755, %v4764
    %v4773 = vmul.f32 %v4765, 0.044715
    %v4774 = vmul.f32 %v4766, 0.044715
    %v4775 = vmul.f32 %v4767, 0.044715
    %v4776 = vmul.f32 %v4768, 0.044715
    %v4777 = vmul.f32 %v4769, 0.044715
    %v4778 = vmul.f32 %v4770, 0.044715
    %v4779 = vmul.f32 %v4771, 0.044715
    %v4780 = vmul.f32 %v4772, 0.044715
    %v4781 = vadd.f32 %v4706, %v4773
    %v4782 = vadd.f32 %v4708, %v4774
    %v4783 = vadd.f32 %v4749, %v4775
    %v4784 = vadd.f32 %v4751, %v4776
    %v4785 = vadd.f32 %v4710, %v4777
    %v4786 = vadd.f32 %v4712, %v4778
    %v4787 = vadd.f32 %v4753, %v4779
    %v4788 = vadd.f32 %v4755, %v4780
    %v4789 = vmul.f32 %v4781, 0.7978846
    %v4790 = vmul.f32 %v4782, 0.7978846
    %v4791 = vmul.f32 %v4783, 0.7978846
    %v4792 = vmul.f32 %v4784, 0.7978846
    %v4793 = vmul.f32 %v4785, 0.7978846
    %v4794 = vmul.f32 %v4786, 0.7978846
    %v4795 = vmul.f32 %v4787, 0.7978846
    %v4796 = vmul.f32 %v4788, 0.7978846
    %v4797 = vtanh.pop %v4789
    %v4798 = vtanh.pop %v4790
    %v4799 = vtanh.pop %v4791
    %v4800 = vtanh.pop %v4792
    %v4801 = vtanh.pop %v4793
    %v4802 = vtanh.pop %v4794
    %v4803 = vtanh.pop %v4795
    %v4804 = vtanh.pop %v4796
    %v4805 = vadd.f32 %v4797, 1.0
    %v4806 = vadd.f32 %v4798, 1.0
    %v4807 = vadd.f32 %v4799, 1.0
    %v4808 = vadd.f32 %v4800, 1.0
    %v4809 = vadd.f32 %v4801, 1.0
    %v4810 = vadd.f32 %v4802, 1.0
    %v4811 = vadd.f32 %v4803, 1.0
    %v4812 = vadd.f32 %v4804, 1.0
    %v4813 = vmul.f32 %v4805, 0.5
    %v4814 = vmul.f32 %v4806, 0.5
    %v4815 = vmul.f32 %v4807, 0.5
    %v4816 = vmul.f32 %v4808, 0.5
    %v4817 = vmul.f32 %v4809, 0.5
    %v4818 = vmul.f32 %v4810, 0.5
    %v4819 = vmul.f32 %v4811, 0.5
    %v4820 = vmul.f32 %v4812, 0.5
    %v4821 = vmul.f32 %v4706, %v4813
    %v4822 = vmul.f32 %v4708, %v4814
    %v4823 = vmul.f32 %v4749, %v4815
    %v4824 = vmul.f32 %v4751, %v4816
    %v4825 = vmul.f32 %v4710, %v4817
    %v4826 = vmul.f32 %v4712, %v4818
    %v4827 = vmul.f32 %v4753, %v4819
    %v4828 = vmul.f32 %v4755, %v4820
    %v4829 = vpack.c.bf16 %v4825, %v4821
    %v4830 = vpack.c.bf16 %v4826, %v4822
    %v4831 = vpack.c.bf16 %v4827, %v4823
    %v4832 = vpack.c.bf16 %v4828, %v4824
    %v4833 = vld [vmem:[%s10] sm:$0xf]
    %v4834 = vld [vmem:[%s10 + $0x4] sm:$0xf]
    %v4835 = vld [vmem:[%s10 + $0x8] sm:$0xf]
    %v4836 = vld [vmem:[%s10 + $0xc] sm:$0xf]
    %v4837 = vld [vmem:[%s10 + $0x10] sm:$0xf]
    %v4838 = vld [vmem:[%s10 + $0x14] sm:$0xf]
    %v4839 = vld [vmem:[%s10 + $0x18] sm:$0xf]
    %v4840 = vld [vmem:[%s10 + $0x1c] sm:$0xf]
    %v4841 = vld [vmem:[%s10 + $0x20] sm:$0xf]
    %v4842 = vld [vmem:[%s10 + $0x24] sm:$0xf]
    %v4843 = vld [vmem:[%s10 + $0x28] sm:$0xf]
    %v4844 = vld [vmem:[%s10 + $0x2c] sm:$0xf]
    %v4845 = vld [vmem:[%s10 + $0x30] sm:$0xf]
    %v4846 = vld [vmem:[%s10 + $0x34] sm:$0xf]
    %v4847 = vld [vmem:[%s10 + $0x38] sm:$0xf]
    %v4848 = vld [vmem:[%s10 + $0x3c] sm:$0xf]
    %v4849 = vld [vmem:[%s10 + $0x40] sm:$0xf]
    %v4850 = vld [vmem:[%s10 + $0x44] sm:$0xf]
    %v4851 = vld [vmem:[%s10 + $0x48] sm:$0xf]
    %v4852 = vld [vmem:[%s10 + $0x4c] sm:$0xf]
    %v4853 = vld [vmem:[%s10 + $0x50] sm:$0xf]
    %v4854 = vld [vmem:[%s10 + $0x54] sm:$0xf]
    %v4855 = vld [vmem:[%s10 + $0x58] sm:$0xf]
    %v4856 = vld [vmem:[%s10 + $0x5c] sm:$0xf]
    %v4857 = vld [vmem:[%s10 + $0x60] sm:$0xf]
    %v4858 = vld [vmem:[%s10 + $0x64] sm:$0xf]
    %v4859 = vld [vmem:[%s10 + $0x68] sm:$0xf]
    %v4860 = vld [vmem:[%s10 + $0x6c] sm:$0xf]
    %v4861 = vld [vmem:[%s10 + $0x70] sm:$0xf]
    %v4862 = vld [vmem:[%s10 + $0x74] sm:$0xf]
    %v4863 = vld [vmem:[%s10 + $0x78] sm:$0xf]
    %v4864 = vld [vmem:[%s10 + $0x7c] sm:$0xf]
    %v4865 = vld [vmem:[%s10 + $0x80] sm:$0xf]
    %v4866 = vld [vmem:[%s10 + $0x84] sm:$0xf]
    %v4867 = vld [vmem:[%s10 + $0x88] sm:$0xf]
    %v4868 = vld [vmem:[%s10 + $0x8c] sm:$0xf]
    %v4869 = vld [vmem:[%s10 + $0x90] sm:$0xf]
    %v4870 = vld [vmem:[%s10 + $0x94] sm:$0xf]
    %v4871 = vld [vmem:[%s10 + $0x98] sm:$0xf]
    %v4872 = vld [vmem:[%s10 + $0x9c] sm:$0xf]
    %v4873 = vld [vmem:[%s10 + $0xa0] sm:$0xf]
    %v4874 = vld [vmem:[%s10 + $0xa4] sm:$0xf]
    %v4875 = vld [vmem:[%s10 + $0xa8] sm:$0xf]
    %v4876 = vld [vmem:[%s10 + $0xac] sm:$0xf]
    %v4877 = vld [vmem:[%s10 + $0xb0] sm:$0xf]
    %v4878 = vld [vmem:[%s10 + $0xb4] sm:$0xf]
    %v4879 = vld [vmem:[%s10 + $0xb8] sm:$0xf]
    %v4880 = vld [vmem:[%s10 + $0xbc] sm:$0xf]
    %v4881 = vld [vmem:[%s10 + $0xc0] sm:$0xf]
    %v4882 = vld [vmem:[%s10 + $0xc4] sm:$0xf]
    %v4883 = vld [vmem:[%s10 + $0xc8] sm:$0xf]
    %v4884 = vld [vmem:[%s10 + $0xcc] sm:$0xf]
    %v4885 = vld [vmem:[%s10 + $0xd0] sm:$0xf]
    %v4886 = vld [vmem:[%s10 + $0xd4] sm:$0xf]
    %v4887 = vld [vmem:[%s10 + $0xd8] sm:$0xf]
    %v4888 = vld [vmem:[%s10 + $0xdc] sm:$0xf]
    %v4889 = vld [vmem:[%s10 + $0xe0] sm:$0xf]
    %v4890 = vld [vmem:[%s10 + $0xe4] sm:$0xf]
    %v4891 = vld [vmem:[%s10 + $0xe8] sm:$0xf]
    %v4892 = vld [vmem:[%s10 + $0xec] sm:$0xf]
    %v4893 = vld [vmem:[%s10 + $0xf0] sm:$0xf]
    %v4894 = vld [vmem:[%s10 + $0xf4] sm:$0xf]
    %v4895 = vld [vmem:[%s10 + $0xf8] sm:$0xf]
    %v4896 = vld [vmem:[%s10 + $0xfc] sm:$0xf]
    %v4897 = vld [vmem:[%s11] sm:$0x1]
    %v4899 = vlaneseq
    %v4900 = vshrl.u32 %v4899, 7
    %v4901 = vsub.s32 0, %v4900
    %v4902 = vrot.slane %v4897, %v4901
    %v4968 = vunpack.c.l.b16 %v4833
    %v4969 = vunpack.c.l.b16 %v4834
    %v4970 = vunpack.c.l.b16 %v4835
    %v4971 = vunpack.c.l.b16 %v4836
    %v4972 = vunpack.c.l.b16 %v4837
    %v4973 = vunpack.c.l.b16 %v4838
    %v4974 = vunpack.c.l.b16 %v4839
    %v4975 = vunpack.c.l.b16 %v4840
    %v4976 = vunpack.c.l.b16 %v4841
    %v4977 = vunpack.c.l.b16 %v4842
    %v4978 = vunpack.c.l.b16 %v4843
    %v4979 = vunpack.c.l.b16 %v4844
    %v4980 = vunpack.c.l.b16 %v4845
    %v4981 = vunpack.c.l.b16 %v4846
    %v4982 = vunpack.c.l.b16 %v4847
    %v4983 = vunpack.c.l.b16 %v4848
    %v4984 = vunpack.c.l.b16 %v4849
    %v4985 = vunpack.c.l.b16 %v4850
    %v4986 = vunpack.c.l.b16 %v4851
    %v4987 = vunpack.c.l.b16 %v4852
    %v4988 = vunpack.c.l.b16 %v4853
    %v4989 = vunpack.c.l.b16 %v4854
    %v4990 = vunpack.c.l.b16 %v4855
    %v4991 = vunpack.c.l.b16 %v4856
    %v4992 = vunpack.c.l.b16 %v4857
    %v4993 = vunpack.c.l.b16 %v4858
    %v4994 = vunpack.c.l.b16 %v4859
    %v4995 = vunpack.c.l.b16 %v4860
    %v4996 = vunpack.c.l.b16 %v4861
    %v4997 = vunpack.c.l.b16 %v4862
    %v4998 = vunpack.c.l.b16 %v4863
    %v4999 = vunpack.c.l.b16 %v4864
    %v5000 = vunpack.c.l.b16 %v4865
    %v5001 = vunpack.c.l.b16 %v4866
    %v5002 = vunpack.c.l.b16 %v4867
    %v5003 = vunpack.c.l.b16 %v4868
    %v5004 = vunpack.c.l.b16 %v4869
    %v5005 = vunpack.c.l.b16 %v4870
    %v5006 = vunpack.c.l.b16 %v4871
    %v5007 = vunpack.c.l.b16 %v4872
    %v5008 = vunpack.c.l.b16 %v4873
    %v5009 = vunpack.c.l.b16 %v4874
    %v5010 = vunpack.c.l.b16 %v4875
    %v5011 = vunpack.c.l.b16 %v4876
    %v5012 = vunpack.c.l.b16 %v4877
    %v5013 = vunpack.c.l.b16 %v4878
    %v5014 = vunpack.c.l.b16 %v4879
    %v5015 = vunpack.c.l.b16 %v4880
    %v5016 = vunpack.c.l.b16 %v4881
    %v5017 = vunpack.c.l.b16 %v4882
    %v5018 = vunpack.c.l.b16 %v4883
    %v5019 = vunpack.c.l.b16 %v4884
    %v5020 = vunpack.c.l.b16 %v4885
    %v5021 = vunpack.c.l.b16 %v4886
    %v5022 = vunpack.c.l.b16 %v4887
    %v5023 = vunpack.c.l.b16 %v4888
    %v5024 = vunpack.c.l.b16 %v4889
    %v5025 = vunpack.c.l.b16 %v4890
    %v5026 = vunpack.c.l.b16 %v4891
    %v5027 = vunpack.c.l.b16 %v4892
    %v5028 = vunpack.c.l.b16 %v4893
    %v5029 = vunpack.c.l.b16 %v4894
    %v5030 = vunpack.c.l.b16 %v4895
    %v5031 = vunpack.c.l.b16 %v4896
    %v5032 = vpack.c.b16 %v4969, %v4968
    %v5033 = vpack.c.b16 %v4971, %v4970
    %v5034 = vpack.c.b16 %v4973, %v4972
    %v5035 = vpack.c.b16 %v4975, %v4974
    %v5036 = vpack.c.b16 %v4977, %v4976
    %v5037 = vpack.c.b16 %v4979, %v4978
    %v5038 = vpack.c.b16 %v4981, %v4980
    %v5039 = vpack.c.b16 %v4983, %v4982
    %v5040 = vpack.c.b16 %v4985, %v4984
    %v5041 = vpack.c.b16 %v4987, %v4986
    %v5042 = vpack.c.b16 %v4989, %v4988
    %v5043 = vpack.c.b16 %v4991, %v4990
    %v5044 = vpack.c.b16 %v4993, %v4992
    %v5045 = vpack.c.b16 %v4995, %v4994
    %v5046 = vpack.c.b16 %v4997, %v4996
    %v5047 = vpack.c.b16 %v4999, %v4998
    %v5048 = vpack.c.b16 %v5001, %v5000
    %v5049 = vpack.c.b16 %v5003, %v5002
    %v5050 = vpack.c.b16 %v5005, %v5004
    %v5051 = vpack.c.b16 %v5007, %v5006
    %v5052 = vpack.c.b16 %v5009, %v5008
    %v5053 = vpack.c.b16 %v5011, %v5010
    %v5054 = vpack.c.b16 %v5013, %v5012
    %v5055 = vpack.c.b16 %v5015, %v5014
    %v5056 = vpack.c.b16 %v5017, %v5016
    %v5057 = vpack.c.b16 %v5019, %v5018
    %v5058 = vpack.c.b16 %v5021, %v5020
    %v5059 = vpack.c.b16 %v5023, %v5022
    %v5060 = vpack.c.b16 %v5025, %v5024
    %v5061 = vpack.c.b16 %v5027, %v5026
    %v5062 = vpack.c.b16 %v5029, %v5028
    %v5063 = vpack.c.b16 %v5031, %v5030
    %5096 = vmatprep.subr.bf16.mxu0 0
    %5097 = vmatpush1.bf16.msra.mxu0 %v5039
    %5098 = vmatprep.subr.bf16.mxu0 0
    %5099 = vmatpush1.bf16.msra.mxu0 %v5038
    %5100 = vmatprep.subr.bf16.mxu0 0
    %5101 = vmatpush1.bf16.msra.mxu0 %v5037
    %5102 = vmatprep.subr.bf16.mxu0 0
    %5103 = vmatpush1.bf16.msra.mxu0 %v5036
    %5104 = vmatprep.subr.bf16.mxu0 0
    %5105 = vmatpush1.bf16.msra.mxu0 %v5035
    %5106 = vmatprep.subr.bf16.mxu0 0
    %5107 = vmatpush1.bf16.msra.mxu0 %v5034
    %5108 = vmatprep.subr.bf16.mxu0 0
    %5109 = vmatpush1.bf16.msra.mxu0 %v5033
    %5110 = vmatprep.subr.bf16.mxu0 0
    %5111 = vmatpush1.bf16.msra.mxu0 %v5032
    %5112 = vmatprep.subr.bf16.mxu0 0
    %5113 = vmatpush2.bf16.msra.mxu0 %v5047
    %5114 = vmatprep.subr.bf16.mxu0 0
    %5115 = vmatpush2.bf16.msra.mxu0 %v5046
    %5116 = vmatprep.subr.bf16.mxu0 0
    %5117 = vmatpush2.bf16.msra.mxu0 %v5045
    %5118 = vmatprep.subr.bf16.mxu0 0
    %5119 = vmatpush2.bf16.msra.mxu0 %v5044
    %5120 = vmatprep.subr.bf16.mxu0 0
    %5121 = vmatpush2.bf16.msra.mxu0 %v5043
    %5122 = vmatprep.subr.bf16.mxu0 0
    %5123 = vmatpush2.bf16.msra.mxu0 %v5042
    %5124 = vmatprep.subr.bf16.mxu0 0
    %5125 = vmatpush2.bf16.msra.mxu0 %v5041
    %5126 = vmatprep.subr.bf16.mxu0 0
    %5127 = vmatpush2.bf16.msra.mxu0 %v5040
    %5128 = vmatprep.mubr.bf16.mxu0 %v4830
    %5129 = vmatmul.mubr.bf16.gmra.mxu0 %v4829
    %v5130 = vpop.f32.mrf.mxu0
    %v5131 = vadd.f32 %v4902, %v5130
    %v5132 = vpop.f32.mrf.mxu0
    %v5133 = vpop.f32.mrf.mxu0
    %v5134 = vadd.f32 %v4902, %v5133
    %v5135 = vpop.f32.mrf.mxu0
    %5136 = vdwg.mxu0
    %5137 = vmatprep.subr.bf16.mxu0 0
    %5138 = vmatpush1.bf16.msra.mxu0 %v5055
    %5139 = vmatprep.subr.bf16.mxu0 0
    %5140 = vmatpush1.bf16.msra.mxu0 %v5054
    %5141 = vmatprep.subr.bf16.mxu0 0
    %5142 = vmatpush1.bf16.msra.mxu0 %v5053
    %5143 = vmatprep.subr.bf16.mxu0 0
    %5144 = vmatpush1.bf16.msra.mxu0 %v5052
    %5145 = vmatprep.subr.bf16.mxu0 0
    %5146 = vmatpush1.bf16.msra.mxu0 %v5051
    %5147 = vmatprep.subr.bf16.mxu0 0
    %5148 = vmatpush1.bf16.msra.mxu0 %v5050
    %5149 = vmatprep.subr.bf16.mxu0 0
    %5150 = vmatpush1.bf16.msra.mxu0 %v5049
    %5151 = vmatprep.subr.bf16.mxu0 0
    %5152 = vmatpush1.bf16.msra.mxu0 %v5048
    %5153 = vmatprep.subr.bf16.mxu0 0
    %5154 = vmatpush2.bf16.msra.mxu0 %v5063
    %5155 = vmatprep.subr.bf16.mxu0 0
    %5156 = vmatpush2.bf16.msra.mxu0 %v5062
    %5157 = vmatprep.subr.bf16.mxu0 0
    %5158 = vmatpush2.bf16.msra.mxu0 %v5061
    %5159 = vmatprep.subr.bf16.mxu0 0
    %5160 = vmatpush2.bf16.msra.mxu0 %v5060
    %5161 = vmatprep.subr.bf16.mxu0 0
    %5162 = vmatpush2.bf16.msra.mxu0 %v5059
    %5163 = vmatprep.subr.bf16.mxu0 0
    %5164 = vmatpush2.bf16.msra.mxu0 %v5058
    %5165 = vmatprep.subr.bf16.mxu0 0
    %5166 = vmatpush2.bf16.msra.mxu0 %v5057
    %5167 = vmatprep.subr.bf16.mxu0 0
    %5168 = vmatpush2.bf16.msra.mxu0 %v5056
    %5169 = vmatprep.mubr.bf16.mxu0 %v4832
    %5170 = vmatmul.mubr.bf16.gmra.mxu0 %v4831
    %v5171 = vpop.f32.mrf.mxu0
    %v5172 = vadd.f32 %v5131, %v5171
    %v5173 = vpop.f32.mrf.mxu0
    %v5174 = vpop.f32.mrf.mxu0
    %v5175 = vadd.f32 %v5134, %v5174
    %v5176 = vpop.f32.mrf.mxu0
    %5177 = vdwg.mxu0
    %v5178 = vadd.f32 %v4454, %v5172
    %v5179 = vadd.f32 %v4455, %v5175
    %v5180 = vld [vmem:[%s12] sm:$0x1]
    %v5181 = vld [vmem:[%s13] sm:$0x1]
    %5182 = vadd.xlane.f32.xlu0 %v5178
    %v5183 = vpop.xlane.xlu0 %5182
    %v5184 = vsel %vm4368, %v5179, 0.0
    %5185 = vadd.xlane.f32.xlu0 %v5184
    %v5186 = vpop.xlane.xlu0 %5185
    %v5187 = vmul.f32 %v5183, %v4372
    %v5188 = vmul.f32 %v5186, %v4372
    %v5189 = vsub.f32 %v5178, %v5187
    %v5190 = vsub.f32 %v5179, %v5188
    %v5191 = vmul.f32 %v5189, %v5189
    %v5192 = vmul.f32 %v5190, %v5190
    %5193 = vadd.xlane.f32.xlu0 %v5191
    %v5194 = vpop.xlane.xlu0 %5193
    %v5195 = vsel %vm4368, %v5192, 0.0
    %5196 = vadd.xlane.f32.xlu0 %v5195
    %v5197 = vpop.xlane.xlu0 %5196
    %v5198 = vmul.f32 %v5194, %v4372
    %v5199 = vmul.f32 %v5197, %v4372
    %v5200 = vadd.f32 %v5198, 1e-05
    %v5201 = vadd.f32 %v5199, 1e-05
    %v5202 = vrsqrt.pop %v5200
    %v5203 = vrsqrt.pop %v5201
    %v5204 = vmul.f32 %v5189, %v5202
    %v5205 = vmul.f32 %v5190, %v5203
    %v5207 = vlaneseq
    %v5208 = vshrl.u32 %v5207, 7
    %v5209 = vsub.s32 0, %v5208
    %v5210 = vrot.slane %v5180, %v5209
    %v5212 = vmul.f32 %v5204, %v5210
    %v5213 = vmul.f32 %v5205, %v5210
    %v5215 = vlaneseq
    %v5216 = vshrl.u32 %v5215, 7
    %v5217 = vsub.s32 0, %v5216
    %v5218 = vrot.slane %v5181, %v5217
    %v5220 = vadd.f32 %v5212, %v5218
    %v5221 = vadd.f32 %v5213, %v5218
    %5222 = vst [vmem:[#allocation2] sm:$0xff] %v5220
    %5223 = vst [vmem:[#allocation2 + $0x8] sm:$0xf] %v5221
    // Predicated region
    $region58: #{per_view_forward.7} parent=1 // pred_check
      _
    $region59: #{per_view_forward.7} parent=1 // pred_check_branch
      %5225 = sbr.rel (0) target = $region61
    $region60: #{per_view_forward.7} parent=1 // pred_region
      %s5227 = ssub.s32 256, 256
      %5228 = vsyncadd [#allocation3], %s5227
      %s5229 = sshll.u32 [#allocation2], 4
      %s5230 = int_to_ptr.vmem [resolvable:$true] %s5229
      %5235 = dma.vmem_to_hbm [thread:$0]  %s5230, 256, %s14, [#allocation3], 128, 128, 8
    $region61: #{per_view_forward.7} parent=1 // pred_fallthru
      _
    // Predicated region
    $region62: #{per_view_forward.7} parent=1 // pred_check
      _
    $region63: #{per_view_forward.7} parent=1 // pred_check_branch
      %5237 = sbr.rel (0) target = $region65
    $region64: #{per_view_forward.7} parent=1 // pred_region
      %5238 = dma.done [#allocation3], 256
    $region65: #{per_view_forward.7} parent=1 // pred_fallthru
      _
    %5239 = vsyncpa [#allocation3], 1

</llo_original>
